<compile_context>
chip_gen: v7x
topology: tpu7x:2x2x1
jax: 0.10.0
libtpu: 0.0.40
codegen_flags: <defaults>
</compile_context>

<pallas_src>
import functools

import jax
import jax.numpy as jnp
import numpy as np
from jax.experimental import pallas as pl
from jax.experimental.pallas import tpu as pltpu


IN_DIM = 784
HIDDEN = 2000
OUT_DIM = 10
N_HIDDEN_LAYERS = 6          # conv1..conv6, each followed by ReLU


def _round_up(x, m):
    return ((x + m - 1) // m) * m


IN_PAD = _round_up(IN_DIM, 128)    # 896
HID_PAD = _round_up(HIDDEN, 128)   # 2048
OUT_PAD = _round_up(OUT_DIM, 128)  # 128


# ----------------------------------------------------------------------------
# Kernel 1: single fused linear  out = relu?(x @ W + b)  (used for conv1, fc1)
# K is a single block (no accumulator / k-gating needed).
# ----------------------------------------------------------------------------
def _linear_kernel(x_ref, w_ref, b_ref, o_ref, *, relu):
    acc = jnp.dot(
        x_ref[...].astype(jnp.bfloat16),     # bf16 x bf16 -> f32 acc on MXU
        w_ref[...],
        preferred_element_type=jnp.float32,
    )
    acc = acc + b_ref[...]
    if relu:
        acc = jnp.maximum(acc, 0.0)
    o_ref[...] = acc.astype(o_ref.dtype)


def pallas_linear(x, w, b, *, relu, out_dtype, tm, tn=1024):
    """y = relu?(x @ w + b).  x:(Mp,Kp), w:(Kp,Np) bf16, b:(1,Np) f32.

    Shapes must be pre-padded: Mp % tm == 0, Kp % 128 == 0, Np % tn == 0.
    """
    Mp, Kp = x.shape
    Kw, Np = w.shape
    assert Kp == Kw and b.shape == (1, Np)
    tn = min(tn, Np)
    assert Mp % tm == 0 and Kp % 128 == 0 and Np % tn == 0 and tn % 128 == 0
    grid = (Mp // tm, Np // tn)

    cost = pl.CostEstimate(
        flops=2 * Mp * Kp * Np,
        transcendentals=0,
        bytes_accessed=(Mp * Kp * x.dtype.itemsize
                        + Kp * Np * w.dtype.itemsize
                        + Np * b.dtype.itemsize
                        + Mp * Np * jnp.dtype(out_dtype).itemsize),
    )

    return pl.pallas_call(
        functools.partial(_linear_kernel, relu=relu),
        out_shape=jax.ShapeDtypeStruct((Mp, Np), out_dtype),
        grid_spec=pltpu.PrefetchScalarGridSpec(
            num_scalar_prefetch=0,
            grid=grid,
            in_specs=[
                pl.BlockSpec((tm, Kp), lambda i, j: (i, 0)),   # activations
                pl.BlockSpec((Kp, tn), lambda i, j: (0, j)),   # weights
                pl.BlockSpec((1, tn), lambda i, j: (0, j)),    # bias
            ],
            out_specs=pl.BlockSpec((tm, tn), lambda i, j: (i, j)),
        ),
        compiler_params=pltpu.CompilerParams(
            dimension_semantics=("parallel", "parallel"),
        ),
        cost_estimate=cost,
    )(x, w, b)


# ----------------------------------------------------------------------------
# Kernel 2: fused stack of identical (HID_PAD -> HID_PAD) ReLU layers.
#
# grid = (M blocks, layer, N blocks).  The activation lives in a VMEM
# ping-pong scratch (2, tm, HID_PAD) bf16; layer l reads slot l%2 and writes
# slot (l+1)%2.  Weight blocks (1, HID_PAD, tn) stream from HBM with the
# layer index in the BlockSpec index_map, so the next layer's first block is
# prefetched while the current layer finishes.  Only the last layer writes the
# (resident) output block.
# ----------------------------------------------------------------------------
def _fused_hidden_kernel(x_ref, w_ref, b_ref, o_ref, act_ref, *, tm, tn):
    l = pl.program_id(1)
    j = pl.program_id(2)
    n_layers = pl.num_programs(1)

    # First (layer, n-block) step of every M block: stage incoming activation.
    @pl.when(jnp.logical_and(l == 0, j == 0))
    def _():
        act_ref[0] = x_ref[...]

    parity = l % 2
    # Both slot loads are tiny vs the 4 MiB weight DMA; a select is the safest
    # way to pick the source slot (all leading indices stay static).
    src = jnp.where(parity == 0, act_ref[0], act_ref[1])   # (tm, HID_PAD) bf16

    acc = jnp.dot(src, w_ref[0], preferred_element_type=jnp.float32)
    out = jnp.maximum(acc + b_ref[0], 0.0).astype(jnp.bfloat16)

    col = pl.multiple_of(j * tn, tn)
    not_last = l < n_layers - 1

    @pl.when(jnp.logical_and(not_last, parity == 0))
    def _():
        act_ref[1, :, pl.ds(col, tn)] = out

    @pl.when(jnp.logical_and(not_last, parity == 1))
    def _():
        act_ref[0, :, pl.ds(col, tn)] = out

    @pl.when(l == n_layers - 1)
    def _():
        o_ref[:, pl.ds(col, tn)] = out


def pallas_hidden_stack(x, w_stack, b_stack, n_layers, *, tm, tn=1024):
    """Apply `n_layers` of relu(x @ W_l + b_l) with all layers in one call.

    x:(Mp,HID_PAD) bf16, w_stack:(L,HID_PAD,HID_PAD) bf16, b_stack:(L,1,HID_PAD) f32.
    Only the first `n_layers` slices of the stack are touched (grid-limited).
    """
    Mp, K = x.shape
    L, Kw, Np = w_stack.shape
    assert K == Kw == Np == HID_PAD
    assert b_stack.shape == (L, 1, Np)
    assert 1 <= n_layers <= L
    tn = min(tn, Np)
    assert Mp % tm == 0 and Np % tn == 0 and tn % 128 == 0

    cost = pl.CostEstimate(
        flops=2 * Mp * K * Np * n_layers,
        transcendentals=0,
        bytes_accessed=(n_layers * (K * Np * 2 + Np * 4)   # weights + bias
                        + Mp * K * 2 + Mp * Np * 2),       # act in + act out
    )

    return pl.pallas_call(
        functools.partial(_fused_hidden_kernel, tm=tm, tn=tn),
        out_shape=jax.ShapeDtypeStruct((Mp, Np), jnp.bfloat16),
        grid_spec=pltpu.PrefetchScalarGridSpec(
            num_scalar_prefetch=0,
            grid=(Mp // tm, n_layers, Np // tn),
            in_specs=[
                pl.BlockSpec((tm, K), lambda m, l, j: (m, 0)),        # resident input act
                pl.BlockSpec((1, K, tn), lambda m, l, j: (l, 0, j)),  # streamed weights
                pl.BlockSpec((1, 1, tn), lambda m, l, j: (l, 0, j)),  # bias blocks
            ],
            out_specs=pl.BlockSpec((tm, Np), lambda m, l, j: (m, 0)), # resident output
            scratch_shapes=[pltpu.VMEM((2, tm, K), jnp.bfloat16)],    # ping-pong act
        ),
        compiler_params=pltpu.CompilerParams(
            # Layer/N axes are sequential (activation resident in scratch);
            # M blocks are independent but kept "arbitrary" to stay safe with
            # the per-M scratch re-initialization.
            dimension_semantics=("arbitrary", "arbitrary", "arbitrary"),
        ),
        cost_estimate=cost,
    )(x, w_stack, b_stack)


# ----------------------------------------------------------------------------
# Parameters: PyTorch nn.Linear default init, padded once to the kernel layout
# (weights transposed to (in, out), bf16; bias f32).  conv2..conv6 stacked.
# ----------------------------------------------------------------------------
def _init_linear_padded(key, fan_in, fan_out, kp, npad):
    kw, kb = jax.random.split(key)
    bound = 1.0 / np.sqrt(fan_in)
    w = jax.random.uniform(kw, (fan_in, fan_out), jnp.float32, -bound, bound)
    b = jax.random.uniform(kb, (fan_out,), jnp.float32, -bound, bound)
    wp = (jnp.zeros((kp, npad), jnp.bfloat16)
          .at[:fan_in, :fan_out].set(w.astype(jnp.bfloat16)))
    bp = jnp.zeros((1, npad), jnp.float32).at[0, :fan_out].set(b)
    return wp, bp


def init_params(key):
    keys = jax.random.split(key, 7)
    conv1 = _init_linear_padded(keys[0], IN_DIM, HIDDEN, IN_PAD, HID_PAD)
    hw, hb = [], []
    for i in range(2, 7):
        w, b = _init_linear_padded(keys[i - 1], HIDDEN, HIDDEN, HID_PAD, HID_PAD)
        hw.append(w)
        hb.append(b)
    fc1 = _init_linear_padded(keys[6], HIDDEN, OUT_DIM, HID_PAD, OUT_PAD)
    return {
        "conv1": conv1,
        "hidden_w": jnp.stack(hw),      # (5, HID_PAD, HID_PAD) bf16
        "hidden_b": jnp.stack(hb),      # (5, 1, HID_PAD)       f32
        "fc1": fc1,
    }


# ----------------------------------------------------------------------------
# Net forward (jit, layer_number static).  Matches PyTorch semantics:
# self.layer_number = layer_number + 1; conv_i applied iff layer_number+1 > i-1.
# ----------------------------------------------------------------------------
@functools.partial(jax.jit, static_argnums=2)
def net_forward(params, x, layer_number):
    ln = layer_number + 1
    assert ln >= 1, "fc1 expects a 2000-dim input; ln == 0 is invalid in the original net"
    n_conv = min(ln, N_HIDDEN_LAYERS)          # number of hidden (ReLU) layers applied

    M = x.shape[0]
    tm = 256 if M >= 256 else _round_up(M, 8)  # adaptive M tile
    Mp = _round_up(M, tm)

    # Pad the network input once; activations stay padded bf16 between layers
    # (zero-padded K/N columns are exact for the matmuls; padded batch rows
    # carry relu(bias) garbage that is sliced off at the end).
    xp = jnp.zeros((Mp, IN_PAD), jnp.float32).at[:M, :IN_DIM].set(x)

    w1, b1 = params["conv1"]
    h = pallas_linear(xp, w1, b1, relu=True, out_dtype=jnp.bfloat16, tm=tm, tn=1024)

    n_fused = n_conv - 1                       # conv2 .. conv_{n_conv}
    if n_fused >= 1:
        h = pallas_hidden_stack(h, params["hidden_w"], params["hidden_b"],
                                n_fused, tm=tm, tn=1024)

    wf, bf = params["fc1"]
    out = pallas_linear(h, wf, bf, relu=False, out_dtype=jnp.float32, tm=tm, tn=128)
    return out[:M, :OUT_DIM]


def net_forward_ref(params, x, layer_number):
    """Plain-JAX f32 reference using the same (bf16-quantized) parameters."""
    ln = layer_number + 1
    M = x.shape[0]
    h = jnp.zeros((M, IN_PAD), jnp.float32).at[:, :IN_DIM].set(x)
    w1, b1 = params["conv1"]
    if ln > 0:
        h = jnp.maximum(h @ w1.astype(jnp.float32) + b1, 0.0)
    hw = params["hidden_w"].astype(jnp.float32)
    hb = params["hidden_b"]
    for i in range(5):
        if ln > i + 1:
            h = jnp.maximum(h @ hw[i] + hb[i], 0.0)
    wf, bf = params["fc1"]
    h = h @ wf.astype(jnp.float32) + bf
    return h[:, :OUT_DIM]


if __name__ == "__main__":
    key = jax.random.PRNGKey(0)
    kparam, kx = jax.random.split(key)

    params = init_params(kparam)

    batch = 8
    layer_number = 5   # self.layer_number = 6 -> all six hidden layers active
    x = jax.random.normal(kx, (batch, IN_DIM), jnp.float32)

    out = jax.block_until_ready(net_forward(params, x, layer_number))
    assert out.shape == (batch, OUT_DIM), out.shape

    ref = jax.block_until_ready(net_forward_ref(params, x, layer_number))
    # bf16 weights + bf16 inter-layer activations vs. the f32 reference.
    np.testing.assert_allclose(np.asarray(out), np.asarray(ref),
                               rtol=3e-2, atol=3e-2)

    print("KERNEL_OK")
</pallas_src>

<mosaic_0001>
module attributes {stable_mosaic.version = 11 : i64} {
  func.func @_linear_kernel(%arg0: i32, %arg1: i32, %arg2: memref<8x896xf32, #tpu.memory_space<vmem>>, %arg3: memref<896x1024xbf16, #tpu.memory_space<vmem>>, %arg4: memref<1x1024xf32, #tpu.memory_space<vmem>>, %arg5: memref<8x1024xbf16, #tpu.memory_space<vmem>>) attributes {dimension_semantics = [#tpu.dimension_semantics<parallel>, #tpu.dimension_semantics<parallel>], iteration_bounds = array<i64: 1, 2>, scalar_prefetch = 0 : i64, scratch_operands = 0 : i64, tpu.core_type = #tpu.core_type<tc>, window_params = [{transform_indices = @transform_0, window_bounds = array<i64: 8, 896>}, {transform_indices = @transform_1, window_bounds = array<i64: 896, 1024>}, {transform_indices = @transform_2, window_bounds = array<i64: 1, 1024>}, {transform_indices = @transform_3, window_bounds = array<i64: 8, 1024>}]} {
    %c0 = arith.constant 0 : index
    %c0_0 = arith.constant 0 : index
    %0 = vector.load %arg2[%c0, %c0_0] : memref<8x896xf32, #tpu.memory_space<vmem>>, vector<8x896xf32>
    %1 = arith.truncf %0 : vector<8x896xf32> to vector<8x896xbf16>
    %c0_1 = arith.constant 0 : index
    %c0_2 = arith.constant 0 : index
    %2 = vector.load %arg3[%c0_1, %c0_2] : memref<896x1024xbf16, #tpu.memory_space<vmem>>, vector<896x1024xbf16>
    %cst = arith.constant dense<0.000000e+00> : vector<8x1024xf32>
    %3 = tpu.matmul %1, %2, %cst {dimension_numbers = #tpu.dot_dimension_numbers<[1], [0], [0], [1], [0, 0, 1, 1], [], []>} : vector<8x896xbf16>, vector<896x1024xbf16>, vector<8x1024xf32> -> vector<8x1024xf32>
    %c0_3 = arith.constant 0 : index
    %c0_4 = arith.constant 0 : index
    %4 = vector.load %arg4[%c0_3, %c0_4] : memref<1x1024xf32, #tpu.memory_space<vmem>>, vector<1x1024xf32>
    %5 = vector.broadcast %4 : vector<1x1024xf32> to vector<8x1024xf32>
    %6 = arith.addf %3, %5 : vector<8x1024xf32>
    %cst_5 = arith.constant 0.000000e+00 : f32
    %7 = vector.broadcast %cst_5 : f32 to vector<8x1024xf32>
    %8 = arith.maximumf %6, %7 : vector<8x1024xf32>
    %9 = arith.truncf %8 : vector<8x1024xf32> to vector<8x1024xbf16>
    %c0_6 = arith.constant 0 : index
    %c0_7 = arith.constant 0 : index
    %10 = vector.load %arg5[%c0_6, %c0_7] : memref<8x1024xbf16, #tpu.memory_space<vmem>>, vector<8x1024xbf16>
    tpu.vector_store %arg5[%c0_6, %c0_7], %9 {strides = array<i32>} : memref<8x1024xbf16, #tpu.memory_space<vmem>>, vector<8x1024xbf16>,
    return
  }
  func.func @transform_0(%arg0: i32, %arg1: i32) -> (i32, i32) {
    %c0_i32 = arith.constant 0 : i32
    %c0_i32_0 = arith.constant 0 : i32
    return %arg0, %c0_i32 : i32, i32
  }
  func.func @transform_1(%arg0: i32, %arg1: i32) -> (i32, i32) {
    %c0_i32 = arith.constant 0 : i32
    %c0_i32_0 = arith.constant 0 : i32
    return %c0_i32, %arg1 : i32, i32
  }
  func.func @transform_2(%arg0: i32, %arg1: i32) -> (i32, i32) {
    %c0_i32 = arith.constant 0 : i32
    %c0_i32_0 = arith.constant 0 : i32
    return %c0_i32, %arg1 : i32, i32
  }
  func.func @transform_3(%arg0: i32, %arg1: i32) -> (i32, i32) {
    %c0_i32 = arith.constant 0 : i32
    return %arg0, %arg1 : i32, i32
  }
}

module attributes {stable_mosaic.version = 11 : i64} {
  func.func @_linear_kernel(%arg0: i32, %arg1: i32, %arg2: memref<8x2048xbf16, #tpu.memory_space<vmem>>, %arg3: memref<2048x128xbf16, #tpu.memory_space<vmem>>, %arg4: memref<1x128xf32, #tpu.memory_space<vmem>>, %arg5: memref<8x128xf32, #tpu.memory_space<vmem>>) attributes {dimension_semantics = [#tpu.dimension_semantics<parallel>, #tpu.dimension_semantics<parallel>], iteration_bounds = array<i64: 1, 1>, scalar_prefetch = 0 : i64, scratch_operands = 0 : i64, tpu.core_type = #tpu.core_type<tc>, window_params = [{transform_indices = @transform_0, window_bounds = array<i64: 8, 2048>}, {transform_indices = @transform_1, window_bounds = array<i64: 2048, 128>}, {transform_indices = @transform_2, window_bounds = array<i64: 1, 128>}, {transform_indices = @transform_3, window_bounds = array<i64: 8, 128>}]} {
    %c0 = arith.constant 0 : index
    %c0_0 = arith.constant 0 : index
    %0 = vector.load %arg2[%c0, %c0_0] : memref<8x2048xbf16, #tpu.memory_space<vmem>>, vector<8x2048xbf16>
    %c0_1 = arith.constant 0 : index
    %c0_2 = arith.constant 0 : index
    %1 = vector.load %arg3[%c0_1, %c0_2] : memref<2048x128xbf16, #tpu.memory_space<vmem>>, vector<2048x128xbf16>
    %cst = arith.constant dense<0.000000e+00> : vector<8x128xf32>
    %2 = tpu.matmul %0, %1, %cst {dimension_numbers = #tpu.dot_dimension_numbers<[1], [0], [0], [1], [0, 0, 1, 1], [], []>} : vector<8x2048xbf16>, vector<2048x128xbf16>, vector<8x128xf32> -> vector<8x128xf32>
    %c0_3 = arith.constant 0 : index
    %c0_4 = arith.constant 0 : index
    %3 = vector.load %arg4[%c0_3, %c0_4] : memref<1x128xf32, #tpu.memory_space<vmem>>, vector<1x128xf32>
    %4 = vector.broadcast %3 : vector<1x128xf32> to vector<8x128xf32>
    %5 = arith.addf %2, %4 : vector<8x128xf32>
    %c0_5 = arith.constant 0 : index
    %c0_6 = arith.constant 0 : index
    %6 = vector.load %arg5[%c0_5, %c0_6] : memref<8x128xf32, #tpu.memory_space<vmem>>, vector<8x128xf32>
    tpu.vector_store %arg5[%c0_5, %c0_6], %5 {strides = array<i32>} : memref<8x128xf32, #tpu.memory_space<vmem>>, vector<8x128xf32>,
    return
  }
  func.func @transform_0(%arg0: i32, %arg1: i32) -> (i32, i32) {
    %c0_i32 = arith.constant 0 : i32
    %c0_i32_0 = arith.constant 0 : i32
    return %arg0, %c0_i32 : i32, i32
  }
  func.func @transform_1(%arg0: i32, %arg1: i32) -> (i32, i32) {
    %c0_i32 = arith.constant 0 : i32
    %c0_i32_0 = arith.constant 0 : i32
    return %c0_i32, %arg1 : i32, i32
  }
  func.func @transform_2(%arg0: i32, %arg1: i32) -> (i32, i32) {
    %c0_i32 = arith.constant 0 : i32
    %c0_i32_0 = arith.constant 0 : i32
    return %c0_i32, %arg1 : i32, i32
  }
  func.func @transform_3(%arg0: i32, %arg1: i32) -> (i32, i32) {
    %c0_i32 = arith.constant 0 : i32
    return %arg0, %arg1 : i32, i32
  }
}

module attributes {stable_mosaic.version = 11 : i64} {
  func.func @_fused_hidden_kernel(%arg0: i32, %arg1: i32, %arg2: i32, %arg3: memref<8x2048xbf16, #tpu.memory_space<vmem>>, %arg4: memref<1x2048x1024xbf16, #tpu.memory_space<vmem>>, %arg5: memref<1x1x1024xf32, #tpu.memory_space<vmem>>, %arg6: memref<8x2048xbf16, #tpu.memory_space<vmem>>, %arg7: memref<2x8x2048xbf16, #tpu.memory_space<vmem>>) attributes {dimension_semantics = [#tpu.dimension_semantics<arbitrary>, #tpu.dimension_semantics<arbitrary>, #tpu.dimension_semantics<arbitrary>], iteration_bounds = array<i64: 1, 5, 2>, scalar_prefetch = 0 : i64, scratch_operands = 1 : i64, tpu.core_type = #tpu.core_type<tc>, window_params = [{transform_indices = @transform_0, window_bounds = array<i64: 8, 2048>}, {transform_indices = @transform_1, window_bounds = array<i64: 1, 2048, 1024>}, {transform_indices = @transform_2, window_bounds = array<i64: 1, 1, 1024>}, {transform_indices = @transform_3, window_bounds = array<i64: 8, 2048>}]} {
    %c0_i32 = arith.constant 0 : i32
    %0 = arith.cmpi eq, %arg1, %c0_i32 : i32
    %c0_i32_0 = arith.constant 0 : i32
    %1 = arith.cmpi eq, %arg2, %c0_i32_0 : i32
    %2 = arith.andi %0, %1 : i1
    %3 = arith.extui %2 : i1 to i32
    %c0_i32_1 = arith.constant 0 : i32
    %4 = arith.cmpi ne, %3, %c0_i32_1 : i32
    scf.if %4 {
      %c0_24 = arith.constant 0 : index
      %c0_25 = arith.constant 0 : index
      %45 = vector.load %arg3[%c0_24, %c0_25] : memref<8x2048xbf16, #tpu.memory_space<vmem>>, vector<8x2048xbf16>
      %c0_26 = arith.constant 0 : index
      %c0_27 = arith.constant 0 : index
      %c0_28 = arith.constant 0 : index
      %46 = vector.load %arg7[%c0_26, %c0_27, %c0_28] : memref<2x8x2048xbf16, #tpu.memory_space<vmem>>, vector<1x8x2048xbf16>
      %47 = vector.shape_cast %46 : vector<1x8x2048xbf16> to vector<8x2048xbf16>
      %48 = vector.shape_cast %45 : vector<8x2048xbf16> to vector<1x8x2048xbf16>
      tpu.vector_store %arg7[%c0_26, %c0_27, %c0_28], %48 {strides = array<i32>} : memref<2x8x2048xbf16, #tpu.memory_space<vmem>>, vector<1x8x2048xbf16>,
    } else {
    }
    %c2_i32 = arith.constant 2 : i32
    %c0_i32_2 = arith.constant 0 : i32
    %5 = arith.cmpi eq, %c2_i32, %c0_i32_2 : i32
    %c1_i32 = arith.constant 1 : i32
    %6 = arith.select %5, %c1_i32, %c2_i32 : i32
    %7 = arith.remsi %arg1, %6 : i32
    %c0_i32_3 = arith.constant 0 : i32
    %8 = arith.cmpi ne, %7, %c0_i32_3 : i32
    %c0_i32_4 = arith.constant 0 : i32
    %9 = arith.cmpi slt, %7, %c0_i32_4 : i32
    %c0_i32_5 = arith.constant 0 : i32
    %10 = arith.cmpi slt, %6, %c0_i32_5 : i32
    %11 = arith.xori %9, %10 : i1
    %12 = arith.andi %11, %8 : i1
    %13 = arith.addi %7, %6 : i32
    %14 = arith.select %12, %13, %7 : i32
    %c0_i32_6 = arith.constant 0 : i32
    %15 = arith.cmpi eq, %14, %c0_i32_6 : i32
    %c0 = arith.constant 0 : index
    %c0_7 = arith.constant 0 : index
    %c0_8 = arith.constant 0 : index
    %16 = vector.load %arg7[%c0, %c0_7, %c0_8] : memref<2x8x2048xbf16, #tpu.memory_space<vmem>>, vector<1x8x2048xbf16>
    %17 = vector.shape_cast %16 : vector<1x8x2048xbf16> to vector<8x2048xbf16>
    %c1 = arith.constant 1 : index
    %c0_9 = arith.constant 0 : index
    %c0_10 = arith.constant 0 : index
    %18 = vector.load %arg7[%c1, %c0_9, %c0_10] : memref<2x8x2048xbf16, #tpu.memory_space<vmem>>, vector<1x8x2048xbf16>
    %19 = vector.shape_cast %18 : vector<1x8x2048xbf16> to vector<8x2048xbf16>
    %20 = arith.select %15, %17, %19 : vector<8x2048xbf16>
    %c0_11 = arith.constant 0 : index
    %c0_12 = arith.constant 0 : index
    %c0_13 = arith.constant 0 : index
    %21 = vector.load %arg4[%c0_11, %c0_12, %c0_13] : memref<1x2048x1024xbf16, #tpu.memory_space<vmem>>, vector<1x2048x1024xbf16>
    %22 = vector.shape_cast %21 : vector<1x2048x1024xbf16> to vector<2048x1024xbf16>
    %cst = arith.constant dense<0.000000e+00> : vector<8x1024xf32>
    %23 = tpu.matmul %20, %22, %cst {dimension_numbers = #tpu.dot_dimension_numbers<[1], [0], [0], [1], [0, 0, 1, 1], [], []>} : vector<8x2048xbf16>, vector<2048x1024xbf16>, vector<8x1024xf32> -> vector<8x1024xf32>
    %c0_14 = arith.constant 0 : index
    %c0_15 = arith.constant 0 : index
    %c0_16 = arith.constant 0 : index
    %24 = vector.load %arg5[%c0_14, %c0_15, %c0_16] : memref<1x1x1024xf32, #tpu.memory_space<vmem>>, vector<1x1x1024xf32>
    %25 = vector.shape_cast %24 : vector<1x1x1024xf32> to vector<1x1024xf32>
    %26 = vector.broadcast %25 : vector<1x1024xf32> to vector<8x1024xf32>
    %27 = arith.addf %23, %26 : vector<8x1024xf32>
    %cst_17 = arith.constant 0.000000e+00 : f32
    %28 = vector.broadcast %cst_17 : f32 to vector<8x1024xf32>
    %29 = arith.maximumf %27, %28 : vector<8x1024xf32>
    %30 = arith.truncf %29 : vector<8x1024xf32> to vector<8x1024xbf16>
    %c1024_i32 = arith.constant 1024 : i32
    %31 = arith.muli %arg2, %c1024_i32 : i32
    %32 = tpu.assume_multiple %31, 1024 : i32
    %c4_i32 = arith.constant 4 : i32
    %33 = arith.cmpi slt, %arg1, %c4_i32 : i32
    %c0_i32_18 = arith.constant 0 : i32
    %34 = arith.cmpi eq, %14, %c0_i32_18 : i32
    %35 = arith.andi %33, %34 : i1
    %36 = arith.extui %35 : i1 to i32
    %c0_i32_19 = arith.constant 0 : i32
    %37 = arith.cmpi ne, %36, %c0_i32_19 : i32
    scf.if %37 {
      %c1_24 = arith.constant 1 : index
      %c0_25 = arith.constant 0 : index
      %45 = arith.index_cast %32 : i32 to index
      %46 = vector.load %arg7[%c1_24, %c0_25, %45] : memref<2x8x2048xbf16, #tpu.memory_space<vmem>>, vector<1x8x1024xbf16>
      %47 = vector.shape_cast %46 : vector<1x8x1024xbf16> to vector<8x1024xbf16>
      %48 = vector.shape_cast %30 : vector<8x1024xbf16> to vector<1x8x1024xbf16>
      tpu.vector_store %arg7[%c1_24, %c0_25, %45], %48 {strides = array<i32>} : memref<2x8x2048xbf16, #tpu.memory_space<vmem>>, vector<1x8x1024xbf16>,
    } else {
    }
    %c1_i32_20 = arith.constant 1 : i32
    %38 = arith.cmpi eq, %14, %c1_i32_20 : i32
    %39 = arith.andi %33, %38 : i1
    %40 = arith.extui %39 : i1 to i32
    %c0_i32_21 = arith.constant 0 : i32
    %41 = arith.cmpi ne, %40, %c0_i32_21 : i32
    scf.if %41 {
      %c0_24 = arith.constant 0 : index
      %c0_25 = arith.constant 0 : index
      %45 = arith.index_cast %32 : i32 to index
      %46 = vector.load %arg7[%c0_24, %c0_25, %45] : memref<2x8x2048xbf16, #tpu.memory_space<vmem>>, vector<1x8x1024xbf16>
      %47 = vector.shape_cast %46 : vector<1x8x1024xbf16> to vector<8x1024xbf16>
      %48 = vector.shape_cast %30 : vector<8x1024xbf16> to vector<1x8x1024xbf16>
      tpu.vector_store %arg7[%c0_24, %c0_25, %45], %48 {strides = array<i32>} : memref<2x8x2048xbf16, #tpu.memory_space<vmem>>, vector<1x8x1024xbf16>,
    } else {
    }
    %c4_i32_22 = arith.constant 4 : i32
    %42 = arith.cmpi eq, %arg1, %c4_i32_22 : i32
    %43 = arith.extui %42 : i1 to i32
    %c0_i32_23 = arith.constant 0 : i32
    %44 = arith.cmpi ne, %43, %c0_i32_23 : i32
    scf.if %44 {
      %c0_24 = arith.constant 0 : index
      %45 = arith.index_cast %32 : i32 to index
      %46 = vector.load %arg6[%c0_24, %45] : memref<8x2048xbf16, #tpu.memory_space<vmem>>, vector<8x1024xbf16>
      tpu.vector_store %arg6[%c0_24, %45], %30 {strides = array<i32>} : memref<8x2048xbf16, #tpu.memory_space<vmem>>, vector<8x1024xbf16>,
    } else {
    }
    return
  }
  func.func @transform_0(%arg0: i32, %arg1: i32, %arg2: i32) -> (i32, i32) {
    %c0_i32 = arith.constant 0 : i32
    %c0_i32_0 = arith.constant 0 : i32
    return %arg0, %c0_i32 : i32, i32
  }
  func.func @transform_1(%arg0: i32, %arg1: i32, %arg2: i32) -> (i32, i32, i32) {
    %c0_i32 = arith.constant 0 : i32
    %c0_i32_0 = arith.constant 0 : i32
    return %arg1, %c0_i32, %arg2 : i32, i32, i32
  }
  func.func @transform_2(%arg0: i32, %arg1: i32, %arg2: i32) -> (i32, i32, i32) {
    %c0_i32 = arith.constant 0 : i32
    %c0_i32_0 = arith.constant 0 : i32
    return %arg1, %c0_i32, %arg2 : i32, i32, i32
  }
  func.func @transform_3(%arg0: i32, %arg1: i32, %arg2: i32) -> (i32, i32) {
    %c0_i32 = arith.constant 0 : i32
    %c0_i32_0 = arith.constant 0 : i32
    return %arg0, %c0_i32 : i32, i32
  }
}

</mosaic_0001>

<llo_original>
// kernel: net_forward.5
$region0: #{net_forward.5}
  #allocation0 [shape = 'u32[]', space=smem, size = 0x4, offset = 0x4, fixed_abs, tag = 'smem constant byte address 0x4 - core index']
  #allocation1 [shape = 'u32[144,128]{1,0:T(1,128)}', space=vmem, size = 0x12000, scoped, tag = 'internal scratch']
  %s0 = inlined_call_operand.vmem [shape: bf16[8,2048], index: 0, kind: input, shape index: {}]
  %s1 = inlined_call_operand.vmem [shape: bf16[2048,128], index: 1, kind: input, shape index: {}]
  %s2 = inlined_call_operand.vmem [shape: f32[1,128], index: 2, kind: input, shape index: {}]
  %s3 = inlined_call_operand.hbm [shape: f32[8,128], index: 3, kind: output, shape index: {}]
  %s4 = sld [smem:[#allocation0]]
  $region22: #{net_forward.5} parent=0
    _
  %s6 = ssub.s32 1, %s4
  %s7 = scalar_select 0, %s6, %s4
  $region1: #{net_forward.5} parent=0
    #allocation2 [shape = 'u8[4096]{0}', space=vmem, size = 0x1000, scoped, tag = 'output window, operand 0, single buffered']
    #allocation3 [shape = 's32[1]{0}', space=sflag, size = 0x4, scoped, tag = 'scoped memory for net_forward.5']
    %8 = vsyncpa [#allocation3], 0
    // Predicated region
    $region2: #{net_forward.5} parent=1 // pred_check
      _
    $region3: #{net_forward.5} parent=1 // pred_check_branch
      %10 = sbr.rel (0) target = $region5
    $region4: #{net_forward.5} parent=1 // pred_region
      _
    $region5: #{net_forward.5} parent=1 // pred_fallthru
      _
    // Predicated region
    $region6: #{net_forward.5} parent=1 // pred_check
      _
    $region7: #{net_forward.5} parent=1 // pred_check_branch
      %12 = sbr.rel (0) target = $region9
    $region8: #{net_forward.5} parent=1 // pred_region
      _
    $region9: #{net_forward.5} parent=1 // pred_fallthru
      _
    // Predicated region
    $region10: #{net_forward.5} parent=1 // pred_check
      _
    $region11: #{net_forward.5} parent=1 // pred_check_branch
      %14 = sbr.rel (0) target = $region13
    $region12: #{net_forward.5} parent=1 // pred_region
      _
    $region13: #{net_forward.5} parent=1 // pred_fallthru
      _
    %v16 = vld [vmem:[%s0] sm:$0xff]
    %v17 = vld [vmem:[%s0 + $0x8] sm:$0xff]
    %v18 = vld [vmem:[%s0 + $0x10] sm:$0xff]
    %v19 = vld [vmem:[%s0 + $0x18] sm:$0xff]
    %v20 = vld [vmem:[%s0 + $0x20] sm:$0xff]
    %v21 = vld [vmem:[%s0 + $0x28] sm:$0xff]
    %v22 = vld [vmem:[%s0 + $0x30] sm:$0xff]
    %v23 = vld [vmem:[%s0 + $0x38] sm:$0xff]
    %v24 = vld [vmem:[%s1] sm:$0xf]
    %v25 = vld [vmem:[%s1 + $0x4] sm:$0xf]
    %v26 = vld [vmem:[%s1 + $0x8] sm:$0xf]
    %v27 = vld [vmem:[%s1 + $0xc] sm:$0xf]
    %v28 = vld [vmem:[%s1 + $0x10] sm:$0xf]
    %v29 = vld [vmem:[%s1 + $0x14] sm:$0xf]
    %v30 = vld [vmem:[%s1 + $0x18] sm:$0xf]
    %v31 = vld [vmem:[%s1 + $0x1c] sm:$0xf]
    %v32 = vld [vmem:[%s1 + $0x20] sm:$0xf]
    %v33 = vld [vmem:[%s1 + $0x24] sm:$0xf]
    %v34 = vld [vmem:[%s1 + $0x28] sm:$0xf]
    %v35 = vld [vmem:[%s1 + $0x2c] sm:$0xf]
    %v36 = vld [vmem:[%s1 + $0x30] sm:$0xf]
    %v37 = vld [vmem:[%s1 + $0x34] sm:$0xf]
    %v38 = vld [vmem:[%s1 + $0x38] sm:$0xf]
    %v39 = vld [vmem:[%s1 + $0x3c] sm:$0xf]
    %v40 = vld [vmem:[%s1 + $0x40] sm:$0xf]
    %v41 = vld [vmem:[%s1 + $0x44] sm:$0xf]
    %v42 = vld [vmem:[%s1 + $0x48] sm:$0xf]
    %v43 = vld [vmem:[%s1 + $0x4c] sm:$0xf]
    %v44 = vld [vmem:[%s1 + $0x50] sm:$0xf]
    %v45 = vld [vmem:[%s1 + $0x54] sm:$0xf]
    %v46 = vld [vmem:[%s1 + $0x58] sm:$0xf]
    %v47 = vld [vmem:[%s1 + $0x5c] sm:$0xf]
    %v48 = vld [vmem:[%s1 + $0x60] sm:$0xf]
    %v49 = vld [vmem:[%s1 + $0x64] sm:$0xf]
    %v50 = vld [vmem:[%s1 + $0x68] sm:$0xf]
    %v51 = vld [vmem:[%s1 + $0x6c] sm:$0xf]
    %v52 = vld [vmem:[%s1 + $0x70] sm:$0xf]
    %v53 = vld [vmem:[%s1 + $0x74] sm:$0xf]
    %v54 = vld [vmem:[%s1 + $0x78] sm:$0xf]
    %v55 = vld [vmem:[%s1 + $0x7c] sm:$0xf]
    %v56 = vld [vmem:[%s1 + $0x80] sm:$0xf]
    %v57 = vld [vmem:[%s1 + $0x84] sm:$0xf]
    %v58 = vld [vmem:[%s1 + $0x88] sm:$0xf]
    %v59 = vld [vmem:[%s1 + $0x8c] sm:$0xf]
    %v60 = vld [vmem:[%s1 + $0x90] sm:$0xf]
    %v61 = vld [vmem:[%s1 + $0x94] sm:$0xf]
    %v62 = vld [vmem:[%s1 + $0x98] sm:$0xf]
    %v63 = vld [vmem:[%s1 + $0x9c] sm:$0xf]
    %v64 = vld [vmem:[%s1 + $0xa0] sm:$0xf]
    %v65 = vld [vmem:[%s1 + $0xa4] sm:$0xf]
    %v66 = vld [vmem:[%s1 + $0xa8] sm:$0xf]
    %v67 = vld [vmem:[%s1 + $0xac] sm:$0xf]
    %v68 = vld [vmem:[%s1 + $0xb0] sm:$0xf]
    %v69 = vld [vmem:[%s1 + $0xb4] sm:$0xf]
    %v70 = vld [vmem:[%s1 + $0xb8] sm:$0xf]
    %v71 = vld [vmem:[%s1 + $0xbc] sm:$0xf]
    %v72 = vld [vmem:[%s1 + $0xc0] sm:$0xf]
    %v73 = vld [vmem:[%s1 + $0xc4] sm:$0xf]
    %v74 = vld [vmem:[%s1 + $0xc8] sm:$0xf]
    %v75 = vld [vmem:[%s1 + $0xcc] sm:$0xf]
    %v76 = vld [vmem:[%s1 + $0xd0] sm:$0xf]
    %v77 = vld [vmem:[%s1 + $0xd4] sm:$0xf]
    %v78 = vld [vmem:[%s1 + $0xd8] sm:$0xf]
    %v79 = vld [vmem:[%s1 + $0xdc] sm:$0xf]
    %v80 = vld [vmem:[%s1 + $0xe0] sm:$0xf]
    %v81 = vld [vmem:[%s1 + $0xe4] sm:$0xf]
    %v82 = vld [vmem:[%s1 + $0xe8] sm:$0xf]
    %v83 = vld [vmem:[%s1 + $0xec] sm:$0xf]
    %v84 = vld [vmem:[%s1 + $0xf0] sm:$0xf]
    %v85 = vld [vmem:[%s1 + $0xf4] sm:$0xf]
    %v86 = vld [vmem:[%s1 + $0xf8] sm:$0xf]
    %v87 = vld [vmem:[%s1 + $0xfc] sm:$0xf]
    %v88 = vld [vmem:[%s1 + $0x100] sm:$0xf]
    %v89 = vld [vmem:[%s1 + $0x104] sm:$0xf]
    %v90 = vld [vmem:[%s1 + $0x108] sm:$0xf]
    %v91 = vld [vmem:[%s1 + $0x10c] sm:$0xf]
    %v92 = vld [vmem:[%s1 + $0x110] sm:$0xf]
    %v93 = vld [vmem:[%s1 + $0x114] sm:$0xf]
    %v94 = vld [vmem:[%s1 + $0x118] sm:$0xf]
    %v95 = vld [vmem:[%s1 + $0x11c] sm:$0xf]
    %v96 = vld [vmem:[%s1 + $0x120] sm:$0xf]
    %v97 = vld [vmem:[%s1 + $0x124] sm:$0xf]
    %v98 = vld [vmem:[%s1 + $0x128] sm:$0xf]
    %v99 = vld [vmem:[%s1 + $0x12c] sm:$0xf]
    %v100 = vld [vmem:[%s1 + $0x130] sm:$0xf]
    %v101 = vld [vmem:[%s1 + $0x134] sm:$0xf]
    %v102 = vld [vmem:[%s1 + $0x138] sm:$0xf]
    %v103 = vld [vmem:[%s1 + $0x13c] sm:$0xf]
    %v104 = vld [vmem:[%s1 + $0x140] sm:$0xf]
    %v105 = vld [vmem:[%s1 + $0x144] sm:$0xf]
    %v106 = vld [vmem:[%s1 + $0x148] sm:$0xf]
    %v107 = vld [vmem:[%s1 + $0x14c] sm:$0xf]
    %v108 = vld [vmem:[%s1 + $0x150] sm:$0xf]
    %v109 = vld [vmem:[%s1 + $0x154] sm:$0xf]
    %v110 = vld [vmem:[%s1 + $0x158] sm:$0xf]
    %v111 = vld [vmem:[%s1 + $0x15c] sm:$0xf]
    %v112 = vld [vmem:[%s1 + $0x160] sm:$0xf]
    %v113 = vld [vmem:[%s1 + $0x164] sm:$0xf]
    %v114 = vld [vmem:[%s1 + $0x168] sm:$0xf]
    %v115 = vld [vmem:[%s1 + $0x16c] sm:$0xf]
    %v116 = vld [vmem:[%s1 + $0x170] sm:$0xf]
    %v117 = vld [vmem:[%s1 + $0x174] sm:$0xf]
    %v118 = vld [vmem:[%s1 + $0x178] sm:$0xf]
    %v119 = vld [vmem:[%s1 + $0x17c] sm:$0xf]
    %v120 = vld [vmem:[%s1 + $0x180] sm:$0xf]
    %v121 = vld [vmem:[%s1 + $0x184] sm:$0xf]
    %v122 = vld [vmem:[%s1 + $0x188] sm:$0xf]
    %v123 = vld [vmem:[%s1 + $0x18c] sm:$0xf]
    %v124 = vld [vmem:[%s1 + $0x190] sm:$0xf]
    %v125 = vld [vmem:[%s1 + $0x194] sm:$0xf]
    %v126 = vld [vmem:[%s1 + $0x198] sm:$0xf]
    %v127 = vld [vmem:[%s1 + $0x19c] sm:$0xf]
    %v128 = vld [vmem:[%s1 + $0x1a0] sm:$0xf]
    %v129 = vld [vmem:[%s1 + $0x1a4] sm:$0xf]
    %v130 = vld [vmem:[%s1 + $0x1a8] sm:$0xf]
    %v131 = vld [vmem:[%s1 + $0x1ac] sm:$0xf]
    %v132 = vld [vmem:[%s1 + $0x1b0] sm:$0xf]
    %v133 = vld [vmem:[%s1 + $0x1b4] sm:$0xf]
    %v134 = vld [vmem:[%s1 + $0x1b8] sm:$0xf]
    %v135 = vld [vmem:[%s1 + $0x1bc] sm:$0xf]
    %v136 = vld [vmem:[%s1 + $0x1c0] sm:$0xf]
    %v137 = vld [vmem:[%s1 + $0x1c4] sm:$0xf]
    %v138 = vld [vmem:[%s1 + $0x1c8] sm:$0xf]
    %v139 = vld [vmem:[%s1 + $0x1cc] sm:$0xf]
    %v140 = vld [vmem:[%s1 + $0x1d0] sm:$0xf]
    %v141 = vld [vmem:[%s1 + $0x1d4] sm:$0xf]
    %v142 = vld [vmem:[%s1 + $0x1d8] sm:$0xf]
    %v143 = vld [vmem:[%s1 + $0x1dc] sm:$0xf]
    %v144 = vld [vmem:[%s1 + $0x1e0] sm:$0xf]
    %v145 = vld [vmem:[%s1 + $0x1e4] sm:$0xf]
    %v146 = vld [vmem:[%s1 + $0x1e8] sm:$0xf]
    %v147 = vld [vmem:[%s1 + $0x1ec] sm:$0xf]
    %v148 = vld [vmem:[%s1 + $0x1f0] sm:$0xf]
    %v149 = vld [vmem:[%s1 + $0x1f4] sm:$0xf]
    %v150 = vld [vmem:[%s1 + $0x1f8] sm:$0xf]
    %v151 = vld [vmem:[%s1 + $0x1fc] sm:$0xf]
    %v152 = vld [vmem:[%s1 + $0x200] sm:$0xf]
    %v153 = vld [vmem:[%s1 + $0x204] sm:$0xf]
    %v154 = vld [vmem:[%s1 + $0x208] sm:$0xf]
    %v155 = vld [vmem:[%s1 + $0x20c] sm:$0xf]
    %v156 = vld [vmem:[%s1 + $0x210] sm:$0xf]
    %v157 = vld [vmem:[%s1 + $0x214] sm:$0xf]
    %v158 = vld [vmem:[%s1 + $0x218] sm:$0xf]
    %v159 = vld [vmem:[%s1 + $0x21c] sm:$0xf]
    %v160 = vld [vmem:[%s1 + $0x220] sm:$0xf]
    %v161 = vld [vmem:[%s1 + $0x224] sm:$0xf]
    %v162 = vld [vmem:[%s1 + $0x228] sm:$0xf]
    %v163 = vld [vmem:[%s1 + $0x22c] sm:$0xf]
    %v164 = vld [vmem:[%s1 + $0x230] sm:$0xf]
    %v165 = vld [vmem:[%s1 + $0x234] sm:$0xf]
    %v166 = vld [vmem:[%s1 + $0x238] sm:$0xf]
    %v167 = vld [vmem:[%s1 + $0x23c] sm:$0xf]
    %v168 = vld [vmem:[%s1 + $0x240] sm:$0xf]
    %v169 = vld [vmem:[%s1 + $0x244] sm:$0xf]
    %v170 = vld [vmem:[%s1 + $0x248] sm:$0xf]
    %v171 = vld [vmem:[%s1 + $0x24c] sm:$0xf]
    %v172 = vld [vmem:[%s1 + $0x250] sm:$0xf]
    %v173 = vld [vmem:[%s1 + $0x254] sm:$0xf]
    %v174 = vld [vmem:[%s1 + $0x258] sm:$0xf]
    %v175 = vld [vmem:[%s1 + $0x25c] sm:$0xf]
    %v176 = vld [vmem:[%s1 + $0x260] sm:$0xf]
    %v177 = vld [vmem:[%s1 + $0x264] sm:$0xf]
    %v178 = vld [vmem:[%s1 + $0x268] sm:$0xf]
    %v179 = vld [vmem:[%s1 + $0x26c] sm:$0xf]
    %v180 = vld [vmem:[%s1 + $0x270] sm:$0xf]
    %v181 = vld [vmem:[%s1 + $0x274] sm:$0xf]
    %v182 = vld [vmem:[%s1 + $0x278] sm:$0xf]
    %v183 = vld [vmem:[%s1 + $0x27c] sm:$0xf]
    %v184 = vld [vmem:[%s1 + $0x280] sm:$0xf]
    %v185 = vld [vmem:[%s1 + $0x284] sm:$0xf]
    %v186 = vld [vmem:[%s1 + $0x288] sm:$0xf]
    %v187 = vld [vmem:[%s1 + $0x28c] sm:$0xf]
    %v188 = vld [vmem:[%s1 + $0x290] sm:$0xf]
    %v189 = vld [vmem:[%s1 + $0x294] sm:$0xf]
    %v190 = vld [vmem:[%s1 + $0x298] sm:$0xf]
    %v191 = vld [vmem:[%s1 + $0x29c] sm:$0xf]
    %v192 = vld [vmem:[%s1 + $0x2a0] sm:$0xf]
    %v193 = vld [vmem:[%s1 + $0x2a4] sm:$0xf]
    %v194 = vld [vmem:[%s1 + $0x2a8] sm:$0xf]
    %v195 = vld [vmem:[%s1 + $0x2ac] sm:$0xf]
    %v196 = vld [vmem:[%s1 + $0x2b0] sm:$0xf]
    %v197 = vld [vmem:[%s1 + $0x2b4] sm:$0xf]
    %v198 = vld [vmem:[%s1 + $0x2b8] sm:$0xf]
    %v199 = vld [vmem:[%s1 + $0x2bc] sm:$0xf]
    %v200 = vld [vmem:[%s1 + $0x2c0] sm:$0xf]
    %v201 = vld [vmem:[%s1 + $0x2c4] sm:$0xf]
    %v202 = vld [vmem:[%s1 + $0x2c8] sm:$0xf]
    %v203 = vld [vmem:[%s1 + $0x2cc] sm:$0xf]
    %v204 = vld [vmem:[%s1 + $0x2d0] sm:$0xf]
    %v205 = vld [vmem:[%s1 + $0x2d4] sm:$0xf]
    %v206 = vld [vmem:[%s1 + $0x2d8] sm:$0xf]
    %v207 = vld [vmem:[%s1 + $0x2dc] sm:$0xf]
    %v208 = vld [vmem:[%s1 + $0x2e0] sm:$0xf]
    %v209 = vld [vmem:[%s1 + $0x2e4] sm:$0xf]
    %v210 = vld [vmem:[%s1 + $0x2e8] sm:$0xf]
    %v211 = vld [vmem:[%s1 + $0x2ec] sm:$0xf]
    %v212 = vld [vmem:[%s1 + $0x2f0] sm:$0xf]
    %v213 = vld [vmem:[%s1 + $0x2f4] sm:$0xf]
    %v214 = vld [vmem:[%s1 + $0x2f8] sm:$0xf]
    %v215 = vld [vmem:[%s1 + $0x2fc] sm:$0xf]
    %v216 = vld [vmem:[%s1 + $0x300] sm:$0xf]
    %v217 = vld [vmem:[%s1 + $0x304] sm:$0xf]
    %v218 = vld [vmem:[%s1 + $0x308] sm:$0xf]
    %v219 = vld [vmem:[%s1 + $0x30c] sm:$0xf]
    %v220 = vld [vmem:[%s1 + $0x310] sm:$0xf]
    %v221 = vld [vmem:[%s1 + $0x314] sm:$0xf]
    %v222 = vld [vmem:[%s1 + $0x318] sm:$0xf]
    %v223 = vld [vmem:[%s1 + $0x31c] sm:$0xf]
    %v224 = vld [vmem:[%s1 + $0x320] sm:$0xf]
    %v225 = vld [vmem:[%s1 + $0x324] sm:$0xf]
    %v226 = vld [vmem:[%s1 + $0x328] sm:$0xf]
    %v227 = vld [vmem:[%s1 + $0x32c] sm:$0xf]
    %v228 = vld [vmem:[%s1 + $0x330] sm:$0xf]
    %v229 = vld [vmem:[%s1 + $0x334] sm:$0xf]
    %v230 = vld [vmem:[%s1 + $0x338] sm:$0xf]
    %v231 = vld [vmem:[%s1 + $0x33c] sm:$0xf]
    %v232 = vld [vmem:[%s1 + $0x340] sm:$0xf]
    %v233 = vld [vmem:[%s1 + $0x344] sm:$0xf]
    %v234 = vld [vmem:[%s1 + $0x348] sm:$0xf]
    %v235 = vld [vmem:[%s1 + $0x34c] sm:$0xf]
    %v236 = vld [vmem:[%s1 + $0x350] sm:$0xf]
    %v237 = vld [vmem:[%s1 + $0x354] sm:$0xf]
    %v238 = vld [vmem:[%s1 + $0x358] sm:$0xf]
    %v239 = vld [vmem:[%s1 + $0x35c] sm:$0xf]
    %v240 = vld [vmem:[%s1 + $0x360] sm:$0xf]
    %v241 = vld [vmem:[%s1 + $0x364] sm:$0xf]
    %v242 = vld [vmem:[%s1 + $0x368] sm:$0xf]
    %v243 = vld [vmem:[%s1 + $0x36c] sm:$0xf]
    %v244 = vld [vmem:[%s1 + $0x370] sm:$0xf]
    %v245 = vld [vmem:[%s1 + $0x374] sm:$0xf]
    %v246 = vld [vmem:[%s1 + $0x378] sm:$0xf]
    %v247 = vld [vmem:[%s1 + $0x37c] sm:$0xf]
    %v248 = vld [vmem:[%s1 + $0x380] sm:$0xf]
    %v249 = vld [vmem:[%s1 + $0x384] sm:$0xf]
    %v250 = vld [vmem:[%s1 + $0x388] sm:$0xf]
    %v251 = vld [vmem:[%s1 + $0x38c] sm:$0xf]
    %v252 = vld [vmem:[%s1 + $0x390] sm:$0xf]
    %v253 = vld [vmem:[%s1 + $0x394] sm:$0xf]
    %v254 = vld [vmem:[%s1 + $0x398] sm:$0xf]
    %v255 = vld [vmem:[%s1 + $0x39c] sm:$0xf]
    %v256 = vld [vmem:[%s1 + $0x3a0] sm:$0xf]
    %v257 = vld [vmem:[%s1 + $0x3a4] sm:$0xf]
    %v258 = vld [vmem:[%s1 + $0x3a8] sm:$0xf]
    %v259 = vld [vmem:[%s1 + $0x3ac] sm:$0xf]
    %v260 = vld [vmem:[%s1 + $0x3b0] sm:$0xf]
    %v261 = vld [vmem:[%s1 + $0x3b4] sm:$0xf]
    %v262 = vld [vmem:[%s1 + $0x3b8] sm:$0xf]
    %v263 = vld [vmem:[%s1 + $0x3bc] sm:$0xf]
    %v264 = vld [vmem:[%s1 + $0x3c0] sm:$0xf]
    %v265 = vld [vmem:[%s1 + $0x3c4] sm:$0xf]
    %v266 = vld [vmem:[%s1 + $0x3c8] sm:$0xf]
    %v267 = vld [vmem:[%s1 + $0x3cc] sm:$0xf]
    %v268 = vld [vmem:[%s1 + $0x3d0] sm:$0xf]
    %v269 = vld [vmem:[%s1 + $0x3d4] sm:$0xf]
    %v270 = vld [vmem:[%s1 + $0x3d8] sm:$0xf]
    %v271 = vld [vmem:[%s1 + $0x3dc] sm:$0xf]
    %v272 = vld [vmem:[%s1 + $0x3e0] sm:$0xf]
    %v273 = vld [vmem:[%s1 + $0x3e4] sm:$0xf]
    %v274 = vld [vmem:[%s1 + $0x3e8] sm:$0xf]
    %v275 = vld [vmem:[%s1 + $0x3ec] sm:$0xf]
    %v276 = vld [vmem:[%s1 + $0x3f0] sm:$0xf]
    %v277 = vld [vmem:[%s1 + $0x3f4] sm:$0xf]
    %v278 = vld [vmem:[%s1 + $0x3f8] sm:$0xf]
    %v279 = vld [vmem:[%s1 + $0x3fc] sm:$0xf]
    %v280 = vld [vmem:[%s2] sm:$0x1]
    %v282 = vlaneseq
    %v283 = vshrl.u32 %v282, 7
    %v284 = vsub.s32 0, %v283
    %v285 = vrot.slane %v280, %v284
    %v295 = vunpack.c.l.b16 %v16
    %v296 = vunpack.c.h.b16 %v16
    %v297 = vunpack.c.l.b16 %v17
    %v298 = vunpack.c.h.b16 %v17
    %v299 = vunpack.c.l.b16 %v18
    %v300 = vunpack.c.h.b16 %v18
    %v301 = vunpack.c.l.b16 %v19
    %v302 = vunpack.c.h.b16 %v19
    %v303 = vunpack.c.l.b16 %v20
    %v304 = vunpack.c.h.b16 %v20
    %v305 = vunpack.c.l.b16 %v21
    %v306 = vunpack.c.h.b16 %v21
    %v307 = vunpack.c.l.b16 %v22
    %v308 = vunpack.c.h.b16 %v22
    %v309 = vunpack.c.l.b16 %v23
    %v310 = vunpack.c.h.b16 %v23
    %v311 = vpack.c.b16 %v295, %v295
    %v312 = vpack.c.b16 %v296, %v296
    %v313 = vpack.c.b16 %v297, %v297
    %v314 = vpack.c.b16 %v298, %v298
    %v315 = vpack.c.b16 %v299, %v299
    %v316 = vpack.c.b16 %v300, %v300
    %v317 = vpack.c.b16 %v301, %v301
    %v318 = vpack.c.b16 %v302, %v302
    %v319 = vpack.c.b16 %v303, %v303
    %v320 = vpack.c.b16 %v304, %v304
    %v321 = vpack.c.b16 %v305, %v305
    %v322 = vpack.c.b16 %v306, %v306
    %v323 = vpack.c.b16 %v307, %v307
    %v324 = vpack.c.b16 %v308, %v308
    %v325 = vpack.c.b16 %v309, %v309
    %v326 = vpack.c.b16 %v310, %v310
    %v599 = vunpack.c.l.b16 %v24
    %v600 = vunpack.c.l.b16 %v25
    %v601 = vunpack.c.l.b16 %v26
    %v602 = vunpack.c.l.b16 %v27
    %v603 = vunpack.c.l.b16 %v28
    %v604 = vunpack.c.l.b16 %v29
    %v605 = vunpack.c.l.b16 %v30
    %v606 = vunpack.c.l.b16 %v31
    %v607 = vunpack.c.l.b16 %v32
    %v608 = vunpack.c.l.b16 %v33
    %v609 = vunpack.c.l.b16 %v34
    %v610 = vunpack.c.l.b16 %v35
    %v611 = vunpack.c.l.b16 %v36
    %v612 = vunpack.c.l.b16 %v37
    %v613 = vunpack.c.l.b16 %v38
    %v614 = vunpack.c.l.b16 %v39
    %v615 = vunpack.c.l.b16 %v40
    %v616 = vunpack.c.l.b16 %v41
    %v617 = vunpack.c.l.b16 %v42
    %v618 = vunpack.c.l.b16 %v43
    %v619 = vunpack.c.l.b16 %v44
    %v620 = vunpack.c.l.b16 %v45
    %v621 = vunpack.c.l.b16 %v46
    %v622 = vunpack.c.l.b16 %v47
    %v623 = vunpack.c.l.b16 %v48
    %v624 = vunpack.c.l.b16 %v49
    %v625 = vunpack.c.l.b16 %v50
    %v626 = vunpack.c.l.b16 %v51
    %v627 = vunpack.c.l.b16 %v52
    %v628 = vunpack.c.l.b16 %v53
    %v629 = vunpack.c.l.b16 %v54
    %v630 = vunpack.c.l.b16 %v55
    %v631 = vunpack.c.l.b16 %v56
    %v632 = vunpack.c.l.b16 %v57
    %v633 = vunpack.c.l.b16 %v58
    %v634 = vunpack.c.l.b16 %v59
    %v635 = vunpack.c.l.b16 %v60
    %v636 = vunpack.c.l.b16 %v61
    %v637 = vunpack.c.l.b16 %v62
    %v638 = vunpack.c.l.b16 %v63
    %v639 = vunpack.c.l.b16 %v64
    %v640 = vunpack.c.l.b16 %v65
    %v641 = vunpack.c.l.b16 %v66
    %v642 = vunpack.c.l.b16 %v67
    %v643 = vunpack.c.l.b16 %v68
    %v644 = vunpack.c.l.b16 %v69
    %v645 = vunpack.c.l.b16 %v70
    %v646 = vunpack.c.l.b16 %v71
    %v647 = vunpack.c.l.b16 %v72
    %v648 = vunpack.c.l.b16 %v73
    %v649 = vunpack.c.l.b16 %v74
    %v650 = vunpack.c.l.b16 %v75
    %v651 = vunpack.c.l.b16 %v76
    %v652 = vunpack.c.l.b16 %v77
    %v653 = vunpack.c.l.b16 %v78
    %v654 = vunpack.c.l.b16 %v79
    %v655 = vunpack.c.l.b16 %v80
    %v656 = vunpack.c.l.b16 %v81
    %v657 = vunpack.c.l.b16 %v82
    %v658 = vunpack.c.l.b16 %v83
    %v659 = vunpack.c.l.b16 %v84
    %v660 = vunpack.c.l.b16 %v85
    %v661 = vunpack.c.l.b16 %v86
    %v662 = vunpack.c.l.b16 %v87
    %v663 = vunpack.c.l.b16 %v88
    %v664 = vunpack.c.l.b16 %v89
    %v665 = vunpack.c.l.b16 %v90
    %v666 = vunpack.c.l.b16 %v91
    %v667 = vunpack.c.l.b16 %v92
    %v668 = vunpack.c.l.b16 %v93
    %v669 = vunpack.c.l.b16 %v94
    %v670 = vunpack.c.l.b16 %v95
    %v671 = vunpack.c.l.b16 %v96
    %v672 = vunpack.c.l.b16 %v97
    %v673 = vunpack.c.l.b16 %v98
    %v674 = vunpack.c.l.b16 %v99
    %v675 = vunpack.c.l.b16 %v100
    %v676 = vunpack.c.l.b16 %v101
    %v677 = vunpack.c.l.b16 %v102
    %v678 = vunpack.c.l.b16 %v103
    %v679 = vunpack.c.l.b16 %v104
    %v680 = vunpack.c.l.b16 %v105
    %v681 = vunpack.c.l.b16 %v106
    %v682 = vunpack.c.l.b16 %v107
    %v683 = vunpack.c.l.b16 %v108
    %v684 = vunpack.c.l.b16 %v109
    %v685 = vunpack.c.l.b16 %v110
    %v686 = vunpack.c.l.b16 %v111
    %v687 = vunpack.c.l.b16 %v112
    %v688 = vunpack.c.l.b16 %v113
    %v689 = vunpack.c.l.b16 %v114
    %v690 = vunpack.c.l.b16 %v115
    %v691 = vunpack.c.l.b16 %v116
    %v692 = vunpack.c.l.b16 %v117
    %v693 = vunpack.c.l.b16 %v118
    %v694 = vunpack.c.l.b16 %v119
    %v695 = vunpack.c.l.b16 %v120
    %v696 = vunpack.c.l.b16 %v121
    %v697 = vunpack.c.l.b16 %v122
    %v698 = vunpack.c.l.b16 %v123
    %v699 = vunpack.c.l.b16 %v124
    %v700 = vunpack.c.l.b16 %v125
    %v701 = vunpack.c.l.b16 %v126
    %v702 = vunpack.c.l.b16 %v127
    %v703 = vunpack.c.l.b16 %v128
    %v704 = vunpack.c.l.b16 %v129
    %v705 = vunpack.c.l.b16 %v130
    %v706 = vunpack.c.l.b16 %v131
    %v707 = vunpack.c.l.b16 %v132
    %v708 = vunpack.c.l.b16 %v133
    %v709 = vunpack.c.l.b16 %v134
    %v710 = vunpack.c.l.b16 %v135
    %v711 = vunpack.c.l.b16 %v136
    %v712 = vunpack.c.l.b16 %v137
    %v713 = vunpack.c.l.b16 %v138
    %v714 = vunpack.c.l.b16 %v139
    %v715 = vunpack.c.l.b16 %v140
    %v716 = vunpack.c.l.b16 %v141
    %v717 = vunpack.c.l.b16 %v142
    %v718 = vunpack.c.l.b16 %v143
    %v719 = vunpack.c.l.b16 %v144
    %v720 = vunpack.c.l.b16 %v145
    %v721 = vunpack.c.l.b16 %v146
    %v722 = vunpack.c.l.b16 %v147
    %v723 = vunpack.c.l.b16 %v148
    %v724 = vunpack.c.l.b16 %v149
    %v725 = vunpack.c.l.b16 %v150
    %v726 = vunpack.c.l.b16 %v151
    %v727 = vunpack.c.l.b16 %v152
    %v728 = vunpack.c.l.b16 %v153
    %v729 = vunpack.c.l.b16 %v154
    %v730 = vunpack.c.l.b16 %v155
    %v731 = vunpack.c.l.b16 %v156
    %v732 = vunpack.c.l.b16 %v157
    %v733 = vunpack.c.l.b16 %v158
    %v734 = vunpack.c.l.b16 %v159
    %v735 = vunpack.c.l.b16 %v160
    %v736 = vunpack.c.l.b16 %v161
    %v737 = vunpack.c.l.b16 %v162
    %v738 = vunpack.c.l.b16 %v163
    %v739 = vunpack.c.l.b16 %v164
    %v740 = vunpack.c.l.b16 %v165
    %v741 = vunpack.c.l.b16 %v166
    %v742 = vunpack.c.l.b16 %v167
    %v743 = vunpack.c.l.b16 %v168
    %v744 = vunpack.c.l.b16 %v169
    %v745 = vunpack.c.l.b16 %v170
    %v746 = vunpack.c.l.b16 %v171
    %v747 = vunpack.c.l.b16 %v172
    %v748 = vunpack.c.l.b16 %v173
    %v749 = vunpack.c.l.b16 %v174
    %v750 = vunpack.c.l.b16 %v175
    %v751 = vunpack.c.l.b16 %v176
    %v752 = vunpack.c.l.b16 %v177
    %v753 = vunpack.c.l.b16 %v178
    %v754 = vunpack.c.l.b16 %v179
    %v755 = vunpack.c.l.b16 %v180
    %v756 = vunpack.c.l.b16 %v181
    %v757 = vunpack.c.l.b16 %v182
    %v758 = vunpack.c.l.b16 %v183
    %v759 = vunpack.c.l.b16 %v184
    %v760 = vunpack.c.l.b16 %v185
    %v761 = vunpack.c.l.b16 %v186
    %v762 = vunpack.c.l.b16 %v187
    %v763 = vunpack.c.l.b16 %v188
    %v764 = vunpack.c.l.b16 %v189
    %v765 = vunpack.c.l.b16 %v190
    %v766 = vunpack.c.l.b16 %v191
    %v767 = vunpack.c.l.b16 %v192
    %v768 = vunpack.c.l.b16 %v193
    %v769 = vunpack.c.l.b16 %v194
    %v770 = vunpack.c.l.b16 %v195
    %v771 = vunpack.c.l.b16 %v196
    %v772 = vunpack.c.l.b16 %v197
    %v773 = vunpack.c.l.b16 %v198
    %v774 = vunpack.c.l.b16 %v199
    %v775 = vunpack.c.l.b16 %v200
    %v776 = vunpack.c.l.b16 %v201
    %v777 = vunpack.c.l.b16 %v202
    %v778 = vunpack.c.l.b16 %v203
    %v779 = vunpack.c.l.b16 %v204
    %v780 = vunpack.c.l.b16 %v205
    %v781 = vunpack.c.l.b16 %v206
    %v782 = vunpack.c.l.b16 %v207
    %v783 = vunpack.c.l.b16 %v208
    %v784 = vunpack.c.l.b16 %v209
    %v785 = vunpack.c.l.b16 %v210
    %v786 = vunpack.c.l.b16 %v211
    %v787 = vunpack.c.l.b16 %v212
    %v788 = vunpack.c.l.b16 %v213
    %v789 = vunpack.c.l.b16 %v214
    %v790 = vunpack.c.l.b16 %v215
    %v791 = vunpack.c.l.b16 %v216
    %v792 = vunpack.c.l.b16 %v217
    %v793 = vunpack.c.l.b16 %v218
    %v794 = vunpack.c.l.b16 %v219
    %v795 = vunpack.c.l.b16 %v220
    %v796 = vunpack.c.l.b16 %v221
    %v797 = vunpack.c.l.b16 %v222
    %v798 = vunpack.c.l.b16 %v223
    %v799 = vunpack.c.l.b16 %v224
    %v800 = vunpack.c.l.b16 %v225
    %v801 = vunpack.c.l.b16 %v226
    %v802 = vunpack.c.l.b16 %v227
    %v803 = vunpack.c.l.b16 %v228
    %v804 = vunpack.c.l.b16 %v229
    %v805 = vunpack.c.l.b16 %v230
    %v806 = vunpack.c.l.b16 %v231
    %v807 = vunpack.c.l.b16 %v232
    %v808 = vunpack.c.l.b16 %v233
    %v809 = vunpack.c.l.b16 %v234
    %v810 = vunpack.c.l.b16 %v235
    %v811 = vunpack.c.l.b16 %v236
    %v812 = vunpack.c.l.b16 %v237
    %v813 = vunpack.c.l.b16 %v238
    %v814 = vunpack.c.l.b16 %v239
    %v815 = vunpack.c.l.b16 %v240
    %v816 = vunpack.c.l.b16 %v241
    %v817 = vunpack.c.l.b16 %v242
    %v818 = vunpack.c.l.b16 %v243
    %v819 = vunpack.c.l.b16 %v244
    %v820 = vunpack.c.l.b16 %v245
    %v821 = vunpack.c.l.b16 %v246
    %v822 = vunpack.c.l.b16 %v247
    %v823 = vunpack.c.l.b16 %v248
    %v824 = vunpack.c.l.b16 %v249
    %v825 = vunpack.c.l.b16 %v250
    %v826 = vunpack.c.l.b16 %v251
    %v827 = vunpack.c.l.b16 %v252
    %v828 = vunpack.c.l.b16 %v253
    %v829 = vunpack.c.l.b16 %v254
    %v830 = vunpack.c.l.b16 %v255
    %v831 = vunpack.c.l.b16 %v256
    %v832 = vunpack.c.l.b16 %v257
    %v833 = vunpack.c.l.b16 %v258
    %v834 = vunpack.c.l.b16 %v259
    %v835 = vunpack.c.l.b16 %v260
    %v836 = vunpack.c.l.b16 %v261
    %v837 = vunpack.c.l.b16 %v262
    %v838 = vunpack.c.l.b16 %v263
    %v839 = vunpack.c.l.b16 %v264
    %v840 = vunpack.c.l.b16 %v265
    %v841 = vunpack.c.l.b16 %v266
    %v842 = vunpack.c.l.b16 %v267
    %v843 = vunpack.c.l.b16 %v268
    %v844 = vunpack.c.l.b16 %v269
    %v845 = vunpack.c.l.b16 %v270
    %v846 = vunpack.c.l.b16 %v271
    %v847 = vunpack.c.l.b16 %v272
    %v848 = vunpack.c.l.b16 %v273
    %v849 = vunpack.c.l.b16 %v274
    %v850 = vunpack.c.l.b16 %v275
    %v851 = vunpack.c.l.b16 %v276
    %v852 = vunpack.c.l.b16 %v277
    %v853 = vunpack.c.l.b16 %v278
    %v854 = vunpack.c.l.b16 %v279
    %v855 = vpack.c.b16 %v600, %v599
    %v856 = vpack.c.b16 %v602, %v601
    %v857 = vpack.c.b16 %v604, %v603
    %v858 = vpack.c.b16 %v606, %v605
    %v859 = vpack.c.b16 %v608, %v607
    %v860 = vpack.c.b16 %v610, %v609
    %v861 = vpack.c.b16 %v612, %v611
    %v862 = vpack.c.b16 %v614, %v613
    %v863 = vpack.c.b16 %v616, %v615
    %v864 = vpack.c.b16 %v618, %v617
    %v865 = vpack.c.b16 %v620, %v619
    %v866 = vpack.c.b16 %v622, %v621
    %v867 = vpack.c.b16 %v624, %v623
    %v868 = vpack.c.b16 %v626, %v625
    %v869 = vpack.c.b16 %v628, %v627
    %v870 = vpack.c.b16 %v630, %v629
    %v871 = vpack.c.b16 %v632, %v631
    %v872 = vpack.c.b16 %v634, %v633
    %v873 = vpack.c.b16 %v636, %v635
    %v874 = vpack.c.b16 %v638, %v637
    %v875 = vpack.c.b16 %v640, %v639
    %v876 = vpack.c.b16 %v642, %v641
    %v877 = vpack.c.b16 %v644, %v643
    %v878 = vpack.c.b16 %v646, %v645
    %v879 = vpack.c.b16 %v648, %v647
    %v880 = vpack.c.b16 %v650, %v649
    %v881 = vpack.c.b16 %v652, %v651
    %v882 = vpack.c.b16 %v654, %v653
    %v883 = vpack.c.b16 %v656, %v655
    %v884 = vpack.c.b16 %v658, %v657
    %v885 = vpack.c.b16 %v660, %v659
    %v886 = vpack.c.b16 %v662, %v661
    %v887 = vpack.c.b16 %v664, %v663
    %v888 = vpack.c.b16 %v666, %v665
    %v889 = vpack.c.b16 %v668, %v667
    %v890 = vpack.c.b16 %v670, %v669
    %v891 = vpack.c.b16 %v672, %v671
    %v892 = vpack.c.b16 %v674, %v673
    %v893 = vpack.c.b16 %v676, %v675
    %v894 = vpack.c.b16 %v678, %v677
    %v895 = vpack.c.b16 %v680, %v679
    %v896 = vpack.c.b16 %v682, %v681
    %v897 = vpack.c.b16 %v684, %v683
    %v898 = vpack.c.b16 %v686, %v685
    %v899 = vpack.c.b16 %v688, %v687
    %v900 = vpack.c.b16 %v690, %v689
    %v901 = vpack.c.b16 %v692, %v691
    %v902 = vpack.c.b16 %v694, %v693
    %v903 = vpack.c.b16 %v696, %v695
    %v904 = vpack.c.b16 %v698, %v697
    %v905 = vpack.c.b16 %v700, %v699
    %v906 = vpack.c.b16 %v702, %v701
    %v907 = vpack.c.b16 %v704, %v703
    %v908 = vpack.c.b16 %v706, %v705
    %v909 = vpack.c.b16 %v708, %v707
    %v910 = vpack.c.b16 %v710, %v709
    %v911 = vpack.c.b16 %v712, %v711
    %v912 = vpack.c.b16 %v714, %v713
    %v913 = vpack.c.b16 %v716, %v715
    %v914 = vpack.c.b16 %v718, %v717
    %v915 = vpack.c.b16 %v720, %v719
    %v916 = vpack.c.b16 %v722, %v721
    %v917 = vpack.c.b16 %v724, %v723
    %v918 = vpack.c.b16 %v726, %v725
    %v919 = vpack.c.b16 %v728, %v727
    %v920 = vpack.c.b16 %v730, %v729
    %v921 = vpack.c.b16 %v732, %v731
    %v922 = vpack.c.b16 %v734, %v733
    %v923 = vpack.c.b16 %v736, %v735
    %v924 = vpack.c.b16 %v738, %v737
    %v925 = vpack.c.b16 %v740, %v739
    %v926 = vpack.c.b16 %v742, %v741
    %v927 = vpack.c.b16 %v744, %v743
    %v928 = vpack.c.b16 %v746, %v745
    %v929 = vpack.c.b16 %v748, %v747
    %v930 = vpack.c.b16 %v750, %v749
    %v931 = vpack.c.b16 %v752, %v751
    %v932 = vpack.c.b16 %v754, %v753
    %v933 = vpack.c.b16 %v756, %v755
    %v934 = vpack.c.b16 %v758, %v757
    %v935 = vpack.c.b16 %v760, %v759
    %v936 = vpack.c.b16 %v762, %v761
    %v937 = vpack.c.b16 %v764, %v763
    %v938 = vpack.c.b16 %v766, %v765
    %v939 = vpack.c.b16 %v768, %v767
    %v940 = vpack.c.b16 %v770, %v769
    %v941 = vpack.c.b16 %v772, %v771
    %v942 = vpack.c.b16 %v774, %v773
    %v943 = vpack.c.b16 %v776, %v775
    %v944 = vpack.c.b16 %v778, %v777
    %v945 = vpack.c.b16 %v780, %v779
    %v946 = vpack.c.b16 %v782, %v781
    %v947 = vpack.c.b16 %v784, %v783
    %v948 = vpack.c.b16 %v786, %v785
    %v949 = vpack.c.b16 %v788, %v787
    %v950 = vpack.c.b16 %v790, %v789
    %v951 = vpack.c.b16 %v792, %v791
    %v952 = vpack.c.b16 %v794, %v793
    %v953 = vpack.c.b16 %v796, %v795
    %v954 = vpack.c.b16 %v798, %v797
    %v955 = vpack.c.b16 %v800, %v799
    %v956 = vpack.c.b16 %v802, %v801
    %v957 = vpack.c.b16 %v804, %v803
    %v958 = vpack.c.b16 %v806, %v805
    %v959 = vpack.c.b16 %v808, %v807
    %v960 = vpack.c.b16 %v810, %v809
    %v961 = vpack.c.b16 %v812, %v811
    %v962 = vpack.c.b16 %v814, %v813
    %v963 = vpack.c.b16 %v816, %v815
    %v964 = vpack.c.b16 %v818, %v817
    %v965 = vpack.c.b16 %v820, %v819
    %v966 = vpack.c.b16 %v822, %v821
    %v967 = vpack.c.b16 %v824, %v823
    %v968 = vpack.c.b16 %v826, %v825
    %v969 = vpack.c.b16 %v828, %v827
    %v970 = vpack.c.b16 %v830, %v829
    %v971 = vpack.c.b16 %v832, %v831
    %v972 = vpack.c.b16 %v834, %v833
    %v973 = vpack.c.b16 %v836, %v835
    %v974 = vpack.c.b16 %v838, %v837
    %v975 = vpack.c.b16 %v840, %v839
    %v976 = vpack.c.b16 %v842, %v841
    %v977 = vpack.c.b16 %v844, %v843
    %v978 = vpack.c.b16 %v846, %v845
    %v979 = vpack.c.b16 %v848, %v847
    %v980 = vpack.c.b16 %v850, %v849
    %v981 = vpack.c.b16 %v852, %v851
    %v982 = vpack.c.b16 %v854, %v853
    %1111 = vmatprep.subr.bf16.mxu0 0
    %1112 = vmatpush1.bf16.msra.mxu0 %v855
    %1113 = vmatprep.subr.bf16.mxu0 0
    %1114 = vmatpush1.bf16.msra.mxu0 %v856
    %1115 = vmatprep.subr.bf16.mxu0 0
    %1116 = vmatpush1.bf16.msra.mxu0 %v857
    %1117 = vmatprep.subr.bf16.mxu0 0
    %1118 = vmatpush1.bf16.msra.mxu0 %v858
    %1119 = vmatprep.subr.bf16.mxu0 0
    %1120 = vmatpush1.bf16.msra.mxu0 %v859
    %1121 = vmatprep.subr.bf16.mxu0 0
    %1122 = vmatpush1.bf16.msra.mxu0 %v860
    %1123 = vmatprep.subr.bf16.mxu0 0
    %1124 = vmatpush1.bf16.msra.mxu0 %v861
    %1125 = vmatprep.subr.bf16.mxu0 0
    %1126 = vmatpush1.bf16.msra.mxu0 %v862
    %1127 = vmatprep.subr.bf16.mxu0 0
    %1128 = vmatpush1.bf16.msra.mxu0 %v863
    %1129 = vmatprep.subr.bf16.mxu0 0
    %1130 = vmatpush1.bf16.msra.mxu0 %v864
    %1131 = vmatprep.subr.bf16.mxu0 0
    %1132 = vmatpush1.bf16.msra.mxu0 %v865
    %1133 = vmatprep.subr.bf16.mxu0 0
    %1134 = vmatpush1.bf16.msra.mxu0 %v866
    %1135 = vmatprep.subr.bf16.mxu0 0
    %1136 = vmatpush1.bf16.msra.mxu0 %v867
    %1137 = vmatprep.subr.bf16.mxu0 0
    %1138 = vmatpush1.bf16.msra.mxu0 %v868
    %1139 = vmatprep.subr.bf16.mxu0 0
    %1140 = vmatpush1.bf16.msra.mxu0 %v869
    %1141 = vmatprep.subr.bf16.mxu0 0
    %1142 = vmatpush1.bf16.msra.mxu0 %v870
    %1143 = vmatprep.mubr.bf16.mxu0 %v312
    %1144 = vmatmul.mubr.bf16.gmra.mrb[0].mxu0 %v311
    %v1145 = vpop.f32.mrb[0].mxu0
    %v1146 = vadd.f32 %v285, %v1145
    %v1147 = vpop.f32.mrb[0].mxu0
    %v1148 = vpop.f32.mrb[0].mxu0
    %v1149 = vpop.f32.mrb[0].mxu0
    %1150 = vdwg.mxu0
    %1151 = vmatprep.subr.bf16.mxu0 0
    %1152 = vmatpush1.bf16.msra.mxu0 %v871
    %1153 = vmatprep.subr.bf16.mxu0 0
    %1154 = vmatpush1.bf16.msra.mxu0 %v872
    %1155 = vmatprep.subr.bf16.mxu0 0
    %1156 = vmatpush1.bf16.msra.mxu0 %v873
    %1157 = vmatprep.subr.bf16.mxu0 0
    %1158 = vmatpush1.bf16.msra.mxu0 %v874
    %1159 = vmatprep.subr.bf16.mxu0 0
    %1160 = vmatpush1.bf16.msra.mxu0 %v875
    %1161 = vmatprep.subr.bf16.mxu0 0
    %1162 = vmatpush1.bf16.msra.mxu0 %v876
    %1163 = vmatprep.subr.bf16.mxu0 0
    %1164 = vmatpush1.bf16.msra.mxu0 %v877
    %1165 = vmatprep.subr.bf16.mxu0 0
    %1166 = vmatpush1.bf16.msra.mxu0 %v878
    %1167 = vmatprep.subr.bf16.mxu0 0
    %1168 = vmatpush1.bf16.msra.mxu0 %v879
    %1169 = vmatprep.subr.bf16.mxu0 0
    %1170 = vmatpush1.bf16.msra.mxu0 %v880
    %1171 = vmatprep.subr.bf16.mxu0 0
    %1172 = vmatpush1.bf16.msra.mxu0 %v881
    %1173 = vmatprep.subr.bf16.mxu0 0
    %1174 = vmatpush1.bf16.msra.mxu0 %v882
    %1175 = vmatprep.subr.bf16.mxu0 0
    %1176 = vmatpush1.bf16.msra.mxu0 %v883
    %1177 = vmatprep.subr.bf16.mxu0 0
    %1178 = vmatpush1.bf16.msra.mxu0 %v884
    %1179 = vmatprep.subr.bf16.mxu0 0
    %1180 = vmatpush1.bf16.msra.mxu0 %v885
    %1181 = vmatprep.subr.bf16.mxu0 0
    %1182 = vmatpush1.bf16.msra.mxu0 %v886
    %1183 = vmatprep.mubr.bf16.mxu0 %v314
    %1184 = vmatmul.mubr.bf16.gmra.mrb[0].mxu0 %v313
    %v1185 = vpop.f32.mrb[0].mxu0
    %v1186 = vadd.f32 %v1146, %v1185
    %v1187 = vpop.f32.mrb[0].mxu0
    %v1188 = vpop.f32.mrb[0].mxu0
    %v1189 = vpop.f32.mrb[0].mxu0
    %1190 = vdwg.mxu0
    %1191 = vmatprep.subr.bf16.mxu0 0
    %1192 = vmatpush1.bf16.msra.mxu0 %v887
    %1193 = vmatprep.subr.bf16.mxu0 0
    %1194 = vmatpush1.bf16.msra.mxu0 %v888
    %1195 = vmatprep.subr.bf16.mxu0 0
    %1196 = vmatpush1.bf16.msra.mxu0 %v889
    %1197 = vmatprep.subr.bf16.mxu0 0
    %1198 = vmatpush1.bf16.msra.mxu0 %v890
    %1199 = vmatprep.subr.bf16.mxu0 0
    %1200 = vmatpush1.bf16.msra.mxu0 %v891
    %1201 = vmatprep.subr.bf16.mxu0 0
    %1202 = vmatpush1.bf16.msra.mxu0 %v892
    %1203 = vmatprep.subr.bf16.mxu0 0
    %1204 = vmatpush1.bf16.msra.mxu0 %v893
    %1205 = vmatprep.subr.bf16.mxu0 0
    %1206 = vmatpush1.bf16.msra.mxu0 %v894
    %1207 = vmatprep.subr.bf16.mxu0 0
    %1208 = vmatpush1.bf16.msra.mxu0 %v895
    %1209 = vmatprep.subr.bf16.mxu0 0
    %1210 = vmatpush1.bf16.msra.mxu0 %v896
    %1211 = vmatprep.subr.bf16.mxu0 0
    %1212 = vmatpush1.bf16.msra.mxu0 %v897
    %1213 = vmatprep.subr.bf16.mxu0 0
    %1214 = vmatpush1.bf16.msra.mxu0 %v898
    %1215 = vmatprep.subr.bf16.mxu0 0
    %1216 = vmatpush1.bf16.msra.mxu0 %v899
    %1217 = vmatprep.subr.bf16.mxu0 0
    %1218 = vmatpush1.bf16.msra.mxu0 %v900
    %1219 = vmatprep.subr.bf16.mxu0 0
    %1220 = vmatpush1.bf16.msra.mxu0 %v901
    %1221 = vmatprep.subr.bf16.mxu0 0
    %1222 = vmatpush1.bf16.msra.mxu0 %v902
    %1223 = vmatprep.mubr.bf16.mxu0 %v316
    %1224 = vmatmul.mubr.bf16.gmra.mrb[0].mxu0 %v315
    %v1225 = vpop.f32.mrb[0].mxu0
    %v1226 = vadd.f32 %v1186, %v1225
    %v1227 = vpop.f32.mrb[0].mxu0
    %v1228 = vpop.f32.mrb[0].mxu0
    %v1229 = vpop.f32.mrb[0].mxu0
    %1230 = vdwg.mxu0
    %1231 = vmatprep.subr.bf16.mxu0 0
    %1232 = vmatpush1.bf16.msra.mxu0 %v903
    %1233 = vmatprep.subr.bf16.mxu0 0
    %1234 = vmatpush1.bf16.msra.mxu0 %v904
    %1235 = vmatprep.subr.bf16.mxu0 0
    %1236 = vmatpush1.bf16.msra.mxu0 %v905
    %1237 = vmatprep.subr.bf16.mxu0 0
    %1238 = vmatpush1.bf16.msra.mxu0 %v906
    %1239 = vmatprep.subr.bf16.mxu0 0
    %1240 = vmatpush1.bf16.msra.mxu0 %v907
    %1241 = vmatprep.subr.bf16.mxu0 0
    %1242 = vmatpush1.bf16.msra.mxu0 %v908
    %1243 = vmatprep.subr.bf16.mxu0 0
    %1244 = vmatpush1.bf16.msra.mxu0 %v909
    %1245 = vmatprep.subr.bf16.mxu0 0
    %1246 = vmatpush1.bf16.msra.mxu0 %v910
    %1247 = vmatprep.subr.bf16.mxu0 0
    %1248 = vmatpush1.bf16.msra.mxu0 %v911
    %1249 = vmatprep.subr.bf16.mxu0 0
    %1250 = vmatpush1.bf16.msra.mxu0 %v912
    %1251 = vmatprep.subr.bf16.mxu0 0
    %1252 = vmatpush1.bf16.msra.mxu0 %v913
    %1253 = vmatprep.subr.bf16.mxu0 0
    %1254 = vmatpush1.bf16.msra.mxu0 %v914
    %1255 = vmatprep.subr.bf16.mxu0 0
    %1256 = vmatpush1.bf16.msra.mxu0 %v915
    %1257 = vmatprep.subr.bf16.mxu0 0
    %1258 = vmatpush1.bf16.msra.mxu0 %v916
    %1259 = vmatprep.subr.bf16.mxu0 0
    %1260 = vmatpush1.bf16.msra.mxu0 %v917
    %1261 = vmatprep.subr.bf16.mxu0 0
    %1262 = vmatpush1.bf16.msra.mxu0 %v918
    %1263 = vmatprep.mubr.bf16.mxu0 %v318
    %1264 = vmatmul.mubr.bf16.gmra.mrb[0].mxu0 %v317
    %v1265 = vpop.f32.mrb[0].mxu0
    %v1266 = vadd.f32 %v1226, %v1265
    %v1267 = vpop.f32.mrb[0].mxu0
    %v1268 = vpop.f32.mrb[0].mxu0
    %v1269 = vpop.f32.mrb[0].mxu0
    %1270 = vdwg.mxu0
    %1271 = vmatprep.subr.bf16.mxu0 0
    %1272 = vmatpush1.bf16.msra.mxu0 %v919
    %1273 = vmatprep.subr.bf16.mxu0 0
    %1274 = vmatpush1.bf16.msra.mxu0 %v920
    %1275 = vmatprep.subr.bf16.mxu0 0
    %1276 = vmatpush1.bf16.msra.mxu0 %v921
    %1277 = vmatprep.subr.bf16.mxu0 0
    %1278 = vmatpush1.bf16.msra.mxu0 %v922
    %1279 = vmatprep.subr.bf16.mxu0 0
    %1280 = vmatpush1.bf16.msra.mxu0 %v923
    %1281 = vmatprep.subr.bf16.mxu0 0
    %1282 = vmatpush1.bf16.msra.mxu0 %v924
    %1283 = vmatprep.subr.bf16.mxu0 0
    %1284 = vmatpush1.bf16.msra.mxu0 %v925
    %1285 = vmatprep.subr.bf16.mxu0 0
    %1286 = vmatpush1.bf16.msra.mxu0 %v926
    %1287 = vmatprep.subr.bf16.mxu0 0
    %1288 = vmatpush1.bf16.msra.mxu0 %v927
    %1289 = vmatprep.subr.bf16.mxu0 0
    %1290 = vmatpush1.bf16.msra.mxu0 %v928
    %1291 = vmatprep.subr.bf16.mxu0 0
    %1292 = vmatpush1.bf16.msra.mxu0 %v929
    %1293 = vmatprep.subr.bf16.mxu0 0
    %1294 = vmatpush1.bf16.msra.mxu0 %v930
    %1295 = vmatprep.subr.bf16.mxu0 0
    %1296 = vmatpush1.bf16.msra.mxu0 %v931
    %1297 = vmatprep.subr.bf16.mxu0 0
    %1298 = vmatpush1.bf16.msra.mxu0 %v932
    %1299 = vmatprep.subr.bf16.mxu0 0
    %1300 = vmatpush1.bf16.msra.mxu0 %v933
    %1301 = vmatprep.subr.bf16.mxu0 0
    %1302 = vmatpush1.bf16.msra.mxu0 %v934
    %1303 = vmatprep.mubr.bf16.mxu0 %v320
    %1304 = vmatmul.mubr.bf16.gmra.mrb[0].mxu0 %v319
    %v1305 = vpop.f32.mrb[0].mxu0
    %v1306 = vadd.f32 %v1266, %v1305
    %v1307 = vpop.f32.mrb[0].mxu0
    %v1308 = vpop.f32.mrb[0].mxu0
    %v1309 = vpop.f32.mrb[0].mxu0
    %1310 = vdwg.mxu0
    %1311 = vmatprep.subr.bf16.mxu0 0
    %1312 = vmatpush1.bf16.msra.mxu0 %v935
    %1313 = vmatprep.subr.bf16.mxu0 0
    %1314 = vmatpush1.bf16.msra.mxu0 %v936
    %1315 = vmatprep.subr.bf16.mxu0 0
    %1316 = vmatpush1.bf16.msra.mxu0 %v937
    %1317 = vmatprep.subr.bf16.mxu0 0
    %1318 = vmatpush1.bf16.msra.mxu0 %v938
    %1319 = vmatprep.subr.bf16.mxu0 0
    %1320 = vmatpush1.bf16.msra.mxu0 %v939
    %1321 = vmatprep.subr.bf16.mxu0 0
    %1322 = vmatpush1.bf16.msra.mxu0 %v940
    %1323 = vmatprep.subr.bf16.mxu0 0
    %1324 = vmatpush1.bf16.msra.mxu0 %v941
    %1325 = vmatprep.subr.bf16.mxu0 0
    %1326 = vmatpush1.bf16.msra.mxu0 %v942
    %1327 = vmatprep.subr.bf16.mxu0 0
    %1328 = vmatpush1.bf16.msra.mxu0 %v943
    %1329 = vmatprep.subr.bf16.mxu0 0
    %1330 = vmatpush1.bf16.msra.mxu0 %v944
    %1331 = vmatprep.subr.bf16.mxu0 0
    %1332 = vmatpush1.bf16.msra.mxu0 %v945
    %1333 = vmatprep.subr.bf16.mxu0 0
    %1334 = vmatpush1.bf16.msra.mxu0 %v946
    %1335 = vmatprep.subr.bf16.mxu0 0
    %1336 = vmatpush1.bf16.msra.mxu0 %v947
    %1337 = vmatprep.subr.bf16.mxu0 0
    %1338 = vmatpush1.bf16.msra.mxu0 %v948
    %1339 = vmatprep.subr.bf16.mxu0 0
    %1340 = vmatpush1.bf16.msra.mxu0 %v949
    %1341 = vmatprep.subr.bf16.mxu0 0
    %1342 = vmatpush1.bf16.msra.mxu0 %v950
    %1343 = vmatprep.mubr.bf16.mxu0 %v322
    %1344 = vmatmul.mubr.bf16.gmra.mrb[0].mxu0 %v321
    %v1345 = vpop.f32.mrb[0].mxu0
    %v1346 = vadd.f32 %v1306, %v1345
    %v1347 = vpop.f32.mrb[0].mxu0
    %v1348 = vpop.f32.mrb[0].mxu0
    %v1349 = vpop.f32.mrb[0].mxu0
    %1350 = vdwg.mxu0
    %1351 = vmatprep.subr.bf16.mxu0 0
    %1352 = vmatpush1.bf16.msra.mxu0 %v951
    %1353 = vmatprep.subr.bf16.mxu0 0
    %1354 = vmatpush1.bf16.msra.mxu0 %v952
    %1355 = vmatprep.subr.bf16.mxu0 0
    %1356 = vmatpush1.bf16.msra.mxu0 %v953
    %1357 = vmatprep.subr.bf16.mxu0 0
    %1358 = vmatpush1.bf16.msra.mxu0 %v954
    %1359 = vmatprep.subr.bf16.mxu0 0
    %1360 = vmatpush1.bf16.msra.mxu0 %v955
    %1361 = vmatprep.subr.bf16.mxu0 0
    %1362 = vmatpush1.bf16.msra.mxu0 %v956
    %1363 = vmatprep.subr.bf16.mxu0 0
    %1364 = vmatpush1.bf16.msra.mxu0 %v957
    %1365 = vmatprep.subr.bf16.mxu0 0
    %1366 = vmatpush1.bf16.msra.mxu0 %v958
    %1367 = vmatprep.subr.bf16.mxu0 0
    %1368 = vmatpush1.bf16.msra.mxu0 %v959
    %1369 = vmatprep.subr.bf16.mxu0 0
    %1370 = vmatpush1.bf16.msra.mxu0 %v960
    %1371 = vmatprep.subr.bf16.mxu0 0
    %1372 = vmatpush1.bf16.msra.mxu0 %v961
    %1373 = vmatprep.subr.bf16.mxu0 0
    %1374 = vmatpush1.bf16.msra.mxu0 %v962
    %1375 = vmatprep.subr.bf16.mxu0 0
    %1376 = vmatpush1.bf16.msra.mxu0 %v963
    %1377 = vmatprep.subr.bf16.mxu0 0
    %1378 = vmatpush1.bf16.msra.mxu0 %v964
    %1379 = vmatprep.subr.bf16.mxu0 0
    %1380 = vmatpush1.bf16.msra.mxu0 %v965
    %1381 = vmatprep.subr.bf16.mxu0 0
    %1382 = vmatpush1.bf16.msra.mxu0 %v966
    %1383 = vmatprep.mubr.bf16.mxu0 %v324
    %1384 = vmatmul.mubr.bf16.gmra.mrb[0].mxu0 %v323
    %v1385 = vpop.f32.mrb[0].mxu0
    %v1386 = vadd.f32 %v1346, %v1385
    %v1387 = vpop.f32.mrb[0].mxu0
    %v1388 = vpop.f32.mrb[0].mxu0
    %v1389 = vpop.f32.mrb[0].mxu0
    %1390 = vdwg.mxu0
    %1391 = vmatprep.subr.bf16.mxu0 0
    %1392 = vmatpush1.bf16.msra.mxu0 %v967
    %1393 = vmatprep.subr.bf16.mxu0 0
    %1394 = vmatpush1.bf16.msra.mxu0 %v968
    %1395 = vmatprep.subr.bf16.mxu0 0
    %1396 = vmatpush1.bf16.msra.mxu0 %v969
    %1397 = vmatprep.subr.bf16.mxu0 0
    %1398 = vmatpush1.bf16.msra.mxu0 %v970
    %1399 = vmatprep.subr.bf16.mxu0 0
    %1400 = vmatpush1.bf16.msra.mxu0 %v971
    %1401 = vmatprep.subr.bf16.mxu0 0
    %1402 = vmatpush1.bf16.msra.mxu0 %v972
    %1403 = vmatprep.subr.bf16.mxu0 0
    %1404 = vmatpush1.bf16.msra.mxu0 %v973
    %1405 = vmatprep.subr.bf16.mxu0 0
    %1406 = vmatpush1.bf16.msra.mxu0 %v974
    %1407 = vmatprep.subr.bf16.mxu0 0
    %1408 = vmatpush1.bf16.msra.mxu0 %v975
    %1409 = vmatprep.subr.bf16.mxu0 0
    %1410 = vmatpush1.bf16.msra.mxu0 %v976
    %1411 = vmatprep.subr.bf16.mxu0 0
    %1412 = vmatpush1.bf16.msra.mxu0 %v977
    %1413 = vmatprep.subr.bf16.mxu0 0
    %1414 = vmatpush1.bf16.msra.mxu0 %v978
    %1415 = vmatprep.subr.bf16.mxu0 0
    %1416 = vmatpush1.bf16.msra.mxu0 %v979
    %1417 = vmatprep.subr.bf16.mxu0 0
    %1418 = vmatpush1.bf16.msra.mxu0 %v980
    %1419 = vmatprep.subr.bf16.mxu0 0
    %1420 = vmatpush1.bf16.msra.mxu0 %v981
    %1421 = vmatprep.subr.bf16.mxu0 0
    %1422 = vmatpush1.bf16.msra.mxu0 %v982
    %1423 = vmatprep.mubr.bf16.mxu0 %v326
    %1424 = vmatmul.mubr.bf16.gmra.mrb[0].mxu0 %v325
    %v1425 = vpop.f32.mrb[0].mxu0
    %v1426 = vadd.f32 %v1386, %v1425
    %v1427 = vpop.f32.mrb[0].mxu0
    %v1428 = vpop.f32.mrb[0].mxu0
    %v1429 = vpop.f32.mrb[0].mxu0
    %1430 = vdwg.mxu0
    %1431 = vst [vmem:[#allocation2] sm:$0xff] %v1426
    // Predicated region
    $region14: #{net_forward.5} parent=1 // pred_check
      _
    $region15: #{net_forward.5} parent=1 // pred_check_branch
      %1433 = sbr.rel (0) target = $region17
    $region16: #{net_forward.5} parent=1 // pred_region
      %s1435 = ssub.s32 128, 128
      %1436 = vsyncadd [#allocation3], %s1435
      %s1438 = sshll.u32 [#allocation2], 4
      %s1439 = int_to_ptr.vmem [resolvable:$true] %s1438
      %1441 = dma.vmem_to_hbm [thread:$0]  %s1439, 128, %s3, [#allocation3]
    $region17: #{net_forward.5} parent=1 // pred_fallthru
      _
    // Predicated region
    $region18: #{net_forward.5} parent=1 // pred_check
      _
    $region19: #{net_forward.5} parent=1 // pred_check_branch
      %1443 = sbr.rel (0) target = $region21
    $region20: #{net_forward.5} parent=1 // pred_region
      %1444 = dma.done [#allocation3], 128
    $region21: #{net_forward.5} parent=1 // pred_fallthru
      _
    %1445 = vsyncpa [#allocation3], 1

// kernel: net_forward.3
$region0: #{net_forward.3}
  #allocation0 [shape = 'u32[]', space=smem, size = 0x4, offset = 0x4, fixed_abs, tag = 'smem constant byte address 0x4 - core index']
  #allocation1 [shape = 'u32[144,128]{1,0:T(1,128)}', space=vmem, size = 0x12000, scoped, tag = 'internal scratch']
  %s0 = inlined_call_operand.vmem [shape: f32[8,896], index: 0, kind: input, shape index: {}]
  %s1 = inlined_call_operand.hbm [shape: bf16[896,2048], index: 1, kind: input, shape index: {}]
  %s2 = inlined_call_operand.hbm [shape: f32[1,2048], index: 2, kind: input, shape index: {}]
  %s3 = inlined_call_operand.vmem [shape: bf16[8,2048], index: 3, kind: output, shape index: {}]
  %s4 = sld [smem:[#allocation0]]
  $region53: #{net_forward.3} parent=0
    _
  %s6 = ssub.s32 1, %s4
  %s7 = scalar_select 0, %s6, %s4
  $region1: #{net_forward.3} parent=0
    #allocation2 [shape = 'u8[3670016]{0}', space=vmem, size = 0x380000, scoped, tag = 'input window, operand 1']
    #allocation3 [shape = 's32[2]{0}', space=sflag, size = 0x8, scoped, tag = 'scoped memory for net_forward.3']
    #allocation4 [shape = 'u8[8192]{0}', space=vmem, size = 0x2000, scoped, tag = 'input window, operand 2']
    #allocation5 [shape = 's32[2]{0}', space=sflag, size = 0x8, scoped, tag = 'scoped memory for net_forward.3']
    %8 = vsyncpa [#allocation3], 0
    %s9 = scalar_lea.sflag [#allocation3], 1
    %10 = vsyncpa %s9, 0
    %11 = vsyncpa [#allocation5], 0
    %s12 = scalar_lea.sflag [#allocation5], 1
    %13 = vsyncpa %s12, 0
    loop: start=0, step=1, limit=4
    $region2: #{net_forward.3} parent=1 // loop_pre_header
      _
    $region3: #{net_forward.3} parent=1 // loop_header
      %s15 = sphi 0, %s19
      %p16 = scmp.ge.s32.totalorder %s15, 4
      %s22 = sphi 0, %s34
      %s23 = sphi 0, %s30
      %s24 = sphi 0, %s22
      %s25 = sphi 0, %s23
      %s26 = sphi 0, %s24
      %s27 = sphi 0, %s25
      %s37 = sphi 0, %s39
      %s40 = sphi 0, %s37
      %s41 = sphi 0, %s40
      %s57 = sphi 0, %s41
      %s63 = sphi 0, %s65
      %s66 = sphi 0, %s63
      %s67 = sphi 0, %s66
      %s83 = sphi 0, %s67
      %s89 = sphi 0, %s91
      %s92 = sphi 0, %s89
      %s93 = sphi 0, %s92
      %s109 = sphi 0, %s93
      %s117 = sphi 0, %s119
      %s120 = sphi 0, %s117
      %s121 = sphi 0, %s120
      %s137 = sphi 0, %s121
    $region4: #{net_forward.3} parent=1 // loop_header_branch
      %18 = sbr.rel (%p16) target = $region8
    $region5: #{net_forward.3} parent=1 // loop_body
      %s20 = ssub.s32 %s15, 1
      %s21 = ssub.s32 %s15, 2
      %s28 = sadd.s32 1, %s23
      %p29 = scmp.ge.s32.totalorder %s28, 2
      %s30 = scalar_select %p29, 0, %s28
      %s31 = sadd.s32 1, %s22
      %s32 = scalar_select %p29, %s31, %s22
      %p33 = scmp.ge.s32.totalorder %s32, 1
      %s34 = scalar_select %p33, 0, %s32
      %s35 = ssub.s32 %s22, %s34
      %p36 = scmp.eq.s32.totalorder %s35, 0
      %s38 = sadd.s32 %s37, 1
      %s39 = scalar_select %p36, %s37, %s38
      %p42 = pneg %p36
      %p43 = scmp.eq.s32.totalorder %s15, 1
      %p44 = por %p42, %p43
      %p45 = scmp.ne.s32.totalorder %s37, %s40
      %p46 = scmp.eq.s32.totalorder %s15, 0
      %p47 = por %p45, %p46
      %p48 = scmp.ne.s32.totalorder %s37, %s40
      %p49 = scmp.eq.s32.totalorder %s20, 1
      %p50 = por %p48, %p49
      %p51 = scmp.ne.s32.totalorder %s40, %s41
      %p52 = scmp.eq.s32.totalorder %s20, 0
      %p53 = por %p51, %p52
      %p54 = scmp.ne.s32.totalorder %s40, %s41
      %p55 = scmp.eq.s32.totalorder %s21, 1
      %p56 = por %p54, %p55
      %p58 = scmp.ne.s32.totalorder %s41, %s57
      %p59 = scmp.eq.s32.totalorder %s21, 0
      %p60 = por %p58, %p59
      %s61 = ssub.s32 %s23, %s30
      %p62 = scmp.eq.s32.totalorder %s61, 0
      %s64 = sadd.s32 %s63, 1
      %s65 = scalar_select %p62, %s63, %s64
      %p68 = pneg %p62
      %p69 = scmp.eq.s32.totalorder %s15, 1
      %p70 = por %p68, %p69
      %p71 = scmp.ne.s32.totalorder %s63, %s66
      %p72 = scmp.eq.s32.totalorder %s15, 0
      %p73 = por %p71, %p72
      %p74 = scmp.ne.s32.totalorder %s63, %s66
      %p75 = scmp.eq.s32.totalorder %s20, 1
      %p76 = por %p74, %p75
      %p77 = scmp.ne.s32.totalorder %s66, %s67
      %p78 = scmp.eq.s32.totalorder %s20, 0
      %p79 = por %p77, %p78
      %p80 = scmp.ne.s32.totalorder %s66, %s67
      %p81 = scmp.eq.s32.totalorder %s21, 1
      %p82 = por %p80, %p81
      %p84 = scmp.ne.s32.totalorder %s67, %s83
      %p85 = scmp.eq.s32.totalorder %s21, 0
      %p86 = por %p84, %p85
      %s87 = ssub.s32 %s23, %s30
      %p88 = scmp.eq.s32.totalorder %s87, 0
      %s90 = sadd.s32 %s89, 1
      %s91 = scalar_select %p88, %s89, %s90
      %p94 = pneg %p88
      %p95 = scmp.eq.s32.totalorder %s15, 1
      %p96 = por %p94, %p95
      %p97 = scmp.ne.s32.totalorder %s89, %s92
      %p98 = scmp.eq.s32.totalorder %s15, 0
      %p99 = por %p97, %p98
      %p100 = scmp.ne.s32.totalorder %s89, %s92
      %p101 = scmp.eq.s32.totalorder %s20, 1
      %p102 = por %p100, %p101
      %p103 = scmp.ne.s32.totalorder %s92, %s93
      %p104 = scmp.eq.s32.totalorder %s20, 0
      %p105 = por %p103, %p104
      %p106 = scmp.ne.s32.totalorder %s92, %s93
      %p107 = scmp.eq.s32.totalorder %s21, 1
      %p108 = por %p106, %p107
      %p110 = scmp.ne.s32.totalorder %s93, %s109
      %p111 = scmp.eq.s32.totalorder %s21, 0
      %p112 = por %p110, %p111
      %s113 = ssub.s32 %s22, %s34
      %s114 = ssub.s32 %s23, %s30
      %s115 = sor.u32 %s113, %s114
      %p116 = scmp.eq.s32.totalorder %s115, 0
      %s118 = sadd.s32 %s117, 1
      %s119 = scalar_select %p116, %s117, %s118
      %p122 = pneg %p116
      %p123 = scmp.eq.s32.totalorder %s15, 1
      %p124 = por %p122, %p123
      %p125 = scmp.ne.s32.totalorder %s117, %s120
      %p126 = scmp.eq.s32.totalorder %s15, 0
      %p127 = por %p125, %p126
      %p128 = scmp.ne.s32.totalorder %s117, %s120
      %p129 = scmp.eq.s32.totalorder %s20, 1
      %p130 = por %p128, %p129
      %p131 = scmp.ne.s32.totalorder %s120, %s121
      %p132 = scmp.eq.s32.totalorder %s20, 0
      %p133 = por %p131, %p132
      %p134 = scmp.ne.s32.totalorder %s120, %s121
      %p135 = scmp.eq.s32.totalorder %s21, 1
      %p136 = por %p134, %p135
      %p138 = scmp.ne.s32.totalorder %s121, %s137
      %p139 = scmp.eq.s32.totalorder %s21, 0
      %p140 = por %p138, %p139
      %p141 = scmp.le.s32.totalorder 1, %s15
      %p142 = scmp.lt.s32.totalorder %s15, 3
      %p143 = pnand %p141, %p142
      %p144 = pneg %p143
      // Predicated region
      $region9: #{net_forward.3} parent=5 // pred_check
        _
      $region10: #{net_forward.3} parent=5 // pred_check_branch
        %146 = sbr.rel (%p143) target = $region12
      $region11: #{net_forward.3} parent=5 // pred_region
        %s147 = ssub.s32 %s15, 1
        // Predicated region
        $region13: #{net_forward.3} parent=11 // pred_check
          %p148 = pneg %p53
        $region14: #{net_forward.3} parent=11 // pred_check_branch
          %150 = sbr.rel (%p148) target = $region16
        $region15: #{net_forward.3} parent=11 // pred_region
          %p151 = scmp.lt.s32.totalorder %s24, 0
          %s152 = scalar_select %p151, %s24, 0
          %s153 = smul.addr %s152, 7
          %s154 = smul.addr %s153, 8
          %s155 = scalar_lea.vmem %s0, %s154
        $region16: #{net_forward.3} parent=11 // pred_fallthru
          _
      $region12: #{net_forward.3} parent=5 // pred_fallthru
        _
      %p156 = scmp.lt.s32.totalorder %s15, 2
      // Predicated region
      $region17: #{net_forward.3} parent=5 // pred_check
        %p157 = pneg %p156
      $region18: #{net_forward.3} parent=5 // pred_check_branch
        %159 = sbr.rel (%p157) target = $region20
      $region19: #{net_forward.3} parent=5 // pred_region
        // Predicated region
        $region21: #{net_forward.3} parent=19 // pred_check
          %p160 = pneg %p73
        $region22: #{net_forward.3} parent=19 // pred_check_branch
          %162 = sbr.rel (%p160) target = $region24
        $region23: #{net_forward.3} parent=19 // pred_region
          %s163 = sand.u32 %s63, 1
          %s164 = scalar_lea.sflag [#allocation3], %s163
          %s165 = sand.u32 %s63, 1
          %s166 = smul.addr %s165, 3584
          %s167 = scalar_lea.vmem [#allocation2], %s166
          %s168 = smul.u32 8, %s23
          %s170 = ssub.s32 57344, 57344
          %171 = vsyncadd %s164, %s170
          %s172 = smul.addr %s168, 64
          %s173 = scalar_lea.hbm %s1, %s172
          %s174 = sshll.u32 %s167, 4
          %s175 = int_to_ptr.vmem [resolvable:$true] %s174
          %180 = dma.hbm_to_vmem [thread:$0]  %s173, 57344, %s175, %s164, 1024, 512, 32
        $region24: #{net_forward.3} parent=19 // pred_fallthru
          _
        // Predicated region
        $region25: #{net_forward.3} parent=19 // pred_check
          %p181 = pneg %p99
        $region26: #{net_forward.3} parent=19 // pred_check_branch
          %183 = sbr.rel (%p181) target = $region28
        $region27: #{net_forward.3} parent=19 // pred_region
          %s184 = sand.u32 %s89, 1
          %s185 = scalar_lea.sflag [#allocation5], %s184
          %s186 = sand.u32 %s89, 1
          %s187 = smul.addr %s186, 8
          %s188 = scalar_lea.vmem [#allocation4], %s187
          %s189 = smul.u32 8, %s23
          %s191 = ssub.s32 128, 128
          %192 = vsyncadd %s185, %s191
          %s193 = smul.addr %s189, 16
          %s194 = scalar_lea.hbm %s2, %s193
          %s196 = sshll.u32 %s188, 4
          %s197 = int_to_ptr.vmem [resolvable:$true] %s196
          %199 = dma.hbm_to_vmem [thread:$0]  %s194, 128, %s197, %s185
        $region28: #{net_forward.3} parent=19 // pred_fallthru
          _
      $region20: #{net_forward.3} parent=5 // pred_fallthru
        _
      %p200 = scmp.le.s32.totalorder 1, %s15
      %p201 = scmp.lt.s32.totalorder %s15, 3
      %p202 = pnand %p200, %p201
      %p203 = pneg %p202
      // Predicated region
      $region29: #{net_forward.3} parent=5 // pred_check
        _
      $region30: #{net_forward.3} parent=5 // pred_check_branch
        %205 = sbr.rel (%p202) target = $region32
      $region31: #{net_forward.3} parent=5 // pred_region
        %s206 = ssub.s32 %s15, 1
        %s207 = sand.u32 %s66, 1
        %s208 = scalar_lea.sflag [#allocation3], %s207
        %s209 = sand.u32 %s66, 1
        %s210 = smul.addr %s209, 3584
        %s211 = scalar_lea.vmem [#allocation2], %s210
        // Predicated region
        $region33: #{net_forward.3} parent=31 // pred_check
          %p212 = pneg %p79
        $region34: #{net_forward.3} parent=31 // pred_check_branch
          %214 = sbr.rel (%p212) target = $region36
        $region35: #{net_forward.3} parent=31 // pred_region
          %215 = dma.done %s208, 57344
        $region36: #{net_forward.3} parent=31 // pred_fallthru
          _
        %s216 = sand.u32 %s92, 1
        %s217 = scalar_lea.sflag [#allocation5], %s216
        %s218 = sand.u32 %s92, 1
        %s219 = smul.addr %s218, 8
        %s220 = scalar_lea.vmem [#allocation4], %s219
        // Predicated region
        $region37: #{net_forward.3} parent=31 // pred_check
          %p221 = pneg %p105
        $region38: #{net_forward.3} parent=31 // pred_check_branch
          %223 = sbr.rel (%p221) target = $region40
        $region39: #{net_forward.3} parent=31 // pred_region
          %224 = dma.done %s217, 128
        $region40: #{net_forward.3} parent=31 // pred_fallthru
          _
        %p225 = scmp.lt.s32.totalorder %s24, 0
        %s226 = scalar_select %p225, %s24, 0
        %s227 = smul.addr %s226, 7
        %s228 = smul.addr %s227, 8
        %s229 = scalar_lea.vmem %s0, %s228
        %p230 = pneg %p53
        %p231 = pneg %p50
        %s232 = sand.u32 %s66, 1
        %s233 = scalar_lea.sflag [#allocation3], %s232
        %s234 = sand.u32 %s66, 1
        %s235 = smul.addr %s234, 3584
        %s236 = scalar_lea.vmem [#allocation2], %s235
        %p237 = pneg %p79
        %p238 = pneg %p76
        %s239 = sand.u32 %s92, 1
        %s240 = scalar_lea.sflag [#allocation5], %s239
        %s241 = sand.u32 %s92, 1
        %s242 = smul.addr %s241, 8
        %s243 = scalar_lea.vmem [#allocation4], %s242
        %p244 = pneg %p105
        %p245 = pneg %p102
        %p246 = pneg %p133
        %p247 = pneg %p130
        %s248 = smul.u32 8, %s25
        %p249 = scmp.lt.s32.totalorder %s24, 0
        %s250 = scalar_select %p249, %s24, 0
        %p251 = scmp.lt.s32.totalorder %s248, 15
        %s252 = scalar_select %p251, %s248, 15
        %s253 = smul.addr %s250, 16
        %s254 = sadd.s32 %s252, %s253
        %s255 = smul.addr %s254, 4
        %s256 = scalar_lea.vmem %s3, %s255
        %p257 = scmp.lt.s32.totalorder %s24, 0
        %s258 = scalar_select %p257, %s24, 0
        %s259 = smul.addr %s258, 7
        %s260 = smul.addr %s259, 8
        %s261 = scalar_lea.vmem %s0, %s260
        %s262 = smul.u32 8, %s25
        %s263 = smul.u32 8, %s25
        %s264 = smul.u32 8, %s25
        %p265 = scmp.lt.s32.totalorder %s24, 0
        %s266 = scalar_select %p265, %s24, 0
        %p267 = scmp.lt.s32.totalorder %s264, 15
        %s268 = scalar_select %p267, %s264, 15
        %s269 = smul.addr %s266, 16
        %s270 = sadd.s32 %s268, %s269
        %s271 = smul.addr %s270, 4
        %s272 = scalar_lea.vmem %s3, %s271
        %s273 = smul.u32 8, %s25
        %v275 = vld [vmem:[%s261] sm:$0xff]
        %v276 = vld [vmem:[%s261 + $0x8] sm:$0xff]
        %v277 = vld [vmem:[%s261 + $0x10] sm:$0xff]
        %v278 = vld [vmem:[%s261 + $0x18] sm:$0xff]
        %v279 = vld [vmem:[%s261 + $0x20] sm:$0xff]
        %v280 = vld [vmem:[%s261 + $0x28] sm:$0xff]
        %v281 = vld [vmem:[%s261 + $0x30] sm:$0xff]
        %v282 = vpack.c.bf16 %v275, %v275
        %v283 = vpack.c.bf16 %v276, %v276
        %v284 = vpack.c.bf16 %v277, %v277
        %v285 = vpack.c.bf16 %v278, %v278
        %v286 = vpack.c.bf16 %v279, %v279
        %v287 = vpack.c.bf16 %v280, %v280
        %v288 = vpack.c.bf16 %v281, %v281
        %v289 = vld [vmem:[%s211] sm:$0xff]
        %v290 = vld [vmem:[%s211 + $0x8] sm:$0xff]
        %v291 = vld [vmem:[%s211 + $0x10] sm:$0xff]
        %v292 = vld [vmem:[%s211 + $0x18] sm:$0xff]
        %v293 = vld [vmem:[%s211 + $0x20] sm:$0xff]
        %v294 = vld [vmem:[%s211 + $0x28] sm:$0xff]
        %v295 = vld [vmem:[%s211 + $0x30] sm:$0xff]
        %v296 = vld [vmem:[%s211 + $0x38] sm:$0xff]
        %v297 = vld [vmem:[%s211 + $0x40] sm:$0xff]
        %v298 = vld [vmem:[%s211 + $0x48] sm:$0xff]
        %v299 = vld [vmem:[%s211 + $0x50] sm:$0xff]
        %v300 = vld [vmem:[%s211 + $0x58] sm:$0xff]
        %v301 = vld [vmem:[%s211 + $0x60] sm:$0xff]
        %v302 = vld [vmem:[%s211 + $0x68] sm:$0xff]
        %v303 = vld [vmem:[%s211 + $0x70] sm:$0xff]
        %v304 = vld [vmem:[%s211 + $0x78] sm:$0xff]
        %v305 = vld [vmem:[%s211 + $0x80] sm:$0xff]
        %v306 = vld [vmem:[%s211 + $0x88] sm:$0xff]
        %v307 = vld [vmem:[%s211 + $0x90] sm:$0xff]
        %v308 = vld [vmem:[%s211 + $0x98] sm:$0xff]
        %v309 = vld [vmem:[%s211 + $0xa0] sm:$0xff]
        %v310 = vld [vmem:[%s211 + $0xa8] sm:$0xff]
        %v311 = vld [vmem:[%s211 + $0xb0] sm:$0xff]
        %v312 = vld [vmem:[%s211 + $0xb8] sm:$0xff]
        %v313 = vld [vmem:[%s211 + $0xc0] sm:$0xff]
        %v314 = vld [vmem:[%s211 + $0xc8] sm:$0xff]
        %v315 = vld [vmem:[%s211 + $0xd0] sm:$0xff]
        %v316 = vld [vmem:[%s211 + $0xd8] sm:$0xff]
        %v317 = vld [vmem:[%s211 + $0xe0] sm:$0xff]
        %v318 = vld [vmem:[%s211 + $0xe8] sm:$0xff]
        %v319 = vld [vmem:[%s211 + $0xf0] sm:$0xff]
        %v320 = vld [vmem:[%s211 + $0xf8] sm:$0xff]
        %v321 = vld [vmem:[%s211 + $0x100] sm:$0xff]
        %v322 = vld [vmem:[%s211 + $0x108] sm:$0xff]
        %v323 = vld [vmem:[%s211 + $0x110] sm:$0xff]
        %v324 = vld [vmem:[%s211 + $0x118] sm:$0xff]
        %v325 = vld [vmem:[%s211 + $0x120] sm:$0xff]
        %v326 = vld [vmem:[%s211 + $0x128] sm:$0xff]
        %v327 = vld [vmem:[%s211 + $0x130] sm:$0xff]
        %v328 = vld [vmem:[%s211 + $0x138] sm:$0xff]
        %v329 = vld [vmem:[%s211 + $0x140] sm:$0xff]
        %v330 = vld [vmem:[%s211 + $0x148] sm:$0xff]
        %v331 = vld [vmem:[%s211 + $0x150] sm:$0xff]
        %v332 = vld [vmem:[%s211 + $0x158] sm:$0xff]
        %v333 = vld [vmem:[%s211 + $0x160] sm:$0xff]
        %v334 = vld [vmem:[%s211 + $0x168] sm:$0xff]
        %v335 = vld [vmem:[%s211 + $0x170] sm:$0xff]
        %v336 = vld [vmem:[%s211 + $0x178] sm:$0xff]
        %v337 = vld [vmem:[%s211 + $0x180] sm:$0xff]
        %v338 = vld [vmem:[%s211 + $0x188] sm:$0xff]
        %v339 = vld [vmem:[%s211 + $0x190] sm:$0xff]
        %v340 = vld [vmem:[%s211 + $0x198] sm:$0xff]
        %v341 = vld [vmem:[%s211 + $0x1a0] sm:$0xff]
        %v342 = vld [vmem:[%s211 + $0x1a8] sm:$0xff]
        %v343 = vld [vmem:[%s211 + $0x1b0] sm:$0xff]
        %v344 = vld [vmem:[%s211 + $0x1b8] sm:$0xff]
        %v345 = vld [vmem:[%s211 + $0x1c0] sm:$0xff]
        %v346 = vld [vmem:[%s211 + $0x1c8] sm:$0xff]
        %v347 = vld [vmem:[%s211 + $0x1d0] sm:$0xff]
        %v348 = vld [vmem:[%s211 + $0x1d8] sm:$0xff]
        %v349 = vld [vmem:[%s211 + $0x1e0] sm:$0xff]
        %v350 = vld [vmem:[%s211 + $0x1e8] sm:$0xff]
        %v351 = vld [vmem:[%s211 + $0x1f0] sm:$0xff]
        %v352 = vld [vmem:[%s211 + $0x1f8] sm:$0xff]
        %v353 = vld [vmem:[%s211 + $0x200] sm:$0xff]
        %v354 = vld [vmem:[%s211 + $0x208] sm:$0xff]
        %v355 = vld [vmem:[%s211 + $0x210] sm:$0xff]
        %v356 = vld [vmem:[%s211 + $0x218] sm:$0xff]
        %v357 = vld [vmem:[%s211 + $0x220] sm:$0xff]
        %v358 = vld [vmem:[%s211 + $0x228] sm:$0xff]
        %v359 = vld [vmem:[%s211 + $0x230] sm:$0xff]
        %v360 = vld [vmem:[%s211 + $0x238] sm:$0xff]
        %v361 = vld [vmem:[%s211 + $0x240] sm:$0xff]
        %v362 = vld [vmem:[%s211 + $0x248] sm:$0xff]
        %v363 = vld [vmem:[%s211 + $0x250] sm:$0xff]
        %v364 = vld [vmem:[%s211 + $0x258] sm:$0xff]
        %v365 = vld [vmem:[%s211 + $0x260] sm:$0xff]
        %v366 = vld [vmem:[%s211 + $0x268] sm:$0xff]
        %v367 = vld [vmem:[%s211 + $0x270] sm:$0xff]
        %v368 = vld [vmem:[%s211 + $0x278] sm:$0xff]
        %v369 = vld [vmem:[%s211 + $0x280] sm:$0xff]
        %v370 = vld [vmem:[%s211 + $0x288] sm:$0xff]
        %v371 = vld [vmem:[%s211 + $0x290] sm:$0xff]
        %v372 = vld [vmem:[%s211 + $0x298] sm:$0xff]
        %v373 = vld [vmem:[%s211 + $0x2a0] sm:$0xff]
        %v374 = vld [vmem:[%s211 + $0x2a8] sm:$0xff]
        %v375 = vld [vmem:[%s211 + $0x2b0] sm:$0xff]
        %v376 = vld [vmem:[%s211 + $0x2b8] sm:$0xff]
        %v377 = vld [vmem:[%s211 + $0x2c0] sm:$0xff]
        %v378 = vld [vmem:[%s211 + $0x2c8] sm:$0xff]
        %v379 = vld [vmem:[%s211 + $0x2d0] sm:$0xff]
        %v380 = vld [vmem:[%s211 + $0x2d8] sm:$0xff]
        %v381 = vld [vmem:[%s211 + $0x2e0] sm:$0xff]
        %v382 = vld [vmem:[%s211 + $0x2e8] sm:$0xff]
        %v383 = vld [vmem:[%s211 + $0x2f0] sm:$0xff]
        %v384 = vld [vmem:[%s211 + $0x2f8] sm:$0xff]
        %v385 = vld [vmem:[%s211 + $0x300] sm:$0xff]
        %v386 = vld [vmem:[%s211 + $0x308] sm:$0xff]
        %v387 = vld [vmem:[%s211 + $0x310] sm:$0xff]
        %v388 = vld [vmem:[%s211 + $0x318] sm:$0xff]
        %v389 = vld [vmem:[%s211 + $0x320] sm:$0xff]
        %v390 = vld [vmem:[%s211 + $0x328] sm:$0xff]
        %v391 = vld [vmem:[%s211 + $0x330] sm:$0xff]
        %v392 = vld [vmem:[%s211 + $0x338] sm:$0xff]
        %v393 = vld [vmem:[%s211 + $0x340] sm:$0xff]
        %v394 = vld [vmem:[%s211 + $0x348] sm:$0xff]
        %v395 = vld [vmem:[%s211 + $0x350] sm:$0xff]
        %v396 = vld [vmem:[%s211 + $0x358] sm:$0xff]
        %v397 = vld [vmem:[%s211 + $0x360] sm:$0xff]
        %v398 = vld [vmem:[%s211 + $0x368] sm:$0xff]
        %v399 = vld [vmem:[%s211 + $0x370] sm:$0xff]
        %v400 = vld [vmem:[%s211 + $0x378] sm:$0xff]
        %v401 = vld [vmem:[%s211 + $0x380] sm:$0xff]
        %v402 = vld [vmem:[%s211 + $0x388] sm:$0xff]
        %v403 = vld [vmem:[%s211 + $0x390] sm:$0xff]
        %v404 = vld [vmem:[%s211 + $0x398] sm:$0xff]
        %v405 = vld [vmem:[%s211 + $0x3a0] sm:$0xff]
        %v406 = vld [vmem:[%s211 + $0x3a8] sm:$0xff]
        %v407 = vld [vmem:[%s211 + $0x3b0] sm:$0xff]
        %v408 = vld [vmem:[%s211 + $0x3b8] sm:$0xff]
        %v409 = vld [vmem:[%s211 + $0x3c0] sm:$0xff]
        %v410 = vld [vmem:[%s211 + $0x3c8] sm:$0xff]
        %v411 = vld [vmem:[%s211 + $0x3d0] sm:$0xff]
        %v412 = vld [vmem:[%s211 + $0x3d8] sm:$0xff]
        %v413 = vld [vmem:[%s211 + $0x3e0] sm:$0xff]
        %v414 = vld [vmem:[%s211 + $0x3e8] sm:$0xff]
        %v415 = vld [vmem:[%s211 + $0x3f0] sm:$0xff]
        %v416 = vld [vmem:[%s211 + $0x3f8] sm:$0xff]
        %v417 = vld [vmem:[%s211 + $0x400] sm:$0xff]
        %v418 = vld [vmem:[%s211 + $0x408] sm:$0xff]
        %v419 = vld [vmem:[%s211 + $0x410] sm:$0xff]
        %v420 = vld [vmem:[%s211 + $0x418] sm:$0xff]
        %v421 = vld [vmem:[%s211 + $0x420] sm:$0xff]
        %v422 = vld [vmem:[%s211 + $0x428] sm:$0xff]
        %v423 = vld [vmem:[%s211 + $0x430] sm:$0xff]
        %v424 = vld [vmem:[%s211 + $0x438] sm:$0xff]
        %v425 = vld [vmem:[%s211 + $0x440] sm:$0xff]
        %v426 = vld [vmem:[%s211 + $0x448] sm:$0xff]
        %v427 = vld [vmem:[%s211 + $0x450] sm:$0xff]
        %v428 = vld [vmem:[%s211 + $0x458] sm:$0xff]
        %v429 = vld [vmem:[%s211 + $0x460] sm:$0xff]
        %v430 = vld [vmem:[%s211 + $0x468] sm:$0xff]
        %v431 = vld [vmem:[%s211 + $0x470] sm:$0xff]
        %v432 = vld [vmem:[%s211 + $0x478] sm:$0xff]
        %v433 = vld [vmem:[%s211 + $0x480] sm:$0xff]
        %v434 = vld [vmem:[%s211 + $0x488] sm:$0xff]
        %v435 = vld [vmem:[%s211 + $0x490] sm:$0xff]
        %v436 = vld [vmem:[%s211 + $0x498] sm:$0xff]
        %v437 = vld [vmem:[%s211 + $0x4a0] sm:$0xff]
        %v438 = vld [vmem:[%s211 + $0x4a8] sm:$0xff]
        %v439 = vld [vmem:[%s211 + $0x4b0] sm:$0xff]
        %v440 = vld [vmem:[%s211 + $0x4b8] sm:$0xff]
        %v441 = vld [vmem:[%s211 + $0x4c0] sm:$0xff]
        %v442 = vld [vmem:[%s211 + $0x4c8] sm:$0xff]
        %v443 = vld [vmem:[%s211 + $0x4d0] sm:$0xff]
        %v444 = vld [vmem:[%s211 + $0x4d8] sm:$0xff]
        %v445 = vld [vmem:[%s211 + $0x4e0] sm:$0xff]
        %v446 = vld [vmem:[%s211 + $0x4e8] sm:$0xff]
        %v447 = vld [vmem:[%s211 + $0x4f0] sm:$0xff]
        %v448 = vld [vmem:[%s211 + $0x4f8] sm:$0xff]
        %v449 = vld [vmem:[%s211 + $0x500] sm:$0xff]
        %v450 = vld [vmem:[%s211 + $0x508] sm:$0xff]
        %v451 = vld [vmem:[%s211 + $0x510] sm:$0xff]
        %v452 = vld [vmem:[%s211 + $0x518] sm:$0xff]
        %v453 = vld [vmem:[%s211 + $0x520] sm:$0xff]
        %v454 = vld [vmem:[%s211 + $0x528] sm:$0xff]
        %v455 = vld [vmem:[%s211 + $0x530] sm:$0xff]
        %v456 = vld [vmem:[%s211 + $0x538] sm:$0xff]
        %v457 = vld [vmem:[%s211 + $0x540] sm:$0xff]
        %v458 = vld [vmem:[%s211 + $0x548] sm:$0xff]
        %v459 = vld [vmem:[%s211 + $0x550] sm:$0xff]
        %v460 = vld [vmem:[%s211 + $0x558] sm:$0xff]
        %v461 = vld [vmem:[%s211 + $0x560] sm:$0xff]
        %v462 = vld [vmem:[%s211 + $0x568] sm:$0xff]
        %v463 = vld [vmem:[%s211 + $0x570] sm:$0xff]
        %v464 = vld [vmem:[%s211 + $0x578] sm:$0xff]
        %v465 = vld [vmem:[%s211 + $0x580] sm:$0xff]
        %v466 = vld [vmem:[%s211 + $0x588] sm:$0xff]
        %v467 = vld [vmem:[%s211 + $0x590] sm:$0xff]
        %v468 = vld [vmem:[%s211 + $0x598] sm:$0xff]
        %v469 = vld [vmem:[%s211 + $0x5a0] sm:$0xff]
        %v470 = vld [vmem:[%s211 + $0x5a8] sm:$0xff]
        %v471 = vld [vmem:[%s211 + $0x5b0] sm:$0xff]
        %v472 = vld [vmem:[%s211 + $0x5b8] sm:$0xff]
        %v473 = vld [vmem:[%s211 + $0x5c0] sm:$0xff]
        %v474 = vld [vmem:[%s211 + $0x5c8] sm:$0xff]
        %v475 = vld [vmem:[%s211 + $0x5d0] sm:$0xff]
        %v476 = vld [vmem:[%s211 + $0x5d8] sm:$0xff]
        %v477 = vld [vmem:[%s211 + $0x5e0] sm:$0xff]
        %v478 = vld [vmem:[%s211 + $0x5e8] sm:$0xff]
        %v479 = vld [vmem:[%s211 + $0x5f0] sm:$0xff]
        %v480 = vld [vmem:[%s211 + $0x5f8] sm:$0xff]
        %v481 = vld [vmem:[%s211 + $0x600] sm:$0xff]
        %v482 = vld [vmem:[%s211 + $0x608] sm:$0xff]
        %v483 = vld [vmem:[%s211 + $0x610] sm:$0xff]
        %v484 = vld [vmem:[%s211 + $0x618] sm:$0xff]
        %v485 = vld [vmem:[%s211 + $0x620] sm:$0xff]
        %v486 = vld [vmem:[%s211 + $0x628] sm:$0xff]
        %v487 = vld [vmem:[%s211 + $0x630] sm:$0xff]
        %v488 = vld [vmem:[%s211 + $0x638] sm:$0xff]
        %v489 = vld [vmem:[%s211 + $0x640] sm:$0xff]
        %v490 = vld [vmem:[%s211 + $0x648] sm:$0xff]
        %v491 = vld [vmem:[%s211 + $0x650] sm:$0xff]
        %v492 = vld [vmem:[%s211 + $0x658] sm:$0xff]
        %v493 = vld [vmem:[%s211 + $0x660] sm:$0xff]
        %v494 = vld [vmem:[%s211 + $0x668] sm:$0xff]
        %v495 = vld [vmem:[%s211 + $0x670] sm:$0xff]
        %v496 = vld [vmem:[%s211 + $0x678] sm:$0xff]
        %v497 = vld [vmem:[%s211 + $0x680] sm:$0xff]
        %v498 = vld [vmem:[%s211 + $0x688] sm:$0xff]
        %v499 = vld [vmem:[%s211 + $0x690] sm:$0xff]
        %v500 = vld [vmem:[%s211 + $0x698] sm:$0xff]
        %v501 = vld [vmem:[%s211 + $0x6a0] sm:$0xff]
        %v502 = vld [vmem:[%s211 + $0x6a8] sm:$0xff]
        %v503 = vld [vmem:[%s211 + $0x6b0] sm:$0xff]
        %v504 = vld [vmem:[%s211 + $0x6b8] sm:$0xff]
        %v505 = vld [vmem:[%s211 + $0x6c0] sm:$0xff]
        %v506 = vld [vmem:[%s211 + $0x6c8] sm:$0xff]
        %v507 = vld [vmem:[%s211 + $0x6d0] sm:$0xff]
        %v508 = vld [vmem:[%s211 + $0x6d8] sm:$0xff]
        %v509 = vld [vmem:[%s211 + $0x6e0] sm:$0xff]
        %v510 = vld [vmem:[%s211 + $0x6e8] sm:$0xff]
        %v511 = vld [vmem:[%s211 + $0x6f0] sm:$0xff]
        %v512 = vld [vmem:[%s211 + $0x6f8] sm:$0xff]
        %v513 = vld [vmem:[%s211 + $0x700] sm:$0xff]
        %v514 = vld [vmem:[%s211 + $0x708] sm:$0xff]
        %v515 = vld [vmem:[%s211 + $0x710] sm:$0xff]
        %v516 = vld [vmem:[%s211 + $0x718] sm:$0xff]
        %v517 = vld [vmem:[%s211 + $0x720] sm:$0xff]
        %v518 = vld [vmem:[%s211 + $0x728] sm:$0xff]
        %v519 = vld [vmem:[%s211 + $0x730] sm:$0xff]
        %v520 = vld [vmem:[%s211 + $0x738] sm:$0xff]
        %v521 = vld [vmem:[%s211 + $0x740] sm:$0xff]
        %v522 = vld [vmem:[%s211 + $0x748] sm:$0xff]
        %v523 = vld [vmem:[%s211 + $0x750] sm:$0xff]
        %v524 = vld [vmem:[%s211 + $0x758] sm:$0xff]
        %v525 = vld [vmem:[%s211 + $0x760] sm:$0xff]
        %v526 = vld [vmem:[%s211 + $0x768] sm:$0xff]
        %v527 = vld [vmem:[%s211 + $0x770] sm:$0xff]
        %v528 = vld [vmem:[%s211 + $0x778] sm:$0xff]
        %v529 = vld [vmem:[%s211 + $0x780] sm:$0xff]
        %v530 = vld [vmem:[%s211 + $0x788] sm:$0xff]
        %v531 = vld [vmem:[%s211 + $0x790] sm:$0xff]
        %v532 = vld [vmem:[%s211 + $0x798] sm:$0xff]
        %v533 = vld [vmem:[%s211 + $0x7a0] sm:$0xff]
        %v534 = vld [vmem:[%s211 + $0x7a8] sm:$0xff]
        %v535 = vld [vmem:[%s211 + $0x7b0] sm:$0xff]
        %v536 = vld [vmem:[%s211 + $0x7b8] sm:$0xff]
        %v537 = vld [vmem:[%s211 + $0x7c0] sm:$0xff]
        %v538 = vld [vmem:[%s211 + $0x7c8] sm:$0xff]
        %v539 = vld [vmem:[%s211 + $0x7d0] sm:$0xff]
        %v540 = vld [vmem:[%s211 + $0x7d8] sm:$0xff]
        %v541 = vld [vmem:[%s211 + $0x7e0] sm:$0xff]
        %v542 = vld [vmem:[%s211 + $0x7e8] sm:$0xff]
        %v543 = vld [vmem:[%s211 + $0x7f0] sm:$0xff]
        %v544 = vld [vmem:[%s211 + $0x7f8] sm:$0xff]
        %v545 = vld [vmem:[%s211 + $0x800] sm:$0xff]
        %v546 = vld [vmem:[%s211 + $0x808] sm:$0xff]
        %v547 = vld [vmem:[%s211 + $0x810] sm:$0xff]
        %v548 = vld [vmem:[%s211 + $0x818] sm:$0xff]
        %v549 = vld [vmem:[%s211 + $0x820] sm:$0xff]
        %v550 = vld [vmem:[%s211 + $0x828] sm:$0xff]
        %v551 = vld [vmem:[%s211 + $0x830] sm:$0xff]
        %v552 = vld [vmem:[%s211 + $0x838] sm:$0xff]
        %v553 = vld [vmem:[%s211 + $0x840] sm:$0xff]
        %v554 = vld [vmem:[%s211 + $0x848] sm:$0xff]
        %v555 = vld [vmem:[%s211 + $0x850] sm:$0xff]
        %v556 = vld [vmem:[%s211 + $0x858] sm:$0xff]
        %v557 = vld [vmem:[%s211 + $0x860] sm:$0xff]
        %v558 = vld [vmem:[%s211 + $0x868] sm:$0xff]
        %v559 = vld [vmem:[%s211 + $0x870] sm:$0xff]
        %v560 = vld [vmem:[%s211 + $0x878] sm:$0xff]
        %v561 = vld [vmem:[%s211 + $0x880] sm:$0xff]
        %v562 = vld [vmem:[%s211 + $0x888] sm:$0xff]
        %v563 = vld [vmem:[%s211 + $0x890] sm:$0xff]
        %v564 = vld [vmem:[%s211 + $0x898] sm:$0xff]
        %v565 = vld [vmem:[%s211 + $0x8a0] sm:$0xff]
        %v566 = vld [vmem:[%s211 + $0x8a8] sm:$0xff]
        %v567 = vld [vmem:[%s211 + $0x8b0] sm:$0xff]
        %v568 = vld [vmem:[%s211 + $0x8b8] sm:$0xff]
        %v569 = vld [vmem:[%s211 + $0x8c0] sm:$0xff]
        %v570 = vld [vmem:[%s211 + $0x8c8] sm:$0xff]
        %v571 = vld [vmem:[%s211 + $0x8d0] sm:$0xff]
        %v572 = vld [vmem:[%s211 + $0x8d8] sm:$0xff]
        %v573 = vld [vmem:[%s211 + $0x8e0] sm:$0xff]
        %v574 = vld [vmem:[%s211 + $0x8e8] sm:$0xff]
        %v575 = vld [vmem:[%s211 + $0x8f0] sm:$0xff]
        %v576 = vld [vmem:[%s211 + $0x8f8] sm:$0xff]
        %v577 = vld [vmem:[%s211 + $0x900] sm:$0xff]
        %v578 = vld [vmem:[%s211 + $0x908] sm:$0xff]
        %v579 = vld [vmem:[%s211 + $0x910] sm:$0xff]
        %v580 = vld [vmem:[%s211 + $0x918] sm:$0xff]
        %v581 = vld [vmem:[%s211 + $0x920] sm:$0xff]
        %v582 = vld [vmem:[%s211 + $0x928] sm:$0xff]
        %v583 = vld [vmem:[%s211 + $0x930] sm:$0xff]
        %v584 = vld [vmem:[%s211 + $0x938] sm:$0xff]
        %v585 = vld [vmem:[%s211 + $0x940] sm:$0xff]
        %v586 = vld [vmem:[%s211 + $0x948] sm:$0xff]
        %v587 = vld [vmem:[%s211 + $0x950] sm:$0xff]
        %v588 = vld [vmem:[%s211 + $0x958] sm:$0xff]
        %v589 = vld [vmem:[%s211 + $0x960] sm:$0xff]
        %v590 = vld [vmem:[%s211 + $0x968] sm:$0xff]
        %v591 = vld [vmem:[%s211 + $0x970] sm:$0xff]
        %v592 = vld [vmem:[%s211 + $0x978] sm:$0xff]
        %v593 = vld [vmem:[%s211 + $0x980] sm:$0xff]
        %v594 = vld [vmem:[%s211 + $0x988] sm:$0xff]
        %v595 = vld [vmem:[%s211 + $0x990] sm:$0xff]
        %v596 = vld [vmem:[%s211 + $0x998] sm:$0xff]
        %v597 = vld [vmem:[%s211 + $0x9a0] sm:$0xff]
        %v598 = vld [vmem:[%s211 + $0x9a8] sm:$0xff]
        %v599 = vld [vmem:[%s211 + $0x9b0] sm:$0xff]
        %v600 = vld [vmem:[%s211 + $0x9b8] sm:$0xff]
        %v601 = vld [vmem:[%s211 + $0x9c0] sm:$0xff]
        %v602 = vld [vmem:[%s211 + $0x9c8] sm:$0xff]
        %v603 = vld [vmem:[%s211 + $0x9d0] sm:$0xff]
        %v604 = vld [vmem:[%s211 + $0x9d8] sm:$0xff]
        %v605 = vld [vmem:[%s211 + $0x9e0] sm:$0xff]
        %v606 = vld [vmem:[%s211 + $0x9e8] sm:$0xff]
        %v607 = vld [vmem:[%s211 + $0x9f0] sm:$0xff]
        %v608 = vld [vmem:[%s211 + $0x9f8] sm:$0xff]
        %v609 = vld [vmem:[%s211 + $0xa00] sm:$0xff]
        %v610 = vld [vmem:[%s211 + $0xa08] sm:$0xff]
        %v611 = vld [vmem:[%s211 + $0xa10] sm:$0xff]
        %v612 = vld [vmem:[%s211 + $0xa18] sm:$0xff]
        %v613 = vld [vmem:[%s211 + $0xa20] sm:$0xff]
        %v614 = vld [vmem:[%s211 + $0xa28] sm:$0xff]
        %v615 = vld [vmem:[%s211 + $0xa30] sm:$0xff]
        %v616 = vld [vmem:[%s211 + $0xa38] sm:$0xff]
        %v617 = vld [vmem:[%s211 + $0xa40] sm:$0xff]
        %v618 = vld [vmem:[%s211 + $0xa48] sm:$0xff]
        %v619 = vld [vmem:[%s211 + $0xa50] sm:$0xff]
        %v620 = vld [vmem:[%s211 + $0xa58] sm:$0xff]
        %v621 = vld [vmem:[%s211 + $0xa60] sm:$0xff]
        %v622 = vld [vmem:[%s211 + $0xa68] sm:$0xff]
        %v623 = vld [vmem:[%s211 + $0xa70] sm:$0xff]
        %v624 = vld [vmem:[%s211 + $0xa78] sm:$0xff]
        %v625 = vld [vmem:[%s211 + $0xa80] sm:$0xff]
        %v626 = vld [vmem:[%s211 + $0xa88] sm:$0xff]
        %v627 = vld [vmem:[%s211 + $0xa90] sm:$0xff]
        %v628 = vld [vmem:[%s211 + $0xa98] sm:$0xff]
        %v629 = vld [vmem:[%s211 + $0xaa0] sm:$0xff]
        %v630 = vld [vmem:[%s211 + $0xaa8] sm:$0xff]
        %v631 = vld [vmem:[%s211 + $0xab0] sm:$0xff]
        %v632 = vld [vmem:[%s211 + $0xab8] sm:$0xff]
        %v633 = vld [vmem:[%s211 + $0xac0] sm:$0xff]
        %v634 = vld [vmem:[%s211 + $0xac8] sm:$0xff]
        %v635 = vld [vmem:[%s211 + $0xad0] sm:$0xff]
        %v636 = vld [vmem:[%s211 + $0xad8] sm:$0xff]
        %v637 = vld [vmem:[%s211 + $0xae0] sm:$0xff]
        %v638 = vld [vmem:[%s211 + $0xae8] sm:$0xff]
        %v639 = vld [vmem:[%s211 + $0xaf0] sm:$0xff]
        %v640 = vld [vmem:[%s211 + $0xaf8] sm:$0xff]
        %v641 = vld [vmem:[%s211 + $0xb00] sm:$0xff]
        %v642 = vld [vmem:[%s211 + $0xb08] sm:$0xff]
        %v643 = vld [vmem:[%s211 + $0xb10] sm:$0xff]
        %v644 = vld [vmem:[%s211 + $0xb18] sm:$0xff]
        %v645 = vld [vmem:[%s211 + $0xb20] sm:$0xff]
        %v646 = vld [vmem:[%s211 + $0xb28] sm:$0xff]
        %v647 = vld [vmem:[%s211 + $0xb30] sm:$0xff]
        %v648 = vld [vmem:[%s211 + $0xb38] sm:$0xff]
        %v649 = vld [vmem:[%s211 + $0xb40] sm:$0xff]
        %v650 = vld [vmem:[%s211 + $0xb48] sm:$0xff]
        %v651 = vld [vmem:[%s211 + $0xb50] sm:$0xff]
        %v652 = vld [vmem:[%s211 + $0xb58] sm:$0xff]
        %v653 = vld [vmem:[%s211 + $0xb60] sm:$0xff]
        %v654 = vld [vmem:[%s211 + $0xb68] sm:$0xff]
        %v655 = vld [vmem:[%s211 + $0xb70] sm:$0xff]
        %v656 = vld [vmem:[%s211 + $0xb78] sm:$0xff]
        %v657 = vld [vmem:[%s211 + $0xb80] sm:$0xff]
        %v658 = vld [vmem:[%s211 + $0xb88] sm:$0xff]
        %v659 = vld [vmem:[%s211 + $0xb90] sm:$0xff]
        %v660 = vld [vmem:[%s211 + $0xb98] sm:$0xff]
        %v661 = vld [vmem:[%s211 + $0xba0] sm:$0xff]
        %v662 = vld [vmem:[%s211 + $0xba8] sm:$0xff]
        %v663 = vld [vmem:[%s211 + $0xbb0] sm:$0xff]
        %v664 = vld [vmem:[%s211 + $0xbb8] sm:$0xff]
        %v665 = vld [vmem:[%s211 + $0xbc0] sm:$0xff]
        %v666 = vld [vmem:[%s211 + $0xbc8] sm:$0xff]
        %v667 = vld [vmem:[%s211 + $0xbd0] sm:$0xff]
        %v668 = vld [vmem:[%s211 + $0xbd8] sm:$0xff]
        %v669 = vld [vmem:[%s211 + $0xbe0] sm:$0xff]
        %v670 = vld [vmem:[%s211 + $0xbe8] sm:$0xff]
        %v671 = vld [vmem:[%s211 + $0xbf0] sm:$0xff]
        %v672 = vld [vmem:[%s211 + $0xbf8] sm:$0xff]
        %v673 = vld [vmem:[%s211 + $0xc00] sm:$0xff]
        %v674 = vld [vmem:[%s211 + $0xc08] sm:$0xff]
        %v675 = vld [vmem:[%s211 + $0xc10] sm:$0xff]
        %v676 = vld [vmem:[%s211 + $0xc18] sm:$0xff]
        %v677 = vld [vmem:[%s211 + $0xc20] sm:$0xff]
        %v678 = vld [vmem:[%s211 + $0xc28] sm:$0xff]
        %v679 = vld [vmem:[%s211 + $0xc30] sm:$0xff]
        %v680 = vld [vmem:[%s211 + $0xc38] sm:$0xff]
        %v681 = vld [vmem:[%s211 + $0xc40] sm:$0xff]
        %v682 = vld [vmem:[%s211 + $0xc48] sm:$0xff]
        %v683 = vld [vmem:[%s211 + $0xc50] sm:$0xff]
        %v684 = vld [vmem:[%s211 + $0xc58] sm:$0xff]
        %v685 = vld [vmem:[%s211 + $0xc60] sm:$0xff]
        %v686 = vld [vmem:[%s211 + $0xc68] sm:$0xff]
        %v687 = vld [vmem:[%s211 + $0xc70] sm:$0xff]
        %v688 = vld [vmem:[%s211 + $0xc78] sm:$0xff]
        %v689 = vld [vmem:[%s211 + $0xc80] sm:$0xff]
        %v690 = vld [vmem:[%s211 + $0xc88] sm:$0xff]
        %v691 = vld [vmem:[%s211 + $0xc90] sm:$0xff]
        %v692 = vld [vmem:[%s211 + $0xc98] sm:$0xff]
        %v693 = vld [vmem:[%s211 + $0xca0] sm:$0xff]
        %v694 = vld [vmem:[%s211 + $0xca8] sm:$0xff]
        %v695 = vld [vmem:[%s211 + $0xcb0] sm:$0xff]
        %v696 = vld [vmem:[%s211 + $0xcb8] sm:$0xff]
        %v697 = vld [vmem:[%s211 + $0xcc0] sm:$0xff]
        %v698 = vld [vmem:[%s211 + $0xcc8] sm:$0xff]
        %v699 = vld [vmem:[%s211 + $0xcd0] sm:$0xff]
        %v700 = vld [vmem:[%s211 + $0xcd8] sm:$0xff]
        %v701 = vld [vmem:[%s211 + $0xce0] sm:$0xff]
        %v702 = vld [vmem:[%s211 + $0xce8] sm:$0xff]
        %v703 = vld [vmem:[%s211 + $0xcf0] sm:$0xff]
        %v704 = vld [vmem:[%s211 + $0xcf8] sm:$0xff]
        %v705 = vld [vmem:[%s211 + $0xd00] sm:$0xff]
        %v706 = vld [vmem:[%s211 + $0xd08] sm:$0xff]
        %v707 = vld [vmem:[%s211 + $0xd10] sm:$0xff]
        %v708 = vld [vmem:[%s211 + $0xd18] sm:$0xff]
        %v709 = vld [vmem:[%s211 + $0xd20] sm:$0xff]
        %v710 = vld [vmem:[%s211 + $0xd28] sm:$0xff]
        %v711 = vld [vmem:[%s211 + $0xd30] sm:$0xff]
        %v712 = vld [vmem:[%s211 + $0xd38] sm:$0xff]
        %v713 = vld [vmem:[%s211 + $0xd40] sm:$0xff]
        %v714 = vld [vmem:[%s211 + $0xd48] sm:$0xff]
        %v715 = vld [vmem:[%s211 + $0xd50] sm:$0xff]
        %v716 = vld [vmem:[%s211 + $0xd58] sm:$0xff]
        %v717 = vld [vmem:[%s211 + $0xd60] sm:$0xff]
        %v718 = vld [vmem:[%s211 + $0xd68] sm:$0xff]
        %v719 = vld [vmem:[%s211 + $0xd70] sm:$0xff]
        %v720 = vld [vmem:[%s211 + $0xd78] sm:$0xff]
        %v721 = vld [vmem:[%s211 + $0xd80] sm:$0xff]
        %v722 = vld [vmem:[%s211 + $0xd88] sm:$0xff]
        %v723 = vld [vmem:[%s211 + $0xd90] sm:$0xff]
        %v724 = vld [vmem:[%s211 + $0xd98] sm:$0xff]
        %v725 = vld [vmem:[%s211 + $0xda0] sm:$0xff]
        %v726 = vld [vmem:[%s211 + $0xda8] sm:$0xff]
        %v727 = vld [vmem:[%s211 + $0xdb0] sm:$0xff]
        %v728 = vld [vmem:[%s211 + $0xdb8] sm:$0xff]
        %v729 = vld [vmem:[%s211 + $0xdc0] sm:$0xff]
        %v730 = vld [vmem:[%s211 + $0xdc8] sm:$0xff]
        %v731 = vld [vmem:[%s211 + $0xdd0] sm:$0xff]
        %v732 = vld [vmem:[%s211 + $0xdd8] sm:$0xff]
        %v733 = vld [vmem:[%s211 + $0xde0] sm:$0xff]
        %v734 = vld [vmem:[%s211 + $0xde8] sm:$0xff]
        %v735 = vld [vmem:[%s211 + $0xdf0] sm:$0xff]
        %v736 = vld [vmem:[%s211 + $0xdf8] sm:$0xff]
        %v737 = vld [vmem:[%s220] sm:$0xff]
        %v739 = vlaneseq
        %v740 = vshrl.u32 %v739, 7
        %v741 = vsub.s32 0, %v740
        %v742 = vrot.slane %v737, %v741
        %v743 = vlaneseq
        %v744 = vshrl.u32 %v743, 7
        %v745 = vsub.s32 1, %v744
        %v746 = vrot.slane %v737, %v745
        %v747 = vlaneseq
        %v748 = vshrl.u32 %v747, 7
        %v749 = vsub.s32 2, %v748
        %v750 = vrot.slane %v737, %v749
        %v751 = vlaneseq
        %v752 = vshrl.u32 %v751, 7
        %v753 = vsub.s32 3, %v752
        %v754 = vrot.slane %v737, %v753
        %v755 = vlaneseq
        %v756 = vshrl.u32 %v755, 7
        %v757 = vsub.s32 4, %v756
        %v758 = vrot.slane %v737, %v757
        %v759 = vlaneseq
        %v760 = vshrl.u32 %v759, 7
        %v761 = vsub.s32 5, %v760
        %v762 = vrot.slane %v737, %v761
        %v763 = vlaneseq
        %v764 = vshrl.u32 %v763, 7
        %v765 = vsub.s32 6, %v764
        %v766 = vrot.slane %v737, %v765
        %v767 = vlaneseq
        %v768 = vshrl.u32 %v767, 7
        %v769 = vsub.s32 7, %v768
        %v770 = vrot.slane %v737, %v769
        %v1227 = vunpack.c.l.b16 %v289
        %v1228 = vunpack.c.h.b16 %v289
        %v1229 = vunpack.c.l.b16 %v290
        %v1230 = vunpack.c.h.b16 %v290
        %v1231 = vunpack.c.l.b16 %v291
        %v1232 = vunpack.c.h.b16 %v291
        %v1233 = vunpack.c.l.b16 %v292
        %v1234 = vunpack.c.h.b16 %v292
        %v1235 = vunpack.c.l.b16 %v293
        %v1236 = vunpack.c.h.b16 %v293
        %v1237 = vunpack.c.l.b16 %v294
        %v1238 = vunpack.c.h.b16 %v294
        %v1239 = vunpack.c.l.b16 %v295
        %v1240 = vunpack.c.h.b16 %v295
        %v1241 = vunpack.c.l.b16 %v296
        %v1242 = vunpack.c.h.b16 %v296
        %v1243 = vunpack.c.l.b16 %v297
        %v1244 = vunpack.c.h.b16 %v297
        %v1245 = vunpack.c.l.b16 %v298
        %v1246 = vunpack.c.h.b16 %v298
        %v1247 = vunpack.c.l.b16 %v299
        %v1248 = vunpack.c.h.b16 %v299
        %v1249 = vunpack.c.l.b16 %v300
        %v1250 = vunpack.c.h.b16 %v300
        %v1251 = vunpack.c.l.b16 %v301
        %v1252 = vunpack.c.h.b16 %v301
        %v1253 = vunpack.c.l.b16 %v302
        %v1254 = vunpack.c.h.b16 %v302
        %v1255 = vunpack.c.l.b16 %v303
        %v1256 = vunpack.c.h.b16 %v303
        %v1257 = vunpack.c.l.b16 %v304
        %v1258 = vunpack.c.h.b16 %v304
        %v1259 = vunpack.c.l.b16 %v305
        %v1260 = vunpack.c.h.b16 %v305
        %v1261 = vunpack.c.l.b16 %v306
        %v1262 = vunpack.c.h.b16 %v306
        %v1263 = vunpack.c.l.b16 %v307
        %v1264 = vunpack.c.h.b16 %v307
        %v1265 = vunpack.c.l.b16 %v308
        %v1266 = vunpack.c.h.b16 %v308
        %v1267 = vunpack.c.l.b16 %v309
        %v1268 = vunpack.c.h.b16 %v309
        %v1269 = vunpack.c.l.b16 %v310
        %v1270 = vunpack.c.h.b16 %v310
        %v1271 = vunpack.c.l.b16 %v311
        %v1272 = vunpack.c.h.b16 %v311
        %v1273 = vunpack.c.l.b16 %v312
        %v1274 = vunpack.c.h.b16 %v312
        %v1275 = vunpack.c.l.b16 %v313
        %v1276 = vunpack.c.h.b16 %v313
        %v1277 = vunpack.c.l.b16 %v314
        %v1278 = vunpack.c.h.b16 %v314
        %v1279 = vunpack.c.l.b16 %v315
        %v1280 = vunpack.c.h.b16 %v315
        %v1281 = vunpack.c.l.b16 %v316
        %v1282 = vunpack.c.h.b16 %v316
        %v1283 = vunpack.c.l.b16 %v317
        %v1284 = vunpack.c.h.b16 %v317
        %v1285 = vunpack.c.l.b16 %v318
        %v1286 = vunpack.c.h.b16 %v318
        %v1287 = vunpack.c.l.b16 %v319
        %v1288 = vunpack.c.h.b16 %v319
        %v1289 = vunpack.c.l.b16 %v320
        %v1290 = vunpack.c.h.b16 %v320
        %v1291 = vunpack.c.l.b16 %v321
        %v1292 = vunpack.c.h.b16 %v321
        %v1293 = vunpack.c.l.b16 %v322
        %v1294 = vunpack.c.h.b16 %v322
        %v1295 = vunpack.c.l.b16 %v323
        %v1296 = vunpack.c.h.b16 %v323
        %v1297 = vunpack.c.l.b16 %v324
        %v1298 = vunpack.c.h.b16 %v324
        %v1299 = vunpack.c.l.b16 %v325
        %v1300 = vunpack.c.h.b16 %v325
        %v1301 = vunpack.c.l.b16 %v326
        %v1302 = vunpack.c.h.b16 %v326
        %v1303 = vunpack.c.l.b16 %v327
        %v1304 = vunpack.c.h.b16 %v327
        %v1305 = vunpack.c.l.b16 %v328
        %v1306 = vunpack.c.h.b16 %v328
        %v1307 = vunpack.c.l.b16 %v329
        %v1308 = vunpack.c.h.b16 %v329
        %v1309 = vunpack.c.l.b16 %v330
        %v1310 = vunpack.c.h.b16 %v330
        %v1311 = vunpack.c.l.b16 %v331
        %v1312 = vunpack.c.h.b16 %v331
        %v1313 = vunpack.c.l.b16 %v332
        %v1314 = vunpack.c.h.b16 %v332
        %v1315 = vunpack.c.l.b16 %v333
        %v1316 = vunpack.c.h.b16 %v333
        %v1317 = vunpack.c.l.b16 %v334
        %v1318 = vunpack.c.h.b16 %v334
        %v1319 = vunpack.c.l.b16 %v335
        %v1320 = vunpack.c.h.b16 %v335
        %v1321 = vunpack.c.l.b16 %v336
        %v1322 = vunpack.c.h.b16 %v336
        %v1323 = vunpack.c.l.b16 %v337
        %v1324 = vunpack.c.h.b16 %v337
        %v1325 = vunpack.c.l.b16 %v338
        %v1326 = vunpack.c.h.b16 %v338
        %v1327 = vunpack.c.l.b16 %v339
        %v1328 = vunpack.c.h.b16 %v339
        %v1329 = vunpack.c.l.b16 %v340
        %v1330 = vunpack.c.h.b16 %v340
        %v1331 = vunpack.c.l.b16 %v341
        %v1332 = vunpack.c.h.b16 %v341
        %v1333 = vunpack.c.l.b16 %v342
        %v1334 = vunpack.c.h.b16 %v342
        %v1335 = vunpack.c.l.b16 %v343
        %v1336 = vunpack.c.h.b16 %v343
        %v1337 = vunpack.c.l.b16 %v344
        %v1338 = vunpack.c.h.b16 %v344
        %v1339 = vunpack.c.l.b16 %v345
        %v1340 = vunpack.c.h.b16 %v345
        %v1341 = vunpack.c.l.b16 %v346
        %v1342 = vunpack.c.h.b16 %v346
        %v1343 = vunpack.c.l.b16 %v347
        %v1344 = vunpack.c.h.b16 %v347
        %v1345 = vunpack.c.l.b16 %v348
        %v1346 = vunpack.c.h.b16 %v348
        %v1347 = vunpack.c.l.b16 %v349
        %v1348 = vunpack.c.h.b16 %v349
        %v1349 = vunpack.c.l.b16 %v350
        %v1350 = vunpack.c.h.b16 %v350
        %v1351 = vunpack.c.l.b16 %v351
        %v1352 = vunpack.c.h.b16 %v351
        %v1353 = vunpack.c.l.b16 %v352
        %v1354 = vunpack.c.h.b16 %v352
        %v1355 = vunpack.c.l.b16 %v353
        %v1356 = vunpack.c.h.b16 %v353
        %v1357 = vunpack.c.l.b16 %v354
        %v1358 = vunpack.c.h.b16 %v354
        %v1359 = vunpack.c.l.b16 %v355
        %v1360 = vunpack.c.h.b16 %v355
        %v1361 = vunpack.c.l.b16 %v356
        %v1362 = vunpack.c.h.b16 %v356
        %v1363 = vunpack.c.l.b16 %v357
        %v1364 = vunpack.c.h.b16 %v357
        %v1365 = vunpack.c.l.b16 %v358
        %v1366 = vunpack.c.h.b16 %v358
        %v1367 = vunpack.c.l.b16 %v359
        %v1368 = vunpack.c.h.b16 %v359
        %v1369 = vunpack.c.l.b16 %v360
        %v1370 = vunpack.c.h.b16 %v360
        %v1371 = vunpack.c.l.b16 %v361
        %v1372 = vunpack.c.h.b16 %v361
        %v1373 = vunpack.c.l.b16 %v362
        %v1374 = vunpack.c.h.b16 %v362
        %v1375 = vunpack.c.l.b16 %v363
        %v1376 = vunpack.c.h.b16 %v363
        %v1377 = vunpack.c.l.b16 %v364
        %v1378 = vunpack.c.h.b16 %v364
        %v1379 = vunpack.c.l.b16 %v365
        %v1380 = vunpack.c.h.b16 %v365
        %v1381 = vunpack.c.l.b16 %v366
        %v1382 = vunpack.c.h.b16 %v366
        %v1383 = vunpack.c.l.b16 %v367
        %v1384 = vunpack.c.h.b16 %v367
        %v1385 = vunpack.c.l.b16 %v368
        %v1386 = vunpack.c.h.b16 %v368
        %v1387 = vunpack.c.l.b16 %v369
        %v1388 = vunpack.c.h.b16 %v369
        %v1389 = vunpack.c.l.b16 %v370
        %v1390 = vunpack.c.h.b16 %v370
        %v1391 = vunpack.c.l.b16 %v371
        %v1392 = vunpack.c.h.b16 %v371
        %v1393 = vunpack.c.l.b16 %v372
        %v1394 = vunpack.c.h.b16 %v372
        %v1395 = vunpack.c.l.b16 %v373
        %v1396 = vunpack.c.h.b16 %v373
        %v1397 = vunpack.c.l.b16 %v374
        %v1398 = vunpack.c.h.b16 %v374
        %v1399 = vunpack.c.l.b16 %v375
        %v1400 = vunpack.c.h.b16 %v375
        %v1401 = vunpack.c.l.b16 %v376
        %v1402 = vunpack.c.h.b16 %v376
        %v1403 = vunpack.c.l.b16 %v377
        %v1404 = vunpack.c.h.b16 %v377
        %v1405 = vunpack.c.l.b16 %v378
        %v1406 = vunpack.c.h.b16 %v378
        %v1407 = vunpack.c.l.b16 %v379
        %v1408 = vunpack.c.h.b16 %v379
        %v1409 = vunpack.c.l.b16 %v380
        %v1410 = vunpack.c.h.b16 %v380
        %v1411 = vunpack.c.l.b16 %v381
        %v1412 = vunpack.c.h.b16 %v381
        %v1413 = vunpack.c.l.b16 %v382
        %v1414 = vunpack.c.h.b16 %v382
        %v1415 = vunpack.c.l.b16 %v383
        %v1416 = vunpack.c.h.b16 %v383
        %v1417 = vunpack.c.l.b16 %v384
        %v1418 = vunpack.c.h.b16 %v384
        %v1419 = vunpack.c.l.b16 %v385
        %v1420 = vunpack.c.h.b16 %v385
        %v1421 = vunpack.c.l.b16 %v386
        %v1422 = vunpack.c.h.b16 %v386
        %v1423 = vunpack.c.l.b16 %v387
        %v1424 = vunpack.c.h.b16 %v387
        %v1425 = vunpack.c.l.b16 %v388
        %v1426 = vunpack.c.h.b16 %v388
        %v1427 = vunpack.c.l.b16 %v389
        %v1428 = vunpack.c.h.b16 %v389
        %v1429 = vunpack.c.l.b16 %v390
        %v1430 = vunpack.c.h.b16 %v390
        %v1431 = vunpack.c.l.b16 %v391
        %v1432 = vunpack.c.h.b16 %v391
        %v1433 = vunpack.c.l.b16 %v392
        %v1434 = vunpack.c.h.b16 %v392
        %v1435 = vunpack.c.l.b16 %v393
        %v1436 = vunpack.c.h.b16 %v393
        %v1437 = vunpack.c.l.b16 %v394
        %v1438 = vunpack.c.h.b16 %v394
        %v1439 = vunpack.c.l.b16 %v395
        %v1440 = vunpack.c.h.b16 %v395
        %v1441 = vunpack.c.l.b16 %v396
        %v1442 = vunpack.c.h.b16 %v396
        %v1443 = vunpack.c.l.b16 %v397
        %v1444 = vunpack.c.h.b16 %v397
        %v1445 = vunpack.c.l.b16 %v398
        %v1446 = vunpack.c.h.b16 %v398
        %v1447 = vunpack.c.l.b16 %v399
        %v1448 = vunpack.c.h.b16 %v399
        %v1449 = vunpack.c.l.b16 %v400
        %v1450 = vunpack.c.h.b16 %v400
        %v1451 = vunpack.c.l.b16 %v401
        %v1452 = vunpack.c.h.b16 %v401
        %v1453 = vunpack.c.l.b16 %v402
        %v1454 = vunpack.c.h.b16 %v402
        %v1455 = vunpack.c.l.b16 %v403
        %v1456 = vunpack.c.h.b16 %v403
        %v1457 = vunpack.c.l.b16 %v404
        %v1458 = vunpack.c.h.b16 %v404
        %v1459 = vunpack.c.l.b16 %v405
        %v1460 = vunpack.c.h.b16 %v405
        %v1461 = vunpack.c.l.b16 %v406
        %v1462 = vunpack.c.h.b16 %v406
        %v1463 = vunpack.c.l.b16 %v407
        %v1464 = vunpack.c.h.b16 %v407
        %v1465 = vunpack.c.l.b16 %v408
        %v1466 = vunpack.c.h.b16 %v408
        %v1467 = vunpack.c.l.b16 %v409
        %v1468 = vunpack.c.h.b16 %v409
        %v1469 = vunpack.c.l.b16 %v410
        %v1470 = vunpack.c.h.b16 %v410
        %v1471 = vunpack.c.l.b16 %v411
        %v1472 = vunpack.c.h.b16 %v411
        %v1473 = vunpack.c.l.b16 %v412
        %v1474 = vunpack.c.h.b16 %v412
        %v1475 = vunpack.c.l.b16 %v413
        %v1476 = vunpack.c.h.b16 %v413
        %v1477 = vunpack.c.l.b16 %v414
        %v1478 = vunpack.c.h.b16 %v414
        %v1479 = vunpack.c.l.b16 %v415
        %v1480 = vunpack.c.h.b16 %v415
        %v1481 = vunpack.c.l.b16 %v416
        %v1482 = vunpack.c.h.b16 %v416
        %v1483 = vunpack.c.l.b16 %v417
        %v1484 = vunpack.c.h.b16 %v417
        %v1485 = vunpack.c.l.b16 %v418
        %v1486 = vunpack.c.h.b16 %v418
        %v1487 = vunpack.c.l.b16 %v419
        %v1488 = vunpack.c.h.b16 %v419
        %v1489 = vunpack.c.l.b16 %v420
        %v1490 = vunpack.c.h.b16 %v420
        %v1491 = vunpack.c.l.b16 %v421
        %v1492 = vunpack.c.h.b16 %v421
        %v1493 = vunpack.c.l.b16 %v422
        %v1494 = vunpack.c.h.b16 %v422
        %v1495 = vunpack.c.l.b16 %v423
        %v1496 = vunpack.c.h.b16 %v423
        %v1497 = vunpack.c.l.b16 %v424
        %v1498 = vunpack.c.h.b16 %v424
        %v1499 = vunpack.c.l.b16 %v425
        %v1500 = vunpack.c.h.b16 %v425
        %v1501 = vunpack.c.l.b16 %v426
        %v1502 = vunpack.c.h.b16 %v426
        %v1503 = vunpack.c.l.b16 %v427
        %v1504 = vunpack.c.h.b16 %v427
        %v1505 = vunpack.c.l.b16 %v428
        %v1506 = vunpack.c.h.b16 %v428
        %v1507 = vunpack.c.l.b16 %v429
        %v1508 = vunpack.c.h.b16 %v429
        %v1509 = vunpack.c.l.b16 %v430
        %v1510 = vunpack.c.h.b16 %v430
        %v1511 = vunpack.c.l.b16 %v431
        %v1512 = vunpack.c.h.b16 %v431
        %v1513 = vunpack.c.l.b16 %v432
        %v1514 = vunpack.c.h.b16 %v432
        %v1515 = vunpack.c.l.b16 %v433
        %v1516 = vunpack.c.h.b16 %v433
        %v1517 = vunpack.c.l.b16 %v434
        %v1518 = vunpack.c.h.b16 %v434
        %v1519 = vunpack.c.l.b16 %v435
        %v1520 = vunpack.c.h.b16 %v435
        %v1521 = vunpack.c.l.b16 %v436
        %v1522 = vunpack.c.h.b16 %v436
        %v1523 = vunpack.c.l.b16 %v437
        %v1524 = vunpack.c.h.b16 %v437
        %v1525 = vunpack.c.l.b16 %v438
        %v1526 = vunpack.c.h.b16 %v438
        %v1527 = vunpack.c.l.b16 %v439
        %v1528 = vunpack.c.h.b16 %v439
        %v1529 = vunpack.c.l.b16 %v440
        %v1530 = vunpack.c.h.b16 %v440
        %v1531 = vunpack.c.l.b16 %v441
        %v1532 = vunpack.c.h.b16 %v441
        %v1533 = vunpack.c.l.b16 %v442
        %v1534 = vunpack.c.h.b16 %v442
        %v1535 = vunpack.c.l.b16 %v443
        %v1536 = vunpack.c.h.b16 %v443
        %v1537 = vunpack.c.l.b16 %v444
        %v1538 = vunpack.c.h.b16 %v444
        %v1539 = vunpack.c.l.b16 %v445
        %v1540 = vunpack.c.h.b16 %v445
        %v1541 = vunpack.c.l.b16 %v446
        %v1542 = vunpack.c.h.b16 %v446
        %v1543 = vunpack.c.l.b16 %v447
        %v1544 = vunpack.c.h.b16 %v447
        %v1545 = vunpack.c.l.b16 %v448
        %v1546 = vunpack.c.h.b16 %v448
        %v1547 = vunpack.c.l.b16 %v449
        %v1548 = vunpack.c.h.b16 %v449
        %v1549 = vunpack.c.l.b16 %v450
        %v1550 = vunpack.c.h.b16 %v450
        %v1551 = vunpack.c.l.b16 %v451
        %v1552 = vunpack.c.h.b16 %v451
        %v1553 = vunpack.c.l.b16 %v452
        %v1554 = vunpack.c.h.b16 %v452
        %v1555 = vunpack.c.l.b16 %v453
        %v1556 = vunpack.c.h.b16 %v453
        %v1557 = vunpack.c.l.b16 %v454
        %v1558 = vunpack.c.h.b16 %v454
        %v1559 = vunpack.c.l.b16 %v455
        %v1560 = vunpack.c.h.b16 %v455
        %v1561 = vunpack.c.l.b16 %v456
        %v1562 = vunpack.c.h.b16 %v456
        %v1563 = vunpack.c.l.b16 %v457
        %v1564 = vunpack.c.h.b16 %v457
        %v1565 = vunpack.c.l.b16 %v458
        %v1566 = vunpack.c.h.b16 %v458
        %v1567 = vunpack.c.l.b16 %v459
        %v1568 = vunpack.c.h.b16 %v459
        %v1569 = vunpack.c.l.b16 %v460
        %v1570 = vunpack.c.h.b16 %v460
        %v1571 = vunpack.c.l.b16 %v461
        %v1572 = vunpack.c.h.b16 %v461
        %v1573 = vunpack.c.l.b16 %v462
        %v1574 = vunpack.c.h.b16 %v462
        %v1575 = vunpack.c.l.b16 %v463
        %v1576 = vunpack.c.h.b16 %v463
        %v1577 = vunpack.c.l.b16 %v464
        %v1578 = vunpack.c.h.b16 %v464
        %v1579 = vunpack.c.l.b16 %v465
        %v1580 = vunpack.c.h.b16 %v465
        %v1581 = vunpack.c.l.b16 %v466
        %v1582 = vunpack.c.h.b16 %v466
        %v1583 = vunpack.c.l.b16 %v467
        %v1584 = vunpack.c.h.b16 %v467
        %v1585 = vunpack.c.l.b16 %v468
        %v1586 = vunpack.c.h.b16 %v468
        %v1587 = vunpack.c.l.b16 %v469
        %v1588 = vunpack.c.h.b16 %v469
        %v1589 = vunpack.c.l.b16 %v470
        %v1590 = vunpack.c.h.b16 %v470
        %v1591 = vunpack.c.l.b16 %v471
        %v1592 = vunpack.c.h.b16 %v471
        %v1593 = vunpack.c.l.b16 %v472
        %v1594 = vunpack.c.h.b16 %v472
        %v1595 = vunpack.c.l.b16 %v473
        %v1596 = vunpack.c.h.b16 %v473
        %v1597 = vunpack.c.l.b16 %v474
        %v1598 = vunpack.c.h.b16 %v474
        %v1599 = vunpack.c.l.b16 %v475
        %v1600 = vunpack.c.h.b16 %v475
        %v1601 = vunpack.c.l.b16 %v476
        %v1602 = vunpack.c.h.b16 %v476
        %v1603 = vunpack.c.l.b16 %v477
        %v1604 = vunpack.c.h.b16 %v477
        %v1605 = vunpack.c.l.b16 %v478
        %v1606 = vunpack.c.h.b16 %v478
        %v1607 = vunpack.c.l.b16 %v479
        %v1608 = vunpack.c.h.b16 %v479
        %v1609 = vunpack.c.l.b16 %v480
        %v1610 = vunpack.c.h.b16 %v480
        %v1611 = vunpack.c.l.b16 %v481
        %v1612 = vunpack.c.h.b16 %v481
        %v1613 = vunpack.c.l.b16 %v482
        %v1614 = vunpack.c.h.b16 %v482
        %v1615 = vunpack.c.l.b16 %v483
        %v1616 = vunpack.c.h.b16 %v483
        %v1617 = vunpack.c.l.b16 %v484
        %v1618 = vunpack.c.h.b16 %v484
        %v1619 = vunpack.c.l.b16 %v485
        %v1620 = vunpack.c.h.b16 %v485
        %v1621 = vunpack.c.l.b16 %v486
        %v1622 = vunpack.c.h.b16 %v486
        %v1623 = vunpack.c.l.b16 %v487
        %v1624 = vunpack.c.h.b16 %v487
        %v1625 = vunpack.c.l.b16 %v488
        %v1626 = vunpack.c.h.b16 %v488
        %v1627 = vunpack.c.l.b16 %v489
        %v1628 = vunpack.c.h.b16 %v489
        %v1629 = vunpack.c.l.b16 %v490
        %v1630 = vunpack.c.h.b16 %v490
        %v1631 = vunpack.c.l.b16 %v491
        %v1632 = vunpack.c.h.b16 %v491
        %v1633 = vunpack.c.l.b16 %v492
        %v1634 = vunpack.c.h.b16 %v492
        %v1635 = vunpack.c.l.b16 %v493
        %v1636 = vunpack.c.h.b16 %v493
        %v1637 = vunpack.c.l.b16 %v494
        %v1638 = vunpack.c.h.b16 %v494
        %v1639 = vunpack.c.l.b16 %v495
        %v1640 = vunpack.c.h.b16 %v495
        %v1641 = vunpack.c.l.b16 %v496
        %v1642 = vunpack.c.h.b16 %v496
        %v1643 = vunpack.c.l.b16 %v497
        %v1644 = vunpack.c.h.b16 %v497
        %v1645 = vunpack.c.l.b16 %v498
        %v1646 = vunpack.c.h.b16 %v498
        %v1647 = vunpack.c.l.b16 %v499
        %v1648 = vunpack.c.h.b16 %v499
        %v1649 = vunpack.c.l.b16 %v500
        %v1650 = vunpack.c.h.b16 %v500
        %v1651 = vunpack.c.l.b16 %v501
        %v1652 = vunpack.c.h.b16 %v501
        %v1653 = vunpack.c.l.b16 %v502
        %v1654 = vunpack.c.h.b16 %v502
        %v1655 = vunpack.c.l.b16 %v503
        %v1656 = vunpack.c.h.b16 %v503
        %v1657 = vunpack.c.l.b16 %v504
        %v1658 = vunpack.c.h.b16 %v504
        %v1659 = vunpack.c.l.b16 %v505
        %v1660 = vunpack.c.h.b16 %v505
        %v1661 = vunpack.c.l.b16 %v506
        %v1662 = vunpack.c.h.b16 %v506
        %v1663 = vunpack.c.l.b16 %v507
        %v1664 = vunpack.c.h.b16 %v507
        %v1665 = vunpack.c.l.b16 %v508
        %v1666 = vunpack.c.h.b16 %v508
        %v1667 = vunpack.c.l.b16 %v509
        %v1668 = vunpack.c.h.b16 %v509
        %v1669 = vunpack.c.l.b16 %v510
        %v1670 = vunpack.c.h.b16 %v510
        %v1671 = vunpack.c.l.b16 %v511
        %v1672 = vunpack.c.h.b16 %v511
        %v1673 = vunpack.c.l.b16 %v512
        %v1674 = vunpack.c.h.b16 %v512
        %v1675 = vunpack.c.l.b16 %v513
        %v1676 = vunpack.c.h.b16 %v513
        %v1677 = vunpack.c.l.b16 %v514
        %v1678 = vunpack.c.h.b16 %v514
        %v1679 = vunpack.c.l.b16 %v515
        %v1680 = vunpack.c.h.b16 %v515
        %v1681 = vunpack.c.l.b16 %v516
        %v1682 = vunpack.c.h.b16 %v516
        %v1683 = vunpack.c.l.b16 %v517
        %v1684 = vunpack.c.h.b16 %v517
        %v1685 = vunpack.c.l.b16 %v518
        %v1686 = vunpack.c.h.b16 %v518
        %v1687 = vunpack.c.l.b16 %v519
        %v1688 = vunpack.c.h.b16 %v519
        %v1689 = vunpack.c.l.b16 %v520
        %v1690 = vunpack.c.h.b16 %v520
        %v1691 = vunpack.c.l.b16 %v521
        %v1692 = vunpack.c.h.b16 %v521
        %v1693 = vunpack.c.l.b16 %v522
        %v1694 = vunpack.c.h.b16 %v522
        %v1695 = vunpack.c.l.b16 %v523
        %v1696 = vunpack.c.h.b16 %v523
        %v1697 = vunpack.c.l.b16 %v524
        %v1698 = vunpack.c.h.b16 %v524
        %v1699 = vunpack.c.l.b16 %v525
        %v1700 = vunpack.c.h.b16 %v525
        %v1701 = vunpack.c.l.b16 %v526
        %v1702 = vunpack.c.h.b16 %v526
        %v1703 = vunpack.c.l.b16 %v527
        %v1704 = vunpack.c.h.b16 %v527
        %v1705 = vunpack.c.l.b16 %v528
        %v1706 = vunpack.c.h.b16 %v528
        %v1707 = vunpack.c.l.b16 %v529
        %v1708 = vunpack.c.h.b16 %v529
        %v1709 = vunpack.c.l.b16 %v530
        %v1710 = vunpack.c.h.b16 %v530
        %v1711 = vunpack.c.l.b16 %v531
        %v1712 = vunpack.c.h.b16 %v531
        %v1713 = vunpack.c.l.b16 %v532
        %v1714 = vunpack.c.h.b16 %v532
        %v1715 = vunpack.c.l.b16 %v533
        %v1716 = vunpack.c.h.b16 %v533
        %v1717 = vunpack.c.l.b16 %v534
        %v1718 = vunpack.c.h.b16 %v534
        %v1719 = vunpack.c.l.b16 %v535
        %v1720 = vunpack.c.h.b16 %v535
        %v1721 = vunpack.c.l.b16 %v536
        %v1722 = vunpack.c.h.b16 %v536
        %v1723 = vunpack.c.l.b16 %v537
        %v1724 = vunpack.c.h.b16 %v537
        %v1725 = vunpack.c.l.b16 %v538
        %v1726 = vunpack.c.h.b16 %v538
        %v1727 = vunpack.c.l.b16 %v539
        %v1728 = vunpack.c.h.b16 %v539
        %v1729 = vunpack.c.l.b16 %v540
        %v1730 = vunpack.c.h.b16 %v540
        %v1731 = vunpack.c.l.b16 %v541
        %v1732 = vunpack.c.h.b16 %v541
        %v1733 = vunpack.c.l.b16 %v542
        %v1734 = vunpack.c.h.b16 %v542
        %v1735 = vunpack.c.l.b16 %v543
        %v1736 = vunpack.c.h.b16 %v543
        %v1737 = vunpack.c.l.b16 %v544
        %v1738 = vunpack.c.h.b16 %v544
        %v1739 = vunpack.c.l.b16 %v545
        %v1740 = vunpack.c.h.b16 %v545
        %v1741 = vunpack.c.l.b16 %v546
        %v1742 = vunpack.c.h.b16 %v546
        %v1743 = vunpack.c.l.b16 %v547
        %v1744 = vunpack.c.h.b16 %v547
        %v1745 = vunpack.c.l.b16 %v548
        %v1746 = vunpack.c.h.b16 %v548
        %v1747 = vunpack.c.l.b16 %v549
        %v1748 = vunpack.c.h.b16 %v549
        %v1749 = vunpack.c.l.b16 %v550
        %v1750 = vunpack.c.h.b16 %v550
        %v1751 = vunpack.c.l.b16 %v551
        %v1752 = vunpack.c.h.b16 %v551
        %v1753 = vunpack.c.l.b16 %v552
        %v1754 = vunpack.c.h.b16 %v552
        %v1755 = vunpack.c.l.b16 %v553
        %v1756 = vunpack.c.h.b16 %v553
        %v1757 = vunpack.c.l.b16 %v554
        %v1758 = vunpack.c.h.b16 %v554
        %v1759 = vunpack.c.l.b16 %v555
        %v1760 = vunpack.c.h.b16 %v555
        %v1761 = vunpack.c.l.b16 %v556
        %v1762 = vunpack.c.h.b16 %v556
        %v1763 = vunpack.c.l.b16 %v557
        %v1764 = vunpack.c.h.b16 %v557
        %v1765 = vunpack.c.l.b16 %v558
        %v1766 = vunpack.c.h.b16 %v558
        %v1767 = vunpack.c.l.b16 %v559
        %v1768 = vunpack.c.h.b16 %v559
        %v1769 = vunpack.c.l.b16 %v560
        %v1770 = vunpack.c.h.b16 %v560
        %v1771 = vunpack.c.l.b16 %v561
        %v1772 = vunpack.c.h.b16 %v561
        %v1773 = vunpack.c.l.b16 %v562
        %v1774 = vunpack.c.h.b16 %v562
        %v1775 = vunpack.c.l.b16 %v563
        %v1776 = vunpack.c.h.b16 %v563
        %v1777 = vunpack.c.l.b16 %v564
        %v1778 = vunpack.c.h.b16 %v564
        %v1779 = vunpack.c.l.b16 %v565
        %v1780 = vunpack.c.h.b16 %v565
        %v1781 = vunpack.c.l.b16 %v566
        %v1782 = vunpack.c.h.b16 %v566
        %v1783 = vunpack.c.l.b16 %v567
        %v1784 = vunpack.c.h.b16 %v567
        %v1785 = vunpack.c.l.b16 %v568
        %v1786 = vunpack.c.h.b16 %v568
        %v1787 = vunpack.c.l.b16 %v569
        %v1788 = vunpack.c.h.b16 %v569
        %v1789 = vunpack.c.l.b16 %v570
        %v1790 = vunpack.c.h.b16 %v570
        %v1791 = vunpack.c.l.b16 %v571
        %v1792 = vunpack.c.h.b16 %v571
        %v1793 = vunpack.c.l.b16 %v572
        %v1794 = vunpack.c.h.b16 %v572
        %v1795 = vunpack.c.l.b16 %v573
        %v1796 = vunpack.c.h.b16 %v573
        %v1797 = vunpack.c.l.b16 %v574
        %v1798 = vunpack.c.h.b16 %v574
        %v1799 = vunpack.c.l.b16 %v575
        %v1800 = vunpack.c.h.b16 %v575
        %v1801 = vunpack.c.l.b16 %v576
        %v1802 = vunpack.c.h.b16 %v576
        %v1803 = vunpack.c.l.b16 %v577
        %v1804 = vunpack.c.h.b16 %v577
        %v1805 = vunpack.c.l.b16 %v578
        %v1806 = vunpack.c.h.b16 %v578
        %v1807 = vunpack.c.l.b16 %v579
        %v1808 = vunpack.c.h.b16 %v579
        %v1809 = vunpack.c.l.b16 %v580
        %v1810 = vunpack.c.h.b16 %v580
        %v1811 = vunpack.c.l.b16 %v581
        %v1812 = vunpack.c.h.b16 %v581
        %v1813 = vunpack.c.l.b16 %v582
        %v1814 = vunpack.c.h.b16 %v582
        %v1815 = vunpack.c.l.b16 %v583
        %v1816 = vunpack.c.h.b16 %v583
        %v1817 = vunpack.c.l.b16 %v584
        %v1818 = vunpack.c.h.b16 %v584
        %v1819 = vunpack.c.l.b16 %v585
        %v1820 = vunpack.c.h.b16 %v585
        %v1821 = vunpack.c.l.b16 %v586
        %v1822 = vunpack.c.h.b16 %v586
        %v1823 = vunpack.c.l.b16 %v587
        %v1824 = vunpack.c.h.b16 %v587
        %v1825 = vunpack.c.l.b16 %v588
        %v1826 = vunpack.c.h.b16 %v588
        %v1827 = vunpack.c.l.b16 %v589
        %v1828 = vunpack.c.h.b16 %v589
        %v1829 = vunpack.c.l.b16 %v590
        %v1830 = vunpack.c.h.b16 %v590
        %v1831 = vunpack.c.l.b16 %v591
        %v1832 = vunpack.c.h.b16 %v591
        %v1833 = vunpack.c.l.b16 %v592
        %v1834 = vunpack.c.h.b16 %v592
        %v1835 = vunpack.c.l.b16 %v593
        %v1836 = vunpack.c.h.b16 %v593
        %v1837 = vunpack.c.l.b16 %v594
        %v1838 = vunpack.c.h.b16 %v594
        %v1839 = vunpack.c.l.b16 %v595
        %v1840 = vunpack.c.h.b16 %v595
        %v1841 = vunpack.c.l.b16 %v596
        %v1842 = vunpack.c.h.b16 %v596
        %v1843 = vunpack.c.l.b16 %v597
        %v1844 = vunpack.c.h.b16 %v597
        %v1845 = vunpack.c.l.b16 %v598
        %v1846 = vunpack.c.h.b16 %v598
        %v1847 = vunpack.c.l.b16 %v599
        %v1848 = vunpack.c.h.b16 %v599
        %v1849 = vunpack.c.l.b16 %v600
        %v1850 = vunpack.c.h.b16 %v600
        %v1851 = vunpack.c.l.b16 %v601
        %v1852 = vunpack.c.h.b16 %v601
        %v1853 = vunpack.c.l.b16 %v602
        %v1854 = vunpack.c.h.b16 %v602
        %v1855 = vunpack.c.l.b16 %v603
        %v1856 = vunpack.c.h.b16 %v603
        %v1857 = vunpack.c.l.b16 %v604
        %v1858 = vunpack.c.h.b16 %v604
        %v1859 = vunpack.c.l.b16 %v605
        %v1860 = vunpack.c.h.b16 %v605
        %v1861 = vunpack.c.l.b16 %v606
        %v1862 = vunpack.c.h.b16 %v606
        %v1863 = vunpack.c.l.b16 %v607
        %v1864 = vunpack.c.h.b16 %v607
        %v1865 = vunpack.c.l.b16 %v608
        %v1866 = vunpack.c.h.b16 %v608
        %v1867 = vunpack.c.l.b16 %v609
        %v1868 = vunpack.c.h.b16 %v609
        %v1869 = vunpack.c.l.b16 %v610
        %v1870 = vunpack.c.h.b16 %v610
        %v1871 = vunpack.c.l.b16 %v611
        %v1872 = vunpack.c.h.b16 %v611
        %v1873 = vunpack.c.l.b16 %v612
        %v1874 = vunpack.c.h.b16 %v612
        %v1875 = vunpack.c.l.b16 %v613
        %v1876 = vunpack.c.h.b16 %v613
        %v1877 = vunpack.c.l.b16 %v614
        %v1878 = vunpack.c.h.b16 %v614
        %v1879 = vunpack.c.l.b16 %v615
        %v1880 = vunpack.c.h.b16 %v615
        %v1881 = vunpack.c.l.b16 %v616
        %v1882 = vunpack.c.h.b16 %v616
        %v1883 = vunpack.c.l.b16 %v617
        %v1884 = vunpack.c.h.b16 %v617
        %v1885 = vunpack.c.l.b16 %v618
        %v1886 = vunpack.c.h.b16 %v618
        %v1887 = vunpack.c.l.b16 %v619
        %v1888 = vunpack.c.h.b16 %v619
        %v1889 = vunpack.c.l.b16 %v620
        %v1890 = vunpack.c.h.b16 %v620
        %v1891 = vunpack.c.l.b16 %v621
        %v1892 = vunpack.c.h.b16 %v621
        %v1893 = vunpack.c.l.b16 %v622
        %v1894 = vunpack.c.h.b16 %v622
        %v1895 = vunpack.c.l.b16 %v623
        %v1896 = vunpack.c.h.b16 %v623
        %v1897 = vunpack.c.l.b16 %v624
        %v1898 = vunpack.c.h.b16 %v624
        %v1899 = vunpack.c.l.b16 %v625
        %v1900 = vunpack.c.h.b16 %v625
        %v1901 = vunpack.c.l.b16 %v626
        %v1902 = vunpack.c.h.b16 %v626
        %v1903 = vunpack.c.l.b16 %v627
        %v1904 = vunpack.c.h.b16 %v627
        %v1905 = vunpack.c.l.b16 %v628
        %v1906 = vunpack.c.h.b16 %v628
        %v1907 = vunpack.c.l.b16 %v629
        %v1908 = vunpack.c.h.b16 %v629
        %v1909 = vunpack.c.l.b16 %v630
        %v1910 = vunpack.c.h.b16 %v630
        %v1911 = vunpack.c.l.b16 %v631
        %v1912 = vunpack.c.h.b16 %v631
        %v1913 = vunpack.c.l.b16 %v632
        %v1914 = vunpack.c.h.b16 %v632
        %v1915 = vunpack.c.l.b16 %v633
        %v1916 = vunpack.c.h.b16 %v633
        %v1917 = vunpack.c.l.b16 %v634
        %v1918 = vunpack.c.h.b16 %v634
        %v1919 = vunpack.c.l.b16 %v635
        %v1920 = vunpack.c.h.b16 %v635
        %v1921 = vunpack.c.l.b16 %v636
        %v1922 = vunpack.c.h.b16 %v636
        %v1923 = vunpack.c.l.b16 %v637
        %v1924 = vunpack.c.h.b16 %v637
        %v1925 = vunpack.c.l.b16 %v638
        %v1926 = vunpack.c.h.b16 %v638
        %v1927 = vunpack.c.l.b16 %v639
        %v1928 = vunpack.c.h.b16 %v639
        %v1929 = vunpack.c.l.b16 %v640
        %v1930 = vunpack.c.h.b16 %v640
        %v1931 = vunpack.c.l.b16 %v641
        %v1932 = vunpack.c.h.b16 %v641
        %v1933 = vunpack.c.l.b16 %v642
        %v1934 = vunpack.c.h.b16 %v642
        %v1935 = vunpack.c.l.b16 %v643
        %v1936 = vunpack.c.h.b16 %v643
        %v1937 = vunpack.c.l.b16 %v644
        %v1938 = vunpack.c.h.b16 %v644
        %v1939 = vunpack.c.l.b16 %v645
        %v1940 = vunpack.c.h.b16 %v645
        %v1941 = vunpack.c.l.b16 %v646
        %v1942 = vunpack.c.h.b16 %v646
        %v1943 = vunpack.c.l.b16 %v647
        %v1944 = vunpack.c.h.b16 %v647
        %v1945 = vunpack.c.l.b16 %v648
        %v1946 = vunpack.c.h.b16 %v648
        %v1947 = vunpack.c.l.b16 %v649
        %v1948 = vunpack.c.h.b16 %v649
        %v1949 = vunpack.c.l.b16 %v650
        %v1950 = vunpack.c.h.b16 %v650
        %v1951 = vunpack.c.l.b16 %v651
        %v1952 = vunpack.c.h.b16 %v651
        %v1953 = vunpack.c.l.b16 %v652
        %v1954 = vunpack.c.h.b16 %v652
        %v1955 = vunpack.c.l.b16 %v653
        %v1956 = vunpack.c.h.b16 %v653
        %v1957 = vunpack.c.l.b16 %v654
        %v1958 = vunpack.c.h.b16 %v654
        %v1959 = vunpack.c.l.b16 %v655
        %v1960 = vunpack.c.h.b16 %v655
        %v1961 = vunpack.c.l.b16 %v656
        %v1962 = vunpack.c.h.b16 %v656
        %v1963 = vunpack.c.l.b16 %v657
        %v1964 = vunpack.c.h.b16 %v657
        %v1965 = vunpack.c.l.b16 %v658
        %v1966 = vunpack.c.h.b16 %v658
        %v1967 = vunpack.c.l.b16 %v659
        %v1968 = vunpack.c.h.b16 %v659
        %v1969 = vunpack.c.l.b16 %v660
        %v1970 = vunpack.c.h.b16 %v660
        %v1971 = vunpack.c.l.b16 %v661
        %v1972 = vunpack.c.h.b16 %v661
        %v1973 = vunpack.c.l.b16 %v662
        %v1974 = vunpack.c.h.b16 %v662
        %v1975 = vunpack.c.l.b16 %v663
        %v1976 = vunpack.c.h.b16 %v663
        %v1977 = vunpack.c.l.b16 %v664
        %v1978 = vunpack.c.h.b16 %v664
        %v1979 = vunpack.c.l.b16 %v665
        %v1980 = vunpack.c.h.b16 %v665
        %v1981 = vunpack.c.l.b16 %v666
        %v1982 = vunpack.c.h.b16 %v666
        %v1983 = vunpack.c.l.b16 %v667
        %v1984 = vunpack.c.h.b16 %v667
        %v1985 = vunpack.c.l.b16 %v668
        %v1986 = vunpack.c.h.b16 %v668
        %v1987 = vunpack.c.l.b16 %v669
        %v1988 = vunpack.c.h.b16 %v669
        %v1989 = vunpack.c.l.b16 %v670
        %v1990 = vunpack.c.h.b16 %v670
        %v1991 = vunpack.c.l.b16 %v671
        %v1992 = vunpack.c.h.b16 %v671
        %v1993 = vunpack.c.l.b16 %v672
        %v1994 = vunpack.c.h.b16 %v672
        %v1995 = vunpack.c.l.b16 %v673
        %v1996 = vunpack.c.h.b16 %v673
        %v1997 = vunpack.c.l.b16 %v674
        %v1998 = vunpack.c.h.b16 %v674
        %v1999 = vunpack.c.l.b16 %v675
        %v2000 = vunpack.c.h.b16 %v675
        %v2001 = vunpack.c.l.b16 %v676
        %v2002 = vunpack.c.h.b16 %v676
        %v2003 = vunpack.c.l.b16 %v677
        %v2004 = vunpack.c.h.b16 %v677
        %v2005 = vunpack.c.l.b16 %v678
        %v2006 = vunpack.c.h.b16 %v678
        %v2007 = vunpack.c.l.b16 %v679
        %v2008 = vunpack.c.h.b16 %v679
        %v2009 = vunpack.c.l.b16 %v680
        %v2010 = vunpack.c.h.b16 %v680
        %v2011 = vunpack.c.l.b16 %v681
        %v2012 = vunpack.c.h.b16 %v681
        %v2013 = vunpack.c.l.b16 %v682
        %v2014 = vunpack.c.h.b16 %v682
        %v2015 = vunpack.c.l.b16 %v683
        %v2016 = vunpack.c.h.b16 %v683
        %v2017 = vunpack.c.l.b16 %v684
        %v2018 = vunpack.c.h.b16 %v684
        %v2019 = vunpack.c.l.b16 %v685
        %v2020 = vunpack.c.h.b16 %v685
        %v2021 = vunpack.c.l.b16 %v686
        %v2022 = vunpack.c.h.b16 %v686
        %v2023 = vunpack.c.l.b16 %v687
        %v2024 = vunpack.c.h.b16 %v687
        %v2025 = vunpack.c.l.b16 %v688
        %v2026 = vunpack.c.h.b16 %v688
        %v2027 = vunpack.c.l.b16 %v689
        %v2028 = vunpack.c.h.b16 %v689
        %v2029 = vunpack.c.l.b16 %v690
        %v2030 = vunpack.c.h.b16 %v690
        %v2031 = vunpack.c.l.b16 %v691
        %v2032 = vunpack.c.h.b16 %v691
        %v2033 = vunpack.c.l.b16 %v692
        %v2034 = vunpack.c.h.b16 %v692
        %v2035 = vunpack.c.l.b16 %v693
        %v2036 = vunpack.c.h.b16 %v693
        %v2037 = vunpack.c.l.b16 %v694
        %v2038 = vunpack.c.h.b16 %v694
        %v2039 = vunpack.c.l.b16 %v695
        %v2040 = vunpack.c.h.b16 %v695
        %v2041 = vunpack.c.l.b16 %v696
        %v2042 = vunpack.c.h.b16 %v696
        %v2043 = vunpack.c.l.b16 %v697
        %v2044 = vunpack.c.h.b16 %v697
        %v2045 = vunpack.c.l.b16 %v698
        %v2046 = vunpack.c.h.b16 %v698
        %v2047 = vunpack.c.l.b16 %v699
        %v2048 = vunpack.c.h.b16 %v699
        %v2049 = vunpack.c.l.b16 %v700
        %v2050 = vunpack.c.h.b16 %v700
        %v2051 = vunpack.c.l.b16 %v701
        %v2052 = vunpack.c.h.b16 %v701
        %v2053 = vunpack.c.l.b16 %v702
        %v2054 = vunpack.c.h.b16 %v702
        %v2055 = vunpack.c.l.b16 %v703
        %v2056 = vunpack.c.h.b16 %v703
        %v2057 = vunpack.c.l.b16 %v704
        %v2058 = vunpack.c.h.b16 %v704
        %v2059 = vunpack.c.l.b16 %v705
        %v2060 = vunpack.c.h.b16 %v705
        %v2061 = vunpack.c.l.b16 %v706
        %v2062 = vunpack.c.h.b16 %v706
        %v2063 = vunpack.c.l.b16 %v707
        %v2064 = vunpack.c.h.b16 %v707
        %v2065 = vunpack.c.l.b16 %v708
        %v2066 = vunpack.c.h.b16 %v708
        %v2067 = vunpack.c.l.b16 %v709
        %v2068 = vunpack.c.h.b16 %v709
        %v2069 = vunpack.c.l.b16 %v710
        %v2070 = vunpack.c.h.b16 %v710
        %v2071 = vunpack.c.l.b16 %v711
        %v2072 = vunpack.c.h.b16 %v711
        %v2073 = vunpack.c.l.b16 %v712
        %v2074 = vunpack.c.h.b16 %v712
        %v2075 = vunpack.c.l.b16 %v713
        %v2076 = vunpack.c.h.b16 %v713
        %v2077 = vunpack.c.l.b16 %v714
        %v2078 = vunpack.c.h.b16 %v714
        %v2079 = vunpack.c.l.b16 %v715
        %v2080 = vunpack.c.h.b16 %v715
        %v2081 = vunpack.c.l.b16 %v716
        %v2082 = vunpack.c.h.b16 %v716
        %v2083 = vunpack.c.l.b16 %v717
        %v2084 = vunpack.c.h.b16 %v717
        %v2085 = vunpack.c.l.b16 %v718
        %v2086 = vunpack.c.h.b16 %v718
        %v2087 = vunpack.c.l.b16 %v719
        %v2088 = vunpack.c.h.b16 %v719
        %v2089 = vunpack.c.l.b16 %v720
        %v2090 = vunpack.c.h.b16 %v720
        %v2091 = vunpack.c.l.b16 %v721
        %v2092 = vunpack.c.h.b16 %v721
        %v2093 = vunpack.c.l.b16 %v722
        %v2094 = vunpack.c.h.b16 %v722
        %v2095 = vunpack.c.l.b16 %v723
        %v2096 = vunpack.c.h.b16 %v723
        %v2097 = vunpack.c.l.b16 %v724
        %v2098 = vunpack.c.h.b16 %v724
        %v2099 = vunpack.c.l.b16 %v725
        %v2100 = vunpack.c.h.b16 %v725
        %v2101 = vunpack.c.l.b16 %v726
        %v2102 = vunpack.c.h.b16 %v726
        %v2103 = vunpack.c.l.b16 %v727
        %v2104 = vunpack.c.h.b16 %v727
        %v2105 = vunpack.c.l.b16 %v728
        %v2106 = vunpack.c.h.b16 %v728
        %v2107 = vunpack.c.l.b16 %v729
        %v2108 = vunpack.c.h.b16 %v729
        %v2109 = vunpack.c.l.b16 %v730
        %v2110 = vunpack.c.h.b16 %v730
        %v2111 = vunpack.c.l.b16 %v731
        %v2112 = vunpack.c.h.b16 %v731
        %v2113 = vunpack.c.l.b16 %v732
        %v2114 = vunpack.c.h.b16 %v732
        %v2115 = vunpack.c.l.b16 %v733
        %v2116 = vunpack.c.h.b16 %v733
        %v2117 = vunpack.c.l.b16 %v734
        %v2118 = vunpack.c.h.b16 %v734
        %v2119 = vunpack.c.l.b16 %v735
        %v2120 = vunpack.c.h.b16 %v735
        %v2121 = vunpack.c.l.b16 %v736
        %v2122 = vunpack.c.h.b16 %v736
        %v2123 = vpack.c.b16 %v1235, %v1227
        %v2124 = vpack.c.b16 %v1236, %v1228
        %v2125 = vpack.c.b16 %v1237, %v1229
        %v2126 = vpack.c.b16 %v1238, %v1230
        %v2127 = vpack.c.b16 %v1239, %v1231
        %v2128 = vpack.c.b16 %v1240, %v1232
        %v2129 = vpack.c.b16 %v1241, %v1233
        %v2130 = vpack.c.b16 %v1242, %v1234
        %v2131 = vpack.c.b16 %v1251, %v1243
        %v2132 = vpack.c.b16 %v1252, %v1244
        %v2133 = vpack.c.b16 %v1253, %v1245
        %v2134 = vpack.c.b16 %v1254, %v1246
        %v2135 = vpack.c.b16 %v1255, %v1247
        %v2136 = vpack.c.b16 %v1256, %v1248
        %v2137 = vpack.c.b16 %v1257, %v1249
        %v2138 = vpack.c.b16 %v1258, %v1250
        %v2139 = vpack.c.b16 %v1267, %v1259
        %v2140 = vpack.c.b16 %v1268, %v1260
        %v2141 = vpack.c.b16 %v1269, %v1261
        %v2142 = vpack.c.b16 %v1270, %v1262
        %v2143 = vpack.c.b16 %v1271, %v1263
        %v2144 = vpack.c.b16 %v1272, %v1264
        %v2145 = vpack.c.b16 %v1273, %v1265
        %v2146 = vpack.c.b16 %v1274, %v1266
        %v2147 = vpack.c.b16 %v1283, %v1275
        %v2148 = vpack.c.b16 %v1284, %v1276
        %v2149 = vpack.c.b16 %v1285, %v1277
        %v2150 = vpack.c.b16 %v1286, %v1278
        %v2151 = vpack.c.b16 %v1287, %v1279
        %v2152 = vpack.c.b16 %v1288, %v1280
        %v2153 = vpack.c.b16 %v1289, %v1281
        %v2154 = vpack.c.b16 %v1290, %v1282
        %v2155 = vpack.c.b16 %v1299, %v1291
        %v2156 = vpack.c.b16 %v1300, %v1292
        %v2157 = vpack.c.b16 %v1301, %v1293
        %v2158 = vpack.c.b16 %v1302, %v1294
        %v2159 = vpack.c.b16 %v1303, %v1295
        %v2160 = vpack.c.b16 %v1304, %v1296
        %v2161 = vpack.c.b16 %v1305, %v1297
        %v2162 = vpack.c.b16 %v1306, %v1298
        %v2163 = vpack.c.b16 %v1315, %v1307
        %v2164 = vpack.c.b16 %v1316, %v1308
        %v2165 = vpack.c.b16 %v1317, %v1309
        %v2166 = vpack.c.b16 %v1318, %v1310
        %v2167 = vpack.c.b16 %v1319, %v1311
        %v2168 = vpack.c.b16 %v1320, %v1312
        %v2169 = vpack.c.b16 %v1321, %v1313
        %v2170 = vpack.c.b16 %v1322, %v1314
        %v2171 = vpack.c.b16 %v1331, %v1323
        %v2172 = vpack.c.b16 %v1332, %v1324
        %v2173 = vpack.c.b16 %v1333, %v1325
        %v2174 = vpack.c.b16 %v1334, %v1326
        %v2175 = vpack.c.b16 %v1335, %v1327
        %v2176 = vpack.c.b16 %v1336, %v1328
        %v2177 = vpack.c.b16 %v1337, %v1329
        %v2178 = vpack.c.b16 %v1338, %v1330
        %v2179 = vpack.c.b16 %v1347, %v1339
        %v2180 = vpack.c.b16 %v1348, %v1340
        %v2181 = vpack.c.b16 %v1349, %v1341
        %v2182 = vpack.c.b16 %v1350, %v1342
        %v2183 = vpack.c.b16 %v1351, %v1343
        %v2184 = vpack.c.b16 %v1352, %v1344
        %v2185 = vpack.c.b16 %v1353, %v1345
        %v2186 = vpack.c.b16 %v1354, %v1346
        %v2187 = vpack.c.b16 %v1363, %v1355
        %v2188 = vpack.c.b16 %v1364, %v1356
        %v2189 = vpack.c.b16 %v1365, %v1357
        %v2190 = vpack.c.b16 %v1366, %v1358
        %v2191 = vpack.c.b16 %v1367, %v1359
        %v2192 = vpack.c.b16 %v1368, %v1360
        %v2193 = vpack.c.b16 %v1369, %v1361
        %v2194 = vpack.c.b16 %v1370, %v1362
        %v2195 = vpack.c.b16 %v1379, %v1371
        %v2196 = vpack.c.b16 %v1380, %v1372
        %v2197 = vpack.c.b16 %v1381, %v1373
        %v2198 = vpack.c.b16 %v1382, %v1374
        %v2199 = vpack.c.b16 %v1383, %v1375
        %v2200 = vpack.c.b16 %v1384, %v1376
        %v2201 = vpack.c.b16 %v1385, %v1377
        %v2202 = vpack.c.b16 %v1386, %v1378
        %v2203 = vpack.c.b16 %v1395, %v1387
        %v2204 = vpack.c.b16 %v1396, %v1388
        %v2205 = vpack.c.b16 %v1397, %v1389
        %v2206 = vpack.c.b16 %v1398, %v1390
        %v2207 = vpack.c.b16 %v1399, %v1391
        %v2208 = vpack.c.b16 %v1400, %v1392
        %v2209 = vpack.c.b16 %v1401, %v1393
        %v2210 = vpack.c.b16 %v1402, %v1394
        %v2211 = vpack.c.b16 %v1411, %v1403
        %v2212 = vpack.c.b16 %v1412, %v1404
        %v2213 = vpack.c.b16 %v1413, %v1405
        %v2214 = vpack.c.b16 %v1414, %v1406
        %v2215 = vpack.c.b16 %v1415, %v1407
        %v2216 = vpack.c.b16 %v1416, %v1408
        %v2217 = vpack.c.b16 %v1417, %v1409
        %v2218 = vpack.c.b16 %v1418, %v1410
        %v2219 = vpack.c.b16 %v1427, %v1419
        %v2220 = vpack.c.b16 %v1428, %v1420
        %v2221 = vpack.c.b16 %v1429, %v1421
        %v2222 = vpack.c.b16 %v1430, %v1422
        %v2223 = vpack.c.b16 %v1431, %v1423
        %v2224 = vpack.c.b16 %v1432, %v1424
        %v2225 = vpack.c.b16 %v1433, %v1425
        %v2226 = vpack.c.b16 %v1434, %v1426
        %v2227 = vpack.c.b16 %v1443, %v1435
        %v2228 = vpack.c.b16 %v1444, %v1436
        %v2229 = vpack.c.b16 %v1445, %v1437
        %v2230 = vpack.c.b16 %v1446, %v1438
        %v2231 = vpack.c.b16 %v1447, %v1439
        %v2232 = vpack.c.b16 %v1448, %v1440
        %v2233 = vpack.c.b16 %v1449, %v1441
        %v2234 = vpack.c.b16 %v1450, %v1442
        %v2235 = vpack.c.b16 %v1459, %v1451
        %v2236 = vpack.c.b16 %v1460, %v1452
        %v2237 = vpack.c.b16 %v1461, %v1453
        %v2238 = vpack.c.b16 %v1462, %v1454
        %v2239 = vpack.c.b16 %v1463, %v1455
        %v2240 = vpack.c.b16 %v1464, %v1456
        %v2241 = vpack.c.b16 %v1465, %v1457
        %v2242 = vpack.c.b16 %v1466, %v1458
        %v2243 = vpack.c.b16 %v1475, %v1467
        %v2244 = vpack.c.b16 %v1476, %v1468
        %v2245 = vpack.c.b16 %v1477, %v1469
        %v2246 = vpack.c.b16 %v1478, %v1470
        %v2247 = vpack.c.b16 %v1479, %v1471
        %v2248 = vpack.c.b16 %v1480, %v1472
        %v2249 = vpack.c.b16 %v1481, %v1473
        %v2250 = vpack.c.b16 %v1482, %v1474
        %v2251 = vpack.c.b16 %v1491, %v1483
        %v2252 = vpack.c.b16 %v1492, %v1484
        %v2253 = vpack.c.b16 %v1493, %v1485
        %v2254 = vpack.c.b16 %v1494, %v1486
        %v2255 = vpack.c.b16 %v1495, %v1487
        %v2256 = vpack.c.b16 %v1496, %v1488
        %v2257 = vpack.c.b16 %v1497, %v1489
        %v2258 = vpack.c.b16 %v1498, %v1490
        %v2259 = vpack.c.b16 %v1507, %v1499
        %v2260 = vpack.c.b16 %v1508, %v1500
        %v2261 = vpack.c.b16 %v1509, %v1501
        %v2262 = vpack.c.b16 %v1510, %v1502
        %v2263 = vpack.c.b16 %v1511, %v1503
        %v2264 = vpack.c.b16 %v1512, %v1504
        %v2265 = vpack.c.b16 %v1513, %v1505
        %v2266 = vpack.c.b16 %v1514, %v1506
        %v2267 = vpack.c.b16 %v1523, %v1515
        %v2268 = vpack.c.b16 %v1524, %v1516
        %v2269 = vpack.c.b16 %v1525, %v1517
        %v2270 = vpack.c.b16 %v1526, %v1518
        %v2271 = vpack.c.b16 %v1527, %v1519
        %v2272 = vpack.c.b16 %v1528, %v1520
        %v2273 = vpack.c.b16 %v1529, %v1521
        %v2274 = vpack.c.b16 %v1530, %v1522
        %v2275 = vpack.c.b16 %v1539, %v1531
        %v2276 = vpack.c.b16 %v1540, %v1532
        %v2277 = vpack.c.b16 %v1541, %v1533
        %v2278 = vpack.c.b16 %v1542, %v1534
        %v2279 = vpack.c.b16 %v1543, %v1535
        %v2280 = vpack.c.b16 %v1544, %v1536
        %v2281 = vpack.c.b16 %v1545, %v1537
        %v2282 = vpack.c.b16 %v1546, %v1538
        %v2283 = vpack.c.b16 %v1555, %v1547
        %v2284 = vpack.c.b16 %v1556, %v1548
        %v2285 = vpack.c.b16 %v1557, %v1549
        %v2286 = vpack.c.b16 %v1558, %v1550
        %v2287 = vpack.c.b16 %v1559, %v1551
        %v2288 = vpack.c.b16 %v1560, %v1552
        %v2289 = vpack.c.b16 %v1561, %v1553
        %v2290 = vpack.c.b16 %v1562, %v1554
        %v2291 = vpack.c.b16 %v1571, %v1563
        %v2292 = vpack.c.b16 %v1572, %v1564
        %v2293 = vpack.c.b16 %v1573, %v1565
        %v2294 = vpack.c.b16 %v1574, %v1566
        %v2295 = vpack.c.b16 %v1575, %v1567
        %v2296 = vpack.c.b16 %v1576, %v1568
        %v2297 = vpack.c.b16 %v1577, %v1569
        %v2298 = vpack.c.b16 %v1578, %v1570
        %v2299 = vpack.c.b16 %v1587, %v1579
        %v2300 = vpack.c.b16 %v1588, %v1580
        %v2301 = vpack.c.b16 %v1589, %v1581
        %v2302 = vpack.c.b16 %v1590, %v1582
        %v2303 = vpack.c.b16 %v1591, %v1583
        %v2304 = vpack.c.b16 %v1592, %v1584
        %v2305 = vpack.c.b16 %v1593, %v1585
        %v2306 = vpack.c.b16 %v1594, %v1586
        %v2307 = vpack.c.b16 %v1603, %v1595
        %v2308 = vpack.c.b16 %v1604, %v1596
        %v2309 = vpack.c.b16 %v1605, %v1597
        %v2310 = vpack.c.b16 %v1606, %v1598
        %v2311 = vpack.c.b16 %v1607, %v1599
        %v2312 = vpack.c.b16 %v1608, %v1600
        %v2313 = vpack.c.b16 %v1609, %v1601
        %v2314 = vpack.c.b16 %v1610, %v1602
        %v2315 = vpack.c.b16 %v1619, %v1611
        %v2316 = vpack.c.b16 %v1620, %v1612
        %v2317 = vpack.c.b16 %v1621, %v1613
        %v2318 = vpack.c.b16 %v1622, %v1614
        %v2319 = vpack.c.b16 %v1623, %v1615
        %v2320 = vpack.c.b16 %v1624, %v1616
        %v2321 = vpack.c.b16 %v1625, %v1617
        %v2322 = vpack.c.b16 %v1626, %v1618
        %v2323 = vpack.c.b16 %v1635, %v1627
        %v2324 = vpack.c.b16 %v1636, %v1628
        %v2325 = vpack.c.b16 %v1637, %v1629
        %v2326 = vpack.c.b16 %v1638, %v1630
        %v2327 = vpack.c.b16 %v1639, %v1631
        %v2328 = vpack.c.b16 %v1640, %v1632
        %v2329 = vpack.c.b16 %v1641, %v1633
        %v2330 = vpack.c.b16 %v1642, %v1634
        %v2331 = vpack.c.b16 %v1651, %v1643
        %v2332 = vpack.c.b16 %v1652, %v1644
        %v2333 = vpack.c.b16 %v1653, %v1645
        %v2334 = vpack.c.b16 %v1654, %v1646
        %v2335 = vpack.c.b16 %v1655, %v1647
        %v2336 = vpack.c.b16 %v1656, %v1648
        %v2337 = vpack.c.b16 %v1657, %v1649
        %v2338 = vpack.c.b16 %v1658, %v1650
        %v2339 = vpack.c.b16 %v1667, %v1659
        %v2340 = vpack.c.b16 %v1668, %v1660
        %v2341 = vpack.c.b16 %v1669, %v1661
        %v2342 = vpack.c.b16 %v1670, %v1662
        %v2343 = vpack.c.b16 %v1671, %v1663
        %v2344 = vpack.c.b16 %v1672, %v1664
        %v2345 = vpack.c.b16 %v1673, %v1665
        %v2346 = vpack.c.b16 %v1674, %v1666
        %v2347 = vpack.c.b16 %v1683, %v1675
        %v2348 = vpack.c.b16 %v1684, %v1676
        %v2349 = vpack.c.b16 %v1685, %v1677
        %v2350 = vpack.c.b16 %v1686, %v1678
        %v2351 = vpack.c.b16 %v1687, %v1679
        %v2352 = vpack.c.b16 %v1688, %v1680
        %v2353 = vpack.c.b16 %v1689, %v1681
        %v2354 = vpack.c.b16 %v1690, %v1682
        %v2355 = vpack.c.b16 %v1699, %v1691
        %v2356 = vpack.c.b16 %v1700, %v1692
        %v2357 = vpack.c.b16 %v1701, %v1693
        %v2358 = vpack.c.b16 %v1702, %v1694
        %v2359 = vpack.c.b16 %v1703, %v1695
        %v2360 = vpack.c.b16 %v1704, %v1696
        %v2361 = vpack.c.b16 %v1705, %v1697
        %v2362 = vpack.c.b16 %v1706, %v1698
        %v2363 = vpack.c.b16 %v1715, %v1707
        %v2364 = vpack.c.b16 %v1716, %v1708
        %v2365 = vpack.c.b16 %v1717, %v1709
        %v2366 = vpack.c.b16 %v1718, %v1710
        %v2367 = vpack.c.b16 %v1719, %v1711
        %v2368 = vpack.c.b16 %v1720, %v1712
        %v2369 = vpack.c.b16 %v1721, %v1713
        %v2370 = vpack.c.b16 %v1722, %v1714
        %v2371 = vpack.c.b16 %v1731, %v1723
        %v2372 = vpack.c.b16 %v1732, %v1724
        %v2373 = vpack.c.b16 %v1733, %v1725
        %v2374 = vpack.c.b16 %v1734, %v1726
        %v2375 = vpack.c.b16 %v1735, %v1727
        %v2376 = vpack.c.b16 %v1736, %v1728
        %v2377 = vpack.c.b16 %v1737, %v1729
        %v2378 = vpack.c.b16 %v1738, %v1730
        %v2379 = vpack.c.b16 %v1747, %v1739
        %v2380 = vpack.c.b16 %v1748, %v1740
        %v2381 = vpack.c.b16 %v1749, %v1741
        %v2382 = vpack.c.b16 %v1750, %v1742
        %v2383 = vpack.c.b16 %v1751, %v1743
        %v2384 = vpack.c.b16 %v1752, %v1744
        %v2385 = vpack.c.b16 %v1753, %v1745
        %v2386 = vpack.c.b16 %v1754, %v1746
        %v2387 = vpack.c.b16 %v1763, %v1755
        %v2388 = vpack.c.b16 %v1764, %v1756
        %v2389 = vpack.c.b16 %v1765, %v1757
        %v2390 = vpack.c.b16 %v1766, %v1758
        %v2391 = vpack.c.b16 %v1767, %v1759
        %v2392 = vpack.c.b16 %v1768, %v1760
        %v2393 = vpack.c.b16 %v1769, %v1761
        %v2394 = vpack.c.b16 %v1770, %v1762
        %v2395 = vpack.c.b16 %v1779, %v1771
        %v2396 = vpack.c.b16 %v1780, %v1772
        %v2397 = vpack.c.b16 %v1781, %v1773
        %v2398 = vpack.c.b16 %v1782, %v1774
        %v2399 = vpack.c.b16 %v1783, %v1775
        %v2400 = vpack.c.b16 %v1784, %v1776
        %v2401 = vpack.c.b16 %v1785, %v1777
        %v2402 = vpack.c.b16 %v1786, %v1778
        %v2403 = vpack.c.b16 %v1795, %v1787
        %v2404 = vpack.c.b16 %v1796, %v1788
        %v2405 = vpack.c.b16 %v1797, %v1789
        %v2406 = vpack.c.b16 %v1798, %v1790
        %v2407 = vpack.c.b16 %v1799, %v1791
        %v2408 = vpack.c.b16 %v1800, %v1792
        %v2409 = vpack.c.b16 %v1801, %v1793
        %v2410 = vpack.c.b16 %v1802, %v1794
        %v2411 = vpack.c.b16 %v1811, %v1803
        %v2412 = vpack.c.b16 %v1812, %v1804
        %v2413 = vpack.c.b16 %v1813, %v1805
        %v2414 = vpack.c.b16 %v1814, %v1806
        %v2415 = vpack.c.b16 %v1815, %v1807
        %v2416 = vpack.c.b16 %v1816, %v1808
        %v2417 = vpack.c.b16 %v1817, %v1809
        %v2418 = vpack.c.b16 %v1818, %v1810
        %v2419 = vpack.c.b16 %v1827, %v1819
        %v2420 = vpack.c.b16 %v1828, %v1820
        %v2421 = vpack.c.b16 %v1829, %v1821
        %v2422 = vpack.c.b16 %v1830, %v1822
        %v2423 = vpack.c.b16 %v1831, %v1823
        %v2424 = vpack.c.b16 %v1832, %v1824
        %v2425 = vpack.c.b16 %v1833, %v1825
        %v2426 = vpack.c.b16 %v1834, %v1826
        %v2427 = vpack.c.b16 %v1843, %v1835
        %v2428 = vpack.c.b16 %v1844, %v1836
        %v2429 = vpack.c.b16 %v1845, %v1837
        %v2430 = vpack.c.b16 %v1846, %v1838
        %v2431 = vpack.c.b16 %v1847, %v1839
        %v2432 = vpack.c.b16 %v1848, %v1840
        %v2433 = vpack.c.b16 %v1849, %v1841
        %v2434 = vpack.c.b16 %v1850, %v1842
        %v2435 = vpack.c.b16 %v1859, %v1851
        %v2436 = vpack.c.b16 %v1860, %v1852
        %v2437 = vpack.c.b16 %v1861, %v1853
        %v2438 = vpack.c.b16 %v1862, %v1854
        %v2439 = vpack.c.b16 %v1863, %v1855
        %v2440 = vpack.c.b16 %v1864, %v1856
        %v2441 = vpack.c.b16 %v1865, %v1857
        %v2442 = vpack.c.b16 %v1866, %v1858
        %v2443 = vpack.c.b16 %v1875, %v1867
        %v2444 = vpack.c.b16 %v1876, %v1868
        %v2445 = vpack.c.b16 %v1877, %v1869
        %v2446 = vpack.c.b16 %v1878, %v1870
        %v2447 = vpack.c.b16 %v1879, %v1871
        %v2448 = vpack.c.b16 %v1880, %v1872
        %v2449 = vpack.c.b16 %v1881, %v1873
        %v2450 = vpack.c.b16 %v1882, %v1874
        %v2451 = vpack.c.b16 %v1891, %v1883
        %v2452 = vpack.c.b16 %v1892, %v1884
        %v2453 = vpack.c.b16 %v1893, %v1885
        %v2454 = vpack.c.b16 %v1894, %v1886
        %v2455 = vpack.c.b16 %v1895, %v1887
        %v2456 = vpack.c.b16 %v1896, %v1888
        %v2457 = vpack.c.b16 %v1897, %v1889
        %v2458 = vpack.c.b16 %v1898, %v1890
        %v2459 = vpack.c.b16 %v1907, %v1899
        %v2460 = vpack.c.b16 %v1908, %v1900
        %v2461 = vpack.c.b16 %v1909, %v1901
        %v2462 = vpack.c.b16 %v1910, %v1902
        %v2463 = vpack.c.b16 %v1911, %v1903
        %v2464 = vpack.c.b16 %v1912, %v1904
        %v2465 = vpack.c.b16 %v1913, %v1905
        %v2466 = vpack.c.b16 %v1914, %v1906
        %v2467 = vpack.c.b16 %v1923, %v1915
        %v2468 = vpack.c.b16 %v1924, %v1916
        %v2469 = vpack.c.b16 %v1925, %v1917
        %v2470 = vpack.c.b16 %v1926, %v1918
        %v2471 = vpack.c.b16 %v1927, %v1919
        %v2472 = vpack.c.b16 %v1928, %v1920
        %v2473 = vpack.c.b16 %v1929, %v1921
        %v2474 = vpack.c.b16 %v1930, %v1922
        %v2475 = vpack.c.b16 %v1939, %v1931
        %v2476 = vpack.c.b16 %v1940, %v1932
        %v2477 = vpack.c.b16 %v1941, %v1933
        %v2478 = vpack.c.b16 %v1942, %v1934
        %v2479 = vpack.c.b16 %v1943, %v1935
        %v2480 = vpack.c.b16 %v1944, %v1936
        %v2481 = vpack.c.b16 %v1945, %v1937
        %v2482 = vpack.c.b16 %v1946, %v1938
        %v2483 = vpack.c.b16 %v1955, %v1947
        %v2484 = vpack.c.b16 %v1956, %v1948
        %v2485 = vpack.c.b16 %v1957, %v1949
        %v2486 = vpack.c.b16 %v1958, %v1950
        %v2487 = vpack.c.b16 %v1959, %v1951
        %v2488 = vpack.c.b16 %v1960, %v1952
        %v2489 = vpack.c.b16 %v1961, %v1953
        %v2490 = vpack.c.b16 %v1962, %v1954
        %v2491 = vpack.c.b16 %v1971, %v1963
        %v2492 = vpack.c.b16 %v1972, %v1964
        %v2493 = vpack.c.b16 %v1973, %v1965
        %v2494 = vpack.c.b16 %v1974, %v1966
        %v2495 = vpack.c.b16 %v1975, %v1967
        %v2496 = vpack.c.b16 %v1976, %v1968
        %v2497 = vpack.c.b16 %v1977, %v1969
        %v2498 = vpack.c.b16 %v1978, %v1970
        %v2499 = vpack.c.b16 %v1987, %v1979
        %v2500 = vpack.c.b16 %v1988, %v1980
        %v2501 = vpack.c.b16 %v1989, %v1981
        %v2502 = vpack.c.b16 %v1990, %v1982
        %v2503 = vpack.c.b16 %v1991, %v1983
        %v2504 = vpack.c.b16 %v1992, %v1984
        %v2505 = vpack.c.b16 %v1993, %v1985
        %v2506 = vpack.c.b16 %v1994, %v1986
        %v2507 = vpack.c.b16 %v2003, %v1995
        %v2508 = vpack.c.b16 %v2004, %v1996
        %v2509 = vpack.c.b16 %v2005, %v1997
        %v2510 = vpack.c.b16 %v2006, %v1998
        %v2511 = vpack.c.b16 %v2007, %v1999
        %v2512 = vpack.c.b16 %v2008, %v2000
        %v2513 = vpack.c.b16 %v2009, %v2001
        %v2514 = vpack.c.b16 %v2010, %v2002
        %v2515 = vpack.c.b16 %v2019, %v2011
        %v2516 = vpack.c.b16 %v2020, %v2012
        %v2517 = vpack.c.b16 %v2021, %v2013
        %v2518 = vpack.c.b16 %v2022, %v2014
        %v2519 = vpack.c.b16 %v2023, %v2015
        %v2520 = vpack.c.b16 %v2024, %v2016
        %v2521 = vpack.c.b16 %v2025, %v2017
        %v2522 = vpack.c.b16 %v2026, %v2018
        %v2523 = vpack.c.b16 %v2035, %v2027
        %v2524 = vpack.c.b16 %v2036, %v2028
        %v2525 = vpack.c.b16 %v2037, %v2029
        %v2526 = vpack.c.b16 %v2038, %v2030
        %v2527 = vpack.c.b16 %v2039, %v2031
        %v2528 = vpack.c.b16 %v2040, %v2032
        %v2529 = vpack.c.b16 %v2041, %v2033
        %v2530 = vpack.c.b16 %v2042, %v2034
        %v2531 = vpack.c.b16 %v2051, %v2043
        %v2532 = vpack.c.b16 %v2052, %v2044
        %v2533 = vpack.c.b16 %v2053, %v2045
        %v2534 = vpack.c.b16 %v2054, %v2046
        %v2535 = vpack.c.b16 %v2055, %v2047
        %v2536 = vpack.c.b16 %v2056, %v2048
        %v2537 = vpack.c.b16 %v2057, %v2049
        %v2538 = vpack.c.b16 %v2058, %v2050
        %v2539 = vpack.c.b16 %v2067, %v2059
        %v2540 = vpack.c.b16 %v2068, %v2060
        %v2541 = vpack.c.b16 %v2069, %v2061
        %v2542 = vpack.c.b16 %v2070, %v2062
        %v2543 = vpack.c.b16 %v2071, %v2063
        %v2544 = vpack.c.b16 %v2072, %v2064
        %v2545 = vpack.c.b16 %v2073, %v2065
        %v2546 = vpack.c.b16 %v2074, %v2066
        %v2547 = vpack.c.b16 %v2083, %v2075
        %v2548 = vpack.c.b16 %v2084, %v2076
        %v2549 = vpack.c.b16 %v2085, %v2077
        %v2550 = vpack.c.b16 %v2086, %v2078
        %v2551 = vpack.c.b16 %v2087, %v2079
        %v2552 = vpack.c.b16 %v2088, %v2080
        %v2553 = vpack.c.b16 %v2089, %v2081
        %v2554 = vpack.c.b16 %v2090, %v2082
        %v2555 = vpack.c.b16 %v2099, %v2091
        %v2556 = vpack.c.b16 %v2100, %v2092
        %v2557 = vpack.c.b16 %v2101, %v2093
        %v2558 = vpack.c.b16 %v2102, %v2094
        %v2559 = vpack.c.b16 %v2103, %v2095
        %v2560 = vpack.c.b16 %v2104, %v2096
        %v2561 = vpack.c.b16 %v2105, %v2097
        %v2562 = vpack.c.b16 %v2106, %v2098
        %v2563 = vpack.c.b16 %v2115, %v2107
        %v2564 = vpack.c.b16 %v2116, %v2108
        %v2565 = vpack.c.b16 %v2117, %v2109
        %v2566 = vpack.c.b16 %v2118, %v2110
        %v2567 = vpack.c.b16 %v2119, %v2111
        %v2568 = vpack.c.b16 %v2120, %v2112
        %v2569 = vpack.c.b16 %v2121, %v2113
        %v2570 = vpack.c.b16 %v2122, %v2114
        %3019 = vmatprep.subr.bf16.mxu0 %v2124
        %3020 = vmatpush1.bf16.msra.mxu0 %v2123
        %3021 = vmatprep.subr.bf16.mxu0 %v2132
        %3022 = vmatpush1.bf16.msra.mxu0 %v2131
        %3023 = vmatprep.subr.bf16.mxu0 %v2140
        %3024 = vmatpush1.bf16.msra.mxu0 %v2139
        %3025 = vmatprep.subr.bf16.mxu0 %v2148
        %3026 = vmatpush1.bf16.msra.mxu0 %v2147
        %3027 = vmatprep.subr.bf16.mxu0 %v2156
        %3028 = vmatpush1.bf16.msra.mxu0 %v2155
        %3029 = vmatprep.subr.bf16.mxu0 %v2164
        %3030 = vmatpush1.bf16.msra.mxu0 %v2163
        %3031 = vmatprep.subr.bf16.mxu0 %v2172
        %3032 = vmatpush1.bf16.msra.mxu0 %v2171
        %3033 = vmatprep.subr.bf16.mxu0 %v2180
        %3034 = vmatpush1.bf16.msra.mxu0 %v2179
        %3035 = vmatprep.subr.bf16.mxu0 %v2188
        %3036 = vmatpush1.bf16.msra.mxu0 %v2187
        %3037 = vmatprep.subr.bf16.mxu0 %v2196
        %3038 = vmatpush1.bf16.msra.mxu0 %v2195
        %3039 = vmatprep.subr.bf16.mxu0 %v2204
        %3040 = vmatpush1.bf16.msra.mxu0 %v2203
        %3041 = vmatprep.subr.bf16.mxu0 %v2212
        %3042 = vmatpush1.bf16.msra.mxu0 %v2211
        %3043 = vmatprep.subr.bf16.mxu0 %v2220
        %3044 = vmatpush1.bf16.msra.mxu0 %v2219
        %3045 = vmatprep.subr.bf16.mxu0 %v2228
        %3046 = vmatpush1.bf16.msra.mxu0 %v2227
        %3047 = vmatprep.subr.bf16.mxu0 %v2236
        %3048 = vmatpush1.bf16.msra.mxu0 %v2235
        %3049 = vmatprep.subr.bf16.mxu0 %v2244
        %3050 = vmatpush1.bf16.msra.mxu0 %v2243
        %3051 = vmatprep.mubr.bf16.mxu0 %v283
        %3052 = vmatmul.mubr.bf16.gmra.mrb[0].mxu0 %v282
        %v3053 = vpop.f32.mrb[0].mxu0
        %v3054 = vadd.f32 %v742, %v3053
        %v3055 = vpop.f32.mrb[0].mxu0
        %v3056 = vadd.f32 %v746, %v3055
        %v3057 = vpop.f32.mrb[0].mxu0
        %v3058 = vpop.f32.mrb[0].mxu0
        %3059 = vdwg.mxu0
        %3060 = vmatprep.subr.bf16.mxu0 %v2252
        %3061 = vmatpush1.bf16.msra.mxu0 %v2251
        %3062 = vmatprep.subr.bf16.mxu0 %v2260
        %3063 = vmatpush1.bf16.msra.mxu0 %v2259
        %3064 = vmatprep.subr.bf16.mxu0 %v2268
        %3065 = vmatpush1.bf16.msra.mxu0 %v2267
        %3066 = vmatprep.subr.bf16.mxu0 %v2276
        %3067 = vmatpush1.bf16.msra.mxu0 %v2275
        %3068 = vmatprep.subr.bf16.mxu0 %v2284
        %3069 = vmatpush1.bf16.msra.mxu0 %v2283
        %3070 = vmatprep.subr.bf16.mxu0 %v2292
        %3071 = vmatpush1.bf16.msra.mxu0 %v2291
        %3072 = vmatprep.subr.bf16.mxu0 %v2300
        %3073 = vmatpush1.bf16.msra.mxu0 %v2299
        %3074 = vmatprep.subr.bf16.mxu0 %v2308
        %3075 = vmatpush1.bf16.msra.mxu0 %v2307
        %3076 = vmatprep.subr.bf16.mxu0 %v2316
        %3077 = vmatpush1.bf16.msra.mxu0 %v2315
        %3078 = vmatprep.subr.bf16.mxu0 %v2324
        %3079 = vmatpush1.bf16.msra.mxu0 %v2323
        %3080 = vmatprep.subr.bf16.mxu0 %v2332
        %3081 = vmatpush1.bf16.msra.mxu0 %v2331
        %3082 = vmatprep.subr.bf16.mxu0 %v2340
        %3083 = vmatpush1.bf16.msra.mxu0 %v2339
        %3084 = vmatprep.subr.bf16.mxu0 %v2348
        %3085 = vmatpush1.bf16.msra.mxu0 %v2347
        %3086 = vmatprep.subr.bf16.mxu0 %v2356
        %3087 = vmatpush1.bf16.msra.mxu0 %v2355
        %3088 = vmatprep.subr.bf16.mxu0 %v2364
        %3089 = vmatpush1.bf16.msra.mxu0 %v2363
        %3090 = vmatprep.subr.bf16.mxu0 %v2372
        %3091 = vmatpush1.bf16.msra.mxu0 %v2371
        %3092 = vmatprep.mubr.bf16.mxu0 %v285
        %3093 = vmatmul.mubr.bf16.gmra.mrb[0].mxu0 %v284
        %v3094 = vpop.f32.mrb[0].mxu0
        %v3095 = vadd.f32 %v3054, %v3094
        %v3096 = vpop.f32.mrb[0].mxu0
        %v3097 = vadd.f32 %v3056, %v3096
        %v3098 = vpop.f32.mrb[0].mxu0
        %v3099 = vpop.f32.mrb[0].mxu0
        %3100 = vdwg.mxu0
        %3101 = vmatprep.subr.bf16.mxu0 %v2380
        %3102 = vmatpush1.bf16.msra.mxu0 %v2379
        %3103 = vmatprep.subr.bf16.mxu0 %v2388
        %3104 = vmatpush1.bf16.msra.mxu0 %v2387
        %3105 = vmatprep.subr.bf16.mxu0 %v2396
        %3106 = vmatpush1.bf16.msra.mxu0 %v2395
        %3107 = vmatprep.subr.bf16.mxu0 %v2404
        %3108 = vmatpush1.bf16.msra.mxu0 %v2403
        %3109 = vmatprep.subr.bf16.mxu0 %v2412
        %3110 = vmatpush1.bf16.msra.mxu0 %v2411
        %3111 = vmatprep.subr.bf16.mxu0 %v2420
        %3112 = vmatpush1.bf16.msra.mxu0 %v2419
        %3113 = vmatprep.subr.bf16.mxu0 %v2428
        %3114 = vmatpush1.bf16.msra.mxu0 %v2427
        %3115 = vmatprep.subr.bf16.mxu0 %v2436
        %3116 = vmatpush1.bf16.msra.mxu0 %v2435
        %3117 = vmatprep.subr.bf16.mxu0 %v2444
        %3118 = vmatpush1.bf16.msra.mxu0 %v2443
        %3119 = vmatprep.subr.bf16.mxu0 %v2452
        %3120 = vmatpush1.bf16.msra.mxu0 %v2451
        %3121 = vmatprep.subr.bf16.mxu0 %v2460
        %3122 = vmatpush1.bf16.msra.mxu0 %v2459
        %3123 = vmatprep.subr.bf16.mxu0 %v2468
        %3124 = vmatpush1.bf16.msra.mxu0 %v2467
        %3125 = vmatprep.subr.bf16.mxu0 %v2476
        %3126 = vmatpush1.bf16.msra.mxu0 %v2475
        %3127 = vmatprep.subr.bf16.mxu0 %v2484
        %3128 = vmatpush1.bf16.msra.mxu0 %v2483
        %3129 = vmatprep.subr.bf16.mxu0 %v2492
        %3130 = vmatpush1.bf16.msra.mxu0 %v2491
        %3131 = vmatprep.subr.bf16.mxu0 %v2500
        %3132 = vmatpush1.bf16.msra.mxu0 %v2499
        %3133 = vmatprep.mubr.bf16.mxu0 %v287
        %3134 = vmatmul.mubr.bf16.gmra.mrb[0].mxu0 %v286
        %v3135 = vpop.f32.mrb[0].mxu0
        %v3136 = vadd.f32 %v3095, %v3135
        %v3137 = vpop.f32.mrb[0].mxu0
        %v3138 = vadd.f32 %v3097, %v3137
        %v3139 = vpop.f32.mrb[0].mxu0
        %v3140 = vpop.f32.mrb[0].mxu0
        %3141 = vdwg.mxu0
        %3142 = vmatprep.subr.bf16.mxu0 %v2508
        %3143 = vmatpush1.bf16.msra.mxu0 %v2507
        %3144 = vmatprep.subr.bf16.mxu0 %v2516
        %3145 = vmatpush1.bf16.msra.mxu0 %v2515
        %3146 = vmatprep.subr.bf16.mxu0 %v2524
        %3147 = vmatpush1.bf16.msra.mxu0 %v2523
        %3148 = vmatprep.subr.bf16.mxu0 %v2532
        %3149 = vmatpush1.bf16.msra.mxu0 %v2531
        %3150 = vmatprep.subr.bf16.mxu0 %v2540
        %3151 = vmatpush1.bf16.msra.mxu0 %v2539
        %3152 = vmatprep.subr.bf16.mxu0 %v2548
        %3153 = vmatpush1.bf16.msra.mxu0 %v2547
        %3154 = vmatprep.subr.bf16.mxu0 %v2556
        %3155 = vmatpush1.bf16.msra.mxu0 %v2555
        %3156 = vmatprep.subr.bf16.mxu0 %v2564
        %3157 = vmatpush1.bf16.msra.mxu0 %v2563
        %3158 = vmatprep.subr.bf16.mxu0 0
        %3159 = vmatpush1.bf16.msra.mxu0 0
        %3160 = vmatprep.subr.bf16.mxu0 0
        %3161 = vmatpush1.bf16.msra.mxu0 0
        %3162 = vmatprep.subr.bf16.mxu0 0
        %3163 = vmatpush1.bf16.msra.mxu0 0
        %3164 = vmatprep.subr.bf16.mxu0 0
        %3165 = vmatpush1.bf16.msra.mxu0 0
        %3166 = vmatprep.subr.bf16.mxu0 0
        %3167 = vmatpush1.bf16.msra.mxu0 0
        %3168 = vmatprep.subr.bf16.mxu0 0
        %3169 = vmatpush1.bf16.msra.mxu0 0
        %3170 = vmatprep.subr.bf16.mxu0 0
        %3171 = vmatpush1.bf16.msra.mxu0 0
        %3172 = vmatprep.subr.bf16.mxu0 0
        %3173 = vmatpush1.bf16.msra.mxu0 0
        %3174 = vmatprep.mubr.bf16.mxu0 0
        %3175 = vmatmul.mubr.bf16.gmra.mrb[0].mxu0 %v288
        %v3176 = vpop.f32.mrb[0].mxu0
        %v3177 = vadd.f32 %v3136, %v3176
        %v3178 = vpop.f32.mrb[0].mxu0
        %v3179 = vadd.f32 %v3138, %v3178
        %v3180 = vpop.f32.mrb[0].mxu0
        %v3181 = vpop.f32.mrb[0].mxu0
        %3182 = vdwg.mxu0
        %3183 = vmatprep.subr.bf16.mxu0 %v2126
        %3184 = vmatpush1.bf16.msra.mxu0 %v2125
        %3185 = vmatprep.subr.bf16.mxu0 %v2134
        %3186 = vmatpush1.bf16.msra.mxu0 %v2133
        %3187 = vmatprep.subr.bf16.mxu0 %v2142
        %3188 = vmatpush1.bf16.msra.mxu0 %v2141
        %3189 = vmatprep.subr.bf16.mxu0 %v2150
        %3190 = vmatpush1.bf16.msra.mxu0 %v2149
        %3191 = vmatprep.subr.bf16.mxu0 %v2158
        %3192 = vmatpush1.bf16.msra.mxu0 %v2157
        %3193 = vmatprep.subr.bf16.mxu0 %v2166
        %3194 = vmatpush1.bf16.msra.mxu0 %v2165
        %3195 = vmatprep.subr.bf16.mxu0 %v2174
        %3196 = vmatpush1.bf16.msra.mxu0 %v2173
        %3197 = vmatprep.subr.bf16.mxu0 %v2182
        %3198 = vmatpush1.bf16.msra.mxu0 %v2181
        %3199 = vmatprep.subr.bf16.mxu0 %v2190
        %3200 = vmatpush1.bf16.msra.mxu0 %v2189
        %3201 = vmatprep.subr.bf16.mxu0 %v2198
        %3202 = vmatpush1.bf16.msra.mxu0 %v2197
        %3203 = vmatprep.subr.bf16.mxu0 %v2206
        %3204 = vmatpush1.bf16.msra.mxu0 %v2205
        %3205 = vmatprep.subr.bf16.mxu0 %v2214
        %3206 = vmatpush1.bf16.msra.mxu0 %v2213
        %3207 = vmatprep.subr.bf16.mxu0 %v2222
        %3208 = vmatpush1.bf16.msra.mxu0 %v2221
        %3209 = vmatprep.subr.bf16.mxu0 %v2230
        %3210 = vmatpush1.bf16.msra.mxu0 %v2229
        %3211 = vmatprep.subr.bf16.mxu0 %v2238
        %3212 = vmatpush1.bf16.msra.mxu0 %v2237
        %3213 = vmatprep.subr.bf16.mxu0 %v2246
        %3214 = vmatpush1.bf16.msra.mxu0 %v2245
        %3215 = vmatprep.mubr.bf16.mxu0 %v283
        %3216 = vmatmul.mubr.bf16.gmra.mrb[0].mxu0 %v282
        %v3217 = vpop.f32.mrb[0].mxu0
        %v3218 = vadd.f32 %v750, %v3217
        %v3219 = vpop.f32.mrb[0].mxu0
        %v3220 = vadd.f32 %v754, %v3219
        %v3221 = vpop.f32.mrb[0].mxu0
        %v3222 = vpop.f32.mrb[0].mxu0
        %3223 = vdwg.mxu0
        %3224 = vmatprep.subr.bf16.mxu0 %v2254
        %3225 = vmatpush1.bf16.msra.mxu0 %v2253
        %3226 = vmatprep.subr.bf16.mxu0 %v2262
        %3227 = vmatpush1.bf16.msra.mxu0 %v2261
        %3228 = vmatprep.subr.bf16.mxu0 %v2270
        %3229 = vmatpush1.bf16.msra.mxu0 %v2269
        %3230 = vmatprep.subr.bf16.mxu0 %v2278
        %3231 = vmatpush1.bf16.msra.mxu0 %v2277
        %3232 = vmatprep.subr.bf16.mxu0 %v2286
        %3233 = vmatpush1.bf16.msra.mxu0 %v2285
        %3234 = vmatprep.subr.bf16.mxu0 %v2294
        %3235 = vmatpush1.bf16.msra.mxu0 %v2293
        %3236 = vmatprep.subr.bf16.mxu0 %v2302
        %3237 = vmatpush1.bf16.msra.mxu0 %v2301
        %3238 = vmatprep.subr.bf16.mxu0 %v2310
        %3239 = vmatpush1.bf16.msra.mxu0 %v2309
        %3240 = vmatprep.subr.bf16.mxu0 %v2318
        %3241 = vmatpush1.bf16.msra.mxu0 %v2317
        %3242 = vmatprep.subr.bf16.mxu0 %v2326
        %3243 = vmatpush1.bf16.msra.mxu0 %v2325
        %3244 = vmatprep.subr.bf16.mxu0 %v2334
        %3245 = vmatpush1.bf16.msra.mxu0 %v2333
        %3246 = vmatprep.subr.bf16.mxu0 %v2342
        %3247 = vmatpush1.bf16.msra.mxu0 %v2341
        %3248 = vmatprep.subr.bf16.mxu0 %v2350
        %3249 = vmatpush1.bf16.msra.mxu0 %v2349
        %3250 = vmatprep.subr.bf16.mxu0 %v2358
        %3251 = vmatpush1.bf16.msra.mxu0 %v2357
        %3252 = vmatprep.subr.bf16.mxu0 %v2366
        %3253 = vmatpush1.bf16.msra.mxu0 %v2365
        %3254 = vmatprep.subr.bf16.mxu0 %v2374
        %3255 = vmatpush1.bf16.msra.mxu0 %v2373
        %3256 = vmatprep.mubr.bf16.mxu0 %v285
        %3257 = vmatmul.mubr.bf16.gmra.mrb[0].mxu0 %v284
        %v3258 = vpop.f32.mrb[0].mxu0
        %v3259 = vadd.f32 %v3218, %v3258
        %v3260 = vpop.f32.mrb[0].mxu0
        %v3261 = vadd.f32 %v3220, %v3260
        %v3262 = vpop.f32.mrb[0].mxu0
        %v3263 = vpop.f32.mrb[0].mxu0
        %3264 = vdwg.mxu0
        %3265 = vmatprep.subr.bf16.mxu0 %v2382
        %3266 = vmatpush1.bf16.msra.mxu0 %v2381
        %3267 = vmatprep.subr.bf16.mxu0 %v2390
        %3268 = vmatpush1.bf16.msra.mxu0 %v2389
        %3269 = vmatprep.subr.bf16.mxu0 %v2398
        %3270 = vmatpush1.bf16.msra.mxu0 %v2397
        %3271 = vmatprep.subr.bf16.mxu0 %v2406
        %3272 = vmatpush1.bf16.msra.mxu0 %v2405
        %3273 = vmatprep.subr.bf16.mxu0 %v2414
        %3274 = vmatpush1.bf16.msra.mxu0 %v2413
        %3275 = vmatprep.subr.bf16.mxu0 %v2422
        %3276 = vmatpush1.bf16.msra.mxu0 %v2421
        %3277 = vmatprep.subr.bf16.mxu0 %v2430
        %3278 = vmatpush1.bf16.msra.mxu0 %v2429
        %3279 = vmatprep.subr.bf16.mxu0 %v2438
        %3280 = vmatpush1.bf16.msra.mxu0 %v2437
        %3281 = vmatprep.subr.bf16.mxu0 %v2446
        %3282 = vmatpush1.bf16.msra.mxu0 %v2445
        %3283 = vmatprep.subr.bf16.mxu0 %v2454
        %3284 = vmatpush1.bf16.msra.mxu0 %v2453
        %3285 = vmatprep.subr.bf16.mxu0 %v2462
        %3286 = vmatpush1.bf16.msra.mxu0 %v2461
        %3287 = vmatprep.subr.bf16.mxu0 %v2470
        %3288 = vmatpush1.bf16.msra.mxu0 %v2469
        %3289 = vmatprep.subr.bf16.mxu0 %v2478
        %3290 = vmatpush1.bf16.msra.mxu0 %v2477
        %3291 = vmatprep.subr.bf16.mxu0 %v2486
        %3292 = vmatpush1.bf16.msra.mxu0 %v2485
        %3293 = vmatprep.subr.bf16.mxu0 %v2494
        %3294 = vmatpush1.bf16.msra.mxu0 %v2493
        %3295 = vmatprep.subr.bf16.mxu0 %v2502
        %3296 = vmatpush1.bf16.msra.mxu0 %v2501
        %3297 = vmatprep.mubr.bf16.mxu0 %v287
        %3298 = vmatmul.mubr.bf16.gmra.mrb[0].mxu0 %v286
        %v3299 = vpop.f32.mrb[0].mxu0
        %v3300 = vadd.f32 %v3259, %v3299
        %v3301 = vpop.f32.mrb[0].mxu0
        %v3302 = vadd.f32 %v3261, %v3301
        %v3303 = vpop.f32.mrb[0].mxu0
        %v3304 = vpop.f32.mrb[0].mxu0
        %3305 = vdwg.mxu0
        %3306 = vmatprep.subr.bf16.mxu0 %v2510
        %3307 = vmatpush1.bf16.msra.mxu0 %v2509
        %3308 = vmatprep.subr.bf16.mxu0 %v2518
        %3309 = vmatpush1.bf16.msra.mxu0 %v2517
        %3310 = vmatprep.subr.bf16.mxu0 %v2526
        %3311 = vmatpush1.bf16.msra.mxu0 %v2525
        %3312 = vmatprep.subr.bf16.mxu0 %v2534
        %3313 = vmatpush1.bf16.msra.mxu0 %v2533
        %3314 = vmatprep.subr.bf16.mxu0 %v2542
        %3315 = vmatpush1.bf16.msra.mxu0 %v2541
        %3316 = vmatprep.subr.bf16.mxu0 %v2550
        %3317 = vmatpush1.bf16.msra.mxu0 %v2549
        %3318 = vmatprep.subr.bf16.mxu0 %v2558
        %3319 = vmatpush1.bf16.msra.mxu0 %v2557
        %3320 = vmatprep.subr.bf16.mxu0 %v2566
        %3321 = vmatpush1.bf16.msra.mxu0 %v2565
        %3322 = vmatprep.subr.bf16.mxu0 0
        %3323 = vmatpush1.bf16.msra.mxu0 0
        %3324 = vmatprep.subr.bf16.mxu0 0
        %3325 = vmatpush1.bf16.msra.mxu0 0
        %3326 = vmatprep.subr.bf16.mxu0 0
        %3327 = vmatpush1.bf16.msra.mxu0 0
        %3328 = vmatprep.subr.bf16.mxu0 0
        %3329 = vmatpush1.bf16.msra.mxu0 0
        %3330 = vmatprep.subr.bf16.mxu0 0
        %3331 = vmatpush1.bf16.msra.mxu0 0
        %3332 = vmatprep.subr.bf16.mxu0 0
        %3333 = vmatpush1.bf16.msra.mxu0 0
        %3334 = vmatprep.subr.bf16.mxu0 0
        %3335 = vmatpush1.bf16.msra.mxu0 0
        %3336 = vmatprep.subr.bf16.mxu0 0
        %3337 = vmatpush1.bf16.msra.mxu0 0
        %3338 = vmatprep.mubr.bf16.mxu0 0
        %3339 = vmatmul.mubr.bf16.gmra.mrb[0].mxu0 %v288
        %v3340 = vpop.f32.mrb[0].mxu0
        %v3341 = vadd.f32 %v3300, %v3340
        %v3342 = vpop.f32.mrb[0].mxu0
        %v3343 = vadd.f32 %v3302, %v3342
        %v3344 = vpop.f32.mrb[0].mxu0
        %v3345 = vpop.f32.mrb[0].mxu0
        %3346 = vdwg.mxu0
        %3347 = vmatprep.subr.bf16.mxu0 %v2128
        %3348 = vmatpush1.bf16.msra.mxu0 %v2127
        %3349 = vmatprep.subr.bf16.mxu0 %v2136
        %3350 = vmatpush1.bf16.msra.mxu0 %v2135
        %3351 = vmatprep.subr.bf16.mxu0 %v2144
        %3352 = vmatpush1.bf16.msra.mxu0 %v2143
        %3353 = vmatprep.subr.bf16.mxu0 %v2152
        %3354 = vmatpush1.bf16.msra.mxu0 %v2151
        %3355 = vmatprep.subr.bf16.mxu0 %v2160
        %3356 = vmatpush1.bf16.msra.mxu0 %v2159
        %3357 = vmatprep.subr.bf16.mxu0 %v2168
        %3358 = vmatpush1.bf16.msra.mxu0 %v2167
        %3359 = vmatprep.subr.bf16.mxu0 %v2176
        %3360 = vmatpush1.bf16.msra.mxu0 %v2175
        %3361 = vmatprep.subr.bf16.mxu0 %v2184
        %3362 = vmatpush1.bf16.msra.mxu0 %v2183
        %3363 = vmatprep.subr.bf16.mxu0 %v2192
        %3364 = vmatpush1.bf16.msra.mxu0 %v2191
        %3365 = vmatprep.subr.bf16.mxu0 %v2200
        %3366 = vmatpush1.bf16.msra.mxu0 %v2199
        %3367 = vmatprep.subr.bf16.mxu0 %v2208
        %3368 = vmatpush1.bf16.msra.mxu0 %v2207
        %3369 = vmatprep.subr.bf16.mxu0 %v2216
        %3370 = vmatpush1.bf16.msra.mxu0 %v2215
        %3371 = vmatprep.subr.bf16.mxu0 %v2224
        %3372 = vmatpush1.bf16.msra.mxu0 %v2223
        %3373 = vmatprep.subr.bf16.mxu0 %v2232
        %3374 = vmatpush1.bf16.msra.mxu0 %v2231
        %3375 = vmatprep.subr.bf16.mxu0 %v2240
        %3376 = vmatpush1.bf16.msra.mxu0 %v2239
        %3377 = vmatprep.subr.bf16.mxu0 %v2248
        %3378 = vmatpush1.bf16.msra.mxu0 %v2247
        %3379 = vmatprep.mubr.bf16.mxu0 %v283
        %3380 = vmatmul.mubr.bf16.gmra.mrb[0].mxu0 %v282
        %v3381 = vpop.f32.mrb[0].mxu0
        %v3382 = vadd.f32 %v758, %v3381
        %v3383 = vpop.f32.mrb[0].mxu0
        %v3384 = vadd.f32 %v762, %v3383
        %v3385 = vpop.f32.mrb[0].mxu0
        %v3386 = vpop.f32.mrb[0].mxu0
        %3387 = vdwg.mxu0
        %3388 = vmatprep.subr.bf16.mxu0 %v2256
        %3389 = vmatpush1.bf16.msra.mxu0 %v2255
        %3390 = vmatprep.subr.bf16.mxu0 %v2264
        %3391 = vmatpush1.bf16.msra.mxu0 %v2263
        %3392 = vmatprep.subr.bf16.mxu0 %v2272
        %3393 = vmatpush1.bf16.msra.mxu0 %v2271
        %3394 = vmatprep.subr.bf16.mxu0 %v2280
        %3395 = vmatpush1.bf16.msra.mxu0 %v2279
        %3396 = vmatprep.subr.bf16.mxu0 %v2288
        %3397 = vmatpush1.bf16.msra.mxu0 %v2287
        %3398 = vmatprep.subr.bf16.mxu0 %v2296
        %3399 = vmatpush1.bf16.msra.mxu0 %v2295
        %3400 = vmatprep.subr.bf16.mxu0 %v2304
        %3401 = vmatpush1.bf16.msra.mxu0 %v2303
        %3402 = vmatprep.subr.bf16.mxu0 %v2312
        %3403 = vmatpush1.bf16.msra.mxu0 %v2311
        %3404 = vmatprep.subr.bf16.mxu0 %v2320
        %3405 = vmatpush1.bf16.msra.mxu0 %v2319
        %3406 = vmatprep.subr.bf16.mxu0 %v2328
        %3407 = vmatpush1.bf16.msra.mxu0 %v2327
        %3408 = vmatprep.subr.bf16.mxu0 %v2336
        %3409 = vmatpush1.bf16.msra.mxu0 %v2335
        %3410 = vmatprep.subr.bf16.mxu0 %v2344
        %3411 = vmatpush1.bf16.msra.mxu0 %v2343
        %3412 = vmatprep.subr.bf16.mxu0 %v2352
        %3413 = vmatpush1.bf16.msra.mxu0 %v2351
        %3414 = vmatprep.subr.bf16.mxu0 %v2360
        %3415 = vmatpush1.bf16.msra.mxu0 %v2359
        %3416 = vmatprep.subr.bf16.mxu0 %v2368
        %3417 = vmatpush1.bf16.msra.mxu0 %v2367
        %3418 = vmatprep.subr.bf16.mxu0 %v2376
        %3419 = vmatpush1.bf16.msra.mxu0 %v2375
        %3420 = vmatprep.mubr.bf16.mxu0 %v285
        %3421 = vmatmul.mubr.bf16.gmra.mrb[0].mxu0 %v284
        %v3422 = vpop.f32.mrb[0].mxu0
        %v3423 = vadd.f32 %v3382, %v3422
        %v3424 = vpop.f32.mrb[0].mxu0
        %v3425 = vadd.f32 %v3384, %v3424
        %v3426 = vpop.f32.mrb[0].mxu0
        %v3427 = vpop.f32.mrb[0].mxu0
        %3428 = vdwg.mxu0
        %3429 = vmatprep.subr.bf16.mxu0 %v2384
        %3430 = vmatpush1.bf16.msra.mxu0 %v2383
        %3431 = vmatprep.subr.bf16.mxu0 %v2392
        %3432 = vmatpush1.bf16.msra.mxu0 %v2391
        %3433 = vmatprep.subr.bf16.mxu0 %v2400
        %3434 = vmatpush1.bf16.msra.mxu0 %v2399
        %3435 = vmatprep.subr.bf16.mxu0 %v2408
        %3436 = vmatpush1.bf16.msra.mxu0 %v2407
        %3437 = vmatprep.subr.bf16.mxu0 %v2416
        %3438 = vmatpush1.bf16.msra.mxu0 %v2415
        %3439 = vmatprep.subr.bf16.mxu0 %v2424
        %3440 = vmatpush1.bf16.msra.mxu0 %v2423
        %3441 = vmatprep.subr.bf16.mxu0 %v2432
        %3442 = vmatpush1.bf16.msra.mxu0 %v2431
        %3443 = vmatprep.subr.bf16.mxu0 %v2440
        %3444 = vmatpush1.bf16.msra.mxu0 %v2439
        %3445 = vmatprep.subr.bf16.mxu0 %v2448
        %3446 = vmatpush1.bf16.msra.mxu0 %v2447
        %3447 = vmatprep.subr.bf16.mxu0 %v2456
        %3448 = vmatpush1.bf16.msra.mxu0 %v2455
        %3449 = vmatprep.subr.bf16.mxu0 %v2464
        %3450 = vmatpush1.bf16.msra.mxu0 %v2463
        %3451 = vmatprep.subr.bf16.mxu0 %v2472
        %3452 = vmatpush1.bf16.msra.mxu0 %v2471
        %3453 = vmatprep.subr.bf16.mxu0 %v2480
        %3454 = vmatpush1.bf16.msra.mxu0 %v2479
        %3455 = vmatprep.subr.bf16.mxu0 %v2488
        %3456 = vmatpush1.bf16.msra.mxu0 %v2487
        %3457 = vmatprep.subr.bf16.mxu0 %v2496
        %3458 = vmatpush1.bf16.msra.mxu0 %v2495
        %3459 = vmatprep.subr.bf16.mxu0 %v2504
        %3460 = vmatpush1.bf16.msra.mxu0 %v2503
        %3461 = vmatprep.mubr.bf16.mxu0 %v287
        %3462 = vmatmul.mubr.bf16.gmra.mrb[0].mxu0 %v286
        %v3463 = vpop.f32.mrb[0].mxu0
        %v3464 = vadd.f32 %v3423, %v3463
        %v3465 = vpop.f32.mrb[0].mxu0
        %v3466 = vadd.f32 %v3425, %v3465
        %v3467 = vpop.f32.mrb[0].mxu0
        %v3468 = vpop.f32.mrb[0].mxu0
        %3469 = vdwg.mxu0
        %3470 = vmatprep.subr.bf16.mxu0 %v2512
        %3471 = vmatpush1.bf16.msra.mxu0 %v2511
        %3472 = vmatprep.subr.bf16.mxu0 %v2520
        %3473 = vmatpush1.bf16.msra.mxu0 %v2519
        %3474 = vmatprep.subr.bf16.mxu0 %v2528
        %3475 = vmatpush1.bf16.msra.mxu0 %v2527
        %3476 = vmatprep.subr.bf16.mxu0 %v2536
        %3477 = vmatpush1.bf16.msra.mxu0 %v2535
        %3478 = vmatprep.subr.bf16.mxu0 %v2544
        %3479 = vmatpush1.bf16.msra.mxu0 %v2543
        %3480 = vmatprep.subr.bf16.mxu0 %v2552
        %3481 = vmatpush1.bf16.msra.mxu0 %v2551
        %3482 = vmatprep.subr.bf16.mxu0 %v2560
        %3483 = vmatpush1.bf16.msra.mxu0 %v2559
        %3484 = vmatprep.subr.bf16.mxu0 %v2568
        %3485 = vmatpush1.bf16.msra.mxu0 %v2567
        %3486 = vmatprep.subr.bf16.mxu0 0
        %3487 = vmatpush1.bf16.msra.mxu0 0
        %3488 = vmatprep.subr.bf16.mxu0 0
        %3489 = vmatpush1.bf16.msra.mxu0 0
        %3490 = vmatprep.subr.bf16.mxu0 0
        %3491 = vmatpush1.bf16.msra.mxu0 0
        %3492 = vmatprep.subr.bf16.mxu0 0
        %3493 = vmatpush1.bf16.msra.mxu0 0
        %3494 = vmatprep.subr.bf16.mxu0 0
        %3495 = vmatpush1.bf16.msra.mxu0 0
        %3496 = vmatprep.subr.bf16.mxu0 0
        %3497 = vmatpush1.bf16.msra.mxu0 0
        %3498 = vmatprep.subr.bf16.mxu0 0
        %3499 = vmatpush1.bf16.msra.mxu0 0
        %3500 = vmatprep.subr.bf16.mxu0 0
        %3501 = vmatpush1.bf16.msra.mxu0 0
        %3502 = vmatprep.mubr.bf16.mxu0 0
        %3503 = vmatmul.mubr.bf16.gmra.mrb[0].mxu0 %v288
        %v3504 = vpop.f32.mrb[0].mxu0
        %v3505 = vadd.f32 %v3464, %v3504
        %v3506 = vpop.f32.mrb[0].mxu0
        %v3507 = vadd.f32 %v3466, %v3506
        %v3508 = vpop.f32.mrb[0].mxu0
        %v3509 = vpop.f32.mrb[0].mxu0
        %3510 = vdwg.mxu0
        %3511 = vmatprep.subr.bf16.mxu0 %v2130
        %3512 = vmatpush1.bf16.msra.mxu0 %v2129
        %3513 = vmatprep.subr.bf16.mxu0 %v2138
        %3514 = vmatpush1.bf16.msra.mxu0 %v2137
        %3515 = vmatprep.subr.bf16.mxu0 %v2146
        %3516 = vmatpush1.bf16.msra.mxu0 %v2145
        %3517 = vmatprep.subr.bf16.mxu0 %v2154
        %3518 = vmatpush1.bf16.msra.mxu0 %v2153
        %3519 = vmatprep.subr.bf16.mxu0 %v2162
        %3520 = vmatpush1.bf16.msra.mxu0 %v2161
        %3521 = vmatprep.subr.bf16.mxu0 %v2170
        %3522 = vmatpush1.bf16.msra.mxu0 %v2169
        %3523 = vmatprep.subr.bf16.mxu0 %v2178
        %3524 = vmatpush1.bf16.msra.mxu0 %v2177
        %3525 = vmatprep.subr.bf16.mxu0 %v2186
        %3526 = vmatpush1.bf16.msra.mxu0 %v2185
        %3527 = vmatprep.subr.bf16.mxu0 %v2194
        %3528 = vmatpush1.bf16.msra.mxu0 %v2193
        %3529 = vmatprep.subr.bf16.mxu0 %v2202
        %3530 = vmatpush1.bf16.msra.mxu0 %v2201
        %3531 = vmatprep.subr.bf16.mxu0 %v2210
        %3532 = vmatpush1.bf16.msra.mxu0 %v2209
        %3533 = vmatprep.subr.bf16.mxu0 %v2218
        %3534 = vmatpush1.bf16.msra.mxu0 %v2217
        %3535 = vmatprep.subr.bf16.mxu0 %v2226
        %3536 = vmatpush1.bf16.msra.mxu0 %v2225
        %3537 = vmatprep.subr.bf16.mxu0 %v2234
        %3538 = vmatpush1.bf16.msra.mxu0 %v2233
        %3539 = vmatprep.subr.bf16.mxu0 %v2242
        %3540 = vmatpush1.bf16.msra.mxu0 %v2241
        %3541 = vmatprep.subr.bf16.mxu0 %v2250
        %3542 = vmatpush1.bf16.msra.mxu0 %v2249
        %3543 = vmatprep.mubr.bf16.mxu0 %v283
        %3544 = vmatmul.mubr.bf16.gmra.mrb[0].mxu0 %v282
        %v3545 = vpop.f32.mrb[0].mxu0
        %v3546 = vadd.f32 %v766, %v3545
        %v3547 = vpop.f32.mrb[0].mxu0
        %v3548 = vadd.f32 %v770, %v3547
        %v3549 = vpop.f32.mrb[0].mxu0
        %v3550 = vpop.f32.mrb[0].mxu0
        %3551 = vdwg.mxu0
        %3552 = vmatprep.subr.bf16.mxu0 %v2258
        %3553 = vmatpush1.bf16.msra.mxu0 %v2257
        %3554 = vmatprep.subr.bf16.mxu0 %v2266
        %3555 = vmatpush1.bf16.msra.mxu0 %v2265
        %3556 = vmatprep.subr.bf16.mxu0 %v2274
        %3557 = vmatpush1.bf16.msra.mxu0 %v2273
        %3558 = vmatprep.subr.bf16.mxu0 %v2282
        %3559 = vmatpush1.bf16.msra.mxu0 %v2281
        %3560 = vmatprep.subr.bf16.mxu0 %v2290
        %3561 = vmatpush1.bf16.msra.mxu0 %v2289
        %3562 = vmatprep.subr.bf16.mxu0 %v2298
        %3563 = vmatpush1.bf16.msra.mxu0 %v2297
        %3564 = vmatprep.subr.bf16.mxu0 %v2306
        %3565 = vmatpush1.bf16.msra.mxu0 %v2305
        %3566 = vmatprep.subr.bf16.mxu0 %v2314
        %3567 = vmatpush1.bf16.msra.mxu0 %v2313
        %3568 = vmatprep.subr.bf16.mxu0 %v2322
        %3569 = vmatpush1.bf16.msra.mxu0 %v2321
        %3570 = vmatprep.subr.bf16.mxu0 %v2330
        %3571 = vmatpush1.bf16.msra.mxu0 %v2329
        %3572 = vmatprep.subr.bf16.mxu0 %v2338
        %3573 = vmatpush1.bf16.msra.mxu0 %v2337
        %3574 = vmatprep.subr.bf16.mxu0 %v2346
        %3575 = vmatpush1.bf16.msra.mxu0 %v2345
        %3576 = vmatprep.subr.bf16.mxu0 %v2354
        %3577 = vmatpush1.bf16.msra.mxu0 %v2353
        %3578 = vmatprep.subr.bf16.mxu0 %v2362
        %3579 = vmatpush1.bf16.msra.mxu0 %v2361
        %3580 = vmatprep.subr.bf16.mxu0 %v2370
        %3581 = vmatpush1.bf16.msra.mxu0 %v2369
        %3582 = vmatprep.subr.bf16.mxu0 %v2378
        %3583 = vmatpush1.bf16.msra.mxu0 %v2377
        %3584 = vmatprep.mubr.bf16.mxu0 %v285
        %3585 = vmatmul.mubr.bf16.gmra.mrb[0].mxu0 %v284
        %v3586 = vpop.f32.mrb[0].mxu0
        %v3587 = vadd.f32 %v3546, %v3586
        %v3588 = vpop.f32.mrb[0].mxu0
        %v3589 = vadd.f32 %v3548, %v3588
        %v3590 = vpop.f32.mrb[0].mxu0
        %v3591 = vpop.f32.mrb[0].mxu0
        %3592 = vdwg.mxu0
        %3593 = vmatprep.subr.bf16.mxu0 %v2386
        %3594 = vmatpush1.bf16.msra.mxu0 %v2385
        %3595 = vmatprep.subr.bf16.mxu0 %v2394
        %3596 = vmatpush1.bf16.msra.mxu0 %v2393
        %3597 = vmatprep.subr.bf16.mxu0 %v2402
        %3598 = vmatpush1.bf16.msra.mxu0 %v2401
        %3599 = vmatprep.subr.bf16.mxu0 %v2410
        %3600 = vmatpush1.bf16.msra.mxu0 %v2409
        %3601 = vmatprep.subr.bf16.mxu0 %v2418
        %3602 = vmatpush1.bf16.msra.mxu0 %v2417
        %3603 = vmatprep.subr.bf16.mxu0 %v2426
        %3604 = vmatpush1.bf16.msra.mxu0 %v2425
        %3605 = vmatprep.subr.bf16.mxu0 %v2434
        %3606 = vmatpush1.bf16.msra.mxu0 %v2433
        %3607 = vmatprep.subr.bf16.mxu0 %v2442
        %3608 = vmatpush1.bf16.msra.mxu0 %v2441
        %3609 = vmatprep.subr.bf16.mxu0 %v2450
        %3610 = vmatpush1.bf16.msra.mxu0 %v2449
        %3611 = vmatprep.subr.bf16.mxu0 %v2458
        %3612 = vmatpush1.bf16.msra.mxu0 %v2457
        %3613 = vmatprep.subr.bf16.mxu0 %v2466
        %3614 = vmatpush1.bf16.msra.mxu0 %v2465
        %3615 = vmatprep.subr.bf16.mxu0 %v2474
        %3616 = vmatpush1.bf16.msra.mxu0 %v2473
        %3617 = vmatprep.subr.bf16.mxu0 %v2482
        %3618 = vmatpush1.bf16.msra.mxu0 %v2481
        %3619 = vmatprep.subr.bf16.mxu0 %v2490
        %3620 = vmatpush1.bf16.msra.mxu0 %v2489
        %3621 = vmatprep.subr.bf16.mxu0 %v2498
        %3622 = vmatpush1.bf16.msra.mxu0 %v2497
        %3623 = vmatprep.subr.bf16.mxu0 %v2506
        %3624 = vmatpush1.bf16.msra.mxu0 %v2505
        %3625 = vmatprep.mubr.bf16.mxu0 %v287
        %3626 = vmatmul.mubr.bf16.gmra.mrb[0].mxu0 %v286
        %v3627 = vpop.f32.mrb[0].mxu0
        %v3628 = vadd.f32 %v3587, %v3627
        %v3629 = vpop.f32.mrb[0].mxu0
        %v3630 = vadd.f32 %v3589, %v3629
        %v3631 = vpop.f32.mrb[0].mxu0
        %v3632 = vpop.f32.mrb[0].mxu0
        %3633 = vdwg.mxu0
        %3634 = vmatprep.subr.bf16.mxu0 %v2514
        %3635 = vmatpush1.bf16.msra.mxu0 %v2513
        %3636 = vmatprep.subr.bf16.mxu0 %v2522
        %3637 = vmatpush1.bf16.msra.mxu0 %v2521
        %3638 = vmatprep.subr.bf16.mxu0 %v2530
        %3639 = vmatpush1.bf16.msra.mxu0 %v2529
        %3640 = vmatprep.subr.bf16.mxu0 %v2538
        %3641 = vmatpush1.bf16.msra.mxu0 %v2537
        %3642 = vmatprep.subr.bf16.mxu0 %v2546
        %3643 = vmatpush1.bf16.msra.mxu0 %v2545
        %3644 = vmatprep.subr.bf16.mxu0 %v2554
        %3645 = vmatpush1.bf16.msra.mxu0 %v2553
        %3646 = vmatprep.subr.bf16.mxu0 %v2562
        %3647 = vmatpush1.bf16.msra.mxu0 %v2561
        %3648 = vmatprep.subr.bf16.mxu0 %v2570
        %3649 = vmatpush1.bf16.msra.mxu0 %v2569
        %3650 = vmatprep.subr.bf16.mxu0 0
        %3651 = vmatpush1.bf16.msra.mxu0 0
        %3652 = vmatprep.subr.bf16.mxu0 0
        %3653 = vmatpush1.bf16.msra.mxu0 0
        %3654 = vmatprep.subr.bf16.mxu0 0
        %3655 = vmatpush1.bf16.msra.mxu0 0
        %3656 = vmatprep.subr.bf16.mxu0 0
        %3657 = vmatpush1.bf16.msra.mxu0 0
        %3658 = vmatprep.subr.bf16.mxu0 0
        %3659 = vmatpush1.bf16.msra.mxu0 0
        %3660 = vmatprep.subr.bf16.mxu0 0
        %3661 = vmatpush1.bf16.msra.mxu0 0
        %3662 = vmatprep.subr.bf16.mxu0 0
        %3663 = vmatpush1.bf16.msra.mxu0 0
        %3664 = vmatprep.subr.bf16.mxu0 0
        %3665 = vmatpush1.bf16.msra.mxu0 0
        %3666 = vmatprep.mubr.bf16.mxu0 0
        %3667 = vmatmul.mubr.bf16.gmra.mrb[0].mxu0 %v288
        %v3668 = vpop.f32.mrb[0].mxu0
        %v3669 = vadd.f32 %v3628, %v3668
        %v3670 = vpop.f32.mrb[0].mxu0
        %v3671 = vadd.f32 %v3630, %v3670
        %v3672 = vpop.f32.mrb[0].mxu0
        %v3673 = vpop.f32.mrb[0].mxu0
        %3674 = vdwg.mxu0
        %v3675 = vmax.f32 %v3177, 0.0
        %v3676 = vmax.f32 %v3179, 0.0
        %v3677 = vmax.f32 %v3341, 0.0
        %v3678 = vmax.f32 %v3343, 0.0
        %v3679 = vmax.f32 %v3505, 0.0
        %v3680 = vmax.f32 %v3507, 0.0
        %v3681 = vmax.f32 %v3669, 0.0
        %v3682 = vmax.f32 %v3671, 0.0
        %v3683 = vpack.c.bf16 %v3675, %v3675
        %v3684 = vpack.c.bf16 %v3676, %v3676
        %v3685 = vpack.c.bf16 %v3677, %v3677
        %v3686 = vpack.c.bf16 %v3678, %v3678
        %v3687 = vpack.c.bf16 %v3679, %v3679
        %v3688 = vpack.c.bf16 %v3680, %v3680
        %v3689 = vpack.c.bf16 %v3681, %v3681
        %v3690 = vpack.c.bf16 %v3682, %v3682
        %v3699 = vunpack.c.l.b16 %v3683
        %v3700 = vunpack.c.l.b16 %v3684
        %v3701 = vunpack.c.l.b16 %v3685
        %v3702 = vunpack.c.l.b16 %v3686
        %v3703 = vunpack.c.l.b16 %v3687
        %v3704 = vunpack.c.l.b16 %v3688
        %v3705 = vunpack.c.l.b16 %v3689
        %v3706 = vunpack.c.l.b16 %v3690
        %v3707 = vpack.c.b16 %v3700, %v3699
        %v3708 = vpack.c.b16 %v3702, %v3701
        %v3709 = vpack.c.b16 %v3704, %v3703
        %v3710 = vpack.c.b16 %v3706, %v3705
        %3715 = vst [vmem:[%s272] sm:$0xff] %v3707
        %3716 = vst [vmem:[%s272 + $0x8] sm:$0xff] %v3708
        %3717 = vst [vmem:[%s272 + $0x10] sm:$0xff] %v3709
        %3718 = vst [vmem:[%s272 + $0x18] sm:$0xff] %v3710
        %s3719 = smul.u32 8, %s25
        %p3720 = scmp.lt.s32.totalorder %s24, 0
        %s3721 = scalar_select %p3720, %s24, 0
        %p3722 = scmp.lt.s32.totalorder %s3719, 15
        %s3723 = scalar_select %p3722, %s3719, 15
        %s3724 = smul.addr %s3721, 16
        %s3725 = sadd.s32 %s3723, %s3724
        %s3726 = smul.addr %s3725, 4
        %s3727 = scalar_lea.vmem %s3, %s3726
        // Predicated region
        $region41: #{net_forward.3} parent=31 // pred_check
          %p3728 = pneg %p130
        $region42: #{net_forward.3} parent=31 // pred_check_branch
          %3730 = sbr.rel (%p3728) target = $region44
        $region43: #{net_forward.3} parent=31 // pred_region
          %s3731 = smul.u32 8, %s25
        $region44: #{net_forward.3} parent=31 // pred_fallthru
          _
      $region32: #{net_forward.3} parent=5 // pred_fallthru
        _
      %p3732 = scmp.le.s32.totalorder 2, %s15
      // Predicated region
      $region45: #{net_forward.3} parent=5 // pred_check
        %p3733 = pneg %p3732
      $region46: #{net_forward.3} parent=5 // pred_check_branch
        %3735 = sbr.rel (%p3733) target = $region48
      $region47: #{net_forward.3} parent=5 // pred_region
        %s3736 = ssub.s32 %s15, 2
        // Predicated region
        $region49: #{net_forward.3} parent=47 // pred_check
          %p3737 = pneg %p136
        $region50: #{net_forward.3} parent=47 // pred_check_branch
          %3739 = sbr.rel (%p3737) target = $region52
        $region51: #{net_forward.3} parent=47 // pred_region
          %s3740 = smul.u32 8, %s27
          %p3741 = scmp.lt.s32.totalorder %s26, 0
          %s3742 = scalar_select %p3741, %s26, 0
          %p3743 = scmp.lt.s32.totalorder %s3740, 15
          %s3744 = scalar_select %p3743, %s3740, 15
          %s3745 = smul.addr %s3742, 16
          %s3746 = sadd.s32 %s3744, %s3745
          %s3747 = smul.addr %s3746, 4
          %s3748 = scalar_lea.vmem %s3, %s3747
        $region52: #{net_forward.3} parent=47 // pred_fallthru
          _
      $region48: #{net_forward.3} parent=5 // pred_fallthru
        _
    $region6: #{net_forward.3} parent=1 // loop_footer
      %s19 = sadd.s32 1, %s15
    $region7: #{net_forward.3} parent=1 // loop_footer_branch
      %14 = sbr.rel target = $region3
    $region8: #{net_forward.3} parent=1 // loop_exit
      _
    %3749 = vsyncpa [#allocation3], 1
    %s3750 = scalar_lea.sflag [#allocation3], 1
    %3751 = vsyncpa %s3750, 1
    %3752 = vsyncpa [#allocation5], 1
    %s3753 = scalar_lea.sflag [#allocation5], 1
    %3754 = vsyncpa %s3753, 1

// kernel: net_forward.4
$region0: #{net_forward.4}
  #allocation0 [shape = 'u32[]', space=smem, size = 0x4, offset = 0x4, fixed_abs, tag = 'smem constant byte address 0x4 - core index']
  #allocation1 [shape = 'u32[144,128]{1,0:T(1,128)}', space=vmem, size = 0x12000, scoped, tag = 'internal scratch']
  #allocation2 [shape = 'bf16[2,8,2048]{2,1,0:T(8,128)(2,1)}', space=vmem, size = 0x10000, scoped, tag = 'scratch operand']
  %s0 = inlined_call_operand.vmem [shape: bf16[8,2048], index: 0, kind: input, shape index: {}]
  %s1 = inlined_call_operand.hbm [shape: bf16[5,2048,2048], index: 1, kind: input, shape index: {}]
  %s2 = inlined_call_operand.hbm [shape: f32[5,1,2048], index: 2, kind: input, shape index: {}]
  %s3 = inlined_call_operand.vmem [shape: bf16[8,2048], index: 3, kind: output, shape index: {}]
  %s4 = sld [smem:[#allocation0]]
  $region69: #{net_forward.4} parent=0
    _
  %s6 = ssub.s32 1, %s4
  %s7 = scalar_select 0, %s6, %s4
  $region1: #{net_forward.4} parent=0
    #allocation3 [shape = 'u8[8388608]{0}', space=vmem, size = 0x800000, scoped, tag = 'input window, operand 1']
    #allocation4 [shape = 's32[2]{0}', space=sflag, size = 0x8, scoped, tag = 'scoped memory for net_forward.4']
    #allocation5 [shape = 'u8[8192]{0}', space=vmem, size = 0x2000, scoped, tag = 'input window, operand 2']
    #allocation6 [shape = 's32[2]{0}', space=sflag, size = 0x8, scoped, tag = 'scoped memory for net_forward.4']
    %8 = vsyncpa [#allocation4], 0
    %s9 = scalar_lea.sflag [#allocation4], 1
    %10 = vsyncpa %s9, 0
    %11 = vsyncpa [#allocation6], 0
    %s12 = scalar_lea.sflag [#allocation6], 1
    %13 = vsyncpa %s12, 0
    loop: start=0, step=1, limit=12
    $region2: #{net_forward.4} parent=1 // loop_pre_header
      _
    $region3: #{net_forward.4} parent=1 // loop_header
      %s15 = sphi 0, %s19
      %p16 = scmp.ge.s32.totalorder %s15, 12
      %s22 = sphi 0, %s41
      %s23 = sphi 0, %s37
      %s24 = sphi 0, %s33
      %s25 = sphi 0, %s22
      %s26 = sphi 0, %s23
      %s27 = sphi 0, %s24
      %s28 = sphi 0, %s25
      %s29 = sphi 0, %s26
      %s30 = sphi 0, %s27
      %s44 = sphi 0, %s46
      %s47 = sphi 0, %s44
      %s48 = sphi 0, %s47
      %s64 = sphi 0, %s48
      %s72 = sphi 0, %s74
      %s75 = sphi 0, %s72
      %s76 = sphi 0, %s75
      %s92 = sphi 0, %s76
      %s100 = sphi 0, %s102
      %s103 = sphi 0, %s100
      %s104 = sphi 0, %s103
      %s120 = sphi 0, %s104
      %s126 = sphi 0, %s128
      %s129 = sphi 0, %s126
      %s130 = sphi 0, %s129
      %s146 = sphi 0, %s130
    $region4: #{net_forward.4} parent=1 // loop_header_branch
      %18 = sbr.rel (%p16) target = $region8
    $region5: #{net_forward.4} parent=1 // loop_body
      %s20 = ssub.s32 %s15, 1
      %s21 = ssub.s32 %s15, 2
      %s31 = sadd.s32 1, %s24
      %p32 = scmp.ge.s32.totalorder %s31, 2
      %s33 = scalar_select %p32, 0, %s31
      %s34 = sadd.s32 1, %s23
      %s35 = scalar_select %p32, %s34, %s23
      %p36 = scmp.ge.s32.totalorder %s35, 5
      %s37 = scalar_select %p36, 0, %s35
      %s38 = sadd.s32 1, %s22
      %s39 = scalar_select %p36, %s38, %s22
      %p40 = scmp.ge.s32.totalorder %s39, 1
      %s41 = scalar_select %p40, 0, %s39
      %s42 = ssub.s32 %s22, %s41
      %p43 = scmp.eq.s32.totalorder %s42, 0
      %s45 = sadd.s32 %s44, 1
      %s46 = scalar_select %p43, %s44, %s45
      %p49 = pneg %p43
      %p50 = scmp.eq.s32.totalorder %s15, 9
      %p51 = por %p49, %p50
      %p52 = scmp.ne.s32.totalorder %s44, %s47
      %p53 = scmp.eq.s32.totalorder %s15, 0
      %p54 = por %p52, %p53
      %p55 = scmp.ne.s32.totalorder %s44, %s47
      %p56 = scmp.eq.s32.totalorder %s20, 9
      %p57 = por %p55, %p56
      %p58 = scmp.ne.s32.totalorder %s47, %s48
      %p59 = scmp.eq.s32.totalorder %s20, 0
      %p60 = por %p58, %p59
      %p61 = scmp.ne.s32.totalorder %s47, %s48
      %p62 = scmp.eq.s32.totalorder %s21, 9
      %p63 = por %p61, %p62
      %p65 = scmp.ne.s32.totalorder %s48, %s64
      %p66 = scmp.eq.s32.totalorder %s21, 0
      %p67 = por %p65, %p66
      %s68 = ssub.s32 %s23, %s37
      %s69 = ssub.s32 %s24, %s33
      %s70 = sor.u32 %s68, %s69
      %p71 = scmp.eq.s32.totalorder %s70, 0
      %s73 = sadd.s32 %s72, 1
      %s74 = scalar_select %p71, %s72, %s73
      %p77 = pneg %p71
      %p78 = scmp.eq.s32.totalorder %s15, 9
      %p79 = por %p77, %p78
      %p80 = scmp.ne.s32.totalorder %s72, %s75
      %p81 = scmp.eq.s32.totalorder %s15, 0
      %p82 = por %p80, %p81
      %p83 = scmp.ne.s32.totalorder %s72, %s75
      %p84 = scmp.eq.s32.totalorder %s20, 9
      %p85 = por %p83, %p84
      %p86 = scmp.ne.s32.totalorder %s75, %s76
      %p87 = scmp.eq.s32.totalorder %s20, 0
      %p88 = por %p86, %p87
      %p89 = scmp.ne.s32.totalorder %s75, %s76
      %p90 = scmp.eq.s32.totalorder %s21, 9
      %p91 = por %p89, %p90
      %p93 = scmp.ne.s32.totalorder %s76, %s92
      %p94 = scmp.eq.s32.totalorder %s21, 0
      %p95 = por %p93, %p94
      %s96 = ssub.s32 %s23, %s37
      %s97 = ssub.s32 %s24, %s33
      %s98 = sor.u32 %s96, %s97
      %p99 = scmp.eq.s32.totalorder %s98, 0
      %s101 = sadd.s32 %s100, 1
      %s102 = scalar_select %p99, %s100, %s101
      %p105 = pneg %p99
      %p106 = scmp.eq.s32.totalorder %s15, 9
      %p107 = por %p105, %p106
      %p108 = scmp.ne.s32.totalorder %s100, %s103
      %p109 = scmp.eq.s32.totalorder %s15, 0
      %p110 = por %p108, %p109
      %p111 = scmp.ne.s32.totalorder %s100, %s103
      %p112 = scmp.eq.s32.totalorder %s20, 9
      %p113 = por %p111, %p112
      %p114 = scmp.ne.s32.totalorder %s103, %s104
      %p115 = scmp.eq.s32.totalorder %s20, 0
      %p116 = por %p114, %p115
      %p117 = scmp.ne.s32.totalorder %s103, %s104
      %p118 = scmp.eq.s32.totalorder %s21, 9
      %p119 = por %p117, %p118
      %p121 = scmp.ne.s32.totalorder %s104, %s120
      %p122 = scmp.eq.s32.totalorder %s21, 0
      %p123 = por %p121, %p122
      %s124 = ssub.s32 %s22, %s41
      %p125 = scmp.eq.s32.totalorder %s124, 0
      %s127 = sadd.s32 %s126, 1
      %s128 = scalar_select %p125, %s126, %s127
      %p131 = pneg %p125
      %p132 = scmp.eq.s32.totalorder %s15, 9
      %p133 = por %p131, %p132
      %p134 = scmp.ne.s32.totalorder %s126, %s129
      %p135 = scmp.eq.s32.totalorder %s15, 0
      %p136 = por %p134, %p135
      %p137 = scmp.ne.s32.totalorder %s126, %s129
      %p138 = scmp.eq.s32.totalorder %s20, 9
      %p139 = por %p137, %p138
      %p140 = scmp.ne.s32.totalorder %s129, %s130
      %p141 = scmp.eq.s32.totalorder %s20, 0
      %p142 = por %p140, %p141
      %p143 = scmp.ne.s32.totalorder %s129, %s130
      %p144 = scmp.eq.s32.totalorder %s21, 9
      %p145 = por %p143, %p144
      %p147 = scmp.ne.s32.totalorder %s130, %s146
      %p148 = scmp.eq.s32.totalorder %s21, 0
      %p149 = por %p147, %p148
      %p150 = scmp.le.s32.totalorder 1, %s15
      %p151 = scmp.lt.s32.totalorder %s15, 11
      %p152 = pnand %p150, %p151
      %p153 = pneg %p152
      // Predicated region
      $region9: #{net_forward.4} parent=5 // pred_check
        _
      $region10: #{net_forward.4} parent=5 // pred_check_branch
        %155 = sbr.rel (%p152) target = $region12
      $region11: #{net_forward.4} parent=5 // pred_region
        %s156 = ssub.s32 %s15, 1
        // Predicated region
        $region13: #{net_forward.4} parent=11 // pred_check
          %p157 = pneg %p60
        $region14: #{net_forward.4} parent=11 // pred_check_branch
          %159 = sbr.rel (%p157) target = $region16
        $region15: #{net_forward.4} parent=11 // pred_region
          %p160 = scmp.lt.s32.totalorder %s25, 0
          %s161 = scalar_select %p160, %s25, 0
          %s162 = smul.addr %s161, 16
          %s163 = smul.addr %s162, 4
          %s164 = scalar_lea.vmem %s0, %s163
        $region16: #{net_forward.4} parent=11 // pred_fallthru
          _
      $region12: #{net_forward.4} parent=5 // pred_fallthru
        _
      %p165 = scmp.lt.s32.totalorder %s15, 10
      // Predicated region
      $region17: #{net_forward.4} parent=5 // pred_check
        %p166 = pneg %p165
      $region18: #{net_forward.4} parent=5 // pred_check_branch
        %168 = sbr.rel (%p166) target = $region20
      $region19: #{net_forward.4} parent=5 // pred_region
        // Predicated region
        $region21: #{net_forward.4} parent=19 // pred_check
          %p169 = pneg %p82
        $region22: #{net_forward.4} parent=19 // pred_check_branch
          %171 = sbr.rel (%p169) target = $region24
        $region23: #{net_forward.4} parent=19 // pred_region
          %s172 = sand.u32 %s72, 1
          %s173 = scalar_lea.sflag [#allocation4], %s172
          %s174 = sand.u32 %s72, 1
          %s175 = smul.addr %s174, 8192
          %s176 = scalar_lea.vmem [#allocation3], %s175
          %s177 = smul.u32 8, %s24
          %s179 = ssub.s32 131072, 131072
          %180 = vsyncadd %s173, %s179
          %s181 = smul.addr %s23, 4096
          %s182 = sadd.s32 %s177, %s181
          %s183 = smul.addr %s182, 64
          %s184 = scalar_lea.hbm %s1, %s183
          %s185 = sshll.u32 %s176, 4
          %s186 = int_to_ptr.vmem [resolvable:$true] %s185
          %191 = dma.hbm_to_vmem [thread:$0]  %s184, 131072, %s186, %s173, 1024, 512, 32
        $region24: #{net_forward.4} parent=19 // pred_fallthru
          _
        // Predicated region
        $region25: #{net_forward.4} parent=19 // pred_check
          %p192 = pneg %p110
        $region26: #{net_forward.4} parent=19 // pred_check_branch
          %194 = sbr.rel (%p192) target = $region28
        $region27: #{net_forward.4} parent=19 // pred_region
          %s195 = sand.u32 %s100, 1
          %s196 = scalar_lea.sflag [#allocation6], %s195
          %s197 = sand.u32 %s100, 1
          %s198 = smul.addr %s197, 8
          %s199 = scalar_lea.vmem [#allocation5], %s198
          %s200 = smul.u32 8, %s24
          %s202 = ssub.s32 128, 128
          %203 = vsyncadd %s196, %s202
          %s204 = smul.addr %s23, 16
          %s205 = sadd.s32 %s200, %s204
          %s206 = smul.addr %s205, 16
          %s207 = scalar_lea.hbm %s2, %s206
          %s209 = sshll.u32 %s199, 4
          %s210 = int_to_ptr.vmem [resolvable:$true] %s209
          %212 = dma.hbm_to_vmem [thread:$0]  %s207, 128, %s210, %s196
        $region28: #{net_forward.4} parent=19 // pred_fallthru
          _
      $region20: #{net_forward.4} parent=5 // pred_fallthru
        _
      %p213 = scmp.le.s32.totalorder 1, %s15
      %p214 = scmp.lt.s32.totalorder %s15, 11
      %p215 = pnand %p213, %p214
      %p216 = pneg %p215
      // Predicated region
      $region29: #{net_forward.4} parent=5 // pred_check
        _
      $region30: #{net_forward.4} parent=5 // pred_check_branch
        %218 = sbr.rel (%p215) target = $region32
      $region31: #{net_forward.4} parent=5 // pred_region
        %s219 = ssub.s32 %s15, 1
        %s220 = sand.u32 %s75, 1
        %s221 = scalar_lea.sflag [#allocation4], %s220
        %s222 = sand.u32 %s75, 1
        %s223 = smul.addr %s222, 8192
        %s224 = scalar_lea.vmem [#allocation3], %s223
        // Predicated region
        $region33: #{net_forward.4} parent=31 // pred_check
          %p225 = pneg %p88
        $region34: #{net_forward.4} parent=31 // pred_check_branch
          %227 = sbr.rel (%p225) target = $region36
        $region35: #{net_forward.4} parent=31 // pred_region
          %228 = dma.done %s221, 131072
        $region36: #{net_forward.4} parent=31 // pred_fallthru
          _
        %s229 = sand.u32 %s103, 1
        %s230 = scalar_lea.sflag [#allocation6], %s229
        %s231 = sand.u32 %s103, 1
        %s232 = smul.addr %s231, 8
        %s233 = scalar_lea.vmem [#allocation5], %s232
        // Predicated region
        $region37: #{net_forward.4} parent=31 // pred_check
          %p234 = pneg %p116
        $region38: #{net_forward.4} parent=31 // pred_check_branch
          %236 = sbr.rel (%p234) target = $region40
        $region39: #{net_forward.4} parent=31 // pred_region
          %237 = dma.done %s230, 128
        $region40: #{net_forward.4} parent=31 // pred_fallthru
          _
        %p238 = scmp.lt.s32.totalorder %s25, 0
        %s239 = scalar_select %p238, %s25, 0
        %s240 = smul.addr %s239, 16
        %s241 = smul.addr %s240, 4
        %s242 = scalar_lea.vmem %s0, %s241
        %p243 = pneg %p60
        %p244 = pneg %p57
        %s245 = sand.u32 %s75, 1
        %s246 = scalar_lea.sflag [#allocation4], %s245
        %s247 = sand.u32 %s75, 1
        %s248 = smul.addr %s247, 8192
        %s249 = scalar_lea.vmem [#allocation3], %s248
        %p250 = pneg %p88
        %p251 = pneg %p85
        %s252 = sand.u32 %s103, 1
        %s253 = scalar_lea.sflag [#allocation6], %s252
        %s254 = sand.u32 %s103, 1
        %s255 = smul.addr %s254, 8
        %s256 = scalar_lea.vmem [#allocation5], %s255
        %p257 = pneg %p116
        %p258 = pneg %p113
        %p259 = pneg %p142
        %p260 = pneg %p139
        %p261 = scmp.lt.s32.totalorder %s25, 0
        %s262 = scalar_select %p261, %s25, 0
        %s263 = smul.addr %s262, 16
        %s264 = smul.addr %s263, 4
        %s265 = scalar_lea.vmem %s3, %s264
        %p266 = scmp.lt.s32.totalorder %s25, 0
        %s267 = scalar_select %p266, %s25, 0
        %s268 = smul.addr %s267, 16
        %s269 = smul.addr %s268, 4
        %s270 = scalar_lea.vmem %s0, %s269
        %s271 = smul.u32 8, %s27
        %s272 = smul.u32 8, %s27
        %p273 = scmp.lt.s32.totalorder %s25, 0
        %s274 = scalar_select %p273, %s25, 0
        %s275 = smul.addr %s274, 16
        %s276 = smul.addr %s275, 4
        %s277 = scalar_lea.vmem %s3, %s276
        %p278 = scmp.eq.s32.totalorder %s26, 0
        %p279 = scmp.eq.s32.totalorder %s27, 0
        %p280 = pnand %p278, %p279
        %p281 = pneg %p280
        // Predicated region
        $region41: #{net_forward.4} parent=31 // pred_check
          _
        $region42: #{net_forward.4} parent=31 // pred_check_branch
          %283 = sbr.rel (%p280) target = $region44
        $region43: #{net_forward.4} parent=31 // pred_region
          %v284 = vld [vmem:[%s270] sm:$0xff]
          %v285 = vld [vmem:[%s270 + $0x8] sm:$0xff]
          %v286 = vld [vmem:[%s270 + $0x10] sm:$0xff]
          %v287 = vld [vmem:[%s270 + $0x18] sm:$0xff]
          %v288 = vld [vmem:[%s270 + $0x20] sm:$0xff]
          %v289 = vld [vmem:[%s270 + $0x28] sm:$0xff]
          %v290 = vld [vmem:[%s270 + $0x30] sm:$0xff]
          %v291 = vld [vmem:[%s270 + $0x38] sm:$0xff]
          %292 = vst [vmem:[#allocation2] sm:$0xff] %v284
          %293 = vst [vmem:[#allocation2 + $0x8] sm:$0xff] %v285
          %294 = vst [vmem:[#allocation2 + $0x10] sm:$0xff] %v286
          %295 = vst [vmem:[#allocation2 + $0x18] sm:$0xff] %v287
          %296 = vst [vmem:[#allocation2 + $0x20] sm:$0xff] %v288
          %297 = vst [vmem:[#allocation2 + $0x28] sm:$0xff] %v289
          %298 = vst [vmem:[#allocation2 + $0x30] sm:$0xff] %v290
          %299 = vst [vmem:[#allocation2 + $0x38] sm:$0xff] %v291
        $region44: #{net_forward.4} parent=31 // pred_fallthru
          _
        %p300 = scmp.lt.s32.totalorder %s26, 0
        %s301 = ssub.s32 0, %s26
        %s302 = scalar_select %p300, %s301, %s26
        %s303 = sand.u32 %s302, 1
        %s304 = ssub.s32 0, %s303
        %s305 = scalar_select %p300, %s304, %s303
        %p306 = scmp.ne.s32.totalorder %s305, 0
        %p307 = scmp.lt.s32.totalorder %s305, 0
        %p308 = pnand %p307, %p306
        %p309 = pneg %p308
        %s310 = sadd.s32 %s305, 2
        %s311 = scalar_select %p309, %s310, %s305
        %p312 = scmp.eq.s32.totalorder %s311, 0
        %v313 = vld [vmem:[#allocation2] sm:$0xff]
        %v314 = vld [vmem:[#allocation2 + $0x8] sm:$0xff]
        %v315 = vld [vmem:[#allocation2 + $0x10] sm:$0xff]
        %v316 = vld [vmem:[#allocation2 + $0x18] sm:$0xff]
        %v317 = vld [vmem:[#allocation2 + $0x20] sm:$0xff]
        %v318 = vld [vmem:[#allocation2 + $0x28] sm:$0xff]
        %v319 = vld [vmem:[#allocation2 + $0x30] sm:$0xff]
        %v320 = vld [vmem:[#allocation2 + $0x38] sm:$0xff]
        %s321 = scalar_lea.vmem [#allocation2], 64
        %v322 = vld [vmem:[%s321] sm:$0xff]
        %v323 = vld [vmem:[%s321 + $0x8] sm:$0xff]
        %v324 = vld [vmem:[%s321 + $0x10] sm:$0xff]
        %v325 = vld [vmem:[%s321 + $0x18] sm:$0xff]
        %v326 = vld [vmem:[%s321 + $0x20] sm:$0xff]
        %v327 = vld [vmem:[%s321 + $0x28] sm:$0xff]
        %v328 = vld [vmem:[%s321 + $0x30] sm:$0xff]
        %v329 = vld [vmem:[%s321 + $0x38] sm:$0xff]
        %s330 = scalar_select %p312, 1, 0
        %v331 = vstv %s330
        %vm332 = vcmp.eq.s32.totalorder %v331, 1
        %v333 = vsel %vm332, %v313, %v322
        %v334 = vsel %vm332, %v314, %v323
        %v335 = vsel %vm332, %v315, %v324
        %v336 = vsel %vm332, %v316, %v325
        %v337 = vsel %vm332, %v317, %v326
        %v338 = vsel %vm332, %v318, %v327
        %v339 = vsel %vm332, %v319, %v328
        %v340 = vsel %vm332, %v320, %v329
        %v341 = vld [vmem:[%s224] sm:$0xff]
        %v342 = vld [vmem:[%s224 + $0x8] sm:$0xff]
        %v343 = vld [vmem:[%s224 + $0x10] sm:$0xff]
        %v344 = vld [vmem:[%s224 + $0x18] sm:$0xff]
        %v345 = vld [vmem:[%s224 + $0x20] sm:$0xff]
        %v346 = vld [vmem:[%s224 + $0x28] sm:$0xff]
        %v347 = vld [vmem:[%s224 + $0x30] sm:$0xff]
        %v348 = vld [vmem:[%s224 + $0x38] sm:$0xff]
        %v349 = vld [vmem:[%s224 + $0x40] sm:$0xff]
        %v350 = vld [vmem:[%s224 + $0x48] sm:$0xff]
        %v351 = vld [vmem:[%s224 + $0x50] sm:$0xff]
        %v352 = vld [vmem:[%s224 + $0x58] sm:$0xff]
        %v353 = vld [vmem:[%s224 + $0x60] sm:$0xff]
        %v354 = vld [vmem:[%s224 + $0x68] sm:$0xff]
        %v355 = vld [vmem:[%s224 + $0x70] sm:$0xff]
        %v356 = vld [vmem:[%s224 + $0x78] sm:$0xff]
        %v357 = vld [vmem:[%s224 + $0x80] sm:$0xff]
        %v358 = vld [vmem:[%s224 + $0x88] sm:$0xff]
        %v359 = vld [vmem:[%s224 + $0x90] sm:$0xff]
        %v360 = vld [vmem:[%s224 + $0x98] sm:$0xff]
        %v361 = vld [vmem:[%s224 + $0xa0] sm:$0xff]
        %v362 = vld [vmem:[%s224 + $0xa8] sm:$0xff]
        %v363 = vld [vmem:[%s224 + $0xb0] sm:$0xff]
        %v364 = vld [vmem:[%s224 + $0xb8] sm:$0xff]
        %v365 = vld [vmem:[%s224 + $0xc0] sm:$0xff]
        %v366 = vld [vmem:[%s224 + $0xc8] sm:$0xff]
        %v367 = vld [vmem:[%s224 + $0xd0] sm:$0xff]
        %v368 = vld [vmem:[%s224 + $0xd8] sm:$0xff]
        %v369 = vld [vmem:[%s224 + $0xe0] sm:$0xff]
        %v370 = vld [vmem:[%s224 + $0xe8] sm:$0xff]
        %v371 = vld [vmem:[%s224 + $0xf0] sm:$0xff]
        %v372 = vld [vmem:[%s224 + $0xf8] sm:$0xff]
        %v373 = vld [vmem:[%s224 + $0x100] sm:$0xff]
        %v374 = vld [vmem:[%s224 + $0x108] sm:$0xff]
        %v375 = vld [vmem:[%s224 + $0x110] sm:$0xff]
        %v376 = vld [vmem:[%s224 + $0x118] sm:$0xff]
        %v377 = vld [vmem:[%s224 + $0x120] sm:$0xff]
        %v378 = vld [vmem:[%s224 + $0x128] sm:$0xff]
        %v379 = vld [vmem:[%s224 + $0x130] sm:$0xff]
        %v380 = vld [vmem:[%s224 + $0x138] sm:$0xff]
        %v381 = vld [vmem:[%s224 + $0x140] sm:$0xff]
        %v382 = vld [vmem:[%s224 + $0x148] sm:$0xff]
        %v383 = vld [vmem:[%s224 + $0x150] sm:$0xff]
        %v384 = vld [vmem:[%s224 + $0x158] sm:$0xff]
        %v385 = vld [vmem:[%s224 + $0x160] sm:$0xff]
        %v386 = vld [vmem:[%s224 + $0x168] sm:$0xff]
        %v387 = vld [vmem:[%s224 + $0x170] sm:$0xff]
        %v388 = vld [vmem:[%s224 + $0x178] sm:$0xff]
        %v389 = vld [vmem:[%s224 + $0x180] sm:$0xff]
        %v390 = vld [vmem:[%s224 + $0x188] sm:$0xff]
        %v391 = vld [vmem:[%s224 + $0x190] sm:$0xff]
        %v392 = vld [vmem:[%s224 + $0x198] sm:$0xff]
        %v393 = vld [vmem:[%s224 + $0x1a0] sm:$0xff]
        %v394 = vld [vmem:[%s224 + $0x1a8] sm:$0xff]
        %v395 = vld [vmem:[%s224 + $0x1b0] sm:$0xff]
        %v396 = vld [vmem:[%s224 + $0x1b8] sm:$0xff]
        %v397 = vld [vmem:[%s224 + $0x1c0] sm:$0xff]
        %v398 = vld [vmem:[%s224 + $0x1c8] sm:$0xff]
        %v399 = vld [vmem:[%s224 + $0x1d0] sm:$0xff]
        %v400 = vld [vmem:[%s224 + $0x1d8] sm:$0xff]
        %v401 = vld [vmem:[%s224 + $0x1e0] sm:$0xff]
        %v402 = vld [vmem:[%s224 + $0x1e8] sm:$0xff]
        %v403 = vld [vmem:[%s224 + $0x1f0] sm:$0xff]
        %v404 = vld [vmem:[%s224 + $0x1f8] sm:$0xff]
        %v405 = vld [vmem:[%s224 + $0x200] sm:$0xff]
        %v406 = vld [vmem:[%s224 + $0x208] sm:$0xff]
        %v407 = vld [vmem:[%s224 + $0x210] sm:$0xff]
        %v408 = vld [vmem:[%s224 + $0x218] sm:$0xff]
        %v409 = vld [vmem:[%s224 + $0x220] sm:$0xff]
        %v410 = vld [vmem:[%s224 + $0x228] sm:$0xff]
        %v411 = vld [vmem:[%s224 + $0x230] sm:$0xff]
        %v412 = vld [vmem:[%s224 + $0x238] sm:$0xff]
        %v413 = vld [vmem:[%s224 + $0x240] sm:$0xff]
        %v414 = vld [vmem:[%s224 + $0x248] sm:$0xff]
        %v415 = vld [vmem:[%s224 + $0x250] sm:$0xff]
        %v416 = vld [vmem:[%s224 + $0x258] sm:$0xff]
        %v417 = vld [vmem:[%s224 + $0x260] sm:$0xff]
        %v418 = vld [vmem:[%s224 + $0x268] sm:$0xff]
        %v419 = vld [vmem:[%s224 + $0x270] sm:$0xff]
        %v420 = vld [vmem:[%s224 + $0x278] sm:$0xff]
        %v421 = vld [vmem:[%s224 + $0x280] sm:$0xff]
        %v422 = vld [vmem:[%s224 + $0x288] sm:$0xff]
        %v423 = vld [vmem:[%s224 + $0x290] sm:$0xff]
        %v424 = vld [vmem:[%s224 + $0x298] sm:$0xff]
        %v425 = vld [vmem:[%s224 + $0x2a0] sm:$0xff]
        %v426 = vld [vmem:[%s224 + $0x2a8] sm:$0xff]
        %v427 = vld [vmem:[%s224 + $0x2b0] sm:$0xff]
        %v428 = vld [vmem:[%s224 + $0x2b8] sm:$0xff]
        %v429 = vld [vmem:[%s224 + $0x2c0] sm:$0xff]
        %v430 = vld [vmem:[%s224 + $0x2c8] sm:$0xff]
        %v431 = vld [vmem:[%s224 + $0x2d0] sm:$0xff]
        %v432 = vld [vmem:[%s224 + $0x2d8] sm:$0xff]
        %v433 = vld [vmem:[%s224 + $0x2e0] sm:$0xff]
        %v434 = vld [vmem:[%s224 + $0x2e8] sm:$0xff]
        %v435 = vld [vmem:[%s224 + $0x2f0] sm:$0xff]
        %v436 = vld [vmem:[%s224 + $0x2f8] sm:$0xff]
        %v437 = vld [vmem:[%s224 + $0x300] sm:$0xff]
        %v438 = vld [vmem:[%s224 + $0x308] sm:$0xff]
        %v439 = vld [vmem:[%s224 + $0x310] sm:$0xff]
        %v440 = vld [vmem:[%s224 + $0x318] sm:$0xff]
        %v441 = vld [vmem:[%s224 + $0x320] sm:$0xff]
        %v442 = vld [vmem:[%s224 + $0x328] sm:$0xff]
        %v443 = vld [vmem:[%s224 + $0x330] sm:$0xff]
        %v444 = vld [vmem:[%s224 + $0x338] sm:$0xff]
        %v445 = vld [vmem:[%s224 + $0x340] sm:$0xff]
        %v446 = vld [vmem:[%s224 + $0x348] sm:$0xff]
        %v447 = vld [vmem:[%s224 + $0x350] sm:$0xff]
        %v448 = vld [vmem:[%s224 + $0x358] sm:$0xff]
        %v449 = vld [vmem:[%s224 + $0x360] sm:$0xff]
        %v450 = vld [vmem:[%s224 + $0x368] sm:$0xff]
        %v451 = vld [vmem:[%s224 + $0x370] sm:$0xff]
        %v452 = vld [vmem:[%s224 + $0x378] sm:$0xff]
        %v453 = vld [vmem:[%s224 + $0x380] sm:$0xff]
        %v454 = vld [vmem:[%s224 + $0x388] sm:$0xff]
        %v455 = vld [vmem:[%s224 + $0x390] sm:$0xff]
        %v456 = vld [vmem:[%s224 + $0x398] sm:$0xff]
        %v457 = vld [vmem:[%s224 + $0x3a0] sm:$0xff]
        %v458 = vld [vmem:[%s224 + $0x3a8] sm:$0xff]
        %v459 = vld [vmem:[%s224 + $0x3b0] sm:$0xff]
        %v460 = vld [vmem:[%s224 + $0x3b8] sm:$0xff]
        %v461 = vld [vmem:[%s224 + $0x3c0] sm:$0xff]
        %v462 = vld [vmem:[%s224 + $0x3c8] sm:$0xff]
        %v463 = vld [vmem:[%s224 + $0x3d0] sm:$0xff]
        %v464 = vld [vmem:[%s224 + $0x3d8] sm:$0xff]
        %v465 = vld [vmem:[%s224 + $0x3e0] sm:$0xff]
        %v466 = vld [vmem:[%s224 + $0x3e8] sm:$0xff]
        %v467 = vld [vmem:[%s224 + $0x3f0] sm:$0xff]
        %v468 = vld [vmem:[%s224 + $0x3f8] sm:$0xff]
        %v469 = vld [vmem:[%s224 + $0x400] sm:$0xff]
        %v470 = vld [vmem:[%s224 + $0x408] sm:$0xff]
        %v471 = vld [vmem:[%s224 + $0x410] sm:$0xff]
        %v472 = vld [vmem:[%s224 + $0x418] sm:$0xff]
        %v473 = vld [vmem:[%s224 + $0x420] sm:$0xff]
        %v474 = vld [vmem:[%s224 + $0x428] sm:$0xff]
        %v475 = vld [vmem:[%s224 + $0x430] sm:$0xff]
        %v476 = vld [vmem:[%s224 + $0x438] sm:$0xff]
        %v477 = vld [vmem:[%s224 + $0x440] sm:$0xff]
        %v478 = vld [vmem:[%s224 + $0x448] sm:$0xff]
        %v479 = vld [vmem:[%s224 + $0x450] sm:$0xff]
        %v480 = vld [vmem:[%s224 + $0x458] sm:$0xff]
        %v481 = vld [vmem:[%s224 + $0x460] sm:$0xff]
        %v482 = vld [vmem:[%s224 + $0x468] sm:$0xff]
        %v483 = vld [vmem:[%s224 + $0x470] sm:$0xff]
        %v484 = vld [vmem:[%s224 + $0x478] sm:$0xff]
        %v485 = vld [vmem:[%s224 + $0x480] sm:$0xff]
        %v486 = vld [vmem:[%s224 + $0x488] sm:$0xff]
        %v487 = vld [vmem:[%s224 + $0x490] sm:$0xff]
        %v488 = vld [vmem:[%s224 + $0x498] sm:$0xff]
        %v489 = vld [vmem:[%s224 + $0x4a0] sm:$0xff]
        %v490 = vld [vmem:[%s224 + $0x4a8] sm:$0xff]
        %v491 = vld [vmem:[%s224 + $0x4b0] sm:$0xff]
        %v492 = vld [vmem:[%s224 + $0x4b8] sm:$0xff]
        %v493 = vld [vmem:[%s224 + $0x4c0] sm:$0xff]
        %v494 = vld [vmem:[%s224 + $0x4c8] sm:$0xff]
        %v495 = vld [vmem:[%s224 + $0x4d0] sm:$0xff]
        %v496 = vld [vmem:[%s224 + $0x4d8] sm:$0xff]
        %v497 = vld [vmem:[%s224 + $0x4e0] sm:$0xff]
        %v498 = vld [vmem:[%s224 + $0x4e8] sm:$0xff]
        %v499 = vld [vmem:[%s224 + $0x4f0] sm:$0xff]
        %v500 = vld [vmem:[%s224 + $0x4f8] sm:$0xff]
        %v501 = vld [vmem:[%s224 + $0x500] sm:$0xff]
        %v502 = vld [vmem:[%s224 + $0x508] sm:$0xff]
        %v503 = vld [vmem:[%s224 + $0x510] sm:$0xff]
        %v504 = vld [vmem:[%s224 + $0x518] sm:$0xff]
        %v505 = vld [vmem:[%s224 + $0x520] sm:$0xff]
        %v506 = vld [vmem:[%s224 + $0x528] sm:$0xff]
        %v507 = vld [vmem:[%s224 + $0x530] sm:$0xff]
        %v508 = vld [vmem:[%s224 + $0x538] sm:$0xff]
        %v509 = vld [vmem:[%s224 + $0x540] sm:$0xff]
        %v510 = vld [vmem:[%s224 + $0x548] sm:$0xff]
        %v511 = vld [vmem:[%s224 + $0x550] sm:$0xff]
        %v512 = vld [vmem:[%s224 + $0x558] sm:$0xff]
        %v513 = vld [vmem:[%s224 + $0x560] sm:$0xff]
        %v514 = vld [vmem:[%s224 + $0x568] sm:$0xff]
        %v515 = vld [vmem:[%s224 + $0x570] sm:$0xff]
        %v516 = vld [vmem:[%s224 + $0x578] sm:$0xff]
        %v517 = vld [vmem:[%s224 + $0x580] sm:$0xff]
        %v518 = vld [vmem:[%s224 + $0x588] sm:$0xff]
        %v519 = vld [vmem:[%s224 + $0x590] sm:$0xff]
        %v520 = vld [vmem:[%s224 + $0x598] sm:$0xff]
        %v521 = vld [vmem:[%s224 + $0x5a0] sm:$0xff]
        %v522 = vld [vmem:[%s224 + $0x5a8] sm:$0xff]
        %v523 = vld [vmem:[%s224 + $0x5b0] sm:$0xff]
        %v524 = vld [vmem:[%s224 + $0x5b8] sm:$0xff]
        %v525 = vld [vmem:[%s224 + $0x5c0] sm:$0xff]
        %v526 = vld [vmem:[%s224 + $0x5c8] sm:$0xff]
        %v527 = vld [vmem:[%s224 + $0x5d0] sm:$0xff]
        %v528 = vld [vmem:[%s224 + $0x5d8] sm:$0xff]
        %v529 = vld [vmem:[%s224 + $0x5e0] sm:$0xff]
        %v530 = vld [vmem:[%s224 + $0x5e8] sm:$0xff]
        %v531 = vld [vmem:[%s224 + $0x5f0] sm:$0xff]
        %v532 = vld [vmem:[%s224 + $0x5f8] sm:$0xff]
        %v533 = vld [vmem:[%s224 + $0x600] sm:$0xff]
        %v534 = vld [vmem:[%s224 + $0x608] sm:$0xff]
        %v535 = vld [vmem:[%s224 + $0x610] sm:$0xff]
        %v536 = vld [vmem:[%s224 + $0x618] sm:$0xff]
        %v537 = vld [vmem:[%s224 + $0x620] sm:$0xff]
        %v538 = vld [vmem:[%s224 + $0x628] sm:$0xff]
        %v539 = vld [vmem:[%s224 + $0x630] sm:$0xff]
        %v540 = vld [vmem:[%s224 + $0x638] sm:$0xff]
        %v541 = vld [vmem:[%s224 + $0x640] sm:$0xff]
        %v542 = vld [vmem:[%s224 + $0x648] sm:$0xff]
        %v543 = vld [vmem:[%s224 + $0x650] sm:$0xff]
        %v544 = vld [vmem:[%s224 + $0x658] sm:$0xff]
        %v545 = vld [vmem:[%s224 + $0x660] sm:$0xff]
        %v546 = vld [vmem:[%s224 + $0x668] sm:$0xff]
        %v547 = vld [vmem:[%s224 + $0x670] sm:$0xff]
        %v548 = vld [vmem:[%s224 + $0x678] sm:$0xff]
        %v549 = vld [vmem:[%s224 + $0x680] sm:$0xff]
        %v550 = vld [vmem:[%s224 + $0x688] sm:$0xff]
        %v551 = vld [vmem:[%s224 + $0x690] sm:$0xff]
        %v552 = vld [vmem:[%s224 + $0x698] sm:$0xff]
        %v553 = vld [vmem:[%s224 + $0x6a0] sm:$0xff]
        %v554 = vld [vmem:[%s224 + $0x6a8] sm:$0xff]
        %v555 = vld [vmem:[%s224 + $0x6b0] sm:$0xff]
        %v556 = vld [vmem:[%s224 + $0x6b8] sm:$0xff]
        %v557 = vld [vmem:[%s224 + $0x6c0] sm:$0xff]
        %v558 = vld [vmem:[%s224 + $0x6c8] sm:$0xff]
        %v559 = vld [vmem:[%s224 + $0x6d0] sm:$0xff]
        %v560 = vld [vmem:[%s224 + $0x6d8] sm:$0xff]
        %v561 = vld [vmem:[%s224 + $0x6e0] sm:$0xff]
        %v562 = vld [vmem:[%s224 + $0x6e8] sm:$0xff]
        %v563 = vld [vmem:[%s224 + $0x6f0] sm:$0xff]
        %v564 = vld [vmem:[%s224 + $0x6f8] sm:$0xff]
        %v565 = vld [vmem:[%s224 + $0x700] sm:$0xff]
        %v566 = vld [vmem:[%s224 + $0x708] sm:$0xff]
        %v567 = vld [vmem:[%s224 + $0x710] sm:$0xff]
        %v568 = vld [vmem:[%s224 + $0x718] sm:$0xff]
        %v569 = vld [vmem:[%s224 + $0x720] sm:$0xff]
        %v570 = vld [vmem:[%s224 + $0x728] sm:$0xff]
        %v571 = vld [vmem:[%s224 + $0x730] sm:$0xff]
        %v572 = vld [vmem:[%s224 + $0x738] sm:$0xff]
        %v573 = vld [vmem:[%s224 + $0x740] sm:$0xff]
        %v574 = vld [vmem:[%s224 + $0x748] sm:$0xff]
        %v575 = vld [vmem:[%s224 + $0x750] sm:$0xff]
        %v576 = vld [vmem:[%s224 + $0x758] sm:$0xff]
        %v577 = vld [vmem:[%s224 + $0x760] sm:$0xff]
        %v578 = vld [vmem:[%s224 + $0x768] sm:$0xff]
        %v579 = vld [vmem:[%s224 + $0x770] sm:$0xff]
        %v580 = vld [vmem:[%s224 + $0x778] sm:$0xff]
        %v581 = vld [vmem:[%s224 + $0x780] sm:$0xff]
        %v582 = vld [vmem:[%s224 + $0x788] sm:$0xff]
        %v583 = vld [vmem:[%s224 + $0x790] sm:$0xff]
        %v584 = vld [vmem:[%s224 + $0x798] sm:$0xff]
        %v585 = vld [vmem:[%s224 + $0x7a0] sm:$0xff]
        %v586 = vld [vmem:[%s224 + $0x7a8] sm:$0xff]
        %v587 = vld [vmem:[%s224 + $0x7b0] sm:$0xff]
        %v588 = vld [vmem:[%s224 + $0x7b8] sm:$0xff]
        %v589 = vld [vmem:[%s224 + $0x7c0] sm:$0xff]
        %v590 = vld [vmem:[%s224 + $0x7c8] sm:$0xff]
        %v591 = vld [vmem:[%s224 + $0x7d0] sm:$0xff]
        %v592 = vld [vmem:[%s224 + $0x7d8] sm:$0xff]
        %v593 = vld [vmem:[%s224 + $0x7e0] sm:$0xff]
        %v594 = vld [vmem:[%s224 + $0x7e8] sm:$0xff]
        %v595 = vld [vmem:[%s224 + $0x7f0] sm:$0xff]
        %v596 = vld [vmem:[%s224 + $0x7f8] sm:$0xff]
        %v597 = vld [vmem:[%s224 + $0x800] sm:$0xff]
        %v598 = vld [vmem:[%s224 + $0x808] sm:$0xff]
        %v599 = vld [vmem:[%s224 + $0x810] sm:$0xff]
        %v600 = vld [vmem:[%s224 + $0x818] sm:$0xff]
        %v601 = vld [vmem:[%s224 + $0x820] sm:$0xff]
        %v602 = vld [vmem:[%s224 + $0x828] sm:$0xff]
        %v603 = vld [vmem:[%s224 + $0x830] sm:$0xff]
        %v604 = vld [vmem:[%s224 + $0x838] sm:$0xff]
        %v605 = vld [vmem:[%s224 + $0x840] sm:$0xff]
        %v606 = vld [vmem:[%s224 + $0x848] sm:$0xff]
        %v607 = vld [vmem:[%s224 + $0x850] sm:$0xff]
        %v608 = vld [vmem:[%s224 + $0x858] sm:$0xff]
        %v609 = vld [vmem:[%s224 + $0x860] sm:$0xff]
        %v610 = vld [vmem:[%s224 + $0x868] sm:$0xff]
        %v611 = vld [vmem:[%s224 + $0x870] sm:$0xff]
        %v612 = vld [vmem:[%s224 + $0x878] sm:$0xff]
        %v613 = vld [vmem:[%s224 + $0x880] sm:$0xff]
        %v614 = vld [vmem:[%s224 + $0x888] sm:$0xff]
        %v615 = vld [vmem:[%s224 + $0x890] sm:$0xff]
        %v616 = vld [vmem:[%s224 + $0x898] sm:$0xff]
        %v617 = vld [vmem:[%s224 + $0x8a0] sm:$0xff]
        %v618 = vld [vmem:[%s224 + $0x8a8] sm:$0xff]
        %v619 = vld [vmem:[%s224 + $0x8b0] sm:$0xff]
        %v620 = vld [vmem:[%s224 + $0x8b8] sm:$0xff]
        %v621 = vld [vmem:[%s224 + $0x8c0] sm:$0xff]
        %v622 = vld [vmem:[%s224 + $0x8c8] sm:$0xff]
        %v623 = vld [vmem:[%s224 + $0x8d0] sm:$0xff]
        %v624 = vld [vmem:[%s224 + $0x8d8] sm:$0xff]
        %v625 = vld [vmem:[%s224 + $0x8e0] sm:$0xff]
        %v626 = vld [vmem:[%s224 + $0x8e8] sm:$0xff]
        %v627 = vld [vmem:[%s224 + $0x8f0] sm:$0xff]
        %v628 = vld [vmem:[%s224 + $0x8f8] sm:$0xff]
        %v629 = vld [vmem:[%s224 + $0x900] sm:$0xff]
        %v630 = vld [vmem:[%s224 + $0x908] sm:$0xff]
        %v631 = vld [vmem:[%s224 + $0x910] sm:$0xff]
        %v632 = vld [vmem:[%s224 + $0x918] sm:$0xff]
        %v633 = vld [vmem:[%s224 + $0x920] sm:$0xff]
        %v634 = vld [vmem:[%s224 + $0x928] sm:$0xff]
        %v635 = vld [vmem:[%s224 + $0x930] sm:$0xff]
        %v636 = vld [vmem:[%s224 + $0x938] sm:$0xff]
        %v637 = vld [vmem:[%s224 + $0x940] sm:$0xff]
        %v638 = vld [vmem:[%s224 + $0x948] sm:$0xff]
        %v639 = vld [vmem:[%s224 + $0x950] sm:$0xff]
        %v640 = vld [vmem:[%s224 + $0x958] sm:$0xff]
        %v641 = vld [vmem:[%s224 + $0x960] sm:$0xff]
        %v642 = vld [vmem:[%s224 + $0x968] sm:$0xff]
        %v643 = vld [vmem:[%s224 + $0x970] sm:$0xff]
        %v644 = vld [vmem:[%s224 + $0x978] sm:$0xff]
        %v645 = vld [vmem:[%s224 + $0x980] sm:$0xff]
        %v646 = vld [vmem:[%s224 + $0x988] sm:$0xff]
        %v647 = vld [vmem:[%s224 + $0x990] sm:$0xff]
        %v648 = vld [vmem:[%s224 + $0x998] sm:$0xff]
        %v649 = vld [vmem:[%s224 + $0x9a0] sm:$0xff]
        %v650 = vld [vmem:[%s224 + $0x9a8] sm:$0xff]
        %v651 = vld [vmem:[%s224 + $0x9b0] sm:$0xff]
        %v652 = vld [vmem:[%s224 + $0x9b8] sm:$0xff]
        %v653 = vld [vmem:[%s224 + $0x9c0] sm:$0xff]
        %v654 = vld [vmem:[%s224 + $0x9c8] sm:$0xff]
        %v655 = vld [vmem:[%s224 + $0x9d0] sm:$0xff]
        %v656 = vld [vmem:[%s224 + $0x9d8] sm:$0xff]
        %v657 = vld [vmem:[%s224 + $0x9e0] sm:$0xff]
        %v658 = vld [vmem:[%s224 + $0x9e8] sm:$0xff]
        %v659 = vld [vmem:[%s224 + $0x9f0] sm:$0xff]
        %v660 = vld [vmem:[%s224 + $0x9f8] sm:$0xff]
        %v661 = vld [vmem:[%s224 + $0xa00] sm:$0xff]
        %v662 = vld [vmem:[%s224 + $0xa08] sm:$0xff]
        %v663 = vld [vmem:[%s224 + $0xa10] sm:$0xff]
        %v664 = vld [vmem:[%s224 + $0xa18] sm:$0xff]
        %v665 = vld [vmem:[%s224 + $0xa20] sm:$0xff]
        %v666 = vld [vmem:[%s224 + $0xa28] sm:$0xff]
        %v667 = vld [vmem:[%s224 + $0xa30] sm:$0xff]
        %v668 = vld [vmem:[%s224 + $0xa38] sm:$0xff]
        %v669 = vld [vmem:[%s224 + $0xa40] sm:$0xff]
        %v670 = vld [vmem:[%s224 + $0xa48] sm:$0xff]
        %v671 = vld [vmem:[%s224 + $0xa50] sm:$0xff]
        %v672 = vld [vmem:[%s224 + $0xa58] sm:$0xff]
        %v673 = vld [vmem:[%s224 + $0xa60] sm:$0xff]
        %v674 = vld [vmem:[%s224 + $0xa68] sm:$0xff]
        %v675 = vld [vmem:[%s224 + $0xa70] sm:$0xff]
        %v676 = vld [vmem:[%s224 + $0xa78] sm:$0xff]
        %v677 = vld [vmem:[%s224 + $0xa80] sm:$0xff]
        %v678 = vld [vmem:[%s224 + $0xa88] sm:$0xff]
        %v679 = vld [vmem:[%s224 + $0xa90] sm:$0xff]
        %v680 = vld [vmem:[%s224 + $0xa98] sm:$0xff]
        %v681 = vld [vmem:[%s224 + $0xaa0] sm:$0xff]
        %v682 = vld [vmem:[%s224 + $0xaa8] sm:$0xff]
        %v683 = vld [vmem:[%s224 + $0xab0] sm:$0xff]
        %v684 = vld [vmem:[%s224 + $0xab8] sm:$0xff]
        %v685 = vld [vmem:[%s224 + $0xac0] sm:$0xff]
        %v686 = vld [vmem:[%s224 + $0xac8] sm:$0xff]
        %v687 = vld [vmem:[%s224 + $0xad0] sm:$0xff]
        %v688 = vld [vmem:[%s224 + $0xad8] sm:$0xff]
        %v689 = vld [vmem:[%s224 + $0xae0] sm:$0xff]
        %v690 = vld [vmem:[%s224 + $0xae8] sm:$0xff]
        %v691 = vld [vmem:[%s224 + $0xaf0] sm:$0xff]
        %v692 = vld [vmem:[%s224 + $0xaf8] sm:$0xff]
        %v693 = vld [vmem:[%s224 + $0xb00] sm:$0xff]
        %v694 = vld [vmem:[%s224 + $0xb08] sm:$0xff]
        %v695 = vld [vmem:[%s224 + $0xb10] sm:$0xff]
        %v696 = vld [vmem:[%s224 + $0xb18] sm:$0xff]
        %v697 = vld [vmem:[%s224 + $0xb20] sm:$0xff]
        %v698 = vld [vmem:[%s224 + $0xb28] sm:$0xff]
        %v699 = vld [vmem:[%s224 + $0xb30] sm:$0xff]
        %v700 = vld [vmem:[%s224 + $0xb38] sm:$0xff]
        %v701 = vld [vmem:[%s224 + $0xb40] sm:$0xff]
        %v702 = vld [vmem:[%s224 + $0xb48] sm:$0xff]
        %v703 = vld [vmem:[%s224 + $0xb50] sm:$0xff]
        %v704 = vld [vmem:[%s224 + $0xb58] sm:$0xff]
        %v705 = vld [vmem:[%s224 + $0xb60] sm:$0xff]
        %v706 = vld [vmem:[%s224 + $0xb68] sm:$0xff]
        %v707 = vld [vmem:[%s224 + $0xb70] sm:$0xff]
        %v708 = vld [vmem:[%s224 + $0xb78] sm:$0xff]
        %v709 = vld [vmem:[%s224 + $0xb80] sm:$0xff]
        %v710 = vld [vmem:[%s224 + $0xb88] sm:$0xff]
        %v711 = vld [vmem:[%s224 + $0xb90] sm:$0xff]
        %v712 = vld [vmem:[%s224 + $0xb98] sm:$0xff]
        %v713 = vld [vmem:[%s224 + $0xba0] sm:$0xff]
        %v714 = vld [vmem:[%s224 + $0xba8] sm:$0xff]
        %v715 = vld [vmem:[%s224 + $0xbb0] sm:$0xff]
        %v716 = vld [vmem:[%s224 + $0xbb8] sm:$0xff]
        %v717 = vld [vmem:[%s224 + $0xbc0] sm:$0xff]
        %v718 = vld [vmem:[%s224 + $0xbc8] sm:$0xff]
        %v719 = vld [vmem:[%s224 + $0xbd0] sm:$0xff]
        %v720 = vld [vmem:[%s224 + $0xbd8] sm:$0xff]
        %v721 = vld [vmem:[%s224 + $0xbe0] sm:$0xff]
        %v722 = vld [vmem:[%s224 + $0xbe8] sm:$0xff]
        %v723 = vld [vmem:[%s224 + $0xbf0] sm:$0xff]
        %v724 = vld [vmem:[%s224 + $0xbf8] sm:$0xff]
        %v725 = vld [vmem:[%s224 + $0xc00] sm:$0xff]
        %v726 = vld [vmem:[%s224 + $0xc08] sm:$0xff]
        %v727 = vld [vmem:[%s224 + $0xc10] sm:$0xff]
        %v728 = vld [vmem:[%s224 + $0xc18] sm:$0xff]
        %v729 = vld [vmem:[%s224 + $0xc20] sm:$0xff]
        %v730 = vld [vmem:[%s224 + $0xc28] sm:$0xff]
        %v731 = vld [vmem:[%s224 + $0xc30] sm:$0xff]
        %v732 = vld [vmem:[%s224 + $0xc38] sm:$0xff]
        %v733 = vld [vmem:[%s224 + $0xc40] sm:$0xff]
        %v734 = vld [vmem:[%s224 + $0xc48] sm:$0xff]
        %v735 = vld [vmem:[%s224 + $0xc50] sm:$0xff]
        %v736 = vld [vmem:[%s224 + $0xc58] sm:$0xff]
        %v737 = vld [vmem:[%s224 + $0xc60] sm:$0xff]
        %v738 = vld [vmem:[%s224 + $0xc68] sm:$0xff]
        %v739 = vld [vmem:[%s224 + $0xc70] sm:$0xff]
        %v740 = vld [vmem:[%s224 + $0xc78] sm:$0xff]
        %v741 = vld [vmem:[%s224 + $0xc80] sm:$0xff]
        %v742 = vld [vmem:[%s224 + $0xc88] sm:$0xff]
        %v743 = vld [vmem:[%s224 + $0xc90] sm:$0xff]
        %v744 = vld [vmem:[%s224 + $0xc98] sm:$0xff]
        %v745 = vld [vmem:[%s224 + $0xca0] sm:$0xff]
        %v746 = vld [vmem:[%s224 + $0xca8] sm:$0xff]
        %v747 = vld [vmem:[%s224 + $0xcb0] sm:$0xff]
        %v748 = vld [vmem:[%s224 + $0xcb8] sm:$0xff]
        %v749 = vld [vmem:[%s224 + $0xcc0] sm:$0xff]
        %v750 = vld [vmem:[%s224 + $0xcc8] sm:$0xff]
        %v751 = vld [vmem:[%s224 + $0xcd0] sm:$0xff]
        %v752 = vld [vmem:[%s224 + $0xcd8] sm:$0xff]
        %v753 = vld [vmem:[%s224 + $0xce0] sm:$0xff]
        %v754 = vld [vmem:[%s224 + $0xce8] sm:$0xff]
        %v755 = vld [vmem:[%s224 + $0xcf0] sm:$0xff]
        %v756 = vld [vmem:[%s224 + $0xcf8] sm:$0xff]
        %v757 = vld [vmem:[%s224 + $0xd00] sm:$0xff]
        %v758 = vld [vmem:[%s224 + $0xd08] sm:$0xff]
        %v759 = vld [vmem:[%s224 + $0xd10] sm:$0xff]
        %v760 = vld [vmem:[%s224 + $0xd18] sm:$0xff]
        %v761 = vld [vmem:[%s224 + $0xd20] sm:$0xff]
        %v762 = vld [vmem:[%s224 + $0xd28] sm:$0xff]
        %v763 = vld [vmem:[%s224 + $0xd30] sm:$0xff]
        %v764 = vld [vmem:[%s224 + $0xd38] sm:$0xff]
        %v765 = vld [vmem:[%s224 + $0xd40] sm:$0xff]
        %v766 = vld [vmem:[%s224 + $0xd48] sm:$0xff]
        %v767 = vld [vmem:[%s224 + $0xd50] sm:$0xff]
        %v768 = vld [vmem:[%s224 + $0xd58] sm:$0xff]
        %v769 = vld [vmem:[%s224 + $0xd60] sm:$0xff]
        %v770 = vld [vmem:[%s224 + $0xd68] sm:$0xff]
        %v771 = vld [vmem:[%s224 + $0xd70] sm:$0xff]
        %v772 = vld [vmem:[%s224 + $0xd78] sm:$0xff]
        %v773 = vld [vmem:[%s224 + $0xd80] sm:$0xff]
        %v774 = vld [vmem:[%s224 + $0xd88] sm:$0xff]
        %v775 = vld [vmem:[%s224 + $0xd90] sm:$0xff]
        %v776 = vld [vmem:[%s224 + $0xd98] sm:$0xff]
        %v777 = vld [vmem:[%s224 + $0xda0] sm:$0xff]
        %v778 = vld [vmem:[%s224 + $0xda8] sm:$0xff]
        %v779 = vld [vmem:[%s224 + $0xdb0] sm:$0xff]
        %v780 = vld [vmem:[%s224 + $0xdb8] sm:$0xff]
        %v781 = vld [vmem:[%s224 + $0xdc0] sm:$0xff]
        %v782 = vld [vmem:[%s224 + $0xdc8] sm:$0xff]
        %v783 = vld [vmem:[%s224 + $0xdd0] sm:$0xff]
        %v784 = vld [vmem:[%s224 + $0xdd8] sm:$0xff]
        %v785 = vld [vmem:[%s224 + $0xde0] sm:$0xff]
        %v786 = vld [vmem:[%s224 + $0xde8] sm:$0xff]
        %v787 = vld [vmem:[%s224 + $0xdf0] sm:$0xff]
        %v788 = vld [vmem:[%s224 + $0xdf8] sm:$0xff]
        %v789 = vld [vmem:[%s224 + $0xe00] sm:$0xff]
        %v790 = vld [vmem:[%s224 + $0xe08] sm:$0xff]
        %v791 = vld [vmem:[%s224 + $0xe10] sm:$0xff]
        %v792 = vld [vmem:[%s224 + $0xe18] sm:$0xff]
        %v793 = vld [vmem:[%s224 + $0xe20] sm:$0xff]
        %v794 = vld [vmem:[%s224 + $0xe28] sm:$0xff]
        %v795 = vld [vmem:[%s224 + $0xe30] sm:$0xff]
        %v796 = vld [vmem:[%s224 + $0xe38] sm:$0xff]
        %v797 = vld [vmem:[%s224 + $0xe40] sm:$0xff]
        %v798 = vld [vmem:[%s224 + $0xe48] sm:$0xff]
        %v799 = vld [vmem:[%s224 + $0xe50] sm:$0xff]
        %v800 = vld [vmem:[%s224 + $0xe58] sm:$0xff]
        %v801 = vld [vmem:[%s224 + $0xe60] sm:$0xff]
        %v802 = vld [vmem:[%s224 + $0xe68] sm:$0xff]
        %v803 = vld [vmem:[%s224 + $0xe70] sm:$0xff]
        %v804 = vld [vmem:[%s224 + $0xe78] sm:$0xff]
        %v805 = vld [vmem:[%s224 + $0xe80] sm:$0xff]
        %v806 = vld [vmem:[%s224 + $0xe88] sm:$0xff]
        %v807 = vld [vmem:[%s224 + $0xe90] sm:$0xff]
        %v808 = vld [vmem:[%s224 + $0xe98] sm:$0xff]
        %v809 = vld [vmem:[%s224 + $0xea0] sm:$0xff]
        %v810 = vld [vmem:[%s224 + $0xea8] sm:$0xff]
        %v811 = vld [vmem:[%s224 + $0xeb0] sm:$0xff]
        %v812 = vld [vmem:[%s224 + $0xeb8] sm:$0xff]
        %v813 = vld [vmem:[%s224 + $0xec0] sm:$0xff]
        %v814 = vld [vmem:[%s224 + $0xec8] sm:$0xff]
        %v815 = vld [vmem:[%s224 + $0xed0] sm:$0xff]
        %v816 = vld [vmem:[%s224 + $0xed8] sm:$0xff]
        %v817 = vld [vmem:[%s224 + $0xee0] sm:$0xff]
        %v818 = vld [vmem:[%s224 + $0xee8] sm:$0xff]
        %v819 = vld [vmem:[%s224 + $0xef0] sm:$0xff]
        %v820 = vld [vmem:[%s224 + $0xef8] sm:$0xff]
        %v821 = vld [vmem:[%s224 + $0xf00] sm:$0xff]
        %v822 = vld [vmem:[%s224 + $0xf08] sm:$0xff]
        %v823 = vld [vmem:[%s224 + $0xf10] sm:$0xff]
        %v824 = vld [vmem:[%s224 + $0xf18] sm:$0xff]
        %v825 = vld [vmem:[%s224 + $0xf20] sm:$0xff]
        %v826 = vld [vmem:[%s224 + $0xf28] sm:$0xff]
        %v827 = vld [vmem:[%s224 + $0xf30] sm:$0xff]
        %v828 = vld [vmem:[%s224 + $0xf38] sm:$0xff]
        %v829 = vld [vmem:[%s224 + $0xf40] sm:$0xff]
        %v830 = vld [vmem:[%s224 + $0xf48] sm:$0xff]
        %v831 = vld [vmem:[%s224 + $0xf50] sm:$0xff]
        %v832 = vld [vmem:[%s224 + $0xf58] sm:$0xff]
        %v833 = vld [vmem:[%s224 + $0xf60] sm:$0xff]
        %v834 = vld [vmem:[%s224 + $0xf68] sm:$0xff]
        %v835 = vld [vmem:[%s224 + $0xf70] sm:$0xff]
        %v836 = vld [vmem:[%s224 + $0xf78] sm:$0xff]
        %v837 = vld [vmem:[%s224 + $0xf80] sm:$0xff]
        %v838 = vld [vmem:[%s224 + $0xf88] sm:$0xff]
        %v839 = vld [vmem:[%s224 + $0xf90] sm:$0xff]
        %v840 = vld [vmem:[%s224 + $0xf98] sm:$0xff]
        %v841 = vld [vmem:[%s224 + $0xfa0] sm:$0xff]
        %v842 = vld [vmem:[%s224 + $0xfa8] sm:$0xff]
        %v843 = vld [vmem:[%s224 + $0xfb0] sm:$0xff]
        %v844 = vld [vmem:[%s224 + $0xfb8] sm:$0xff]
        %v845 = vld [vmem:[%s224 + $0xfc0] sm:$0xff]
        %v846 = vld [vmem:[%s224 + $0xfc8] sm:$0xff]
        %v847 = vld [vmem:[%s224 + $0xfd0] sm:$0xff]
        %v848 = vld [vmem:[%s224 + $0xfd8] sm:$0xff]
        %v849 = vld [vmem:[%s224 + $0xfe0] sm:$0xff]
        %v850 = vld [vmem:[%s224 + $0xfe8] sm:$0xff]
        %v851 = vld [vmem:[%s224 + $0xff0] sm:$0xff]
        %v852 = vld [vmem:[%s224 + $0xff8] sm:$0xff]
        %v853 = vld [vmem:[%s224 + $0x1000] sm:$0xff]
        %v854 = vld [vmem:[%s224 + $0x1008] sm:$0xff]
        %v855 = vld [vmem:[%s224 + $0x1010] sm:$0xff]
        %v856 = vld [vmem:[%s224 + $0x1018] sm:$0xff]
        %v857 = vld [vmem:[%s224 + $0x1020] sm:$0xff]
        %v858 = vld [vmem:[%s224 + $0x1028] sm:$0xff]
        %v859 = vld [vmem:[%s224 + $0x1030] sm:$0xff]
        %v860 = vld [vmem:[%s224 + $0x1038] sm:$0xff]
        %v861 = vld [vmem:[%s224 + $0x1040] sm:$0xff]
        %v862 = vld [vmem:[%s224 + $0x1048] sm:$0xff]
        %v863 = vld [vmem:[%s224 + $0x1050] sm:$0xff]
        %v864 = vld [vmem:[%s224 + $0x1058] sm:$0xff]
        %v865 = vld [vmem:[%s224 + $0x1060] sm:$0xff]
        %v866 = vld [vmem:[%s224 + $0x1068] sm:$0xff]
        %v867 = vld [vmem:[%s224 + $0x1070] sm:$0xff]
        %v868 = vld [vmem:[%s224 + $0x1078] sm:$0xff]
        %v869 = vld [vmem:[%s224 + $0x1080] sm:$0xff]
        %v870 = vld [vmem:[%s224 + $0x1088] sm:$0xff]
        %v871 = vld [vmem:[%s224 + $0x1090] sm:$0xff]
        %v872 = vld [vmem:[%s224 + $0x1098] sm:$0xff]
        %v873 = vld [vmem:[%s224 + $0x10a0] sm:$0xff]
        %v874 = vld [vmem:[%s224 + $0x10a8] sm:$0xff]
        %v875 = vld [vmem:[%s224 + $0x10b0] sm:$0xff]
        %v876 = vld [vmem:[%s224 + $0x10b8] sm:$0xff]
        %v877 = vld [vmem:[%s224 + $0x10c0] sm:$0xff]
        %v878 = vld [vmem:[%s224 + $0x10c8] sm:$0xff]
        %v879 = vld [vmem:[%s224 + $0x10d0] sm:$0xff]
        %v880 = vld [vmem:[%s224 + $0x10d8] sm:$0xff]
        %v881 = vld [vmem:[%s224 + $0x10e0] sm:$0xff]
        %v882 = vld [vmem:[%s224 + $0x10e8] sm:$0xff]
        %v883 = vld [vmem:[%s224 + $0x10f0] sm:$0xff]
        %v884 = vld [vmem:[%s224 + $0x10f8] sm:$0xff]
        %v885 = vld [vmem:[%s224 + $0x1100] sm:$0xff]
        %v886 = vld [vmem:[%s224 + $0x1108] sm:$0xff]
        %v887 = vld [vmem:[%s224 + $0x1110] sm:$0xff]
        %v888 = vld [vmem:[%s224 + $0x1118] sm:$0xff]
        %v889 = vld [vmem:[%s224 + $0x1120] sm:$0xff]
        %v890 = vld [vmem:[%s224 + $0x1128] sm:$0xff]
        %v891 = vld [vmem:[%s224 + $0x1130] sm:$0xff]
        %v892 = vld [vmem:[%s224 + $0x1138] sm:$0xff]
        %v893 = vld [vmem:[%s224 + $0x1140] sm:$0xff]
        %v894 = vld [vmem:[%s224 + $0x1148] sm:$0xff]
        %v895 = vld [vmem:[%s224 + $0x1150] sm:$0xff]
        %v896 = vld [vmem:[%s224 + $0x1158] sm:$0xff]
        %v897 = vld [vmem:[%s224 + $0x1160] sm:$0xff]
        %v898 = vld [vmem:[%s224 + $0x1168] sm:$0xff]
        %v899 = vld [vmem:[%s224 + $0x1170] sm:$0xff]
        %v900 = vld [vmem:[%s224 + $0x1178] sm:$0xff]
        %v901 = vld [vmem:[%s224 + $0x1180] sm:$0xff]
        %v902 = vld [vmem:[%s224 + $0x1188] sm:$0xff]
        %v903 = vld [vmem:[%s224 + $0x1190] sm:$0xff]
        %v904 = vld [vmem:[%s224 + $0x1198] sm:$0xff]
        %v905 = vld [vmem:[%s224 + $0x11a0] sm:$0xff]
        %v906 = vld [vmem:[%s224 + $0x11a8] sm:$0xff]
        %v907 = vld [vmem:[%s224 + $0x11b0] sm:$0xff]
        %v908 = vld [vmem:[%s224 + $0x11b8] sm:$0xff]
        %v909 = vld [vmem:[%s224 + $0x11c0] sm:$0xff]
        %v910 = vld [vmem:[%s224 + $0x11c8] sm:$0xff]
        %v911 = vld [vmem:[%s224 + $0x11d0] sm:$0xff]
        %v912 = vld [vmem:[%s224 + $0x11d8] sm:$0xff]
        %v913 = vld [vmem:[%s224 + $0x11e0] sm:$0xff]
        %v914 = vld [vmem:[%s224 + $0x11e8] sm:$0xff]
        %v915 = vld [vmem:[%s224 + $0x11f0] sm:$0xff]
        %v916 = vld [vmem:[%s224 + $0x11f8] sm:$0xff]
        %v917 = vld [vmem:[%s224 + $0x1200] sm:$0xff]
        %v918 = vld [vmem:[%s224 + $0x1208] sm:$0xff]
        %v919 = vld [vmem:[%s224 + $0x1210] sm:$0xff]
        %v920 = vld [vmem:[%s224 + $0x1218] sm:$0xff]
        %v921 = vld [vmem:[%s224 + $0x1220] sm:$0xff]
        %v922 = vld [vmem:[%s224 + $0x1228] sm:$0xff]
        %v923 = vld [vmem:[%s224 + $0x1230] sm:$0xff]
        %v924 = vld [vmem:[%s224 + $0x1238] sm:$0xff]
        %v925 = vld [vmem:[%s224 + $0x1240] sm:$0xff]
        %v926 = vld [vmem:[%s224 + $0x1248] sm:$0xff]
        %v927 = vld [vmem:[%s224 + $0x1250] sm:$0xff]
        %v928 = vld [vmem:[%s224 + $0x1258] sm:$0xff]
        %v929 = vld [vmem:[%s224 + $0x1260] sm:$0xff]
        %v930 = vld [vmem:[%s224 + $0x1268] sm:$0xff]
        %v931 = vld [vmem:[%s224 + $0x1270] sm:$0xff]
        %v932 = vld [vmem:[%s224 + $0x1278] sm:$0xff]
        %v933 = vld [vmem:[%s224 + $0x1280] sm:$0xff]
        %v934 = vld [vmem:[%s224 + $0x1288] sm:$0xff]
        %v935 = vld [vmem:[%s224 + $0x1290] sm:$0xff]
        %v936 = vld [vmem:[%s224 + $0x1298] sm:$0xff]
        %v937 = vld [vmem:[%s224 + $0x12a0] sm:$0xff]
        %v938 = vld [vmem:[%s224 + $0x12a8] sm:$0xff]
        %v939 = vld [vmem:[%s224 + $0x12b0] sm:$0xff]
        %v940 = vld [vmem:[%s224 + $0x12b8] sm:$0xff]
        %v941 = vld [vmem:[%s224 + $0x12c0] sm:$0xff]
        %v942 = vld [vmem:[%s224 + $0x12c8] sm:$0xff]
        %v943 = vld [vmem:[%s224 + $0x12d0] sm:$0xff]
        %v944 = vld [vmem:[%s224 + $0x12d8] sm:$0xff]
        %v945 = vld [vmem:[%s224 + $0x12e0] sm:$0xff]
        %v946 = vld [vmem:[%s224 + $0x12e8] sm:$0xff]
        %v947 = vld [vmem:[%s224 + $0x12f0] sm:$0xff]
        %v948 = vld [vmem:[%s224 + $0x12f8] sm:$0xff]
        %v949 = vld [vmem:[%s224 + $0x1300] sm:$0xff]
        %v950 = vld [vmem:[%s224 + $0x1308] sm:$0xff]
        %v951 = vld [vmem:[%s224 + $0x1310] sm:$0xff]
        %v952 = vld [vmem:[%s224 + $0x1318] sm:$0xff]
        %v953 = vld [vmem:[%s224 + $0x1320] sm:$0xff]
        %v954 = vld [vmem:[%s224 + $0x1328] sm:$0xff]
        %v955 = vld [vmem:[%s224 + $0x1330] sm:$0xff]
        %v956 = vld [vmem:[%s224 + $0x1338] sm:$0xff]
        %v957 = vld [vmem:[%s224 + $0x1340] sm:$0xff]
        %v958 = vld [vmem:[%s224 + $0x1348] sm:$0xff]
        %v959 = vld [vmem:[%s224 + $0x1350] sm:$0xff]
        %v960 = vld [vmem:[%s224 + $0x1358] sm:$0xff]
        %v961 = vld [vmem:[%s224 + $0x1360] sm:$0xff]
        %v962 = vld [vmem:[%s224 + $0x1368] sm:$0xff]
        %v963 = vld [vmem:[%s224 + $0x1370] sm:$0xff]
        %v964 = vld [vmem:[%s224 + $0x1378] sm:$0xff]
        %v965 = vld [vmem:[%s224 + $0x1380] sm:$0xff]
        %v966 = vld [vmem:[%s224 + $0x1388] sm:$0xff]
        %v967 = vld [vmem:[%s224 + $0x1390] sm:$0xff]
        %v968 = vld [vmem:[%s224 + $0x1398] sm:$0xff]
        %v969 = vld [vmem:[%s224 + $0x13a0] sm:$0xff]
        %v970 = vld [vmem:[%s224 + $0x13a8] sm:$0xff]
        %v971 = vld [vmem:[%s224 + $0x13b0] sm:$0xff]
        %v972 = vld [vmem:[%s224 + $0x13b8] sm:$0xff]
        %v973 = vld [vmem:[%s224 + $0x13c0] sm:$0xff]
        %v974 = vld [vmem:[%s224 + $0x13c8] sm:$0xff]
        %v975 = vld [vmem:[%s224 + $0x13d0] sm:$0xff]
        %v976 = vld [vmem:[%s224 + $0x13d8] sm:$0xff]
        %v977 = vld [vmem:[%s224 + $0x13e0] sm:$0xff]
        %v978 = vld [vmem:[%s224 + $0x13e8] sm:$0xff]
        %v979 = vld [vmem:[%s224 + $0x13f0] sm:$0xff]
        %v980 = vld [vmem:[%s224 + $0x13f8] sm:$0xff]
        %v981 = vld [vmem:[%s224 + $0x1400] sm:$0xff]
        %v982 = vld [vmem:[%s224 + $0x1408] sm:$0xff]
        %v983 = vld [vmem:[%s224 + $0x1410] sm:$0xff]
        %v984 = vld [vmem:[%s224 + $0x1418] sm:$0xff]
        %v985 = vld [vmem:[%s224 + $0x1420] sm:$0xff]
        %v986 = vld [vmem:[%s224 + $0x1428] sm:$0xff]
        %v987 = vld [vmem:[%s224 + $0x1430] sm:$0xff]
        %v988 = vld [vmem:[%s224 + $0x1438] sm:$0xff]
        %v989 = vld [vmem:[%s224 + $0x1440] sm:$0xff]
        %v990 = vld [vmem:[%s224 + $0x1448] sm:$0xff]
        %v991 = vld [vmem:[%s224 + $0x1450] sm:$0xff]
        %v992 = vld [vmem:[%s224 + $0x1458] sm:$0xff]
        %v993 = vld [vmem:[%s224 + $0x1460] sm:$0xff]
        %v994 = vld [vmem:[%s224 + $0x1468] sm:$0xff]
        %v995 = vld [vmem:[%s224 + $0x1470] sm:$0xff]
        %v996 = vld [vmem:[%s224 + $0x1478] sm:$0xff]
        %v997 = vld [vmem:[%s224 + $0x1480] sm:$0xff]
        %v998 = vld [vmem:[%s224 + $0x1488] sm:$0xff]
        %v999 = vld [vmem:[%s224 + $0x1490] sm:$0xff]
        %v1000 = vld [vmem:[%s224 + $0x1498] sm:$0xff]
        %v1001 = vld [vmem:[%s224 + $0x14a0] sm:$0xff]
        %v1002 = vld [vmem:[%s224 + $0x14a8] sm:$0xff]
        %v1003 = vld [vmem:[%s224 + $0x14b0] sm:$0xff]
        %v1004 = vld [vmem:[%s224 + $0x14b8] sm:$0xff]
        %v1005 = vld [vmem:[%s224 + $0x14c0] sm:$0xff]
        %v1006 = vld [vmem:[%s224 + $0x14c8] sm:$0xff]
        %v1007 = vld [vmem:[%s224 + $0x14d0] sm:$0xff]
        %v1008 = vld [vmem:[%s224 + $0x14d8] sm:$0xff]
        %v1009 = vld [vmem:[%s224 + $0x14e0] sm:$0xff]
        %v1010 = vld [vmem:[%s224 + $0x14e8] sm:$0xff]
        %v1011 = vld [vmem:[%s224 + $0x14f0] sm:$0xff]
        %v1012 = vld [vmem:[%s224 + $0x14f8] sm:$0xff]
        %v1013 = vld [vmem:[%s224 + $0x1500] sm:$0xff]
        %v1014 = vld [vmem:[%s224 + $0x1508] sm:$0xff]
        %v1015 = vld [vmem:[%s224 + $0x1510] sm:$0xff]
        %v1016 = vld [vmem:[%s224 + $0x1518] sm:$0xff]
        %v1017 = vld [vmem:[%s224 + $0x1520] sm:$0xff]
        %v1018 = vld [vmem:[%s224 + $0x1528] sm:$0xff]
        %v1019 = vld [vmem:[%s224 + $0x1530] sm:$0xff]
        %v1020 = vld [vmem:[%s224 + $0x1538] sm:$0xff]
        %v1021 = vld [vmem:[%s224 + $0x1540] sm:$0xff]
        %v1022 = vld [vmem:[%s224 + $0x1548] sm:$0xff]
        %v1023 = vld [vmem:[%s224 + $0x1550] sm:$0xff]
        %v1024 = vld [vmem:[%s224 + $0x1558] sm:$0xff]
        %v1025 = vld [vmem:[%s224 + $0x1560] sm:$0xff]
        %v1026 = vld [vmem:[%s224 + $0x1568] sm:$0xff]
        %v1027 = vld [vmem:[%s224 + $0x1570] sm:$0xff]
        %v1028 = vld [vmem:[%s224 + $0x1578] sm:$0xff]
        %v1029 = vld [vmem:[%s224 + $0x1580] sm:$0xff]
        %v1030 = vld [vmem:[%s224 + $0x1588] sm:$0xff]
        %v1031 = vld [vmem:[%s224 + $0x1590] sm:$0xff]
        %v1032 = vld [vmem:[%s224 + $0x1598] sm:$0xff]
        %v1033 = vld [vmem:[%s224 + $0x15a0] sm:$0xff]
        %v1034 = vld [vmem:[%s224 + $0x15a8] sm:$0xff]
        %v1035 = vld [vmem:[%s224 + $0x15b0] sm:$0xff]
        %v1036 = vld [vmem:[%s224 + $0x15b8] sm:$0xff]
        %v1037 = vld [vmem:[%s224 + $0x15c0] sm:$0xff]
        %v1038 = vld [vmem:[%s224 + $0x15c8] sm:$0xff]
        %v1039 = vld [vmem:[%s224 + $0x15d0] sm:$0xff]
        %v1040 = vld [vmem:[%s224 + $0x15d8] sm:$0xff]
        %v1041 = vld [vmem:[%s224 + $0x15e0] sm:$0xff]
        %v1042 = vld [vmem:[%s224 + $0x15e8] sm:$0xff]
        %v1043 = vld [vmem:[%s224 + $0x15f0] sm:$0xff]
        %v1044 = vld [vmem:[%s224 + $0x15f8] sm:$0xff]
        %v1045 = vld [vmem:[%s224 + $0x1600] sm:$0xff]
        %v1046 = vld [vmem:[%s224 + $0x1608] sm:$0xff]
        %v1047 = vld [vmem:[%s224 + $0x1610] sm:$0xff]
        %v1048 = vld [vmem:[%s224 + $0x1618] sm:$0xff]
        %v1049 = vld [vmem:[%s224 + $0x1620] sm:$0xff]
        %v1050 = vld [vmem:[%s224 + $0x1628] sm:$0xff]
        %v1051 = vld [vmem:[%s224 + $0x1630] sm:$0xff]
        %v1052 = vld [vmem:[%s224 + $0x1638] sm:$0xff]
        %v1053 = vld [vmem:[%s224 + $0x1640] sm:$0xff]
        %v1054 = vld [vmem:[%s224 + $0x1648] sm:$0xff]
        %v1055 = vld [vmem:[%s224 + $0x1650] sm:$0xff]
        %v1056 = vld [vmem:[%s224 + $0x1658] sm:$0xff]
        %v1057 = vld [vmem:[%s224 + $0x1660] sm:$0xff]
        %v1058 = vld [vmem:[%s224 + $0x1668] sm:$0xff]
        %v1059 = vld [vmem:[%s224 + $0x1670] sm:$0xff]
        %v1060 = vld [vmem:[%s224 + $0x1678] sm:$0xff]
        %v1061 = vld [vmem:[%s224 + $0x1680] sm:$0xff]
        %v1062 = vld [vmem:[%s224 + $0x1688] sm:$0xff]
        %v1063 = vld [vmem:[%s224 + $0x1690] sm:$0xff]
        %v1064 = vld [vmem:[%s224 + $0x1698] sm:$0xff]
        %v1065 = vld [vmem:[%s224 + $0x16a0] sm:$0xff]
        %v1066 = vld [vmem:[%s224 + $0x16a8] sm:$0xff]
        %v1067 = vld [vmem:[%s224 + $0x16b0] sm:$0xff]
        %v1068 = vld [vmem:[%s224 + $0x16b8] sm:$0xff]
        %v1069 = vld [vmem:[%s224 + $0x16c0] sm:$0xff]
        %v1070 = vld [vmem:[%s224 + $0x16c8] sm:$0xff]
        %v1071 = vld [vmem:[%s224 + $0x16d0] sm:$0xff]
        %v1072 = vld [vmem:[%s224 + $0x16d8] sm:$0xff]
        %v1073 = vld [vmem:[%s224 + $0x16e0] sm:$0xff]
        %v1074 = vld [vmem:[%s224 + $0x16e8] sm:$0xff]
        %v1075 = vld [vmem:[%s224 + $0x16f0] sm:$0xff]
        %v1076 = vld [vmem:[%s224 + $0x16f8] sm:$0xff]
        %v1077 = vld [vmem:[%s224 + $0x1700] sm:$0xff]
        %v1078 = vld [vmem:[%s224 + $0x1708] sm:$0xff]
        %v1079 = vld [vmem:[%s224 + $0x1710] sm:$0xff]
        %v1080 = vld [vmem:[%s224 + $0x1718] sm:$0xff]
        %v1081 = vld [vmem:[%s224 + $0x1720] sm:$0xff]
        %v1082 = vld [vmem:[%s224 + $0x1728] sm:$0xff]
        %v1083 = vld [vmem:[%s224 + $0x1730] sm:$0xff]
        %v1084 = vld [vmem:[%s224 + $0x1738] sm:$0xff]
        %v1085 = vld [vmem:[%s224 + $0x1740] sm:$0xff]
        %v1086 = vld [vmem:[%s224 + $0x1748] sm:$0xff]
        %v1087 = vld [vmem:[%s224 + $0x1750] sm:$0xff]
        %v1088 = vld [vmem:[%s224 + $0x1758] sm:$0xff]
        %v1089 = vld [vmem:[%s224 + $0x1760] sm:$0xff]
        %v1090 = vld [vmem:[%s224 + $0x1768] sm:$0xff]
        %v1091 = vld [vmem:[%s224 + $0x1770] sm:$0xff]
        %v1092 = vld [vmem:[%s224 + $0x1778] sm:$0xff]
        %v1093 = vld [vmem:[%s224 + $0x1780] sm:$0xff]
        %v1094 = vld [vmem:[%s224 + $0x1788] sm:$0xff]
        %v1095 = vld [vmem:[%s224 + $0x1790] sm:$0xff]
        %v1096 = vld [vmem:[%s224 + $0x1798] sm:$0xff]
        %v1097 = vld [vmem:[%s224 + $0x17a0] sm:$0xff]
        %v1098 = vld [vmem:[%s224 + $0x17a8] sm:$0xff]
        %v1099 = vld [vmem:[%s224 + $0x17b0] sm:$0xff]
        %v1100 = vld [vmem:[%s224 + $0x17b8] sm:$0xff]
        %v1101 = vld [vmem:[%s224 + $0x17c0] sm:$0xff]
        %v1102 = vld [vmem:[%s224 + $0x17c8] sm:$0xff]
        %v1103 = vld [vmem:[%s224 + $0x17d0] sm:$0xff]
        %v1104 = vld [vmem:[%s224 + $0x17d8] sm:$0xff]
        %v1105 = vld [vmem:[%s224 + $0x17e0] sm:$0xff]
        %v1106 = vld [vmem:[%s224 + $0x17e8] sm:$0xff]
        %v1107 = vld [vmem:[%s224 + $0x17f0] sm:$0xff]
        %v1108 = vld [vmem:[%s224 + $0x17f8] sm:$0xff]
        %v1109 = vld [vmem:[%s224 + $0x1800] sm:$0xff]
        %v1110 = vld [vmem:[%s224 + $0x1808] sm:$0xff]
        %v1111 = vld [vmem:[%s224 + $0x1810] sm:$0xff]
        %v1112 = vld [vmem:[%s224 + $0x1818] sm:$0xff]
        %v1113 = vld [vmem:[%s224 + $0x1820] sm:$0xff]
        %v1114 = vld [vmem:[%s224 + $0x1828] sm:$0xff]
        %v1115 = vld [vmem:[%s224 + $0x1830] sm:$0xff]
        %v1116 = vld [vmem:[%s224 + $0x1838] sm:$0xff]
        %v1117 = vld [vmem:[%s224 + $0x1840] sm:$0xff]
        %v1118 = vld [vmem:[%s224 + $0x1848] sm:$0xff]
        %v1119 = vld [vmem:[%s224 + $0x1850] sm:$0xff]
        %v1120 = vld [vmem:[%s224 + $0x1858] sm:$0xff]
        %v1121 = vld [vmem:[%s224 + $0x1860] sm:$0xff]
        %v1122 = vld [vmem:[%s224 + $0x1868] sm:$0xff]
        %v1123 = vld [vmem:[%s224 + $0x1870] sm:$0xff]
        %v1124 = vld [vmem:[%s224 + $0x1878] sm:$0xff]
        %v1125 = vld [vmem:[%s224 + $0x1880] sm:$0xff]
        %v1126 = vld [vmem:[%s224 + $0x1888] sm:$0xff]
        %v1127 = vld [vmem:[%s224 + $0x1890] sm:$0xff]
        %v1128 = vld [vmem:[%s224 + $0x1898] sm:$0xff]
        %v1129 = vld [vmem:[%s224 + $0x18a0] sm:$0xff]
        %v1130 = vld [vmem:[%s224 + $0x18a8] sm:$0xff]
        %v1131 = vld [vmem:[%s224 + $0x18b0] sm:$0xff]
        %v1132 = vld [vmem:[%s224 + $0x18b8] sm:$0xff]
        %v1133 = vld [vmem:[%s224 + $0x18c0] sm:$0xff]
        %v1134 = vld [vmem:[%s224 + $0x18c8] sm:$0xff]
        %v1135 = vld [vmem:[%s224 + $0x18d0] sm:$0xff]
        %v1136 = vld [vmem:[%s224 + $0x18d8] sm:$0xff]
        %v1137 = vld [vmem:[%s224 + $0x18e0] sm:$0xff]
        %v1138 = vld [vmem:[%s224 + $0x18e8] sm:$0xff]
        %v1139 = vld [vmem:[%s224 + $0x18f0] sm:$0xff]
        %v1140 = vld [vmem:[%s224 + $0x18f8] sm:$0xff]
        %v1141 = vld [vmem:[%s224 + $0x1900] sm:$0xff]
        %v1142 = vld [vmem:[%s224 + $0x1908] sm:$0xff]
        %v1143 = vld [vmem:[%s224 + $0x1910] sm:$0xff]
        %v1144 = vld [vmem:[%s224 + $0x1918] sm:$0xff]
        %v1145 = vld [vmem:[%s224 + $0x1920] sm:$0xff]
        %v1146 = vld [vmem:[%s224 + $0x1928] sm:$0xff]
        %v1147 = vld [vmem:[%s224 + $0x1930] sm:$0xff]
        %v1148 = vld [vmem:[%s224 + $0x1938] sm:$0xff]
        %v1149 = vld [vmem:[%s224 + $0x1940] sm:$0xff]
        %v1150 = vld [vmem:[%s224 + $0x1948] sm:$0xff]
        %v1151 = vld [vmem:[%s224 + $0x1950] sm:$0xff]
        %v1152 = vld [vmem:[%s224 + $0x1958] sm:$0xff]
        %v1153 = vld [vmem:[%s224 + $0x1960] sm:$0xff]
        %v1154 = vld [vmem:[%s224 + $0x1968] sm:$0xff]
        %v1155 = vld [vmem:[%s224 + $0x1970] sm:$0xff]
        %v1156 = vld [vmem:[%s224 + $0x1978] sm:$0xff]
        %v1157 = vld [vmem:[%s224 + $0x1980] sm:$0xff]
        %v1158 = vld [vmem:[%s224 + $0x1988] sm:$0xff]
        %v1159 = vld [vmem:[%s224 + $0x1990] sm:$0xff]
        %v1160 = vld [vmem:[%s224 + $0x1998] sm:$0xff]
        %v1161 = vld [vmem:[%s224 + $0x19a0] sm:$0xff]
        %v1162 = vld [vmem:[%s224 + $0x19a8] sm:$0xff]
        %v1163 = vld [vmem:[%s224 + $0x19b0] sm:$0xff]
        %v1164 = vld [vmem:[%s224 + $0x19b8] sm:$0xff]
        %v1165 = vld [vmem:[%s224 + $0x19c0] sm:$0xff]
        %v1166 = vld [vmem:[%s224 + $0x19c8] sm:$0xff]
        %v1167 = vld [vmem:[%s224 + $0x19d0] sm:$0xff]
        %v1168 = vld [vmem:[%s224 + $0x19d8] sm:$0xff]
        %v1169 = vld [vmem:[%s224 + $0x19e0] sm:$0xff]
        %v1170 = vld [vmem:[%s224 + $0x19e8] sm:$0xff]
        %v1171 = vld [vmem:[%s224 + $0x19f0] sm:$0xff]
        %v1172 = vld [vmem:[%s224 + $0x19f8] sm:$0xff]
        %v1173 = vld [vmem:[%s224 + $0x1a00] sm:$0xff]
        %v1174 = vld [vmem:[%s224 + $0x1a08] sm:$0xff]
        %v1175 = vld [vmem:[%s224 + $0x1a10] sm:$0xff]
        %v1176 = vld [vmem:[%s224 + $0x1a18] sm:$0xff]
        %v1177 = vld [vmem:[%s224 + $0x1a20] sm:$0xff]
        %v1178 = vld [vmem:[%s224 + $0x1a28] sm:$0xff]
        %v1179 = vld [vmem:[%s224 + $0x1a30] sm:$0xff]
        %v1180 = vld [vmem:[%s224 + $0x1a38] sm:$0xff]
        %v1181 = vld [vmem:[%s224 + $0x1a40] sm:$0xff]
        %v1182 = vld [vmem:[%s224 + $0x1a48] sm:$0xff]
        %v1183 = vld [vmem:[%s224 + $0x1a50] sm:$0xff]
        %v1184 = vld [vmem:[%s224 + $0x1a58] sm:$0xff]
        %v1185 = vld [vmem:[%s224 + $0x1a60] sm:$0xff]
        %v1186 = vld [vmem:[%s224 + $0x1a68] sm:$0xff]
        %v1187 = vld [vmem:[%s224 + $0x1a70] sm:$0xff]
        %v1188 = vld [vmem:[%s224 + $0x1a78] sm:$0xff]
        %v1189 = vld [vmem:[%s224 + $0x1a80] sm:$0xff]
        %v1190 = vld [vmem:[%s224 + $0x1a88] sm:$0xff]
        %v1191 = vld [vmem:[%s224 + $0x1a90] sm:$0xff]
        %v1192 = vld [vmem:[%s224 + $0x1a98] sm:$0xff]
        %v1193 = vld [vmem:[%s224 + $0x1aa0] sm:$0xff]
        %v1194 = vld [vmem:[%s224 + $0x1aa8] sm:$0xff]
        %v1195 = vld [vmem:[%s224 + $0x1ab0] sm:$0xff]
        %v1196 = vld [vmem:[%s224 + $0x1ab8] sm:$0xff]
        %v1197 = vld [vmem:[%s224 + $0x1ac0] sm:$0xff]
        %v1198 = vld [vmem:[%s224 + $0x1ac8] sm:$0xff]
        %v1199 = vld [vmem:[%s224 + $0x1ad0] sm:$0xff]
        %v1200 = vld [vmem:[%s224 + $0x1ad8] sm:$0xff]
        %v1201 = vld [vmem:[%s224 + $0x1ae0] sm:$0xff]
        %v1202 = vld [vmem:[%s224 + $0x1ae8] sm:$0xff]
        %v1203 = vld [vmem:[%s224 + $0x1af0] sm:$0xff]
        %v1204 = vld [vmem:[%s224 + $0x1af8] sm:$0xff]
        %v1205 = vld [vmem:[%s224 + $0x1b00] sm:$0xff]
        %v1206 = vld [vmem:[%s224 + $0x1b08] sm:$0xff]
        %v1207 = vld [vmem:[%s224 + $0x1b10] sm:$0xff]
        %v1208 = vld [vmem:[%s224 + $0x1b18] sm:$0xff]
        %v1209 = vld [vmem:[%s224 + $0x1b20] sm:$0xff]
        %v1210 = vld [vmem:[%s224 + $0x1b28] sm:$0xff]
        %v1211 = vld [vmem:[%s224 + $0x1b30] sm:$0xff]
        %v1212 = vld [vmem:[%s224 + $0x1b38] sm:$0xff]
        %v1213 = vld [vmem:[%s224 + $0x1b40] sm:$0xff]
        %v1214 = vld [vmem:[%s224 + $0x1b48] sm:$0xff]
        %v1215 = vld [vmem:[%s224 + $0x1b50] sm:$0xff]
        %v1216 = vld [vmem:[%s224 + $0x1b58] sm:$0xff]
        %v1217 = vld [vmem:[%s224 + $0x1b60] sm:$0xff]
        %v1218 = vld [vmem:[%s224 + $0x1b68] sm:$0xff]
        %v1219 = vld [vmem:[%s224 + $0x1b70] sm:$0xff]
        %v1220 = vld [vmem:[%s224 + $0x1b78] sm:$0xff]
        %v1221 = vld [vmem:[%s224 + $0x1b80] sm:$0xff]
        %v1222 = vld [vmem:[%s224 + $0x1b88] sm:$0xff]
        %v1223 = vld [vmem:[%s224 + $0x1b90] sm:$0xff]
        %v1224 = vld [vmem:[%s224 + $0x1b98] sm:$0xff]
        %v1225 = vld [vmem:[%s224 + $0x1ba0] sm:$0xff]
        %v1226 = vld [vmem:[%s224 + $0x1ba8] sm:$0xff]
        %v1227 = vld [vmem:[%s224 + $0x1bb0] sm:$0xff]
        %v1228 = vld [vmem:[%s224 + $0x1bb8] sm:$0xff]
        %v1229 = vld [vmem:[%s224 + $0x1bc0] sm:$0xff]
        %v1230 = vld [vmem:[%s224 + $0x1bc8] sm:$0xff]
        %v1231 = vld [vmem:[%s224 + $0x1bd0] sm:$0xff]
        %v1232 = vld [vmem:[%s224 + $0x1bd8] sm:$0xff]
        %v1233 = vld [vmem:[%s224 + $0x1be0] sm:$0xff]
        %v1234 = vld [vmem:[%s224 + $0x1be8] sm:$0xff]
        %v1235 = vld [vmem:[%s224 + $0x1bf0] sm:$0xff]
        %v1236 = vld [vmem:[%s224 + $0x1bf8] sm:$0xff]
        %v1237 = vld [vmem:[%s224 + $0x1c00] sm:$0xff]
        %v1238 = vld [vmem:[%s224 + $0x1c08] sm:$0xff]
        %v1239 = vld [vmem:[%s224 + $0x1c10] sm:$0xff]
        %v1240 = vld [vmem:[%s224 + $0x1c18] sm:$0xff]
        %v1241 = vld [vmem:[%s224 + $0x1c20] sm:$0xff]
        %v1242 = vld [vmem:[%s224 + $0x1c28] sm:$0xff]
        %v1243 = vld [vmem:[%s224 + $0x1c30] sm:$0xff]
        %v1244 = vld [vmem:[%s224 + $0x1c38] sm:$0xff]
        %v1245 = vld [vmem:[%s224 + $0x1c40] sm:$0xff]
        %v1246 = vld [vmem:[%s224 + $0x1c48] sm:$0xff]
        %v1247 = vld [vmem:[%s224 + $0x1c50] sm:$0xff]
        %v1248 = vld [vmem:[%s224 + $0x1c58] sm:$0xff]
        %v1249 = vld [vmem:[%s224 + $0x1c60] sm:$0xff]
        %v1250 = vld [vmem:[%s224 + $0x1c68] sm:$0xff]
        %v1251 = vld [vmem:[%s224 + $0x1c70] sm:$0xff]
        %v1252 = vld [vmem:[%s224 + $0x1c78] sm:$0xff]
        %v1253 = vld [vmem:[%s224 + $0x1c80] sm:$0xff]
        %v1254 = vld [vmem:[%s224 + $0x1c88] sm:$0xff]
        %v1255 = vld [vmem:[%s224 + $0x1c90] sm:$0xff]
        %v1256 = vld [vmem:[%s224 + $0x1c98] sm:$0xff]
        %v1257 = vld [vmem:[%s224 + $0x1ca0] sm:$0xff]
        %v1258 = vld [vmem:[%s224 + $0x1ca8] sm:$0xff]
        %v1259 = vld [vmem:[%s224 + $0x1cb0] sm:$0xff]
        %v1260 = vld [vmem:[%s224 + $0x1cb8] sm:$0xff]
        %v1261 = vld [vmem:[%s224 + $0x1cc0] sm:$0xff]
        %v1262 = vld [vmem:[%s224 + $0x1cc8] sm:$0xff]
        %v1263 = vld [vmem:[%s224 + $0x1cd0] sm:$0xff]
        %v1264 = vld [vmem:[%s224 + $0x1cd8] sm:$0xff]
        %v1265 = vld [vmem:[%s224 + $0x1ce0] sm:$0xff]
        %v1266 = vld [vmem:[%s224 + $0x1ce8] sm:$0xff]
        %v1267 = vld [vmem:[%s224 + $0x1cf0] sm:$0xff]
        %v1268 = vld [vmem:[%s224 + $0x1cf8] sm:$0xff]
        %v1269 = vld [vmem:[%s224 + $0x1d00] sm:$0xff]
        %v1270 = vld [vmem:[%s224 + $0x1d08] sm:$0xff]
        %v1271 = vld [vmem:[%s224 + $0x1d10] sm:$0xff]
        %v1272 = vld [vmem:[%s224 + $0x1d18] sm:$0xff]
        %v1273 = vld [vmem:[%s224 + $0x1d20] sm:$0xff]
        %v1274 = vld [vmem:[%s224 + $0x1d28] sm:$0xff]
        %v1275 = vld [vmem:[%s224 + $0x1d30] sm:$0xff]
        %v1276 = vld [vmem:[%s224 + $0x1d38] sm:$0xff]
        %v1277 = vld [vmem:[%s224 + $0x1d40] sm:$0xff]
        %v1278 = vld [vmem:[%s224 + $0x1d48] sm:$0xff]
        %v1279 = vld [vmem:[%s224 + $0x1d50] sm:$0xff]
        %v1280 = vld [vmem:[%s224 + $0x1d58] sm:$0xff]
        %v1281 = vld [vmem:[%s224 + $0x1d60] sm:$0xff]
        %v1282 = vld [vmem:[%s224 + $0x1d68] sm:$0xff]
        %v1283 = vld [vmem:[%s224 + $0x1d70] sm:$0xff]
        %v1284 = vld [vmem:[%s224 + $0x1d78] sm:$0xff]
        %v1285 = vld [vmem:[%s224 + $0x1d80] sm:$0xff]
        %v1286 = vld [vmem:[%s224 + $0x1d88] sm:$0xff]
        %v1287 = vld [vmem:[%s224 + $0x1d90] sm:$0xff]
        %v1288 = vld [vmem:[%s224 + $0x1d98] sm:$0xff]
        %v1289 = vld [vmem:[%s224 + $0x1da0] sm:$0xff]
        %v1290 = vld [vmem:[%s224 + $0x1da8] sm:$0xff]
        %v1291 = vld [vmem:[%s224 + $0x1db0] sm:$0xff]
        %v1292 = vld [vmem:[%s224 + $0x1db8] sm:$0xff]
        %v1293 = vld [vmem:[%s224 + $0x1dc0] sm:$0xff]
        %v1294 = vld [vmem:[%s224 + $0x1dc8] sm:$0xff]
        %v1295 = vld [vmem:[%s224 + $0x1dd0] sm:$0xff]
        %v1296 = vld [vmem:[%s224 + $0x1dd8] sm:$0xff]
        %v1297 = vld [vmem:[%s224 + $0x1de0] sm:$0xff]
        %v1298 = vld [vmem:[%s224 + $0x1de8] sm:$0xff]
        %v1299 = vld [vmem:[%s224 + $0x1df0] sm:$0xff]
        %v1300 = vld [vmem:[%s224 + $0x1df8] sm:$0xff]
        %v1301 = vld [vmem:[%s224 + $0x1e00] sm:$0xff]
        %v1302 = vld [vmem:[%s224 + $0x1e08] sm:$0xff]
        %v1303 = vld [vmem:[%s224 + $0x1e10] sm:$0xff]
        %v1304 = vld [vmem:[%s224 + $0x1e18] sm:$0xff]
        %v1305 = vld [vmem:[%s224 + $0x1e20] sm:$0xff]
        %v1306 = vld [vmem:[%s224 + $0x1e28] sm:$0xff]
        %v1307 = vld [vmem:[%s224 + $0x1e30] sm:$0xff]
        %v1308 = vld [vmem:[%s224 + $0x1e38] sm:$0xff]
        %v1309 = vld [vmem:[%s224 + $0x1e40] sm:$0xff]
        %v1310 = vld [vmem:[%s224 + $0x1e48] sm:$0xff]
        %v1311 = vld [vmem:[%s224 + $0x1e50] sm:$0xff]
        %v1312 = vld [vmem:[%s224 + $0x1e58] sm:$0xff]
        %v1313 = vld [vmem:[%s224 + $0x1e60] sm:$0xff]
        %v1314 = vld [vmem:[%s224 + $0x1e68] sm:$0xff]
        %v1315 = vld [vmem:[%s224 + $0x1e70] sm:$0xff]
        %v1316 = vld [vmem:[%s224 + $0x1e78] sm:$0xff]
        %v1317 = vld [vmem:[%s224 + $0x1e80] sm:$0xff]
        %v1318 = vld [vmem:[%s224 + $0x1e88] sm:$0xff]
        %v1319 = vld [vmem:[%s224 + $0x1e90] sm:$0xff]
        %v1320 = vld [vmem:[%s224 + $0x1e98] sm:$0xff]
        %v1321 = vld [vmem:[%s224 + $0x1ea0] sm:$0xff]
        %v1322 = vld [vmem:[%s224 + $0x1ea8] sm:$0xff]
        %v1323 = vld [vmem:[%s224 + $0x1eb0] sm:$0xff]
        %v1324 = vld [vmem:[%s224 + $0x1eb8] sm:$0xff]
        %v1325 = vld [vmem:[%s224 + $0x1ec0] sm:$0xff]
        %v1326 = vld [vmem:[%s224 + $0x1ec8] sm:$0xff]
        %v1327 = vld [vmem:[%s224 + $0x1ed0] sm:$0xff]
        %v1328 = vld [vmem:[%s224 + $0x1ed8] sm:$0xff]
        %v1329 = vld [vmem:[%s224 + $0x1ee0] sm:$0xff]
        %v1330 = vld [vmem:[%s224 + $0x1ee8] sm:$0xff]
        %v1331 = vld [vmem:[%s224 + $0x1ef0] sm:$0xff]
        %v1332 = vld [vmem:[%s224 + $0x1ef8] sm:$0xff]
        %v1333 = vld [vmem:[%s224 + $0x1f00] sm:$0xff]
        %v1334 = vld [vmem:[%s224 + $0x1f08] sm:$0xff]
        %v1335 = vld [vmem:[%s224 + $0x1f10] sm:$0xff]
        %v1336 = vld [vmem:[%s224 + $0x1f18] sm:$0xff]
        %v1337 = vld [vmem:[%s224 + $0x1f20] sm:$0xff]
        %v1338 = vld [vmem:[%s224 + $0x1f28] sm:$0xff]
        %v1339 = vld [vmem:[%s224 + $0x1f30] sm:$0xff]
        %v1340 = vld [vmem:[%s224 + $0x1f38] sm:$0xff]
        %v1341 = vld [vmem:[%s224 + $0x1f40] sm:$0xff]
        %v1342 = vld [vmem:[%s224 + $0x1f48] sm:$0xff]
        %v1343 = vld [vmem:[%s224 + $0x1f50] sm:$0xff]
        %v1344 = vld [vmem:[%s224 + $0x1f58] sm:$0xff]
        %v1345 = vld [vmem:[%s224 + $0x1f60] sm:$0xff]
        %v1346 = vld [vmem:[%s224 + $0x1f68] sm:$0xff]
        %v1347 = vld [vmem:[%s224 + $0x1f70] sm:$0xff]
        %v1348 = vld [vmem:[%s224 + $0x1f78] sm:$0xff]
        %v1349 = vld [vmem:[%s224 + $0x1f80] sm:$0xff]
        %v1350 = vld [vmem:[%s224 + $0x1f88] sm:$0xff]
        %v1351 = vld [vmem:[%s224 + $0x1f90] sm:$0xff]
        %v1352 = vld [vmem:[%s224 + $0x1f98] sm:$0xff]
        %v1353 = vld [vmem:[%s224 + $0x1fa0] sm:$0xff]
        %v1354 = vld [vmem:[%s224 + $0x1fa8] sm:$0xff]
        %v1355 = vld [vmem:[%s224 + $0x1fb0] sm:$0xff]
        %v1356 = vld [vmem:[%s224 + $0x1fb8] sm:$0xff]
        %v1357 = vld [vmem:[%s224 + $0x1fc0] sm:$0xff]
        %v1358 = vld [vmem:[%s224 + $0x1fc8] sm:$0xff]
        %v1359 = vld [vmem:[%s224 + $0x1fd0] sm:$0xff]
        %v1360 = vld [vmem:[%s224 + $0x1fd8] sm:$0xff]
        %v1361 = vld [vmem:[%s224 + $0x1fe0] sm:$0xff]
        %v1362 = vld [vmem:[%s224 + $0x1fe8] sm:$0xff]
        %v1363 = vld [vmem:[%s224 + $0x1ff0] sm:$0xff]
        %v1364 = vld [vmem:[%s224 + $0x1ff8] sm:$0xff]
        %v1365 = vld [vmem:[%s233] sm:$0xff]
        %v1367 = vlaneseq
        %v1368 = vshrl.u32 %v1367, 7
        %v1369 = vsub.s32 0, %v1368
        %v1370 = vrot.slane %v1365, %v1369
        %v1371 = vlaneseq
        %v1372 = vshrl.u32 %v1371, 7
        %v1373 = vsub.s32 1, %v1372
        %v1374 = vrot.slane %v1365, %v1373
        %v1375 = vlaneseq
        %v1376 = vshrl.u32 %v1375, 7
        %v1377 = vsub.s32 2, %v1376
        %v1378 = vrot.slane %v1365, %v1377
        %v1379 = vlaneseq
        %v1380 = vshrl.u32 %v1379, 7
        %v1381 = vsub.s32 3, %v1380
        %v1382 = vrot.slane %v1365, %v1381
        %v1383 = vlaneseq
        %v1384 = vshrl.u32 %v1383, 7
        %v1385 = vsub.s32 4, %v1384
        %v1386 = vrot.slane %v1365, %v1385
        %v1387 = vlaneseq
        %v1388 = vshrl.u32 %v1387, 7
        %v1389 = vsub.s32 5, %v1388
        %v1390 = vrot.slane %v1365, %v1389
        %v1391 = vlaneseq
        %v1392 = vshrl.u32 %v1391, 7
        %v1393 = vsub.s32 6, %v1392
        %v1394 = vrot.slane %v1365, %v1393
        %v1395 = vlaneseq
        %v1396 = vshrl.u32 %v1395, 7
        %v1397 = vsub.s32 7, %v1396
        %v1398 = vrot.slane %v1365, %v1397
        %v1415 = vunpack.c.l.b16 %v333
        %v1416 = vunpack.c.h.b16 %v333
        %v1417 = vunpack.c.l.b16 %v334
        %v1418 = vunpack.c.h.b16 %v334
        %v1419 = vunpack.c.l.b16 %v335
        %v1420 = vunpack.c.h.b16 %v335
        %v1421 = vunpack.c.l.b16 %v336
        %v1422 = vunpack.c.h.b16 %v336
        %v1423 = vunpack.c.l.b16 %v337
        %v1424 = vunpack.c.h.b16 %v337
        %v1425 = vunpack.c.l.b16 %v338
        %v1426 = vunpack.c.h.b16 %v338
        %v1427 = vunpack.c.l.b16 %v339
        %v1428 = vunpack.c.h.b16 %v339
        %v1429 = vunpack.c.l.b16 %v340
        %v1430 = vunpack.c.h.b16 %v340
        %v1431 = vpack.c.b16 %v1415, %v1415
        %v1432 = vpack.c.b16 %v1416, %v1416
        %v1433 = vpack.c.b16 %v1417, %v1417
        %v1434 = vpack.c.b16 %v1418, %v1418
        %v1435 = vpack.c.b16 %v1419, %v1419
        %v1436 = vpack.c.b16 %v1420, %v1420
        %v1437 = vpack.c.b16 %v1421, %v1421
        %v1438 = vpack.c.b16 %v1422, %v1422
        %v1439 = vpack.c.b16 %v1423, %v1423
        %v1440 = vpack.c.b16 %v1424, %v1424
        %v1441 = vpack.c.b16 %v1425, %v1425
        %v1442 = vpack.c.b16 %v1426, %v1426
        %v1443 = vpack.c.b16 %v1427, %v1427
        %v1444 = vpack.c.b16 %v1428, %v1428
        %v1445 = vpack.c.b16 %v1429, %v1429
        %v1446 = vpack.c.b16 %v1430, %v1430
        %v2487 = vunpack.c.l.b16 %v341
        %v2488 = vunpack.c.h.b16 %v341
        %v2489 = vunpack.c.l.b16 %v342
        %v2490 = vunpack.c.h.b16 %v342
        %v2491 = vunpack.c.l.b16 %v343
        %v2492 = vunpack.c.h.b16 %v343
        %v2493 = vunpack.c.l.b16 %v344
        %v2494 = vunpack.c.h.b16 %v344
        %v2495 = vunpack.c.l.b16 %v345
        %v2496 = vunpack.c.h.b16 %v345
        %v2497 = vunpack.c.l.b16 %v346
        %v2498 = vunpack.c.h.b16 %v346
        %v2499 = vunpack.c.l.b16 %v347
        %v2500 = vunpack.c.h.b16 %v347
        %v2501 = vunpack.c.l.b16 %v348
        %v2502 = vunpack.c.h.b16 %v348
        %v2503 = vunpack.c.l.b16 %v349
        %v2504 = vunpack.c.h.b16 %v349
        %v2505 = vunpack.c.l.b16 %v350
        %v2506 = vunpack.c.h.b16 %v350
        %v2507 = vunpack.c.l.b16 %v351
        %v2508 = vunpack.c.h.b16 %v351
        %v2509 = vunpack.c.l.b16 %v352
        %v2510 = vunpack.c.h.b16 %v352
        %v2511 = vunpack.c.l.b16 %v353
        %v2512 = vunpack.c.h.b16 %v353
        %v2513 = vunpack.c.l.b16 %v354
        %v2514 = vunpack.c.h.b16 %v354
        %v2515 = vunpack.c.l.b16 %v355
        %v2516 = vunpack.c.h.b16 %v355
        %v2517 = vunpack.c.l.b16 %v356
        %v2518 = vunpack.c.h.b16 %v356
        %v2519 = vunpack.c.l.b16 %v357
        %v2520 = vunpack.c.h.b16 %v357
        %v2521 = vunpack.c.l.b16 %v358
        %v2522 = vunpack.c.h.b16 %v358
        %v2523 = vunpack.c.l.b16 %v359
        %v2524 = vunpack.c.h.b16 %v359
        %v2525 = vunpack.c.l.b16 %v360
        %v2526 = vunpack.c.h.b16 %v360
        %v2527 = vunpack.c.l.b16 %v361
        %v2528 = vunpack.c.h.b16 %v361
        %v2529 = vunpack.c.l.b16 %v362
        %v2530 = vunpack.c.h.b16 %v362
        %v2531 = vunpack.c.l.b16 %v363
        %v2532 = vunpack.c.h.b16 %v363
        %v2533 = vunpack.c.l.b16 %v364
        %v2534 = vunpack.c.h.b16 %v364
        %v2535 = vunpack.c.l.b16 %v365
        %v2536 = vunpack.c.h.b16 %v365
        %v2537 = vunpack.c.l.b16 %v366
        %v2538 = vunpack.c.h.b16 %v366
        %v2539 = vunpack.c.l.b16 %v367
        %v2540 = vunpack.c.h.b16 %v367
        %v2541 = vunpack.c.l.b16 %v368
        %v2542 = vunpack.c.h.b16 %v368
        %v2543 = vunpack.c.l.b16 %v369
        %v2544 = vunpack.c.h.b16 %v369
        %v2545 = vunpack.c.l.b16 %v370
        %v2546 = vunpack.c.h.b16 %v370
        %v2547 = vunpack.c.l.b16 %v371
        %v2548 = vunpack.c.h.b16 %v371
        %v2549 = vunpack.c.l.b16 %v372
        %v2550 = vunpack.c.h.b16 %v372
        %v2551 = vunpack.c.l.b16 %v373
        %v2552 = vunpack.c.h.b16 %v373
        %v2553 = vunpack.c.l.b16 %v374
        %v2554 = vunpack.c.h.b16 %v374
        %v2555 = vunpack.c.l.b16 %v375
        %v2556 = vunpack.c.h.b16 %v375
        %v2557 = vunpack.c.l.b16 %v376
        %v2558 = vunpack.c.h.b16 %v376
        %v2559 = vunpack.c.l.b16 %v377
        %v2560 = vunpack.c.h.b16 %v377
        %v2561 = vunpack.c.l.b16 %v378
        %v2562 = vunpack.c.h.b16 %v378
        %v2563 = vunpack.c.l.b16 %v379
        %v2564 = vunpack.c.h.b16 %v379
        %v2565 = vunpack.c.l.b16 %v380
        %v2566 = vunpack.c.h.b16 %v380
        %v2567 = vunpack.c.l.b16 %v381
        %v2568 = vunpack.c.h.b16 %v381
        %v2569 = vunpack.c.l.b16 %v382
        %v2570 = vunpack.c.h.b16 %v382
        %v2571 = vunpack.c.l.b16 %v383
        %v2572 = vunpack.c.h.b16 %v383
        %v2573 = vunpack.c.l.b16 %v384
        %v2574 = vunpack.c.h.b16 %v384
        %v2575 = vunpack.c.l.b16 %v385
        %v2576 = vunpack.c.h.b16 %v385
        %v2577 = vunpack.c.l.b16 %v386
        %v2578 = vunpack.c.h.b16 %v386
        %v2579 = vunpack.c.l.b16 %v387
        %v2580 = vunpack.c.h.b16 %v387
        %v2581 = vunpack.c.l.b16 %v388
        %v2582 = vunpack.c.h.b16 %v388
        %v2583 = vunpack.c.l.b16 %v389
        %v2584 = vunpack.c.h.b16 %v389
        %v2585 = vunpack.c.l.b16 %v390
        %v2586 = vunpack.c.h.b16 %v390
        %v2587 = vunpack.c.l.b16 %v391
        %v2588 = vunpack.c.h.b16 %v391
        %v2589 = vunpack.c.l.b16 %v392
        %v2590 = vunpack.c.h.b16 %v392
        %v2591 = vunpack.c.l.b16 %v393
        %v2592 = vunpack.c.h.b16 %v393
        %v2593 = vunpack.c.l.b16 %v394
        %v2594 = vunpack.c.h.b16 %v394
        %v2595 = vunpack.c.l.b16 %v395
        %v2596 = vunpack.c.h.b16 %v395
        %v2597 = vunpack.c.l.b16 %v396
        %v2598 = vunpack.c.h.b16 %v396
        %v2599 = vunpack.c.l.b16 %v397
        %v2600 = vunpack.c.h.b16 %v397
        %v2601 = vunpack.c.l.b16 %v398
        %v2602 = vunpack.c.h.b16 %v398
        %v2603 = vunpack.c.l.b16 %v399
        %v2604 = vunpack.c.h.b16 %v399
        %v2605 = vunpack.c.l.b16 %v400
        %v2606 = vunpack.c.h.b16 %v400
        %v2607 = vunpack.c.l.b16 %v401
        %v2608 = vunpack.c.h.b16 %v401
        %v2609 = vunpack.c.l.b16 %v402
        %v2610 = vunpack.c.h.b16 %v402
        %v2611 = vunpack.c.l.b16 %v403
        %v2612 = vunpack.c.h.b16 %v403
        %v2613 = vunpack.c.l.b16 %v404
        %v2614 = vunpack.c.h.b16 %v404
        %v2615 = vunpack.c.l.b16 %v405
        %v2616 = vunpack.c.h.b16 %v405
        %v2617 = vunpack.c.l.b16 %v406
        %v2618 = vunpack.c.h.b16 %v406
        %v2619 = vunpack.c.l.b16 %v407
        %v2620 = vunpack.c.h.b16 %v407
        %v2621 = vunpack.c.l.b16 %v408
        %v2622 = vunpack.c.h.b16 %v408
        %v2623 = vunpack.c.l.b16 %v409
        %v2624 = vunpack.c.h.b16 %v409
        %v2625 = vunpack.c.l.b16 %v410
        %v2626 = vunpack.c.h.b16 %v410
        %v2627 = vunpack.c.l.b16 %v411
        %v2628 = vunpack.c.h.b16 %v411
        %v2629 = vunpack.c.l.b16 %v412
        %v2630 = vunpack.c.h.b16 %v412
        %v2631 = vunpack.c.l.b16 %v413
        %v2632 = vunpack.c.h.b16 %v413
        %v2633 = vunpack.c.l.b16 %v414
        %v2634 = vunpack.c.h.b16 %v414
        %v2635 = vunpack.c.l.b16 %v415
        %v2636 = vunpack.c.h.b16 %v415
        %v2637 = vunpack.c.l.b16 %v416
        %v2638 = vunpack.c.h.b16 %v416
        %v2639 = vunpack.c.l.b16 %v417
        %v2640 = vunpack.c.h.b16 %v417
        %v2641 = vunpack.c.l.b16 %v418
        %v2642 = vunpack.c.h.b16 %v418
        %v2643 = vunpack.c.l.b16 %v419
        %v2644 = vunpack.c.h.b16 %v419
        %v2645 = vunpack.c.l.b16 %v420
        %v2646 = vunpack.c.h.b16 %v420
        %v2647 = vunpack.c.l.b16 %v421
        %v2648 = vunpack.c.h.b16 %v421
        %v2649 = vunpack.c.l.b16 %v422
        %v2650 = vunpack.c.h.b16 %v422
        %v2651 = vunpack.c.l.b16 %v423
        %v2652 = vunpack.c.h.b16 %v423
        %v2653 = vunpack.c.l.b16 %v424
        %v2654 = vunpack.c.h.b16 %v424
        %v2655 = vunpack.c.l.b16 %v425
        %v2656 = vunpack.c.h.b16 %v425
        %v2657 = vunpack.c.l.b16 %v426
        %v2658 = vunpack.c.h.b16 %v426
        %v2659 = vunpack.c.l.b16 %v427
        %v2660 = vunpack.c.h.b16 %v427
        %v2661 = vunpack.c.l.b16 %v428
        %v2662 = vunpack.c.h.b16 %v428
        %v2663 = vunpack.c.l.b16 %v429
        %v2664 = vunpack.c.h.b16 %v429
        %v2665 = vunpack.c.l.b16 %v430
        %v2666 = vunpack.c.h.b16 %v430
        %v2667 = vunpack.c.l.b16 %v431
        %v2668 = vunpack.c.h.b16 %v431
        %v2669 = vunpack.c.l.b16 %v432
        %v2670 = vunpack.c.h.b16 %v432
        %v2671 = vunpack.c.l.b16 %v433
        %v2672 = vunpack.c.h.b16 %v433
        %v2673 = vunpack.c.l.b16 %v434
        %v2674 = vunpack.c.h.b16 %v434
        %v2675 = vunpack.c.l.b16 %v435
        %v2676 = vunpack.c.h.b16 %v435
        %v2677 = vunpack.c.l.b16 %v436
        %v2678 = vunpack.c.h.b16 %v436
        %v2679 = vunpack.c.l.b16 %v437
        %v2680 = vunpack.c.h.b16 %v437
        %v2681 = vunpack.c.l.b16 %v438
        %v2682 = vunpack.c.h.b16 %v438
        %v2683 = vunpack.c.l.b16 %v439
        %v2684 = vunpack.c.h.b16 %v439
        %v2685 = vunpack.c.l.b16 %v440
        %v2686 = vunpack.c.h.b16 %v440
        %v2687 = vunpack.c.l.b16 %v441
        %v2688 = vunpack.c.h.b16 %v441
        %v2689 = vunpack.c.l.b16 %v442
        %v2690 = vunpack.c.h.b16 %v442
        %v2691 = vunpack.c.l.b16 %v443
        %v2692 = vunpack.c.h.b16 %v443
        %v2693 = vunpack.c.l.b16 %v444
        %v2694 = vunpack.c.h.b16 %v444
        %v2695 = vunpack.c.l.b16 %v445
        %v2696 = vunpack.c.h.b16 %v445
        %v2697 = vunpack.c.l.b16 %v446
        %v2698 = vunpack.c.h.b16 %v446
        %v2699 = vunpack.c.l.b16 %v447
        %v2700 = vunpack.c.h.b16 %v447
        %v2701 = vunpack.c.l.b16 %v448
        %v2702 = vunpack.c.h.b16 %v448
        %v2703 = vunpack.c.l.b16 %v449
        %v2704 = vunpack.c.h.b16 %v449
        %v2705 = vunpack.c.l.b16 %v450
        %v2706 = vunpack.c.h.b16 %v450
        %v2707 = vunpack.c.l.b16 %v451
        %v2708 = vunpack.c.h.b16 %v451
        %v2709 = vunpack.c.l.b16 %v452
        %v2710 = vunpack.c.h.b16 %v452
        %v2711 = vunpack.c.l.b16 %v453
        %v2712 = vunpack.c.h.b16 %v453
        %v2713 = vunpack.c.l.b16 %v454
        %v2714 = vunpack.c.h.b16 %v454
        %v2715 = vunpack.c.l.b16 %v455
        %v2716 = vunpack.c.h.b16 %v455
        %v2717 = vunpack.c.l.b16 %v456
        %v2718 = vunpack.c.h.b16 %v456
        %v2719 = vunpack.c.l.b16 %v457
        %v2720 = vunpack.c.h.b16 %v457
        %v2721 = vunpack.c.l.b16 %v458
        %v2722 = vunpack.c.h.b16 %v458
        %v2723 = vunpack.c.l.b16 %v459
        %v2724 = vunpack.c.h.b16 %v459
        %v2725 = vunpack.c.l.b16 %v460
        %v2726 = vunpack.c.h.b16 %v460
        %v2727 = vunpack.c.l.b16 %v461
        %v2728 = vunpack.c.h.b16 %v461
        %v2729 = vunpack.c.l.b16 %v462
        %v2730 = vunpack.c.h.b16 %v462
        %v2731 = vunpack.c.l.b16 %v463
        %v2732 = vunpack.c.h.b16 %v463
        %v2733 = vunpack.c.l.b16 %v464
        %v2734 = vunpack.c.h.b16 %v464
        %v2735 = vunpack.c.l.b16 %v465
        %v2736 = vunpack.c.h.b16 %v465
        %v2737 = vunpack.c.l.b16 %v466
        %v2738 = vunpack.c.h.b16 %v466
        %v2739 = vunpack.c.l.b16 %v467
        %v2740 = vunpack.c.h.b16 %v467
        %v2741 = vunpack.c.l.b16 %v468
        %v2742 = vunpack.c.h.b16 %v468
        %v2743 = vunpack.c.l.b16 %v469
        %v2744 = vunpack.c.h.b16 %v469
        %v2745 = vunpack.c.l.b16 %v470
        %v2746 = vunpack.c.h.b16 %v470
        %v2747 = vunpack.c.l.b16 %v471
        %v2748 = vunpack.c.h.b16 %v471
        %v2749 = vunpack.c.l.b16 %v472
        %v2750 = vunpack.c.h.b16 %v472
        %v2751 = vunpack.c.l.b16 %v473
        %v2752 = vunpack.c.h.b16 %v473
        %v2753 = vunpack.c.l.b16 %v474
        %v2754 = vunpack.c.h.b16 %v474
        %v2755 = vunpack.c.l.b16 %v475
        %v2756 = vunpack.c.h.b16 %v475
        %v2757 = vunpack.c.l.b16 %v476
        %v2758 = vunpack.c.h.b16 %v476
        %v2759 = vunpack.c.l.b16 %v477
        %v2760 = vunpack.c.h.b16 %v477
        %v2761 = vunpack.c.l.b16 %v478
        %v2762 = vunpack.c.h.b16 %v478
        %v2763 = vunpack.c.l.b16 %v479
        %v2764 = vunpack.c.h.b16 %v479
        %v2765 = vunpack.c.l.b16 %v480
        %v2766 = vunpack.c.h.b16 %v480
        %v2767 = vunpack.c.l.b16 %v481
        %v2768 = vunpack.c.h.b16 %v481
        %v2769 = vunpack.c.l.b16 %v482
        %v2770 = vunpack.c.h.b16 %v482
        %v2771 = vunpack.c.l.b16 %v483
        %v2772 = vunpack.c.h.b16 %v483
        %v2773 = vunpack.c.l.b16 %v484
        %v2774 = vunpack.c.h.b16 %v484
        %v2775 = vunpack.c.l.b16 %v485
        %v2776 = vunpack.c.h.b16 %v485
        %v2777 = vunpack.c.l.b16 %v486
        %v2778 = vunpack.c.h.b16 %v486
        %v2779 = vunpack.c.l.b16 %v487
        %v2780 = vunpack.c.h.b16 %v487
        %v2781 = vunpack.c.l.b16 %v488
        %v2782 = vunpack.c.h.b16 %v488
        %v2783 = vunpack.c.l.b16 %v489
        %v2784 = vunpack.c.h.b16 %v489
        %v2785 = vunpack.c.l.b16 %v490
        %v2786 = vunpack.c.h.b16 %v490
        %v2787 = vunpack.c.l.b16 %v491
        %v2788 = vunpack.c.h.b16 %v491
        %v2789 = vunpack.c.l.b16 %v492
        %v2790 = vunpack.c.h.b16 %v492
        %v2791 = vunpack.c.l.b16 %v493
        %v2792 = vunpack.c.h.b16 %v493
        %v2793 = vunpack.c.l.b16 %v494
        %v2794 = vunpack.c.h.b16 %v494
        %v2795 = vunpack.c.l.b16 %v495
        %v2796 = vunpack.c.h.b16 %v495
        %v2797 = vunpack.c.l.b16 %v496
        %v2798 = vunpack.c.h.b16 %v496
        %v2799 = vunpack.c.l.b16 %v497
        %v2800 = vunpack.c.h.b16 %v497
        %v2801 = vunpack.c.l.b16 %v498
        %v2802 = vunpack.c.h.b16 %v498
        %v2803 = vunpack.c.l.b16 %v499
        %v2804 = vunpack.c.h.b16 %v499
        %v2805 = vunpack.c.l.b16 %v500
        %v2806 = vunpack.c.h.b16 %v500
        %v2807 = vunpack.c.l.b16 %v501
        %v2808 = vunpack.c.h.b16 %v501
        %v2809 = vunpack.c.l.b16 %v502
        %v2810 = vunpack.c.h.b16 %v502
        %v2811 = vunpack.c.l.b16 %v503
        %v2812 = vunpack.c.h.b16 %v503
        %v2813 = vunpack.c.l.b16 %v504
        %v2814 = vunpack.c.h.b16 %v504
        %v2815 = vunpack.c.l.b16 %v505
        %v2816 = vunpack.c.h.b16 %v505
        %v2817 = vunpack.c.l.b16 %v506
        %v2818 = vunpack.c.h.b16 %v506
        %v2819 = vunpack.c.l.b16 %v507
        %v2820 = vunpack.c.h.b16 %v507
        %v2821 = vunpack.c.l.b16 %v508
        %v2822 = vunpack.c.h.b16 %v508
        %v2823 = vunpack.c.l.b16 %v509
        %v2824 = vunpack.c.h.b16 %v509
        %v2825 = vunpack.c.l.b16 %v510
        %v2826 = vunpack.c.h.b16 %v510
        %v2827 = vunpack.c.l.b16 %v511
        %v2828 = vunpack.c.h.b16 %v511
        %v2829 = vunpack.c.l.b16 %v512
        %v2830 = vunpack.c.h.b16 %v512
        %v2831 = vunpack.c.l.b16 %v513
        %v2832 = vunpack.c.h.b16 %v513
        %v2833 = vunpack.c.l.b16 %v514
        %v2834 = vunpack.c.h.b16 %v514
        %v2835 = vunpack.c.l.b16 %v515
        %v2836 = vunpack.c.h.b16 %v515
        %v2837 = vunpack.c.l.b16 %v516
        %v2838 = vunpack.c.h.b16 %v516
        %v2839 = vunpack.c.l.b16 %v517
        %v2840 = vunpack.c.h.b16 %v517
        %v2841 = vunpack.c.l.b16 %v518
        %v2842 = vunpack.c.h.b16 %v518
        %v2843 = vunpack.c.l.b16 %v519
        %v2844 = vunpack.c.h.b16 %v519
        %v2845 = vunpack.c.l.b16 %v520
        %v2846 = vunpack.c.h.b16 %v520
        %v2847 = vunpack.c.l.b16 %v521
        %v2848 = vunpack.c.h.b16 %v521
        %v2849 = vunpack.c.l.b16 %v522
        %v2850 = vunpack.c.h.b16 %v522
        %v2851 = vunpack.c.l.b16 %v523
        %v2852 = vunpack.c.h.b16 %v523
        %v2853 = vunpack.c.l.b16 %v524
        %v2854 = vunpack.c.h.b16 %v524
        %v2855 = vunpack.c.l.b16 %v525
        %v2856 = vunpack.c.h.b16 %v525
        %v2857 = vunpack.c.l.b16 %v526
        %v2858 = vunpack.c.h.b16 %v526
        %v2859 = vunpack.c.l.b16 %v527
        %v2860 = vunpack.c.h.b16 %v527
        %v2861 = vunpack.c.l.b16 %v528
        %v2862 = vunpack.c.h.b16 %v528
        %v2863 = vunpack.c.l.b16 %v529
        %v2864 = vunpack.c.h.b16 %v529
        %v2865 = vunpack.c.l.b16 %v530
        %v2866 = vunpack.c.h.b16 %v530
        %v2867 = vunpack.c.l.b16 %v531
        %v2868 = vunpack.c.h.b16 %v531
        %v2869 = vunpack.c.l.b16 %v532
        %v2870 = vunpack.c.h.b16 %v532
        %v2871 = vunpack.c.l.b16 %v533
        %v2872 = vunpack.c.h.b16 %v533
        %v2873 = vunpack.c.l.b16 %v534
        %v2874 = vunpack.c.h.b16 %v534
        %v2875 = vunpack.c.l.b16 %v535
        %v2876 = vunpack.c.h.b16 %v535
        %v2877 = vunpack.c.l.b16 %v536
        %v2878 = vunpack.c.h.b16 %v536
        %v2879 = vunpack.c.l.b16 %v537
        %v2880 = vunpack.c.h.b16 %v537
        %v2881 = vunpack.c.l.b16 %v538
        %v2882 = vunpack.c.h.b16 %v538
        %v2883 = vunpack.c.l.b16 %v539
        %v2884 = vunpack.c.h.b16 %v539
        %v2885 = vunpack.c.l.b16 %v540
        %v2886 = vunpack.c.h.b16 %v540
        %v2887 = vunpack.c.l.b16 %v541
        %v2888 = vunpack.c.h.b16 %v541
        %v2889 = vunpack.c.l.b16 %v542
        %v2890 = vunpack.c.h.b16 %v542
        %v2891 = vunpack.c.l.b16 %v543
        %v2892 = vunpack.c.h.b16 %v543
        %v2893 = vunpack.c.l.b16 %v544
        %v2894 = vunpack.c.h.b16 %v544
        %v2895 = vunpack.c.l.b16 %v545
        %v2896 = vunpack.c.h.b16 %v545
        %v2897 = vunpack.c.l.b16 %v546
        %v2898 = vunpack.c.h.b16 %v546
        %v2899 = vunpack.c.l.b16 %v547
        %v2900 = vunpack.c.h.b16 %v547
        %v2901 = vunpack.c.l.b16 %v548
        %v2902 = vunpack.c.h.b16 %v548
        %v2903 = vunpack.c.l.b16 %v549
        %v2904 = vunpack.c.h.b16 %v549
        %v2905 = vunpack.c.l.b16 %v550
        %v2906 = vunpack.c.h.b16 %v550
        %v2907 = vunpack.c.l.b16 %v551
        %v2908 = vunpack.c.h.b16 %v551
        %v2909 = vunpack.c.l.b16 %v552
        %v2910 = vunpack.c.h.b16 %v552
        %v2911 = vunpack.c.l.b16 %v553
        %v2912 = vunpack.c.h.b16 %v553
        %v2913 = vunpack.c.l.b16 %v554
        %v2914 = vunpack.c.h.b16 %v554
        %v2915 = vunpack.c.l.b16 %v555
        %v2916 = vunpack.c.h.b16 %v555
        %v2917 = vunpack.c.l.b16 %v556
        %v2918 = vunpack.c.h.b16 %v556
        %v2919 = vunpack.c.l.b16 %v557
        %v2920 = vunpack.c.h.b16 %v557
        %v2921 = vunpack.c.l.b16 %v558
        %v2922 = vunpack.c.h.b16 %v558
        %v2923 = vunpack.c.l.b16 %v559
        %v2924 = vunpack.c.h.b16 %v559
        %v2925 = vunpack.c.l.b16 %v560
        %v2926 = vunpack.c.h.b16 %v560
        %v2927 = vunpack.c.l.b16 %v561
        %v2928 = vunpack.c.h.b16 %v561
        %v2929 = vunpack.c.l.b16 %v562
        %v2930 = vunpack.c.h.b16 %v562
        %v2931 = vunpack.c.l.b16 %v563
        %v2932 = vunpack.c.h.b16 %v563
        %v2933 = vunpack.c.l.b16 %v564
        %v2934 = vunpack.c.h.b16 %v564
        %v2935 = vunpack.c.l.b16 %v565
        %v2936 = vunpack.c.h.b16 %v565
        %v2937 = vunpack.c.l.b16 %v566
        %v2938 = vunpack.c.h.b16 %v566
        %v2939 = vunpack.c.l.b16 %v567
        %v2940 = vunpack.c.h.b16 %v567
        %v2941 = vunpack.c.l.b16 %v568
        %v2942 = vunpack.c.h.b16 %v568
        %v2943 = vunpack.c.l.b16 %v569
        %v2944 = vunpack.c.h.b16 %v569
        %v2945 = vunpack.c.l.b16 %v570
        %v2946 = vunpack.c.h.b16 %v570
        %v2947 = vunpack.c.l.b16 %v571
        %v2948 = vunpack.c.h.b16 %v571
        %v2949 = vunpack.c.l.b16 %v572
        %v2950 = vunpack.c.h.b16 %v572
        %v2951 = vunpack.c.l.b16 %v573
        %v2952 = vunpack.c.h.b16 %v573
        %v2953 = vunpack.c.l.b16 %v574
        %v2954 = vunpack.c.h.b16 %v574
        %v2955 = vunpack.c.l.b16 %v575
        %v2956 = vunpack.c.h.b16 %v575
        %v2957 = vunpack.c.l.b16 %v576
        %v2958 = vunpack.c.h.b16 %v576
        %v2959 = vunpack.c.l.b16 %v577
        %v2960 = vunpack.c.h.b16 %v577
        %v2961 = vunpack.c.l.b16 %v578
        %v2962 = vunpack.c.h.b16 %v578
        %v2963 = vunpack.c.l.b16 %v579
        %v2964 = vunpack.c.h.b16 %v579
        %v2965 = vunpack.c.l.b16 %v580
        %v2966 = vunpack.c.h.b16 %v580
        %v2967 = vunpack.c.l.b16 %v581
        %v2968 = vunpack.c.h.b16 %v581
        %v2969 = vunpack.c.l.b16 %v582
        %v2970 = vunpack.c.h.b16 %v582
        %v2971 = vunpack.c.l.b16 %v583
        %v2972 = vunpack.c.h.b16 %v583
        %v2973 = vunpack.c.l.b16 %v584
        %v2974 = vunpack.c.h.b16 %v584
        %v2975 = vunpack.c.l.b16 %v585
        %v2976 = vunpack.c.h.b16 %v585
        %v2977 = vunpack.c.l.b16 %v586
        %v2978 = vunpack.c.h.b16 %v586
        %v2979 = vunpack.c.l.b16 %v587
        %v2980 = vunpack.c.h.b16 %v587
        %v2981 = vunpack.c.l.b16 %v588
        %v2982 = vunpack.c.h.b16 %v588
        %v2983 = vunpack.c.l.b16 %v589
        %v2984 = vunpack.c.h.b16 %v589
        %v2985 = vunpack.c.l.b16 %v590
        %v2986 = vunpack.c.h.b16 %v590
        %v2987 = vunpack.c.l.b16 %v591
        %v2988 = vunpack.c.h.b16 %v591
        %v2989 = vunpack.c.l.b16 %v592
        %v2990 = vunpack.c.h.b16 %v592
        %v2991 = vunpack.c.l.b16 %v593
        %v2992 = vunpack.c.h.b16 %v593
        %v2993 = vunpack.c.l.b16 %v594
        %v2994 = vunpack.c.h.b16 %v594
        %v2995 = vunpack.c.l.b16 %v595
        %v2996 = vunpack.c.h.b16 %v595
        %v2997 = vunpack.c.l.b16 %v596
        %v2998 = vunpack.c.h.b16 %v596
        %v2999 = vunpack.c.l.b16 %v597
        %v3000 = vunpack.c.h.b16 %v597
        %v3001 = vunpack.c.l.b16 %v598
        %v3002 = vunpack.c.h.b16 %v598
        %v3003 = vunpack.c.l.b16 %v599
        %v3004 = vunpack.c.h.b16 %v599
        %v3005 = vunpack.c.l.b16 %v600
        %v3006 = vunpack.c.h.b16 %v600
        %v3007 = vunpack.c.l.b16 %v601
        %v3008 = vunpack.c.h.b16 %v601
        %v3009 = vunpack.c.l.b16 %v602
        %v3010 = vunpack.c.h.b16 %v602
        %v3011 = vunpack.c.l.b16 %v603
        %v3012 = vunpack.c.h.b16 %v603
        %v3013 = vunpack.c.l.b16 %v604
        %v3014 = vunpack.c.h.b16 %v604
        %v3015 = vunpack.c.l.b16 %v605
        %v3016 = vunpack.c.h.b16 %v605
        %v3017 = vunpack.c.l.b16 %v606
        %v3018 = vunpack.c.h.b16 %v606
        %v3019 = vunpack.c.l.b16 %v607
        %v3020 = vunpack.c.h.b16 %v607
        %v3021 = vunpack.c.l.b16 %v608
        %v3022 = vunpack.c.h.b16 %v608
        %v3023 = vunpack.c.l.b16 %v609
        %v3024 = vunpack.c.h.b16 %v609
        %v3025 = vunpack.c.l.b16 %v610
        %v3026 = vunpack.c.h.b16 %v610
        %v3027 = vunpack.c.l.b16 %v611
        %v3028 = vunpack.c.h.b16 %v611
        %v3029 = vunpack.c.l.b16 %v612
        %v3030 = vunpack.c.h.b16 %v612
        %v3031 = vunpack.c.l.b16 %v613
        %v3032 = vunpack.c.h.b16 %v613
        %v3033 = vunpack.c.l.b16 %v614
        %v3034 = vunpack.c.h.b16 %v614
        %v3035 = vunpack.c.l.b16 %v615
        %v3036 = vunpack.c.h.b16 %v615
        %v3037 = vunpack.c.l.b16 %v616
        %v3038 = vunpack.c.h.b16 %v616
        %v3039 = vunpack.c.l.b16 %v617
        %v3040 = vunpack.c.h.b16 %v617
        %v3041 = vunpack.c.l.b16 %v618
        %v3042 = vunpack.c.h.b16 %v618
        %v3043 = vunpack.c.l.b16 %v619
        %v3044 = vunpack.c.h.b16 %v619
        %v3045 = vunpack.c.l.b16 %v620
        %v3046 = vunpack.c.h.b16 %v620
        %v3047 = vunpack.c.l.b16 %v621
        %v3048 = vunpack.c.h.b16 %v621
        %v3049 = vunpack.c.l.b16 %v622
        %v3050 = vunpack.c.h.b16 %v622
        %v3051 = vunpack.c.l.b16 %v623
        %v3052 = vunpack.c.h.b16 %v623
        %v3053 = vunpack.c.l.b16 %v624
        %v3054 = vunpack.c.h.b16 %v624
        %v3055 = vunpack.c.l.b16 %v625
        %v3056 = vunpack.c.h.b16 %v625
        %v3057 = vunpack.c.l.b16 %v626
        %v3058 = vunpack.c.h.b16 %v626
        %v3059 = vunpack.c.l.b16 %v627
        %v3060 = vunpack.c.h.b16 %v627
        %v3061 = vunpack.c.l.b16 %v628
        %v3062 = vunpack.c.h.b16 %v628
        %v3063 = vunpack.c.l.b16 %v629
        %v3064 = vunpack.c.h.b16 %v629
        %v3065 = vunpack.c.l.b16 %v630
        %v3066 = vunpack.c.h.b16 %v630
        %v3067 = vunpack.c.l.b16 %v631
        %v3068 = vunpack.c.h.b16 %v631
        %v3069 = vunpack.c.l.b16 %v632
        %v3070 = vunpack.c.h.b16 %v632
        %v3071 = vunpack.c.l.b16 %v633
        %v3072 = vunpack.c.h.b16 %v633
        %v3073 = vunpack.c.l.b16 %v634
        %v3074 = vunpack.c.h.b16 %v634
        %v3075 = vunpack.c.l.b16 %v635
        %v3076 = vunpack.c.h.b16 %v635
        %v3077 = vunpack.c.l.b16 %v636
        %v3078 = vunpack.c.h.b16 %v636
        %v3079 = vunpack.c.l.b16 %v637
        %v3080 = vunpack.c.h.b16 %v637
        %v3081 = vunpack.c.l.b16 %v638
        %v3082 = vunpack.c.h.b16 %v638
        %v3083 = vunpack.c.l.b16 %v639
        %v3084 = vunpack.c.h.b16 %v639
        %v3085 = vunpack.c.l.b16 %v640
        %v3086 = vunpack.c.h.b16 %v640
        %v3087 = vunpack.c.l.b16 %v641
        %v3088 = vunpack.c.h.b16 %v641
        %v3089 = vunpack.c.l.b16 %v642
        %v3090 = vunpack.c.h.b16 %v642
        %v3091 = vunpack.c.l.b16 %v643
        %v3092 = vunpack.c.h.b16 %v643
        %v3093 = vunpack.c.l.b16 %v644
        %v3094 = vunpack.c.h.b16 %v644
        %v3095 = vunpack.c.l.b16 %v645
        %v3096 = vunpack.c.h.b16 %v645
        %v3097 = vunpack.c.l.b16 %v646
        %v3098 = vunpack.c.h.b16 %v646
        %v3099 = vunpack.c.l.b16 %v647
        %v3100 = vunpack.c.h.b16 %v647
        %v3101 = vunpack.c.l.b16 %v648
        %v3102 = vunpack.c.h.b16 %v648
        %v3103 = vunpack.c.l.b16 %v649
        %v3104 = vunpack.c.h.b16 %v649
        %v3105 = vunpack.c.l.b16 %v650
        %v3106 = vunpack.c.h.b16 %v650
        %v3107 = vunpack.c.l.b16 %v651
        %v3108 = vunpack.c.h.b16 %v651
        %v3109 = vunpack.c.l.b16 %v652
        %v3110 = vunpack.c.h.b16 %v652
        %v3111 = vunpack.c.l.b16 %v653
        %v3112 = vunpack.c.h.b16 %v653
        %v3113 = vunpack.c.l.b16 %v654
        %v3114 = vunpack.c.h.b16 %v654
        %v3115 = vunpack.c.l.b16 %v655
        %v3116 = vunpack.c.h.b16 %v655
        %v3117 = vunpack.c.l.b16 %v656
        %v3118 = vunpack.c.h.b16 %v656
        %v3119 = vunpack.c.l.b16 %v657
        %v3120 = vunpack.c.h.b16 %v657
        %v3121 = vunpack.c.l.b16 %v658
        %v3122 = vunpack.c.h.b16 %v658
        %v3123 = vunpack.c.l.b16 %v659
        %v3124 = vunpack.c.h.b16 %v659
        %v3125 = vunpack.c.l.b16 %v660
        %v3126 = vunpack.c.h.b16 %v660
        %v3127 = vunpack.c.l.b16 %v661
        %v3128 = vunpack.c.h.b16 %v661
        %v3129 = vunpack.c.l.b16 %v662
        %v3130 = vunpack.c.h.b16 %v662
        %v3131 = vunpack.c.l.b16 %v663
        %v3132 = vunpack.c.h.b16 %v663
        %v3133 = vunpack.c.l.b16 %v664
        %v3134 = vunpack.c.h.b16 %v664
        %v3135 = vunpack.c.l.b16 %v665
        %v3136 = vunpack.c.h.b16 %v665
        %v3137 = vunpack.c.l.b16 %v666
        %v3138 = vunpack.c.h.b16 %v666
        %v3139 = vunpack.c.l.b16 %v667
        %v3140 = vunpack.c.h.b16 %v667
        %v3141 = vunpack.c.l.b16 %v668
        %v3142 = vunpack.c.h.b16 %v668
        %v3143 = vunpack.c.l.b16 %v669
        %v3144 = vunpack.c.h.b16 %v669
        %v3145 = vunpack.c.l.b16 %v670
        %v3146 = vunpack.c.h.b16 %v670
        %v3147 = vunpack.c.l.b16 %v671
        %v3148 = vunpack.c.h.b16 %v671
        %v3149 = vunpack.c.l.b16 %v672
        %v3150 = vunpack.c.h.b16 %v672
        %v3151 = vunpack.c.l.b16 %v673
        %v3152 = vunpack.c.h.b16 %v673
        %v3153 = vunpack.c.l.b16 %v674
        %v3154 = vunpack.c.h.b16 %v674
        %v3155 = vunpack.c.l.b16 %v675
        %v3156 = vunpack.c.h.b16 %v675
        %v3157 = vunpack.c.l.b16 %v676
        %v3158 = vunpack.c.h.b16 %v676
        %v3159 = vunpack.c.l.b16 %v677
        %v3160 = vunpack.c.h.b16 %v677
        %v3161 = vunpack.c.l.b16 %v678
        %v3162 = vunpack.c.h.b16 %v678
        %v3163 = vunpack.c.l.b16 %v679
        %v3164 = vunpack.c.h.b16 %v679
        %v3165 = vunpack.c.l.b16 %v680
        %v3166 = vunpack.c.h.b16 %v680
        %v3167 = vunpack.c.l.b16 %v681
        %v3168 = vunpack.c.h.b16 %v681
        %v3169 = vunpack.c.l.b16 %v682
        %v3170 = vunpack.c.h.b16 %v682
        %v3171 = vunpack.c.l.b16 %v683
        %v3172 = vunpack.c.h.b16 %v683
        %v3173 = vunpack.c.l.b16 %v684
        %v3174 = vunpack.c.h.b16 %v684
        %v3175 = vunpack.c.l.b16 %v685
        %v3176 = vunpack.c.h.b16 %v685
        %v3177 = vunpack.c.l.b16 %v686
        %v3178 = vunpack.c.h.b16 %v686
        %v3179 = vunpack.c.l.b16 %v687
        %v3180 = vunpack.c.h.b16 %v687
        %v3181 = vunpack.c.l.b16 %v688
        %v3182 = vunpack.c.h.b16 %v688
        %v3183 = vunpack.c.l.b16 %v689
        %v3184 = vunpack.c.h.b16 %v689
        %v3185 = vunpack.c.l.b16 %v690
        %v3186 = vunpack.c.h.b16 %v690
        %v3187 = vunpack.c.l.b16 %v691
        %v3188 = vunpack.c.h.b16 %v691
        %v3189 = vunpack.c.l.b16 %v692
        %v3190 = vunpack.c.h.b16 %v692
        %v3191 = vunpack.c.l.b16 %v693
        %v3192 = vunpack.c.h.b16 %v693
        %v3193 = vunpack.c.l.b16 %v694
        %v3194 = vunpack.c.h.b16 %v694
        %v3195 = vunpack.c.l.b16 %v695
        %v3196 = vunpack.c.h.b16 %v695
        %v3197 = vunpack.c.l.b16 %v696
        %v3198 = vunpack.c.h.b16 %v696
        %v3199 = vunpack.c.l.b16 %v697
        %v3200 = vunpack.c.h.b16 %v697
        %v3201 = vunpack.c.l.b16 %v698
        %v3202 = vunpack.c.h.b16 %v698
        %v3203 = vunpack.c.l.b16 %v699
        %v3204 = vunpack.c.h.b16 %v699
        %v3205 = vunpack.c.l.b16 %v700
        %v3206 = vunpack.c.h.b16 %v700
        %v3207 = vunpack.c.l.b16 %v701
        %v3208 = vunpack.c.h.b16 %v701
        %v3209 = vunpack.c.l.b16 %v702
        %v3210 = vunpack.c.h.b16 %v702
        %v3211 = vunpack.c.l.b16 %v703
        %v3212 = vunpack.c.h.b16 %v703
        %v3213 = vunpack.c.l.b16 %v704
        %v3214 = vunpack.c.h.b16 %v704
        %v3215 = vunpack.c.l.b16 %v705
        %v3216 = vunpack.c.h.b16 %v705
        %v3217 = vunpack.c.l.b16 %v706
        %v3218 = vunpack.c.h.b16 %v706
        %v3219 = vunpack.c.l.b16 %v707
        %v3220 = vunpack.c.h.b16 %v707
        %v3221 = vunpack.c.l.b16 %v708
        %v3222 = vunpack.c.h.b16 %v708
        %v3223 = vunpack.c.l.b16 %v709
        %v3224 = vunpack.c.h.b16 %v709
        %v3225 = vunpack.c.l.b16 %v710
        %v3226 = vunpack.c.h.b16 %v710
        %v3227 = vunpack.c.l.b16 %v711
        %v3228 = vunpack.c.h.b16 %v711
        %v3229 = vunpack.c.l.b16 %v712
        %v3230 = vunpack.c.h.b16 %v712
        %v3231 = vunpack.c.l.b16 %v713
        %v3232 = vunpack.c.h.b16 %v713
        %v3233 = vunpack.c.l.b16 %v714
        %v3234 = vunpack.c.h.b16 %v714
        %v3235 = vunpack.c.l.b16 %v715
        %v3236 = vunpack.c.h.b16 %v715
        %v3237 = vunpack.c.l.b16 %v716
        %v3238 = vunpack.c.h.b16 %v716
        %v3239 = vunpack.c.l.b16 %v717
        %v3240 = vunpack.c.h.b16 %v717
        %v3241 = vunpack.c.l.b16 %v718
        %v3242 = vunpack.c.h.b16 %v718
        %v3243 = vunpack.c.l.b16 %v719
        %v3244 = vunpack.c.h.b16 %v719
        %v3245 = vunpack.c.l.b16 %v720
        %v3246 = vunpack.c.h.b16 %v720
        %v3247 = vunpack.c.l.b16 %v721
        %v3248 = vunpack.c.h.b16 %v721
        %v3249 = vunpack.c.l.b16 %v722
        %v3250 = vunpack.c.h.b16 %v722
        %v3251 = vunpack.c.l.b16 %v723
        %v3252 = vunpack.c.h.b16 %v723
        %v3253 = vunpack.c.l.b16 %v724
        %v3254 = vunpack.c.h.b16 %v724
        %v3255 = vunpack.c.l.b16 %v725
        %v3256 = vunpack.c.h.b16 %v725
        %v3257 = vunpack.c.l.b16 %v726
        %v3258 = vunpack.c.h.b16 %v726
        %v3259 = vunpack.c.l.b16 %v727
        %v3260 = vunpack.c.h.b16 %v727
        %v3261 = vunpack.c.l.b16 %v728
        %v3262 = vunpack.c.h.b16 %v728
        %v3263 = vunpack.c.l.b16 %v729
        %v3264 = vunpack.c.h.b16 %v729
        %v3265 = vunpack.c.l.b16 %v730
        %v3266 = vunpack.c.h.b16 %v730
        %v3267 = vunpack.c.l.b16 %v731
        %v3268 = vunpack.c.h.b16 %v731
        %v3269 = vunpack.c.l.b16 %v732
        %v3270 = vunpack.c.h.b16 %v732
        %v3271 = vunpack.c.l.b16 %v733
        %v3272 = vunpack.c.h.b16 %v733
        %v3273 = vunpack.c.l.b16 %v734
        %v3274 = vunpack.c.h.b16 %v734
        %v3275 = vunpack.c.l.b16 %v735
        %v3276 = vunpack.c.h.b16 %v735
        %v3277 = vunpack.c.l.b16 %v736
        %v3278 = vunpack.c.h.b16 %v736
        %v3279 = vunpack.c.l.b16 %v737
        %v3280 = vunpack.c.h.b16 %v737
        %v3281 = vunpack.c.l.b16 %v738
        %v3282 = vunpack.c.h.b16 %v738
        %v3283 = vunpack.c.l.b16 %v739
        %v3284 = vunpack.c.h.b16 %v739
        %v3285 = vunpack.c.l.b16 %v740
        %v3286 = vunpack.c.h.b16 %v740
        %v3287 = vunpack.c.l.b16 %v741
        %v3288 = vunpack.c.h.b16 %v741
        %v3289 = vunpack.c.l.b16 %v742
        %v3290 = vunpack.c.h.b16 %v742
        %v3291 = vunpack.c.l.b16 %v743
        %v3292 = vunpack.c.h.b16 %v743
        %v3293 = vunpack.c.l.b16 %v744
        %v3294 = vunpack.c.h.b16 %v744
        %v3295 = vunpack.c.l.b16 %v745
        %v3296 = vunpack.c.h.b16 %v745
        %v3297 = vunpack.c.l.b16 %v746
        %v3298 = vunpack.c.h.b16 %v746
        %v3299 = vunpack.c.l.b16 %v747
        %v3300 = vunpack.c.h.b16 %v747
        %v3301 = vunpack.c.l.b16 %v748
        %v3302 = vunpack.c.h.b16 %v748
        %v3303 = vunpack.c.l.b16 %v749
        %v3304 = vunpack.c.h.b16 %v749
        %v3305 = vunpack.c.l.b16 %v750
        %v3306 = vunpack.c.h.b16 %v750
        %v3307 = vunpack.c.l.b16 %v751
        %v3308 = vunpack.c.h.b16 %v751
        %v3309 = vunpack.c.l.b16 %v752
        %v3310 = vunpack.c.h.b16 %v752
        %v3311 = vunpack.c.l.b16 %v753
        %v3312 = vunpack.c.h.b16 %v753
        %v3313 = vunpack.c.l.b16 %v754
        %v3314 = vunpack.c.h.b16 %v754
        %v3315 = vunpack.c.l.b16 %v755
        %v3316 = vunpack.c.h.b16 %v755
        %v3317 = vunpack.c.l.b16 %v756
        %v3318 = vunpack.c.h.b16 %v756
        %v3319 = vunpack.c.l.b16 %v757
        %v3320 = vunpack.c.h.b16 %v757
        %v3321 = vunpack.c.l.b16 %v758
        %v3322 = vunpack.c.h.b16 %v758
        %v3323 = vunpack.c.l.b16 %v759
        %v3324 = vunpack.c.h.b16 %v759
        %v3325 = vunpack.c.l.b16 %v760
        %v3326 = vunpack.c.h.b16 %v760
        %v3327 = vunpack.c.l.b16 %v761
        %v3328 = vunpack.c.h.b16 %v761
        %v3329 = vunpack.c.l.b16 %v762
        %v3330 = vunpack.c.h.b16 %v762
        %v3331 = vunpack.c.l.b16 %v763
        %v3332 = vunpack.c.h.b16 %v763
        %v3333 = vunpack.c.l.b16 %v764
        %v3334 = vunpack.c.h.b16 %v764
        %v3335 = vunpack.c.l.b16 %v765
        %v3336 = vunpack.c.h.b16 %v765
        %v3337 = vunpack.c.l.b16 %v766
        %v3338 = vunpack.c.h.b16 %v766
        %v3339 = vunpack.c.l.b16 %v767
        %v3340 = vunpack.c.h.b16 %v767
        %v3341 = vunpack.c.l.b16 %v768
        %v3342 = vunpack.c.h.b16 %v768
        %v3343 = vunpack.c.l.b16 %v769
        %v3344 = vunpack.c.h.b16 %v769
        %v3345 = vunpack.c.l.b16 %v770
        %v3346 = vunpack.c.h.b16 %v770
        %v3347 = vunpack.c.l.b16 %v771
        %v3348 = vunpack.c.h.b16 %v771
        %v3349 = vunpack.c.l.b16 %v772
        %v3350 = vunpack.c.h.b16 %v772
        %v3351 = vunpack.c.l.b16 %v773
        %v3352 = vunpack.c.h.b16 %v773
        %v3353 = vunpack.c.l.b16 %v774
        %v3354 = vunpack.c.h.b16 %v774
        %v3355 = vunpack.c.l.b16 %v775
        %v3356 = vunpack.c.h.b16 %v775
        %v3357 = vunpack.c.l.b16 %v776
        %v3358 = vunpack.c.h.b16 %v776
        %v3359 = vunpack.c.l.b16 %v777
        %v3360 = vunpack.c.h.b16 %v777
        %v3361 = vunpack.c.l.b16 %v778
        %v3362 = vunpack.c.h.b16 %v778
        %v3363 = vunpack.c.l.b16 %v779
        %v3364 = vunpack.c.h.b16 %v779
        %v3365 = vunpack.c.l.b16 %v780
        %v3366 = vunpack.c.h.b16 %v780
        %v3367 = vunpack.c.l.b16 %v781
        %v3368 = vunpack.c.h.b16 %v781
        %v3369 = vunpack.c.l.b16 %v782
        %v3370 = vunpack.c.h.b16 %v782
        %v3371 = vunpack.c.l.b16 %v783
        %v3372 = vunpack.c.h.b16 %v783
        %v3373 = vunpack.c.l.b16 %v784
        %v3374 = vunpack.c.h.b16 %v784
        %v3375 = vunpack.c.l.b16 %v785
        %v3376 = vunpack.c.h.b16 %v785
        %v3377 = vunpack.c.l.b16 %v786
        %v3378 = vunpack.c.h.b16 %v786
        %v3379 = vunpack.c.l.b16 %v787
        %v3380 = vunpack.c.h.b16 %v787
        %v3381 = vunpack.c.l.b16 %v788
        %v3382 = vunpack.c.h.b16 %v788
        %v3383 = vunpack.c.l.b16 %v789
        %v3384 = vunpack.c.h.b16 %v789
        %v3385 = vunpack.c.l.b16 %v790
        %v3386 = vunpack.c.h.b16 %v790
        %v3387 = vunpack.c.l.b16 %v791
        %v3388 = vunpack.c.h.b16 %v791
        %v3389 = vunpack.c.l.b16 %v792
        %v3390 = vunpack.c.h.b16 %v792
        %v3391 = vunpack.c.l.b16 %v793
        %v3392 = vunpack.c.h.b16 %v793
        %v3393 = vunpack.c.l.b16 %v794
        %v3394 = vunpack.c.h.b16 %v794
        %v3395 = vunpack.c.l.b16 %v795
        %v3396 = vunpack.c.h.b16 %v795
        %v3397 = vunpack.c.l.b16 %v796
        %v3398 = vunpack.c.h.b16 %v796
        %v3399 = vunpack.c.l.b16 %v797
        %v3400 = vunpack.c.h.b16 %v797
        %v3401 = vunpack.c.l.b16 %v798
        %v3402 = vunpack.c.h.b16 %v798
        %v3403 = vunpack.c.l.b16 %v799
        %v3404 = vunpack.c.h.b16 %v799
        %v3405 = vunpack.c.l.b16 %v800
        %v3406 = vunpack.c.h.b16 %v800
        %v3407 = vunpack.c.l.b16 %v801
        %v3408 = vunpack.c.h.b16 %v801
        %v3409 = vunpack.c.l.b16 %v802
        %v3410 = vunpack.c.h.b16 %v802
        %v3411 = vunpack.c.l.b16 %v803
        %v3412 = vunpack.c.h.b16 %v803
        %v3413 = vunpack.c.l.b16 %v804
        %v3414 = vunpack.c.h.b16 %v804
        %v3415 = vunpack.c.l.b16 %v805
        %v3416 = vunpack.c.h.b16 %v805
        %v3417 = vunpack.c.l.b16 %v806
        %v3418 = vunpack.c.h.b16 %v806
        %v3419 = vunpack.c.l.b16 %v807
        %v3420 = vunpack.c.h.b16 %v807
        %v3421 = vunpack.c.l.b16 %v808
        %v3422 = vunpack.c.h.b16 %v808
        %v3423 = vunpack.c.l.b16 %v809
        %v3424 = vunpack.c.h.b16 %v809
        %v3425 = vunpack.c.l.b16 %v810
        %v3426 = vunpack.c.h.b16 %v810
        %v3427 = vunpack.c.l.b16 %v811
        %v3428 = vunpack.c.h.b16 %v811
        %v3429 = vunpack.c.l.b16 %v812
        %v3430 = vunpack.c.h.b16 %v812
        %v3431 = vunpack.c.l.b16 %v813
        %v3432 = vunpack.c.h.b16 %v813
        %v3433 = vunpack.c.l.b16 %v814
        %v3434 = vunpack.c.h.b16 %v814
        %v3435 = vunpack.c.l.b16 %v815
        %v3436 = vunpack.c.h.b16 %v815
        %v3437 = vunpack.c.l.b16 %v816
        %v3438 = vunpack.c.h.b16 %v816
        %v3439 = vunpack.c.l.b16 %v817
        %v3440 = vunpack.c.h.b16 %v817
        %v3441 = vunpack.c.l.b16 %v818
        %v3442 = vunpack.c.h.b16 %v818
        %v3443 = vunpack.c.l.b16 %v819
        %v3444 = vunpack.c.h.b16 %v819
        %v3445 = vunpack.c.l.b16 %v820
        %v3446 = vunpack.c.h.b16 %v820
        %v3447 = vunpack.c.l.b16 %v821
        %v3448 = vunpack.c.h.b16 %v821
        %v3449 = vunpack.c.l.b16 %v822
        %v3450 = vunpack.c.h.b16 %v822
        %v3451 = vunpack.c.l.b16 %v823
        %v3452 = vunpack.c.h.b16 %v823
        %v3453 = vunpack.c.l.b16 %v824
        %v3454 = vunpack.c.h.b16 %v824
        %v3455 = vunpack.c.l.b16 %v825
        %v3456 = vunpack.c.h.b16 %v825
        %v3457 = vunpack.c.l.b16 %v826
        %v3458 = vunpack.c.h.b16 %v826
        %v3459 = vunpack.c.l.b16 %v827
        %v3460 = vunpack.c.h.b16 %v827
        %v3461 = vunpack.c.l.b16 %v828
        %v3462 = vunpack.c.h.b16 %v828
        %v3463 = vunpack.c.l.b16 %v829
        %v3464 = vunpack.c.h.b16 %v829
        %v3465 = vunpack.c.l.b16 %v830
        %v3466 = vunpack.c.h.b16 %v830
        %v3467 = vunpack.c.l.b16 %v831
        %v3468 = vunpack.c.h.b16 %v831
        %v3469 = vunpack.c.l.b16 %v832
        %v3470 = vunpack.c.h.b16 %v832
        %v3471 = vunpack.c.l.b16 %v833
        %v3472 = vunpack.c.h.b16 %v833
        %v3473 = vunpack.c.l.b16 %v834
        %v3474 = vunpack.c.h.b16 %v834
        %v3475 = vunpack.c.l.b16 %v835
        %v3476 = vunpack.c.h.b16 %v835
        %v3477 = vunpack.c.l.b16 %v836
        %v3478 = vunpack.c.h.b16 %v836
        %v3479 = vunpack.c.l.b16 %v837
        %v3480 = vunpack.c.h.b16 %v837
        %v3481 = vunpack.c.l.b16 %v838
        %v3482 = vunpack.c.h.b16 %v838
        %v3483 = vunpack.c.l.b16 %v839
        %v3484 = vunpack.c.h.b16 %v839
        %v3485 = vunpack.c.l.b16 %v840
        %v3486 = vunpack.c.h.b16 %v840
        %v3487 = vunpack.c.l.b16 %v841
        %v3488 = vunpack.c.h.b16 %v841
        %v3489 = vunpack.c.l.b16 %v842
        %v3490 = vunpack.c.h.b16 %v842
        %v3491 = vunpack.c.l.b16 %v843
        %v3492 = vunpack.c.h.b16 %v843
        %v3493 = vunpack.c.l.b16 %v844
        %v3494 = vunpack.c.h.b16 %v844
        %v3495 = vunpack.c.l.b16 %v845
        %v3496 = vunpack.c.h.b16 %v845
        %v3497 = vunpack.c.l.b16 %v846
        %v3498 = vunpack.c.h.b16 %v846
        %v3499 = vunpack.c.l.b16 %v847
        %v3500 = vunpack.c.h.b16 %v847
        %v3501 = vunpack.c.l.b16 %v848
        %v3502 = vunpack.c.h.b16 %v848
        %v3503 = vunpack.c.l.b16 %v849
        %v3504 = vunpack.c.h.b16 %v849
        %v3505 = vunpack.c.l.b16 %v850
        %v3506 = vunpack.c.h.b16 %v850
        %v3507 = vunpack.c.l.b16 %v851
        %v3508 = vunpack.c.h.b16 %v851
        %v3509 = vunpack.c.l.b16 %v852
        %v3510 = vunpack.c.h.b16 %v852
        %v3511 = vunpack.c.l.b16 %v853
        %v3512 = vunpack.c.h.b16 %v853
        %v3513 = vunpack.c.l.b16 %v854
        %v3514 = vunpack.c.h.b16 %v854
        %v3515 = vunpack.c.l.b16 %v855
        %v3516 = vunpack.c.h.b16 %v855
        %v3517 = vunpack.c.l.b16 %v856
        %v3518 = vunpack.c.h.b16 %v856
        %v3519 = vunpack.c.l.b16 %v857
        %v3520 = vunpack.c.h.b16 %v857
        %v3521 = vunpack.c.l.b16 %v858
        %v3522 = vunpack.c.h.b16 %v858
        %v3523 = vunpack.c.l.b16 %v859
        %v3524 = vunpack.c.h.b16 %v859
        %v3525 = vunpack.c.l.b16 %v860
        %v3526 = vunpack.c.h.b16 %v860
        %v3527 = vunpack.c.l.b16 %v861
        %v3528 = vunpack.c.h.b16 %v861
        %v3529 = vunpack.c.l.b16 %v862
        %v3530 = vunpack.c.h.b16 %v862
        %v3531 = vunpack.c.l.b16 %v863
        %v3532 = vunpack.c.h.b16 %v863
        %v3533 = vunpack.c.l.b16 %v864
        %v3534 = vunpack.c.h.b16 %v864
        %v3535 = vunpack.c.l.b16 %v865
        %v3536 = vunpack.c.h.b16 %v865
        %v3537 = vunpack.c.l.b16 %v866
        %v3538 = vunpack.c.h.b16 %v866
        %v3539 = vunpack.c.l.b16 %v867
        %v3540 = vunpack.c.h.b16 %v867
        %v3541 = vunpack.c.l.b16 %v868
        %v3542 = vunpack.c.h.b16 %v868
        %v3543 = vunpack.c.l.b16 %v869
        %v3544 = vunpack.c.h.b16 %v869
        %v3545 = vunpack.c.l.b16 %v870
        %v3546 = vunpack.c.h.b16 %v870
        %v3547 = vunpack.c.l.b16 %v871
        %v3548 = vunpack.c.h.b16 %v871
        %v3549 = vunpack.c.l.b16 %v872
        %v3550 = vunpack.c.h.b16 %v872
        %v3551 = vunpack.c.l.b16 %v873
        %v3552 = vunpack.c.h.b16 %v873
        %v3553 = vunpack.c.l.b16 %v874
        %v3554 = vunpack.c.h.b16 %v874
        %v3555 = vunpack.c.l.b16 %v875
        %v3556 = vunpack.c.h.b16 %v875
        %v3557 = vunpack.c.l.b16 %v876
        %v3558 = vunpack.c.h.b16 %v876
        %v3559 = vunpack.c.l.b16 %v877
        %v3560 = vunpack.c.h.b16 %v877
        %v3561 = vunpack.c.l.b16 %v878
        %v3562 = vunpack.c.h.b16 %v878
        %v3563 = vunpack.c.l.b16 %v879
        %v3564 = vunpack.c.h.b16 %v879
        %v3565 = vunpack.c.l.b16 %v880
        %v3566 = vunpack.c.h.b16 %v880
        %v3567 = vunpack.c.l.b16 %v881
        %v3568 = vunpack.c.h.b16 %v881
        %v3569 = vunpack.c.l.b16 %v882
        %v3570 = vunpack.c.h.b16 %v882
        %v3571 = vunpack.c.l.b16 %v883
        %v3572 = vunpack.c.h.b16 %v883
        %v3573 = vunpack.c.l.b16 %v884
        %v3574 = vunpack.c.h.b16 %v884
        %v3575 = vunpack.c.l.b16 %v885
        %v3576 = vunpack.c.h.b16 %v885
        %v3577 = vunpack.c.l.b16 %v886
        %v3578 = vunpack.c.h.b16 %v886
        %v3579 = vunpack.c.l.b16 %v887
        %v3580 = vunpack.c.h.b16 %v887
        %v3581 = vunpack.c.l.b16 %v888
        %v3582 = vunpack.c.h.b16 %v888
        %v3583 = vunpack.c.l.b16 %v889
        %v3584 = vunpack.c.h.b16 %v889
        %v3585 = vunpack.c.l.b16 %v890
        %v3586 = vunpack.c.h.b16 %v890
        %v3587 = vunpack.c.l.b16 %v891
        %v3588 = vunpack.c.h.b16 %v891
        %v3589 = vunpack.c.l.b16 %v892
        %v3590 = vunpack.c.h.b16 %v892
        %v3591 = vunpack.c.l.b16 %v893
        %v3592 = vunpack.c.h.b16 %v893
        %v3593 = vunpack.c.l.b16 %v894
        %v3594 = vunpack.c.h.b16 %v894
        %v3595 = vunpack.c.l.b16 %v895
        %v3596 = vunpack.c.h.b16 %v895
        %v3597 = vunpack.c.l.b16 %v896
        %v3598 = vunpack.c.h.b16 %v896
        %v3599 = vunpack.c.l.b16 %v897
        %v3600 = vunpack.c.h.b16 %v897
        %v3601 = vunpack.c.l.b16 %v898
        %v3602 = vunpack.c.h.b16 %v898
        %v3603 = vunpack.c.l.b16 %v899
        %v3604 = vunpack.c.h.b16 %v899
        %v3605 = vunpack.c.l.b16 %v900
        %v3606 = vunpack.c.h.b16 %v900
        %v3607 = vunpack.c.l.b16 %v901
        %v3608 = vunpack.c.h.b16 %v901
        %v3609 = vunpack.c.l.b16 %v902
        %v3610 = vunpack.c.h.b16 %v902
        %v3611 = vunpack.c.l.b16 %v903
        %v3612 = vunpack.c.h.b16 %v903
        %v3613 = vunpack.c.l.b16 %v904
        %v3614 = vunpack.c.h.b16 %v904
        %v3615 = vunpack.c.l.b16 %v905
        %v3616 = vunpack.c.h.b16 %v905
        %v3617 = vunpack.c.l.b16 %v906
        %v3618 = vunpack.c.h.b16 %v906
        %v3619 = vunpack.c.l.b16 %v907
        %v3620 = vunpack.c.h.b16 %v907
        %v3621 = vunpack.c.l.b16 %v908
        %v3622 = vunpack.c.h.b16 %v908
        %v3623 = vunpack.c.l.b16 %v909
        %v3624 = vunpack.c.h.b16 %v909
        %v3625 = vunpack.c.l.b16 %v910
        %v3626 = vunpack.c.h.b16 %v910
        %v3627 = vunpack.c.l.b16 %v911
        %v3628 = vunpack.c.h.b16 %v911
        %v3629 = vunpack.c.l.b16 %v912
        %v3630 = vunpack.c.h.b16 %v912
        %v3631 = vunpack.c.l.b16 %v913
        %v3632 = vunpack.c.h.b16 %v913
        %v3633 = vunpack.c.l.b16 %v914
        %v3634 = vunpack.c.h.b16 %v914
        %v3635 = vunpack.c.l.b16 %v915
        %v3636 = vunpack.c.h.b16 %v915
        %v3637 = vunpack.c.l.b16 %v916
        %v3638 = vunpack.c.h.b16 %v916
        %v3639 = vunpack.c.l.b16 %v917
        %v3640 = vunpack.c.h.b16 %v917
        %v3641 = vunpack.c.l.b16 %v918
        %v3642 = vunpack.c.h.b16 %v918
        %v3643 = vunpack.c.l.b16 %v919
        %v3644 = vunpack.c.h.b16 %v919
        %v3645 = vunpack.c.l.b16 %v920
        %v3646 = vunpack.c.h.b16 %v920
        %v3647 = vunpack.c.l.b16 %v921
        %v3648 = vunpack.c.h.b16 %v921
        %v3649 = vunpack.c.l.b16 %v922
        %v3650 = vunpack.c.h.b16 %v922
        %v3651 = vunpack.c.l.b16 %v923
        %v3652 = vunpack.c.h.b16 %v923
        %v3653 = vunpack.c.l.b16 %v924
        %v3654 = vunpack.c.h.b16 %v924
        %v3655 = vunpack.c.l.b16 %v925
        %v3656 = vunpack.c.h.b16 %v925
        %v3657 = vunpack.c.l.b16 %v926
        %v3658 = vunpack.c.h.b16 %v926
        %v3659 = vunpack.c.l.b16 %v927
        %v3660 = vunpack.c.h.b16 %v927
        %v3661 = vunpack.c.l.b16 %v928
        %v3662 = vunpack.c.h.b16 %v928
        %v3663 = vunpack.c.l.b16 %v929
        %v3664 = vunpack.c.h.b16 %v929
        %v3665 = vunpack.c.l.b16 %v930
        %v3666 = vunpack.c.h.b16 %v930
        %v3667 = vunpack.c.l.b16 %v931
        %v3668 = vunpack.c.h.b16 %v931
        %v3669 = vunpack.c.l.b16 %v932
        %v3670 = vunpack.c.h.b16 %v932
        %v3671 = vunpack.c.l.b16 %v933
        %v3672 = vunpack.c.h.b16 %v933
        %v3673 = vunpack.c.l.b16 %v934
        %v3674 = vunpack.c.h.b16 %v934
        %v3675 = vunpack.c.l.b16 %v935
        %v3676 = vunpack.c.h.b16 %v935
        %v3677 = vunpack.c.l.b16 %v936
        %v3678 = vunpack.c.h.b16 %v936
        %v3679 = vunpack.c.l.b16 %v937
        %v3680 = vunpack.c.h.b16 %v937
        %v3681 = vunpack.c.l.b16 %v938
        %v3682 = vunpack.c.h.b16 %v938
        %v3683 = vunpack.c.l.b16 %v939
        %v3684 = vunpack.c.h.b16 %v939
        %v3685 = vunpack.c.l.b16 %v940
        %v3686 = vunpack.c.h.b16 %v940
        %v3687 = vunpack.c.l.b16 %v941
        %v3688 = vunpack.c.h.b16 %v941
        %v3689 = vunpack.c.l.b16 %v942
        %v3690 = vunpack.c.h.b16 %v942
        %v3691 = vunpack.c.l.b16 %v943
        %v3692 = vunpack.c.h.b16 %v943
        %v3693 = vunpack.c.l.b16 %v944
        %v3694 = vunpack.c.h.b16 %v944
        %v3695 = vunpack.c.l.b16 %v945
        %v3696 = vunpack.c.h.b16 %v945
        %v3697 = vunpack.c.l.b16 %v946
        %v3698 = vunpack.c.h.b16 %v946
        %v3699 = vunpack.c.l.b16 %v947
        %v3700 = vunpack.c.h.b16 %v947
        %v3701 = vunpack.c.l.b16 %v948
        %v3702 = vunpack.c.h.b16 %v948
        %v3703 = vunpack.c.l.b16 %v949
        %v3704 = vunpack.c.h.b16 %v949
        %v3705 = vunpack.c.l.b16 %v950
        %v3706 = vunpack.c.h.b16 %v950
        %v3707 = vunpack.c.l.b16 %v951
        %v3708 = vunpack.c.h.b16 %v951
        %v3709 = vunpack.c.l.b16 %v952
        %v3710 = vunpack.c.h.b16 %v952
        %v3711 = vunpack.c.l.b16 %v953
        %v3712 = vunpack.c.h.b16 %v953
        %v3713 = vunpack.c.l.b16 %v954
        %v3714 = vunpack.c.h.b16 %v954
        %v3715 = vunpack.c.l.b16 %v955
        %v3716 = vunpack.c.h.b16 %v955
        %v3717 = vunpack.c.l.b16 %v956
        %v3718 = vunpack.c.h.b16 %v956
        %v3719 = vunpack.c.l.b16 %v957
        %v3720 = vunpack.c.h.b16 %v957
        %v3721 = vunpack.c.l.b16 %v958
        %v3722 = vunpack.c.h.b16 %v958
        %v3723 = vunpack.c.l.b16 %v959
        %v3724 = vunpack.c.h.b16 %v959
        %v3725 = vunpack.c.l.b16 %v960
        %v3726 = vunpack.c.h.b16 %v960
        %v3727 = vunpack.c.l.b16 %v961
        %v3728 = vunpack.c.h.b16 %v961
        %v3729 = vunpack.c.l.b16 %v962
        %v3730 = vunpack.c.h.b16 %v962
        %v3731 = vunpack.c.l.b16 %v963
        %v3732 = vunpack.c.h.b16 %v963
        %v3733 = vunpack.c.l.b16 %v964
        %v3734 = vunpack.c.h.b16 %v964
        %v3735 = vunpack.c.l.b16 %v965
        %v3736 = vunpack.c.h.b16 %v965
        %v3737 = vunpack.c.l.b16 %v966
        %v3738 = vunpack.c.h.b16 %v966
        %v3739 = vunpack.c.l.b16 %v967
        %v3740 = vunpack.c.h.b16 %v967
        %v3741 = vunpack.c.l.b16 %v968
        %v3742 = vunpack.c.h.b16 %v968
        %v3743 = vunpack.c.l.b16 %v969
        %v3744 = vunpack.c.h.b16 %v969
        %v3745 = vunpack.c.l.b16 %v970
        %v3746 = vunpack.c.h.b16 %v970
        %v3747 = vunpack.c.l.b16 %v971
        %v3748 = vunpack.c.h.b16 %v971
        %v3749 = vunpack.c.l.b16 %v972
        %v3750 = vunpack.c.h.b16 %v972
        %v3751 = vunpack.c.l.b16 %v973
        %v3752 = vunpack.c.h.b16 %v973
        %v3753 = vunpack.c.l.b16 %v974
        %v3754 = vunpack.c.h.b16 %v974
        %v3755 = vunpack.c.l.b16 %v975
        %v3756 = vunpack.c.h.b16 %v975
        %v3757 = vunpack.c.l.b16 %v976
        %v3758 = vunpack.c.h.b16 %v976
        %v3759 = vunpack.c.l.b16 %v977
        %v3760 = vunpack.c.h.b16 %v977
        %v3761 = vunpack.c.l.b16 %v978
        %v3762 = vunpack.c.h.b16 %v978
        %v3763 = vunpack.c.l.b16 %v979
        %v3764 = vunpack.c.h.b16 %v979
        %v3765 = vunpack.c.l.b16 %v980
        %v3766 = vunpack.c.h.b16 %v980
        %v3767 = vunpack.c.l.b16 %v981
        %v3768 = vunpack.c.h.b16 %v981
        %v3769 = vunpack.c.l.b16 %v982
        %v3770 = vunpack.c.h.b16 %v982
        %v3771 = vunpack.c.l.b16 %v983
        %v3772 = vunpack.c.h.b16 %v983
        %v3773 = vunpack.c.l.b16 %v984
        %v3774 = vunpack.c.h.b16 %v984
        %v3775 = vunpack.c.l.b16 %v985
        %v3776 = vunpack.c.h.b16 %v985
        %v3777 = vunpack.c.l.b16 %v986
        %v3778 = vunpack.c.h.b16 %v986
        %v3779 = vunpack.c.l.b16 %v987
        %v3780 = vunpack.c.h.b16 %v987
        %v3781 = vunpack.c.l.b16 %v988
        %v3782 = vunpack.c.h.b16 %v988
        %v3783 = vunpack.c.l.b16 %v989
        %v3784 = vunpack.c.h.b16 %v989
        %v3785 = vunpack.c.l.b16 %v990
        %v3786 = vunpack.c.h.b16 %v990
        %v3787 = vunpack.c.l.b16 %v991
        %v3788 = vunpack.c.h.b16 %v991
        %v3789 = vunpack.c.l.b16 %v992
        %v3790 = vunpack.c.h.b16 %v992
        %v3791 = vunpack.c.l.b16 %v993
        %v3792 = vunpack.c.h.b16 %v993
        %v3793 = vunpack.c.l.b16 %v994
        %v3794 = vunpack.c.h.b16 %v994
        %v3795 = vunpack.c.l.b16 %v995
        %v3796 = vunpack.c.h.b16 %v995
        %v3797 = vunpack.c.l.b16 %v996
        %v3798 = vunpack.c.h.b16 %v996
        %v3799 = vunpack.c.l.b16 %v997
        %v3800 = vunpack.c.h.b16 %v997
        %v3801 = vunpack.c.l.b16 %v998
        %v3802 = vunpack.c.h.b16 %v998
        %v3803 = vunpack.c.l.b16 %v999
        %v3804 = vunpack.c.h.b16 %v999
        %v3805 = vunpack.c.l.b16 %v1000
        %v3806 = vunpack.c.h.b16 %v1000
        %v3807 = vunpack.c.l.b16 %v1001
        %v3808 = vunpack.c.h.b16 %v1001
        %v3809 = vunpack.c.l.b16 %v1002
        %v3810 = vunpack.c.h.b16 %v1002
        %v3811 = vunpack.c.l.b16 %v1003
        %v3812 = vunpack.c.h.b16 %v1003
        %v3813 = vunpack.c.l.b16 %v1004
        %v3814 = vunpack.c.h.b16 %v1004
        %v3815 = vunpack.c.l.b16 %v1005
        %v3816 = vunpack.c.h.b16 %v1005
        %v3817 = vunpack.c.l.b16 %v1006
        %v3818 = vunpack.c.h.b16 %v1006
        %v3819 = vunpack.c.l.b16 %v1007
        %v3820 = vunpack.c.h.b16 %v1007
        %v3821 = vunpack.c.l.b16 %v1008
        %v3822 = vunpack.c.h.b16 %v1008
        %v3823 = vunpack.c.l.b16 %v1009
        %v3824 = vunpack.c.h.b16 %v1009
        %v3825 = vunpack.c.l.b16 %v1010
        %v3826 = vunpack.c.h.b16 %v1010
        %v3827 = vunpack.c.l.b16 %v1011
        %v3828 = vunpack.c.h.b16 %v1011
        %v3829 = vunpack.c.l.b16 %v1012
        %v3830 = vunpack.c.h.b16 %v1012
        %v3831 = vunpack.c.l.b16 %v1013
        %v3832 = vunpack.c.h.b16 %v1013
        %v3833 = vunpack.c.l.b16 %v1014
        %v3834 = vunpack.c.h.b16 %v1014
        %v3835 = vunpack.c.l.b16 %v1015
        %v3836 = vunpack.c.h.b16 %v1015
        %v3837 = vunpack.c.l.b16 %v1016
        %v3838 = vunpack.c.h.b16 %v1016
        %v3839 = vunpack.c.l.b16 %v1017
        %v3840 = vunpack.c.h.b16 %v1017
        %v3841 = vunpack.c.l.b16 %v1018
        %v3842 = vunpack.c.h.b16 %v1018
        %v3843 = vunpack.c.l.b16 %v1019
        %v3844 = vunpack.c.h.b16 %v1019
        %v3845 = vunpack.c.l.b16 %v1020
        %v3846 = vunpack.c.h.b16 %v1020
        %v3847 = vunpack.c.l.b16 %v1021
        %v3848 = vunpack.c.h.b16 %v1021
        %v3849 = vunpack.c.l.b16 %v1022
        %v3850 = vunpack.c.h.b16 %v1022
        %v3851 = vunpack.c.l.b16 %v1023
        %v3852 = vunpack.c.h.b16 %v1023
        %v3853 = vunpack.c.l.b16 %v1024
        %v3854 = vunpack.c.h.b16 %v1024
        %v3855 = vunpack.c.l.b16 %v1025
        %v3856 = vunpack.c.h.b16 %v1025
        %v3857 = vunpack.c.l.b16 %v1026
        %v3858 = vunpack.c.h.b16 %v1026
        %v3859 = vunpack.c.l.b16 %v1027
        %v3860 = vunpack.c.h.b16 %v1027
        %v3861 = vunpack.c.l.b16 %v1028
        %v3862 = vunpack.c.h.b16 %v1028
        %v3863 = vunpack.c.l.b16 %v1029
        %v3864 = vunpack.c.h.b16 %v1029
        %v3865 = vunpack.c.l.b16 %v1030
        %v3866 = vunpack.c.h.b16 %v1030
        %v3867 = vunpack.c.l.b16 %v1031
        %v3868 = vunpack.c.h.b16 %v1031
        %v3869 = vunpack.c.l.b16 %v1032
        %v3870 = vunpack.c.h.b16 %v1032
        %v3871 = vunpack.c.l.b16 %v1033
        %v3872 = vunpack.c.h.b16 %v1033
        %v3873 = vunpack.c.l.b16 %v1034
        %v3874 = vunpack.c.h.b16 %v1034
        %v3875 = vunpack.c.l.b16 %v1035
        %v3876 = vunpack.c.h.b16 %v1035
        %v3877 = vunpack.c.l.b16 %v1036
        %v3878 = vunpack.c.h.b16 %v1036
        %v3879 = vunpack.c.l.b16 %v1037
        %v3880 = vunpack.c.h.b16 %v1037
        %v3881 = vunpack.c.l.b16 %v1038
        %v3882 = vunpack.c.h.b16 %v1038
        %v3883 = vunpack.c.l.b16 %v1039
        %v3884 = vunpack.c.h.b16 %v1039
        %v3885 = vunpack.c.l.b16 %v1040
        %v3886 = vunpack.c.h.b16 %v1040
        %v3887 = vunpack.c.l.b16 %v1041
        %v3888 = vunpack.c.h.b16 %v1041
        %v3889 = vunpack.c.l.b16 %v1042
        %v3890 = vunpack.c.h.b16 %v1042
        %v3891 = vunpack.c.l.b16 %v1043
        %v3892 = vunpack.c.h.b16 %v1043
        %v3893 = vunpack.c.l.b16 %v1044
        %v3894 = vunpack.c.h.b16 %v1044
        %v3895 = vunpack.c.l.b16 %v1045
        %v3896 = vunpack.c.h.b16 %v1045
        %v3897 = vunpack.c.l.b16 %v1046
        %v3898 = vunpack.c.h.b16 %v1046
        %v3899 = vunpack.c.l.b16 %v1047
        %v3900 = vunpack.c.h.b16 %v1047
        %v3901 = vunpack.c.l.b16 %v1048
        %v3902 = vunpack.c.h.b16 %v1048
        %v3903 = vunpack.c.l.b16 %v1049
        %v3904 = vunpack.c.h.b16 %v1049
        %v3905 = vunpack.c.l.b16 %v1050
        %v3906 = vunpack.c.h.b16 %v1050
        %v3907 = vunpack.c.l.b16 %v1051
        %v3908 = vunpack.c.h.b16 %v1051
        %v3909 = vunpack.c.l.b16 %v1052
        %v3910 = vunpack.c.h.b16 %v1052
        %v3911 = vunpack.c.l.b16 %v1053
        %v3912 = vunpack.c.h.b16 %v1053
        %v3913 = vunpack.c.l.b16 %v1054
        %v3914 = vunpack.c.h.b16 %v1054
        %v3915 = vunpack.c.l.b16 %v1055
        %v3916 = vunpack.c.h.b16 %v1055
        %v3917 = vunpack.c.l.b16 %v1056
        %v3918 = vunpack.c.h.b16 %v1056
        %v3919 = vunpack.c.l.b16 %v1057
        %v3920 = vunpack.c.h.b16 %v1057
        %v3921 = vunpack.c.l.b16 %v1058
        %v3922 = vunpack.c.h.b16 %v1058
        %v3923 = vunpack.c.l.b16 %v1059
        %v3924 = vunpack.c.h.b16 %v1059
        %v3925 = vunpack.c.l.b16 %v1060
        %v3926 = vunpack.c.h.b16 %v1060
        %v3927 = vunpack.c.l.b16 %v1061
        %v3928 = vunpack.c.h.b16 %v1061
        %v3929 = vunpack.c.l.b16 %v1062
        %v3930 = vunpack.c.h.b16 %v1062
        %v3931 = vunpack.c.l.b16 %v1063
        %v3932 = vunpack.c.h.b16 %v1063
        %v3933 = vunpack.c.l.b16 %v1064
        %v3934 = vunpack.c.h.b16 %v1064
        %v3935 = vunpack.c.l.b16 %v1065
        %v3936 = vunpack.c.h.b16 %v1065
        %v3937 = vunpack.c.l.b16 %v1066
        %v3938 = vunpack.c.h.b16 %v1066
        %v3939 = vunpack.c.l.b16 %v1067
        %v3940 = vunpack.c.h.b16 %v1067
        %v3941 = vunpack.c.l.b16 %v1068
        %v3942 = vunpack.c.h.b16 %v1068
        %v3943 = vunpack.c.l.b16 %v1069
        %v3944 = vunpack.c.h.b16 %v1069
        %v3945 = vunpack.c.l.b16 %v1070
        %v3946 = vunpack.c.h.b16 %v1070
        %v3947 = vunpack.c.l.b16 %v1071
        %v3948 = vunpack.c.h.b16 %v1071
        %v3949 = vunpack.c.l.b16 %v1072
        %v3950 = vunpack.c.h.b16 %v1072
        %v3951 = vunpack.c.l.b16 %v1073
        %v3952 = vunpack.c.h.b16 %v1073
        %v3953 = vunpack.c.l.b16 %v1074
        %v3954 = vunpack.c.h.b16 %v1074
        %v3955 = vunpack.c.l.b16 %v1075
        %v3956 = vunpack.c.h.b16 %v1075
        %v3957 = vunpack.c.l.b16 %v1076
        %v3958 = vunpack.c.h.b16 %v1076
        %v3959 = vunpack.c.l.b16 %v1077
        %v3960 = vunpack.c.h.b16 %v1077
        %v3961 = vunpack.c.l.b16 %v1078
        %v3962 = vunpack.c.h.b16 %v1078
        %v3963 = vunpack.c.l.b16 %v1079
        %v3964 = vunpack.c.h.b16 %v1079
        %v3965 = vunpack.c.l.b16 %v1080
        %v3966 = vunpack.c.h.b16 %v1080
        %v3967 = vunpack.c.l.b16 %v1081
        %v3968 = vunpack.c.h.b16 %v1081
        %v3969 = vunpack.c.l.b16 %v1082
        %v3970 = vunpack.c.h.b16 %v1082
        %v3971 = vunpack.c.l.b16 %v1083
        %v3972 = vunpack.c.h.b16 %v1083
        %v3973 = vunpack.c.l.b16 %v1084
        %v3974 = vunpack.c.h.b16 %v1084
        %v3975 = vunpack.c.l.b16 %v1085
        %v3976 = vunpack.c.h.b16 %v1085
        %v3977 = vunpack.c.l.b16 %v1086
        %v3978 = vunpack.c.h.b16 %v1086
        %v3979 = vunpack.c.l.b16 %v1087
        %v3980 = vunpack.c.h.b16 %v1087
        %v3981 = vunpack.c.l.b16 %v1088
        %v3982 = vunpack.c.h.b16 %v1088
        %v3983 = vunpack.c.l.b16 %v1089
        %v3984 = vunpack.c.h.b16 %v1089
        %v3985 = vunpack.c.l.b16 %v1090
        %v3986 = vunpack.c.h.b16 %v1090
        %v3987 = vunpack.c.l.b16 %v1091
        %v3988 = vunpack.c.h.b16 %v1091
        %v3989 = vunpack.c.l.b16 %v1092
        %v3990 = vunpack.c.h.b16 %v1092
        %v3991 = vunpack.c.l.b16 %v1093
        %v3992 = vunpack.c.h.b16 %v1093
        %v3993 = vunpack.c.l.b16 %v1094
        %v3994 = vunpack.c.h.b16 %v1094
        %v3995 = vunpack.c.l.b16 %v1095
        %v3996 = vunpack.c.h.b16 %v1095
        %v3997 = vunpack.c.l.b16 %v1096
        %v3998 = vunpack.c.h.b16 %v1096
        %v3999 = vunpack.c.l.b16 %v1097
        %v4000 = vunpack.c.h.b16 %v1097
        %v4001 = vunpack.c.l.b16 %v1098
        %v4002 = vunpack.c.h.b16 %v1098
        %v4003 = vunpack.c.l.b16 %v1099
        %v4004 = vunpack.c.h.b16 %v1099
        %v4005 = vunpack.c.l.b16 %v1100
        %v4006 = vunpack.c.h.b16 %v1100
        %v4007 = vunpack.c.l.b16 %v1101
        %v4008 = vunpack.c.h.b16 %v1101
        %v4009 = vunpack.c.l.b16 %v1102
        %v4010 = vunpack.c.h.b16 %v1102
        %v4011 = vunpack.c.l.b16 %v1103
        %v4012 = vunpack.c.h.b16 %v1103
        %v4013 = vunpack.c.l.b16 %v1104
        %v4014 = vunpack.c.h.b16 %v1104
        %v4015 = vunpack.c.l.b16 %v1105
        %v4016 = vunpack.c.h.b16 %v1105
        %v4017 = vunpack.c.l.b16 %v1106
        %v4018 = vunpack.c.h.b16 %v1106
        %v4019 = vunpack.c.l.b16 %v1107
        %v4020 = vunpack.c.h.b16 %v1107
        %v4021 = vunpack.c.l.b16 %v1108
        %v4022 = vunpack.c.h.b16 %v1108
        %v4023 = vunpack.c.l.b16 %v1109
        %v4024 = vunpack.c.h.b16 %v1109
        %v4025 = vunpack.c.l.b16 %v1110
        %v4026 = vunpack.c.h.b16 %v1110
        %v4027 = vunpack.c.l.b16 %v1111
        %v4028 = vunpack.c.h.b16 %v1111
        %v4029 = vunpack.c.l.b16 %v1112
        %v4030 = vunpack.c.h.b16 %v1112
        %v4031 = vunpack.c.l.b16 %v1113
        %v4032 = vunpack.c.h.b16 %v1113
        %v4033 = vunpack.c.l.b16 %v1114
        %v4034 = vunpack.c.h.b16 %v1114
        %v4035 = vunpack.c.l.b16 %v1115
        %v4036 = vunpack.c.h.b16 %v1115
        %v4037 = vunpack.c.l.b16 %v1116
        %v4038 = vunpack.c.h.b16 %v1116
        %v4039 = vunpack.c.l.b16 %v1117
        %v4040 = vunpack.c.h.b16 %v1117
        %v4041 = vunpack.c.l.b16 %v1118
        %v4042 = vunpack.c.h.b16 %v1118
        %v4043 = vunpack.c.l.b16 %v1119
        %v4044 = vunpack.c.h.b16 %v1119
        %v4045 = vunpack.c.l.b16 %v1120
        %v4046 = vunpack.c.h.b16 %v1120
        %v4047 = vunpack.c.l.b16 %v1121
        %v4048 = vunpack.c.h.b16 %v1121
        %v4049 = vunpack.c.l.b16 %v1122
        %v4050 = vunpack.c.h.b16 %v1122
        %v4051 = vunpack.c.l.b16 %v1123
        %v4052 = vunpack.c.h.b16 %v1123
        %v4053 = vunpack.c.l.b16 %v1124
        %v4054 = vunpack.c.h.b16 %v1124
        %v4055 = vunpack.c.l.b16 %v1125
        %v4056 = vunpack.c.h.b16 %v1125
        %v4057 = vunpack.c.l.b16 %v1126
        %v4058 = vunpack.c.h.b16 %v1126
        %v4059 = vunpack.c.l.b16 %v1127
        %v4060 = vunpack.c.h.b16 %v1127
        %v4061 = vunpack.c.l.b16 %v1128
        %v4062 = vunpack.c.h.b16 %v1128
        %v4063 = vunpack.c.l.b16 %v1129
        %v4064 = vunpack.c.h.b16 %v1129
        %v4065 = vunpack.c.l.b16 %v1130
        %v4066 = vunpack.c.h.b16 %v1130
        %v4067 = vunpack.c.l.b16 %v1131
        %v4068 = vunpack.c.h.b16 %v1131
        %v4069 = vunpack.c.l.b16 %v1132
        %v4070 = vunpack.c.h.b16 %v1132
        %v4071 = vunpack.c.l.b16 %v1133
        %v4072 = vunpack.c.h.b16 %v1133
        %v4073 = vunpack.c.l.b16 %v1134
        %v4074 = vunpack.c.h.b16 %v1134
        %v4075 = vunpack.c.l.b16 %v1135
        %v4076 = vunpack.c.h.b16 %v1135
        %v4077 = vunpack.c.l.b16 %v1136
        %v4078 = vunpack.c.h.b16 %v1136
        %v4079 = vunpack.c.l.b16 %v1137
        %v4080 = vunpack.c.h.b16 %v1137
        %v4081 = vunpack.c.l.b16 %v1138
        %v4082 = vunpack.c.h.b16 %v1138
        %v4083 = vunpack.c.l.b16 %v1139
        %v4084 = vunpack.c.h.b16 %v1139
        %v4085 = vunpack.c.l.b16 %v1140
        %v4086 = vunpack.c.h.b16 %v1140
        %v4087 = vunpack.c.l.b16 %v1141
        %v4088 = vunpack.c.h.b16 %v1141
        %v4089 = vunpack.c.l.b16 %v1142
        %v4090 = vunpack.c.h.b16 %v1142
        %v4091 = vunpack.c.l.b16 %v1143
        %v4092 = vunpack.c.h.b16 %v1143
        %v4093 = vunpack.c.l.b16 %v1144
        %v4094 = vunpack.c.h.b16 %v1144
        %v4095 = vunpack.c.l.b16 %v1145
        %v4096 = vunpack.c.h.b16 %v1145
        %v4097 = vunpack.c.l.b16 %v1146
        %v4098 = vunpack.c.h.b16 %v1146
        %v4099 = vunpack.c.l.b16 %v1147
        %v4100 = vunpack.c.h.b16 %v1147
        %v4101 = vunpack.c.l.b16 %v1148
        %v4102 = vunpack.c.h.b16 %v1148
        %v4103 = vunpack.c.l.b16 %v1149
        %v4104 = vunpack.c.h.b16 %v1149
        %v4105 = vunpack.c.l.b16 %v1150
        %v4106 = vunpack.c.h.b16 %v1150
        %v4107 = vunpack.c.l.b16 %v1151
        %v4108 = vunpack.c.h.b16 %v1151
        %v4109 = vunpack.c.l.b16 %v1152
        %v4110 = vunpack.c.h.b16 %v1152
        %v4111 = vunpack.c.l.b16 %v1153
        %v4112 = vunpack.c.h.b16 %v1153
        %v4113 = vunpack.c.l.b16 %v1154
        %v4114 = vunpack.c.h.b16 %v1154
        %v4115 = vunpack.c.l.b16 %v1155
        %v4116 = vunpack.c.h.b16 %v1155
        %v4117 = vunpack.c.l.b16 %v1156
        %v4118 = vunpack.c.h.b16 %v1156
        %v4119 = vunpack.c.l.b16 %v1157
        %v4120 = vunpack.c.h.b16 %v1157
        %v4121 = vunpack.c.l.b16 %v1158
        %v4122 = vunpack.c.h.b16 %v1158
        %v4123 = vunpack.c.l.b16 %v1159
        %v4124 = vunpack.c.h.b16 %v1159
        %v4125 = vunpack.c.l.b16 %v1160
        %v4126 = vunpack.c.h.b16 %v1160
        %v4127 = vunpack.c.l.b16 %v1161
        %v4128 = vunpack.c.h.b16 %v1161
        %v4129 = vunpack.c.l.b16 %v1162
        %v4130 = vunpack.c.h.b16 %v1162
        %v4131 = vunpack.c.l.b16 %v1163
        %v4132 = vunpack.c.h.b16 %v1163
        %v4133 = vunpack.c.l.b16 %v1164
        %v4134 = vunpack.c.h.b16 %v1164
        %v4135 = vunpack.c.l.b16 %v1165
        %v4136 = vunpack.c.h.b16 %v1165
        %v4137 = vunpack.c.l.b16 %v1166
        %v4138 = vunpack.c.h.b16 %v1166
        %v4139 = vunpack.c.l.b16 %v1167
        %v4140 = vunpack.c.h.b16 %v1167
        %v4141 = vunpack.c.l.b16 %v1168
        %v4142 = vunpack.c.h.b16 %v1168
        %v4143 = vunpack.c.l.b16 %v1169
        %v4144 = vunpack.c.h.b16 %v1169
        %v4145 = vunpack.c.l.b16 %v1170
        %v4146 = vunpack.c.h.b16 %v1170
        %v4147 = vunpack.c.l.b16 %v1171
        %v4148 = vunpack.c.h.b16 %v1171
        %v4149 = vunpack.c.l.b16 %v1172
        %v4150 = vunpack.c.h.b16 %v1172
        %v4151 = vunpack.c.l.b16 %v1173
        %v4152 = vunpack.c.h.b16 %v1173
        %v4153 = vunpack.c.l.b16 %v1174
        %v4154 = vunpack.c.h.b16 %v1174
        %v4155 = vunpack.c.l.b16 %v1175
        %v4156 = vunpack.c.h.b16 %v1175
        %v4157 = vunpack.c.l.b16 %v1176
        %v4158 = vunpack.c.h.b16 %v1176
        %v4159 = vunpack.c.l.b16 %v1177
        %v4160 = vunpack.c.h.b16 %v1177
        %v4161 = vunpack.c.l.b16 %v1178
        %v4162 = vunpack.c.h.b16 %v1178
        %v4163 = vunpack.c.l.b16 %v1179
        %v4164 = vunpack.c.h.b16 %v1179
        %v4165 = vunpack.c.l.b16 %v1180
        %v4166 = vunpack.c.h.b16 %v1180
        %v4167 = vunpack.c.l.b16 %v1181
        %v4168 = vunpack.c.h.b16 %v1181
        %v4169 = vunpack.c.l.b16 %v1182
        %v4170 = vunpack.c.h.b16 %v1182
        %v4171 = vunpack.c.l.b16 %v1183
        %v4172 = vunpack.c.h.b16 %v1183
        %v4173 = vunpack.c.l.b16 %v1184
        %v4174 = vunpack.c.h.b16 %v1184
        %v4175 = vunpack.c.l.b16 %v1185
        %v4176 = vunpack.c.h.b16 %v1185
        %v4177 = vunpack.c.l.b16 %v1186
        %v4178 = vunpack.c.h.b16 %v1186
        %v4179 = vunpack.c.l.b16 %v1187
        %v4180 = vunpack.c.h.b16 %v1187
        %v4181 = vunpack.c.l.b16 %v1188
        %v4182 = vunpack.c.h.b16 %v1188
        %v4183 = vunpack.c.l.b16 %v1189
        %v4184 = vunpack.c.h.b16 %v1189
        %v4185 = vunpack.c.l.b16 %v1190
        %v4186 = vunpack.c.h.b16 %v1190
        %v4187 = vunpack.c.l.b16 %v1191
        %v4188 = vunpack.c.h.b16 %v1191
        %v4189 = vunpack.c.l.b16 %v1192
        %v4190 = vunpack.c.h.b16 %v1192
        %v4191 = vunpack.c.l.b16 %v1193
        %v4192 = vunpack.c.h.b16 %v1193
        %v4193 = vunpack.c.l.b16 %v1194
        %v4194 = vunpack.c.h.b16 %v1194
        %v4195 = vunpack.c.l.b16 %v1195
        %v4196 = vunpack.c.h.b16 %v1195
        %v4197 = vunpack.c.l.b16 %v1196
        %v4198 = vunpack.c.h.b16 %v1196
        %v4199 = vunpack.c.l.b16 %v1197
        %v4200 = vunpack.c.h.b16 %v1197
        %v4201 = vunpack.c.l.b16 %v1198
        %v4202 = vunpack.c.h.b16 %v1198
        %v4203 = vunpack.c.l.b16 %v1199
        %v4204 = vunpack.c.h.b16 %v1199
        %v4205 = vunpack.c.l.b16 %v1200
        %v4206 = vunpack.c.h.b16 %v1200
        %v4207 = vunpack.c.l.b16 %v1201
        %v4208 = vunpack.c.h.b16 %v1201
        %v4209 = vunpack.c.l.b16 %v1202
        %v4210 = vunpack.c.h.b16 %v1202
        %v4211 = vunpack.c.l.b16 %v1203
        %v4212 = vunpack.c.h.b16 %v1203
        %v4213 = vunpack.c.l.b16 %v1204
        %v4214 = vunpack.c.h.b16 %v1204
        %v4215 = vunpack.c.l.b16 %v1205
        %v4216 = vunpack.c.h.b16 %v1205
        %v4217 = vunpack.c.l.b16 %v1206
        %v4218 = vunpack.c.h.b16 %v1206
        %v4219 = vunpack.c.l.b16 %v1207
        %v4220 = vunpack.c.h.b16 %v1207
        %v4221 = vunpack.c.l.b16 %v1208
        %v4222 = vunpack.c.h.b16 %v1208
        %v4223 = vunpack.c.l.b16 %v1209
        %v4224 = vunpack.c.h.b16 %v1209
        %v4225 = vunpack.c.l.b16 %v1210
        %v4226 = vunpack.c.h.b16 %v1210
        %v4227 = vunpack.c.l.b16 %v1211
        %v4228 = vunpack.c.h.b16 %v1211
        %v4229 = vunpack.c.l.b16 %v1212
        %v4230 = vunpack.c.h.b16 %v1212
        %v4231 = vunpack.c.l.b16 %v1213
        %v4232 = vunpack.c.h.b16 %v1213
        %v4233 = vunpack.c.l.b16 %v1214
        %v4234 = vunpack.c.h.b16 %v1214
        %v4235 = vunpack.c.l.b16 %v1215
        %v4236 = vunpack.c.h.b16 %v1215
        %v4237 = vunpack.c.l.b16 %v1216
        %v4238 = vunpack.c.h.b16 %v1216
        %v4239 = vunpack.c.l.b16 %v1217
        %v4240 = vunpack.c.h.b16 %v1217
        %v4241 = vunpack.c.l.b16 %v1218
        %v4242 = vunpack.c.h.b16 %v1218
        %v4243 = vunpack.c.l.b16 %v1219
        %v4244 = vunpack.c.h.b16 %v1219
        %v4245 = vunpack.c.l.b16 %v1220
        %v4246 = vunpack.c.h.b16 %v1220
        %v4247 = vunpack.c.l.b16 %v1221
        %v4248 = vunpack.c.h.b16 %v1221
        %v4249 = vunpack.c.l.b16 %v1222
        %v4250 = vunpack.c.h.b16 %v1222
        %v4251 = vunpack.c.l.b16 %v1223
        %v4252 = vunpack.c.h.b16 %v1223
        %v4253 = vunpack.c.l.b16 %v1224
        %v4254 = vunpack.c.h.b16 %v1224
        %v4255 = vunpack.c.l.b16 %v1225
        %v4256 = vunpack.c.h.b16 %v1225
        %v4257 = vunpack.c.l.b16 %v1226
        %v4258 = vunpack.c.h.b16 %v1226
        %v4259 = vunpack.c.l.b16 %v1227
        %v4260 = vunpack.c.h.b16 %v1227
        %v4261 = vunpack.c.l.b16 %v1228
        %v4262 = vunpack.c.h.b16 %v1228
        %v4263 = vunpack.c.l.b16 %v1229
        %v4264 = vunpack.c.h.b16 %v1229
        %v4265 = vunpack.c.l.b16 %v1230
        %v4266 = vunpack.c.h.b16 %v1230
        %v4267 = vunpack.c.l.b16 %v1231
        %v4268 = vunpack.c.h.b16 %v1231
        %v4269 = vunpack.c.l.b16 %v1232
        %v4270 = vunpack.c.h.b16 %v1232
        %v4271 = vunpack.c.l.b16 %v1233
        %v4272 = vunpack.c.h.b16 %v1233
        %v4273 = vunpack.c.l.b16 %v1234
        %v4274 = vunpack.c.h.b16 %v1234
        %v4275 = vunpack.c.l.b16 %v1235
        %v4276 = vunpack.c.h.b16 %v1235
        %v4277 = vunpack.c.l.b16 %v1236
        %v4278 = vunpack.c.h.b16 %v1236
        %v4279 = vunpack.c.l.b16 %v1237
        %v4280 = vunpack.c.h.b16 %v1237
        %v4281 = vunpack.c.l.b16 %v1238
        %v4282 = vunpack.c.h.b16 %v1238
        %v4283 = vunpack.c.l.b16 %v1239
        %v4284 = vunpack.c.h.b16 %v1239
        %v4285 = vunpack.c.l.b16 %v1240
        %v4286 = vunpack.c.h.b16 %v1240
        %v4287 = vunpack.c.l.b16 %v1241
        %v4288 = vunpack.c.h.b16 %v1241
        %v4289 = vunpack.c.l.b16 %v1242
        %v4290 = vunpack.c.h.b16 %v1242
        %v4291 = vunpack.c.l.b16 %v1243
        %v4292 = vunpack.c.h.b16 %v1243
        %v4293 = vunpack.c.l.b16 %v1244
        %v4294 = vunpack.c.h.b16 %v1244
        %v4295 = vunpack.c.l.b16 %v1245
        %v4296 = vunpack.c.h.b16 %v1245
        %v4297 = vunpack.c.l.b16 %v1246
        %v4298 = vunpack.c.h.b16 %v1246
        %v4299 = vunpack.c.l.b16 %v1247
        %v4300 = vunpack.c.h.b16 %v1247
        %v4301 = vunpack.c.l.b16 %v1248
        %v4302 = vunpack.c.h.b16 %v1248
        %v4303 = vunpack.c.l.b16 %v1249
        %v4304 = vunpack.c.h.b16 %v1249
        %v4305 = vunpack.c.l.b16 %v1250
        %v4306 = vunpack.c.h.b16 %v1250
        %v4307 = vunpack.c.l.b16 %v1251
        %v4308 = vunpack.c.h.b16 %v1251
        %v4309 = vunpack.c.l.b16 %v1252
        %v4310 = vunpack.c.h.b16 %v1252
        %v4311 = vunpack.c.l.b16 %v1253
        %v4312 = vunpack.c.h.b16 %v1253
        %v4313 = vunpack.c.l.b16 %v1254
        %v4314 = vunpack.c.h.b16 %v1254
        %v4315 = vunpack.c.l.b16 %v1255
        %v4316 = vunpack.c.h.b16 %v1255
        %v4317 = vunpack.c.l.b16 %v1256
        %v4318 = vunpack.c.h.b16 %v1256
        %v4319 = vunpack.c.l.b16 %v1257
        %v4320 = vunpack.c.h.b16 %v1257
        %v4321 = vunpack.c.l.b16 %v1258
        %v4322 = vunpack.c.h.b16 %v1258
        %v4323 = vunpack.c.l.b16 %v1259
        %v4324 = vunpack.c.h.b16 %v1259
        %v4325 = vunpack.c.l.b16 %v1260
        %v4326 = vunpack.c.h.b16 %v1260
        %v4327 = vunpack.c.l.b16 %v1261
        %v4328 = vunpack.c.h.b16 %v1261
        %v4329 = vunpack.c.l.b16 %v1262
        %v4330 = vunpack.c.h.b16 %v1262
        %v4331 = vunpack.c.l.b16 %v1263
        %v4332 = vunpack.c.h.b16 %v1263
        %v4333 = vunpack.c.l.b16 %v1264
        %v4334 = vunpack.c.h.b16 %v1264
        %v4335 = vunpack.c.l.b16 %v1265
        %v4336 = vunpack.c.h.b16 %v1265
        %v4337 = vunpack.c.l.b16 %v1266
        %v4338 = vunpack.c.h.b16 %v1266
        %v4339 = vunpack.c.l.b16 %v1267
        %v4340 = vunpack.c.h.b16 %v1267
        %v4341 = vunpack.c.l.b16 %v1268
        %v4342 = vunpack.c.h.b16 %v1268
        %v4343 = vunpack.c.l.b16 %v1269
        %v4344 = vunpack.c.h.b16 %v1269
        %v4345 = vunpack.c.l.b16 %v1270
        %v4346 = vunpack.c.h.b16 %v1270
        %v4347 = vunpack.c.l.b16 %v1271
        %v4348 = vunpack.c.h.b16 %v1271
        %v4349 = vunpack.c.l.b16 %v1272
        %v4350 = vunpack.c.h.b16 %v1272
        %v4351 = vunpack.c.l.b16 %v1273
        %v4352 = vunpack.c.h.b16 %v1273
        %v4353 = vunpack.c.l.b16 %v1274
        %v4354 = vunpack.c.h.b16 %v1274
        %v4355 = vunpack.c.l.b16 %v1275
        %v4356 = vunpack.c.h.b16 %v1275
        %v4357 = vunpack.c.l.b16 %v1276
        %v4358 = vunpack.c.h.b16 %v1276
        %v4359 = vunpack.c.l.b16 %v1277
        %v4360 = vunpack.c.h.b16 %v1277
        %v4361 = vunpack.c.l.b16 %v1278
        %v4362 = vunpack.c.h.b16 %v1278
        %v4363 = vunpack.c.l.b16 %v1279
        %v4364 = vunpack.c.h.b16 %v1279
        %v4365 = vunpack.c.l.b16 %v1280
        %v4366 = vunpack.c.h.b16 %v1280
        %v4367 = vunpack.c.l.b16 %v1281
        %v4368 = vunpack.c.h.b16 %v1281
        %v4369 = vunpack.c.l.b16 %v1282
        %v4370 = vunpack.c.h.b16 %v1282
        %v4371 = vunpack.c.l.b16 %v1283
        %v4372 = vunpack.c.h.b16 %v1283
        %v4373 = vunpack.c.l.b16 %v1284
        %v4374 = vunpack.c.h.b16 %v1284
        %v4375 = vunpack.c.l.b16 %v1285
        %v4376 = vunpack.c.h.b16 %v1285
        %v4377 = vunpack.c.l.b16 %v1286
        %v4378 = vunpack.c.h.b16 %v1286
        %v4379 = vunpack.c.l.b16 %v1287
        %v4380 = vunpack.c.h.b16 %v1287
        %v4381 = vunpack.c.l.b16 %v1288
        %v4382 = vunpack.c.h.b16 %v1288
        %v4383 = vunpack.c.l.b16 %v1289
        %v4384 = vunpack.c.h.b16 %v1289
        %v4385 = vunpack.c.l.b16 %v1290
        %v4386 = vunpack.c.h.b16 %v1290
        %v4387 = vunpack.c.l.b16 %v1291
        %v4388 = vunpack.c.h.b16 %v1291
        %v4389 = vunpack.c.l.b16 %v1292
        %v4390 = vunpack.c.h.b16 %v1292
        %v4391 = vunpack.c.l.b16 %v1293
        %v4392 = vunpack.c.h.b16 %v1293
        %v4393 = vunpack.c.l.b16 %v1294
        %v4394 = vunpack.c.h.b16 %v1294
        %v4395 = vunpack.c.l.b16 %v1295
        %v4396 = vunpack.c.h.b16 %v1295
        %v4397 = vunpack.c.l.b16 %v1296
        %v4398 = vunpack.c.h.b16 %v1296
        %v4399 = vunpack.c.l.b16 %v1297
        %v4400 = vunpack.c.h.b16 %v1297
        %v4401 = vunpack.c.l.b16 %v1298
        %v4402 = vunpack.c.h.b16 %v1298
        %v4403 = vunpack.c.l.b16 %v1299
        %v4404 = vunpack.c.h.b16 %v1299
        %v4405 = vunpack.c.l.b16 %v1300
        %v4406 = vunpack.c.h.b16 %v1300
        %v4407 = vunpack.c.l.b16 %v1301
        %v4408 = vunpack.c.h.b16 %v1301
        %v4409 = vunpack.c.l.b16 %v1302
        %v4410 = vunpack.c.h.b16 %v1302
        %v4411 = vunpack.c.l.b16 %v1303
        %v4412 = vunpack.c.h.b16 %v1303
        %v4413 = vunpack.c.l.b16 %v1304
        %v4414 = vunpack.c.h.b16 %v1304
        %v4415 = vunpack.c.l.b16 %v1305
        %v4416 = vunpack.c.h.b16 %v1305
        %v4417 = vunpack.c.l.b16 %v1306
        %v4418 = vunpack.c.h.b16 %v1306
        %v4419 = vunpack.c.l.b16 %v1307
        %v4420 = vunpack.c.h.b16 %v1307
        %v4421 = vunpack.c.l.b16 %v1308
        %v4422 = vunpack.c.h.b16 %v1308
        %v4423 = vunpack.c.l.b16 %v1309
        %v4424 = vunpack.c.h.b16 %v1309
        %v4425 = vunpack.c.l.b16 %v1310
        %v4426 = vunpack.c.h.b16 %v1310
        %v4427 = vunpack.c.l.b16 %v1311
        %v4428 = vunpack.c.h.b16 %v1311
        %v4429 = vunpack.c.l.b16 %v1312
        %v4430 = vunpack.c.h.b16 %v1312
        %v4431 = vunpack.c.l.b16 %v1313
        %v4432 = vunpack.c.h.b16 %v1313
        %v4433 = vunpack.c.l.b16 %v1314
        %v4434 = vunpack.c.h.b16 %v1314
        %v4435 = vunpack.c.l.b16 %v1315
        %v4436 = vunpack.c.h.b16 %v1315
        %v4437 = vunpack.c.l.b16 %v1316
        %v4438 = vunpack.c.h.b16 %v1316
        %v4439 = vunpack.c.l.b16 %v1317
        %v4440 = vunpack.c.h.b16 %v1317
        %v4441 = vunpack.c.l.b16 %v1318
        %v4442 = vunpack.c.h.b16 %v1318
        %v4443 = vunpack.c.l.b16 %v1319
        %v4444 = vunpack.c.h.b16 %v1319
        %v4445 = vunpack.c.l.b16 %v1320
        %v4446 = vunpack.c.h.b16 %v1320
        %v4447 = vunpack.c.l.b16 %v1321
        %v4448 = vunpack.c.h.b16 %v1321
        %v4449 = vunpack.c.l.b16 %v1322
        %v4450 = vunpack.c.h.b16 %v1322
        %v4451 = vunpack.c.l.b16 %v1323
        %v4452 = vunpack.c.h.b16 %v1323
        %v4453 = vunpack.c.l.b16 %v1324
        %v4454 = vunpack.c.h.b16 %v1324
        %v4455 = vunpack.c.l.b16 %v1325
        %v4456 = vunpack.c.h.b16 %v1325
        %v4457 = vunpack.c.l.b16 %v1326
        %v4458 = vunpack.c.h.b16 %v1326
        %v4459 = vunpack.c.l.b16 %v1327
        %v4460 = vunpack.c.h.b16 %v1327
        %v4461 = vunpack.c.l.b16 %v1328
        %v4462 = vunpack.c.h.b16 %v1328
        %v4463 = vunpack.c.l.b16 %v1329
        %v4464 = vunpack.c.h.b16 %v1329
        %v4465 = vunpack.c.l.b16 %v1330
        %v4466 = vunpack.c.h.b16 %v1330
        %v4467 = vunpack.c.l.b16 %v1331
        %v4468 = vunpack.c.h.b16 %v1331
        %v4469 = vunpack.c.l.b16 %v1332
        %v4470 = vunpack.c.h.b16 %v1332
        %v4471 = vunpack.c.l.b16 %v1333
        %v4472 = vunpack.c.h.b16 %v1333
        %v4473 = vunpack.c.l.b16 %v1334
        %v4474 = vunpack.c.h.b16 %v1334
        %v4475 = vunpack.c.l.b16 %v1335
        %v4476 = vunpack.c.h.b16 %v1335
        %v4477 = vunpack.c.l.b16 %v1336
        %v4478 = vunpack.c.h.b16 %v1336
        %v4479 = vunpack.c.l.b16 %v1337
        %v4480 = vunpack.c.h.b16 %v1337
        %v4481 = vunpack.c.l.b16 %v1338
        %v4482 = vunpack.c.h.b16 %v1338
        %v4483 = vunpack.c.l.b16 %v1339
        %v4484 = vunpack.c.h.b16 %v1339
        %v4485 = vunpack.c.l.b16 %v1340
        %v4486 = vunpack.c.h.b16 %v1340
        %v4487 = vunpack.c.l.b16 %v1341
        %v4488 = vunpack.c.h.b16 %v1341
        %v4489 = vunpack.c.l.b16 %v1342
        %v4490 = vunpack.c.h.b16 %v1342
        %v4491 = vunpack.c.l.b16 %v1343
        %v4492 = vunpack.c.h.b16 %v1343
        %v4493 = vunpack.c.l.b16 %v1344
        %v4494 = vunpack.c.h.b16 %v1344
        %v4495 = vunpack.c.l.b16 %v1345
        %v4496 = vunpack.c.h.b16 %v1345
        %v4497 = vunpack.c.l.b16 %v1346
        %v4498 = vunpack.c.h.b16 %v1346
        %v4499 = vunpack.c.l.b16 %v1347
        %v4500 = vunpack.c.h.b16 %v1347
        %v4501 = vunpack.c.l.b16 %v1348
        %v4502 = vunpack.c.h.b16 %v1348
        %v4503 = vunpack.c.l.b16 %v1349
        %v4504 = vunpack.c.h.b16 %v1349
        %v4505 = vunpack.c.l.b16 %v1350
        %v4506 = vunpack.c.h.b16 %v1350
        %v4507 = vunpack.c.l.b16 %v1351
        %v4508 = vunpack.c.h.b16 %v1351
        %v4509 = vunpack.c.l.b16 %v1352
        %v4510 = vunpack.c.h.b16 %v1352
        %v4511 = vunpack.c.l.b16 %v1353
        %v4512 = vunpack.c.h.b16 %v1353
        %v4513 = vunpack.c.l.b16 %v1354
        %v4514 = vunpack.c.h.b16 %v1354
        %v4515 = vunpack.c.l.b16 %v1355
        %v4516 = vunpack.c.h.b16 %v1355
        %v4517 = vunpack.c.l.b16 %v1356
        %v4518 = vunpack.c.h.b16 %v1356
        %v4519 = vunpack.c.l.b16 %v1357
        %v4520 = vunpack.c.h.b16 %v1357
        %v4521 = vunpack.c.l.b16 %v1358
        %v4522 = vunpack.c.h.b16 %v1358
        %v4523 = vunpack.c.l.b16 %v1359
        %v4524 = vunpack.c.h.b16 %v1359
        %v4525 = vunpack.c.l.b16 %v1360
        %v4526 = vunpack.c.h.b16 %v1360
        %v4527 = vunpack.c.l.b16 %v1361
        %v4528 = vunpack.c.h.b16 %v1361
        %v4529 = vunpack.c.l.b16 %v1362
        %v4530 = vunpack.c.h.b16 %v1362
        %v4531 = vunpack.c.l.b16 %v1363
        %v4532 = vunpack.c.h.b16 %v1363
        %v4533 = vunpack.c.l.b16 %v1364
        %v4534 = vunpack.c.h.b16 %v1364
        %v4535 = vpack.c.b16 %v2495, %v2487
        %v4536 = vpack.c.b16 %v2496, %v2488
        %v4537 = vpack.c.b16 %v2497, %v2489
        %v4538 = vpack.c.b16 %v2498, %v2490
        %v4539 = vpack.c.b16 %v2499, %v2491
        %v4540 = vpack.c.b16 %v2500, %v2492
        %v4541 = vpack.c.b16 %v2501, %v2493
        %v4542 = vpack.c.b16 %v2502, %v2494
        %v4543 = vpack.c.b16 %v2511, %v2503
        %v4544 = vpack.c.b16 %v2512, %v2504
        %v4545 = vpack.c.b16 %v2513, %v2505
        %v4546 = vpack.c.b16 %v2514, %v2506
        %v4547 = vpack.c.b16 %v2515, %v2507
        %v4548 = vpack.c.b16 %v2516, %v2508
        %v4549 = vpack.c.b16 %v2517, %v2509
        %v4550 = vpack.c.b16 %v2518, %v2510
        %v4551 = vpack.c.b16 %v2527, %v2519
        %v4552 = vpack.c.b16 %v2528, %v2520
        %v4553 = vpack.c.b16 %v2529, %v2521
        %v4554 = vpack.c.b16 %v2530, %v2522
        %v4555 = vpack.c.b16 %v2531, %v2523
        %v4556 = vpack.c.b16 %v2532, %v2524
        %v4557 = vpack.c.b16 %v2533, %v2525
        %v4558 = vpack.c.b16 %v2534, %v2526
        %v4559 = vpack.c.b16 %v2543, %v2535
        %v4560 = vpack.c.b16 %v2544, %v2536
        %v4561 = vpack.c.b16 %v2545, %v2537
        %v4562 = vpack.c.b16 %v2546, %v2538
        %v4563 = vpack.c.b16 %v2547, %v2539
        %v4564 = vpack.c.b16 %v2548, %v2540
        %v4565 = vpack.c.b16 %v2549, %v2541
        %v4566 = vpack.c.b16 %v2550, %v2542
        %v4567 = vpack.c.b16 %v2559, %v2551
        %v4568 = vpack.c.b16 %v2560, %v2552
        %v4569 = vpack.c.b16 %v2561, %v2553
        %v4570 = vpack.c.b16 %v2562, %v2554
        %v4571 = vpack.c.b16 %v2563, %v2555
        %v4572 = vpack.c.b16 %v2564, %v2556
        %v4573 = vpack.c.b16 %v2565, %v2557
        %v4574 = vpack.c.b16 %v2566, %v2558
        %v4575 = vpack.c.b16 %v2575, %v2567
        %v4576 = vpack.c.b16 %v2576, %v2568
        %v4577 = vpack.c.b16 %v2577, %v2569
        %v4578 = vpack.c.b16 %v2578, %v2570
        %v4579 = vpack.c.b16 %v2579, %v2571
        %v4580 = vpack.c.b16 %v2580, %v2572
        %v4581 = vpack.c.b16 %v2581, %v2573
        %v4582 = vpack.c.b16 %v2582, %v2574
        %v4583 = vpack.c.b16 %v2591, %v2583
        %v4584 = vpack.c.b16 %v2592, %v2584
        %v4585 = vpack.c.b16 %v2593, %v2585
        %v4586 = vpack.c.b16 %v2594, %v2586
        %v4587 = vpack.c.b16 %v2595, %v2587
        %v4588 = vpack.c.b16 %v2596, %v2588
        %v4589 = vpack.c.b16 %v2597, %v2589
        %v4590 = vpack.c.b16 %v2598, %v2590
        %v4591 = vpack.c.b16 %v2607, %v2599
        %v4592 = vpack.c.b16 %v2608, %v2600
        %v4593 = vpack.c.b16 %v2609, %v2601
        %v4594 = vpack.c.b16 %v2610, %v2602
        %v4595 = vpack.c.b16 %v2611, %v2603
        %v4596 = vpack.c.b16 %v2612, %v2604
        %v4597 = vpack.c.b16 %v2613, %v2605
        %v4598 = vpack.c.b16 %v2614, %v2606
        %v4599 = vpack.c.b16 %v2623, %v2615
        %v4600 = vpack.c.b16 %v2624, %v2616
        %v4601 = vpack.c.b16 %v2625, %v2617
        %v4602 = vpack.c.b16 %v2626, %v2618
        %v4603 = vpack.c.b16 %v2627, %v2619
        %v4604 = vpack.c.b16 %v2628, %v2620
        %v4605 = vpack.c.b16 %v2629, %v2621
        %v4606 = vpack.c.b16 %v2630, %v2622
        %v4607 = vpack.c.b16 %v2639, %v2631
        %v4608 = vpack.c.b16 %v2640, %v2632
        %v4609 = vpack.c.b16 %v2641, %v2633
        %v4610 = vpack.c.b16 %v2642, %v2634
        %v4611 = vpack.c.b16 %v2643, %v2635
        %v4612 = vpack.c.b16 %v2644, %v2636
        %v4613 = vpack.c.b16 %v2645, %v2637
        %v4614 = vpack.c.b16 %v2646, %v2638
        %v4615 = vpack.c.b16 %v2655, %v2647
        %v4616 = vpack.c.b16 %v2656, %v2648
        %v4617 = vpack.c.b16 %v2657, %v2649
        %v4618 = vpack.c.b16 %v2658, %v2650
        %v4619 = vpack.c.b16 %v2659, %v2651
        %v4620 = vpack.c.b16 %v2660, %v2652
        %v4621 = vpack.c.b16 %v2661, %v2653
        %v4622 = vpack.c.b16 %v2662, %v2654
        %v4623 = vpack.c.b16 %v2671, %v2663
        %v4624 = vpack.c.b16 %v2672, %v2664
        %v4625 = vpack.c.b16 %v2673, %v2665
        %v4626 = vpack.c.b16 %v2674, %v2666
        %v4627 = vpack.c.b16 %v2675, %v2667
        %v4628 = vpack.c.b16 %v2676, %v2668
        %v4629 = vpack.c.b16 %v2677, %v2669
        %v4630 = vpack.c.b16 %v2678, %v2670
        %v4631 = vpack.c.b16 %v2687, %v2679
        %v4632 = vpack.c.b16 %v2688, %v2680
        %v4633 = vpack.c.b16 %v2689, %v2681
        %v4634 = vpack.c.b16 %v2690, %v2682
        %v4635 = vpack.c.b16 %v2691, %v2683
        %v4636 = vpack.c.b16 %v2692, %v2684
        %v4637 = vpack.c.b16 %v2693, %v2685
        %v4638 = vpack.c.b16 %v2694, %v2686
        %v4639 = vpack.c.b16 %v2703, %v2695
        %v4640 = vpack.c.b16 %v2704, %v2696
        %v4641 = vpack.c.b16 %v2705, %v2697
        %v4642 = vpack.c.b16 %v2706, %v2698
        %v4643 = vpack.c.b16 %v2707, %v2699
        %v4644 = vpack.c.b16 %v2708, %v2700
        %v4645 = vpack.c.b16 %v2709, %v2701
        %v4646 = vpack.c.b16 %v2710, %v2702
        %v4647 = vpack.c.b16 %v2719, %v2711
        %v4648 = vpack.c.b16 %v2720, %v2712
        %v4649 = vpack.c.b16 %v2721, %v2713
        %v4650 = vpack.c.b16 %v2722, %v2714
        %v4651 = vpack.c.b16 %v2723, %v2715
        %v4652 = vpack.c.b16 %v2724, %v2716
        %v4653 = vpack.c.b16 %v2725, %v2717
        %v4654 = vpack.c.b16 %v2726, %v2718
        %v4655 = vpack.c.b16 %v2735, %v2727
        %v4656 = vpack.c.b16 %v2736, %v2728
        %v4657 = vpack.c.b16 %v2737, %v2729
        %v4658 = vpack.c.b16 %v2738, %v2730
        %v4659 = vpack.c.b16 %v2739, %v2731
        %v4660 = vpack.c.b16 %v2740, %v2732
        %v4661 = vpack.c.b16 %v2741, %v2733
        %v4662 = vpack.c.b16 %v2742, %v2734
        %v4663 = vpack.c.b16 %v2751, %v2743
        %v4664 = vpack.c.b16 %v2752, %v2744
        %v4665 = vpack.c.b16 %v2753, %v2745
        %v4666 = vpack.c.b16 %v2754, %v2746
        %v4667 = vpack.c.b16 %v2755, %v2747
        %v4668 = vpack.c.b16 %v2756, %v2748
        %v4669 = vpack.c.b16 %v2757, %v2749
        %v4670 = vpack.c.b16 %v2758, %v2750
        %v4671 = vpack.c.b16 %v2767, %v2759
        %v4672 = vpack.c.b16 %v2768, %v2760
        %v4673 = vpack.c.b16 %v2769, %v2761
        %v4674 = vpack.c.b16 %v2770, %v2762
        %v4675 = vpack.c.b16 %v2771, %v2763
        %v4676 = vpack.c.b16 %v2772, %v2764
        %v4677 = vpack.c.b16 %v2773, %v2765
        %v4678 = vpack.c.b16 %v2774, %v2766
        %v4679 = vpack.c.b16 %v2783, %v2775
        %v4680 = vpack.c.b16 %v2784, %v2776
        %v4681 = vpack.c.b16 %v2785, %v2777
        %v4682 = vpack.c.b16 %v2786, %v2778
        %v4683 = vpack.c.b16 %v2787, %v2779
        %v4684 = vpack.c.b16 %v2788, %v2780
        %v4685 = vpack.c.b16 %v2789, %v2781
        %v4686 = vpack.c.b16 %v2790, %v2782
        %v4687 = vpack.c.b16 %v2799, %v2791
        %v4688 = vpack.c.b16 %v2800, %v2792
        %v4689 = vpack.c.b16 %v2801, %v2793
        %v4690 = vpack.c.b16 %v2802, %v2794
        %v4691 = vpack.c.b16 %v2803, %v2795
        %v4692 = vpack.c.b16 %v2804, %v2796
        %v4693 = vpack.c.b16 %v2805, %v2797
        %v4694 = vpack.c.b16 %v2806, %v2798
        %v4695 = vpack.c.b16 %v2815, %v2807
        %v4696 = vpack.c.b16 %v2816, %v2808
        %v4697 = vpack.c.b16 %v2817, %v2809
        %v4698 = vpack.c.b16 %v2818, %v2810
        %v4699 = vpack.c.b16 %v2819, %v2811
        %v4700 = vpack.c.b16 %v2820, %v2812
        %v4701 = vpack.c.b16 %v2821, %v2813
        %v4702 = vpack.c.b16 %v2822, %v2814
        %v4703 = vpack.c.b16 %v2831, %v2823
        %v4704 = vpack.c.b16 %v2832, %v2824
        %v4705 = vpack.c.b16 %v2833, %v2825
        %v4706 = vpack.c.b16 %v2834, %v2826
        %v4707 = vpack.c.b16 %v2835, %v2827
        %v4708 = vpack.c.b16 %v2836, %v2828
        %v4709 = vpack.c.b16 %v2837, %v2829
        %v4710 = vpack.c.b16 %v2838, %v2830
        %v4711 = vpack.c.b16 %v2847, %v2839
        %v4712 = vpack.c.b16 %v2848, %v2840
        %v4713 = vpack.c.b16 %v2849, %v2841
        %v4714 = vpack.c.b16 %v2850, %v2842
        %v4715 = vpack.c.b16 %v2851, %v2843
        %v4716 = vpack.c.b16 %v2852, %v2844
        %v4717 = vpack.c.b16 %v2853, %v2845
        %v4718 = vpack.c.b16 %v2854, %v2846
        %v4719 = vpack.c.b16 %v2863, %v2855
        %v4720 = vpack.c.b16 %v2864, %v2856
        %v4721 = vpack.c.b16 %v2865, %v2857
        %v4722 = vpack.c.b16 %v2866, %v2858
        %v4723 = vpack.c.b16 %v2867, %v2859
        %v4724 = vpack.c.b16 %v2868, %v2860
        %v4725 = vpack.c.b16 %v2869, %v2861
        %v4726 = vpack.c.b16 %v2870, %v2862
        %v4727 = vpack.c.b16 %v2879, %v2871
        %v4728 = vpack.c.b16 %v2880, %v2872
        %v4729 = vpack.c.b16 %v2881, %v2873
        %v4730 = vpack.c.b16 %v2882, %v2874
        %v4731 = vpack.c.b16 %v2883, %v2875
        %v4732 = vpack.c.b16 %v2884, %v2876
        %v4733 = vpack.c.b16 %v2885, %v2877
        %v4734 = vpack.c.b16 %v2886, %v2878
        %v4735 = vpack.c.b16 %v2895, %v2887
        %v4736 = vpack.c.b16 %v2896, %v2888
        %v4737 = vpack.c.b16 %v2897, %v2889
        %v4738 = vpack.c.b16 %v2898, %v2890
        %v4739 = vpack.c.b16 %v2899, %v2891
        %v4740 = vpack.c.b16 %v2900, %v2892
        %v4741 = vpack.c.b16 %v2901, %v2893
        %v4742 = vpack.c.b16 %v2902, %v2894
        %v4743 = vpack.c.b16 %v2911, %v2903
        %v4744 = vpack.c.b16 %v2912, %v2904
        %v4745 = vpack.c.b16 %v2913, %v2905
        %v4746 = vpack.c.b16 %v2914, %v2906
        %v4747 = vpack.c.b16 %v2915, %v2907
        %v4748 = vpack.c.b16 %v2916, %v2908
        %v4749 = vpack.c.b16 %v2917, %v2909
        %v4750 = vpack.c.b16 %v2918, %v2910
        %v4751 = vpack.c.b16 %v2927, %v2919
        %v4752 = vpack.c.b16 %v2928, %v2920
        %v4753 = vpack.c.b16 %v2929, %v2921
        %v4754 = vpack.c.b16 %v2930, %v2922
        %v4755 = vpack.c.b16 %v2931, %v2923
        %v4756 = vpack.c.b16 %v2932, %v2924
        %v4757 = vpack.c.b16 %v2933, %v2925
        %v4758 = vpack.c.b16 %v2934, %v2926
        %v4759 = vpack.c.b16 %v2943, %v2935
        %v4760 = vpack.c.b16 %v2944, %v2936
        %v4761 = vpack.c.b16 %v2945, %v2937
        %v4762 = vpack.c.b16 %v2946, %v2938
        %v4763 = vpack.c.b16 %v2947, %v2939
        %v4764 = vpack.c.b16 %v2948, %v2940
        %v4765 = vpack.c.b16 %v2949, %v2941
        %v4766 = vpack.c.b16 %v2950, %v2942
        %v4767 = vpack.c.b16 %v2959, %v2951
        %v4768 = vpack.c.b16 %v2960, %v2952
        %v4769 = vpack.c.b16 %v2961, %v2953
        %v4770 = vpack.c.b16 %v2962, %v2954
        %v4771 = vpack.c.b16 %v2963, %v2955
        %v4772 = vpack.c.b16 %v2964, %v2956
        %v4773 = vpack.c.b16 %v2965, %v2957
        %v4774 = vpack.c.b16 %v2966, %v2958
        %v4775 = vpack.c.b16 %v2975, %v2967
        %v4776 = vpack.c.b16 %v2976, %v2968
        %v4777 = vpack.c.b16 %v2977, %v2969
        %v4778 = vpack.c.b16 %v2978, %v2970
        %v4779 = vpack.c.b16 %v2979, %v2971
        %v4780 = vpack.c.b16 %v2980, %v2972
        %v4781 = vpack.c.b16 %v2981, %v2973
        %v4782 = vpack.c.b16 %v2982, %v2974
        %v4783 = vpack.c.b16 %v2991, %v2983
        %v4784 = vpack.c.b16 %v2992, %v2984
        %v4785 = vpack.c.b16 %v2993, %v2985
        %v4786 = vpack.c.b16 %v2994, %v2986
        %v4787 = vpack.c.b16 %v2995, %v2987
        %v4788 = vpack.c.b16 %v2996, %v2988
        %v4789 = vpack.c.b16 %v2997, %v2989
        %v4790 = vpack.c.b16 %v2998, %v2990
        %v4791 = vpack.c.b16 %v3007, %v2999
        %v4792 = vpack.c.b16 %v3008, %v3000
        %v4793 = vpack.c.b16 %v3009, %v3001
        %v4794 = vpack.c.b16 %v3010, %v3002
        %v4795 = vpack.c.b16 %v3011, %v3003
        %v4796 = vpack.c.b16 %v3012, %v3004
        %v4797 = vpack.c.b16 %v3013, %v3005
        %v4798 = vpack.c.b16 %v3014, %v3006
        %v4799 = vpack.c.b16 %v3023, %v3015
        %v4800 = vpack.c.b16 %v3024, %v3016
        %v4801 = vpack.c.b16 %v3025, %v3017
        %v4802 = vpack.c.b16 %v3026, %v3018
        %v4803 = vpack.c.b16 %v3027, %v3019
        %v4804 = vpack.c.b16 %v3028, %v3020
        %v4805 = vpack.c.b16 %v3029, %v3021
        %v4806 = vpack.c.b16 %v3030, %v3022
        %v4807 = vpack.c.b16 %v3039, %v3031
        %v4808 = vpack.c.b16 %v3040, %v3032
        %v4809 = vpack.c.b16 %v3041, %v3033
        %v4810 = vpack.c.b16 %v3042, %v3034
        %v4811 = vpack.c.b16 %v3043, %v3035
        %v4812 = vpack.c.b16 %v3044, %v3036
        %v4813 = vpack.c.b16 %v3045, %v3037
        %v4814 = vpack.c.b16 %v3046, %v3038
        %v4815 = vpack.c.b16 %v3055, %v3047
        %v4816 = vpack.c.b16 %v3056, %v3048
        %v4817 = vpack.c.b16 %v3057, %v3049
        %v4818 = vpack.c.b16 %v3058, %v3050
        %v4819 = vpack.c.b16 %v3059, %v3051
        %v4820 = vpack.c.b16 %v3060, %v3052
        %v4821 = vpack.c.b16 %v3061, %v3053
        %v4822 = vpack.c.b16 %v3062, %v3054
        %v4823 = vpack.c.b16 %v3071, %v3063
        %v4824 = vpack.c.b16 %v3072, %v3064
        %v4825 = vpack.c.b16 %v3073, %v3065
        %v4826 = vpack.c.b16 %v3074, %v3066
        %v4827 = vpack.c.b16 %v3075, %v3067
        %v4828 = vpack.c.b16 %v3076, %v3068
        %v4829 = vpack.c.b16 %v3077, %v3069
        %v4830 = vpack.c.b16 %v3078, %v3070
        %v4831 = vpack.c.b16 %v3087, %v3079
        %v4832 = vpack.c.b16 %v3088, %v3080
        %v4833 = vpack.c.b16 %v3089, %v3081
        %v4834 = vpack.c.b16 %v3090, %v3082
        %v4835 = vpack.c.b16 %v3091, %v3083
        %v4836 = vpack.c.b16 %v3092, %v3084
        %v4837 = vpack.c.b16 %v3093, %v3085
        %v4838 = vpack.c.b16 %v3094, %v3086
        %v4839 = vpack.c.b16 %v3103, %v3095
        %v4840 = vpack.c.b16 %v3104, %v3096
        %v4841 = vpack.c.b16 %v3105, %v3097
        %v4842 = vpack.c.b16 %v3106, %v3098
        %v4843 = vpack.c.b16 %v3107, %v3099
        %v4844 = vpack.c.b16 %v3108, %v3100
        %v4845 = vpack.c.b16 %v3109, %v3101
        %v4846 = vpack.c.b16 %v3110, %v3102
        %v4847 = vpack.c.b16 %v3119, %v3111
        %v4848 = vpack.c.b16 %v3120, %v3112
        %v4849 = vpack.c.b16 %v3121, %v3113
        %v4850 = vpack.c.b16 %v3122, %v3114
        %v4851 = vpack.c.b16 %v3123, %v3115
        %v4852 = vpack.c.b16 %v3124, %v3116
        %v4853 = vpack.c.b16 %v3125, %v3117
        %v4854 = vpack.c.b16 %v3126, %v3118
        %v4855 = vpack.c.b16 %v3135, %v3127
        %v4856 = vpack.c.b16 %v3136, %v3128
        %v4857 = vpack.c.b16 %v3137, %v3129
        %v4858 = vpack.c.b16 %v3138, %v3130
        %v4859 = vpack.c.b16 %v3139, %v3131
        %v4860 = vpack.c.b16 %v3140, %v3132
        %v4861 = vpack.c.b16 %v3141, %v3133
        %v4862 = vpack.c.b16 %v3142, %v3134
        %v4863 = vpack.c.b16 %v3151, %v3143
        %v4864 = vpack.c.b16 %v3152, %v3144
        %v4865 = vpack.c.b16 %v3153, %v3145
        %v4866 = vpack.c.b16 %v3154, %v3146
        %v4867 = vpack.c.b16 %v3155, %v3147
        %v4868 = vpack.c.b16 %v3156, %v3148
        %v4869 = vpack.c.b16 %v3157, %v3149
        %v4870 = vpack.c.b16 %v3158, %v3150
        %v4871 = vpack.c.b16 %v3167, %v3159
        %v4872 = vpack.c.b16 %v3168, %v3160
        %v4873 = vpack.c.b16 %v3169, %v3161
        %v4874 = vpack.c.b16 %v3170, %v3162
        %v4875 = vpack.c.b16 %v3171, %v3163
        %v4876 = vpack.c.b16 %v3172, %v3164
        %v4877 = vpack.c.b16 %v3173, %v3165
        %v4878 = vpack.c.b16 %v3174, %v3166
        %v4879 = vpack.c.b16 %v3183, %v3175
        %v4880 = vpack.c.b16 %v3184, %v3176
        %v4881 = vpack.c.b16 %v3185, %v3177
        %v4882 = vpack.c.b16 %v3186, %v3178
        %v4883 = vpack.c.b16 %v3187, %v3179
        %v4884 = vpack.c.b16 %v3188, %v3180
        %v4885 = vpack.c.b16 %v3189, %v3181
        %v4886 = vpack.c.b16 %v3190, %v3182
        %v4887 = vpack.c.b16 %v3199, %v3191
        %v4888 = vpack.c.b16 %v3200, %v3192
        %v4889 = vpack.c.b16 %v3201, %v3193
        %v4890 = vpack.c.b16 %v3202, %v3194
        %v4891 = vpack.c.b16 %v3203, %v3195
        %v4892 = vpack.c.b16 %v3204, %v3196
        %v4893 = vpack.c.b16 %v3205, %v3197
        %v4894 = vpack.c.b16 %v3206, %v3198
        %v4895 = vpack.c.b16 %v3215, %v3207
        %v4896 = vpack.c.b16 %v3216, %v3208
        %v4897 = vpack.c.b16 %v3217, %v3209
        %v4898 = vpack.c.b16 %v3218, %v3210
        %v4899 = vpack.c.b16 %v3219, %v3211
        %v4900 = vpack.c.b16 %v3220, %v3212
        %v4901 = vpack.c.b16 %v3221, %v3213
        %v4902 = vpack.c.b16 %v3222, %v3214
        %v4903 = vpack.c.b16 %v3231, %v3223
        %v4904 = vpack.c.b16 %v3232, %v3224
        %v4905 = vpack.c.b16 %v3233, %v3225
        %v4906 = vpack.c.b16 %v3234, %v3226
        %v4907 = vpack.c.b16 %v3235, %v3227
        %v4908 = vpack.c.b16 %v3236, %v3228
        %v4909 = vpack.c.b16 %v3237, %v3229
        %v4910 = vpack.c.b16 %v3238, %v3230
        %v4911 = vpack.c.b16 %v3247, %v3239
        %v4912 = vpack.c.b16 %v3248, %v3240
        %v4913 = vpack.c.b16 %v3249, %v3241
        %v4914 = vpack.c.b16 %v3250, %v3242
        %v4915 = vpack.c.b16 %v3251, %v3243
        %v4916 = vpack.c.b16 %v3252, %v3244
        %v4917 = vpack.c.b16 %v3253, %v3245
        %v4918 = vpack.c.b16 %v3254, %v3246
        %v4919 = vpack.c.b16 %v3263, %v3255
        %v4920 = vpack.c.b16 %v3264, %v3256
        %v4921 = vpack.c.b16 %v3265, %v3257
        %v4922 = vpack.c.b16 %v3266, %v3258
        %v4923 = vpack.c.b16 %v3267, %v3259
        %v4924 = vpack.c.b16 %v3268, %v3260
        %v4925 = vpack.c.b16 %v3269, %v3261
        %v4926 = vpack.c.b16 %v3270, %v3262
        %v4927 = vpack.c.b16 %v3279, %v3271
        %v4928 = vpack.c.b16 %v3280, %v3272
        %v4929 = vpack.c.b16 %v3281, %v3273
        %v4930 = vpack.c.b16 %v3282, %v3274
        %v4931 = vpack.c.b16 %v3283, %v3275
        %v4932 = vpack.c.b16 %v3284, %v3276
        %v4933 = vpack.c.b16 %v3285, %v3277
        %v4934 = vpack.c.b16 %v3286, %v3278
        %v4935 = vpack.c.b16 %v3295, %v3287
        %v4936 = vpack.c.b16 %v3296, %v3288
        %v4937 = vpack.c.b16 %v3297, %v3289
        %v4938 = vpack.c.b16 %v3298, %v3290
        %v4939 = vpack.c.b16 %v3299, %v3291
        %v4940 = vpack.c.b16 %v3300, %v3292
        %v4941 = vpack.c.b16 %v3301, %v3293
        %v4942 = vpack.c.b16 %v3302, %v3294
        %v4943 = vpack.c.b16 %v3311, %v3303
        %v4944 = vpack.c.b16 %v3312, %v3304
        %v4945 = vpack.c.b16 %v3313, %v3305
        %v4946 = vpack.c.b16 %v3314, %v3306
        %v4947 = vpack.c.b16 %v3315, %v3307
        %v4948 = vpack.c.b16 %v3316, %v3308
        %v4949 = vpack.c.b16 %v3317, %v3309
        %v4950 = vpack.c.b16 %v3318, %v3310
        %v4951 = vpack.c.b16 %v3327, %v3319
        %v4952 = vpack.c.b16 %v3328, %v3320
        %v4953 = vpack.c.b16 %v3329, %v3321
        %v4954 = vpack.c.b16 %v3330, %v3322
        %v4955 = vpack.c.b16 %v3331, %v3323
        %v4956 = vpack.c.b16 %v3332, %v3324
        %v4957 = vpack.c.b16 %v3333, %v3325
        %v4958 = vpack.c.b16 %v3334, %v3326
        %v4959 = vpack.c.b16 %v3343, %v3335
        %v4960 = vpack.c.b16 %v3344, %v3336
        %v4961 = vpack.c.b16 %v3345, %v3337
        %v4962 = vpack.c.b16 %v3346, %v3338
        %v4963 = vpack.c.b16 %v3347, %v3339
        %v4964 = vpack.c.b16 %v3348, %v3340
        %v4965 = vpack.c.b16 %v3349, %v3341
        %v4966 = vpack.c.b16 %v3350, %v3342
        %v4967 = vpack.c.b16 %v3359, %v3351
        %v4968 = vpack.c.b16 %v3360, %v3352
        %v4969 = vpack.c.b16 %v3361, %v3353
        %v4970 = vpack.c.b16 %v3362, %v3354
        %v4971 = vpack.c.b16 %v3363, %v3355
        %v4972 = vpack.c.b16 %v3364, %v3356
        %v4973 = vpack.c.b16 %v3365, %v3357
        %v4974 = vpack.c.b16 %v3366, %v3358
        %v4975 = vpack.c.b16 %v3375, %v3367
        %v4976 = vpack.c.b16 %v3376, %v3368
        %v4977 = vpack.c.b16 %v3377, %v3369
        %v4978 = vpack.c.b16 %v3378, %v3370
        %v4979 = vpack.c.b16 %v3379, %v3371
        %v4980 = vpack.c.b16 %v3380, %v3372
        %v4981 = vpack.c.b16 %v3381, %v3373
        %v4982 = vpack.c.b16 %v3382, %v3374
        %v4983 = vpack.c.b16 %v3391, %v3383
        %v4984 = vpack.c.b16 %v3392, %v3384
        %v4985 = vpack.c.b16 %v3393, %v3385
        %v4986 = vpack.c.b16 %v3394, %v3386
        %v4987 = vpack.c.b16 %v3395, %v3387
        %v4988 = vpack.c.b16 %v3396, %v3388
        %v4989 = vpack.c.b16 %v3397, %v3389
        %v4990 = vpack.c.b16 %v3398, %v3390
        %v4991 = vpack.c.b16 %v3407, %v3399
        %v4992 = vpack.c.b16 %v3408, %v3400
        %v4993 = vpack.c.b16 %v3409, %v3401
        %v4994 = vpack.c.b16 %v3410, %v3402
        %v4995 = vpack.c.b16 %v3411, %v3403
        %v4996 = vpack.c.b16 %v3412, %v3404
        %v4997 = vpack.c.b16 %v3413, %v3405
        %v4998 = vpack.c.b16 %v3414, %v3406
        %v4999 = vpack.c.b16 %v3423, %v3415
        %v5000 = vpack.c.b16 %v3424, %v3416
        %v5001 = vpack.c.b16 %v3425, %v3417
        %v5002 = vpack.c.b16 %v3426, %v3418
        %v5003 = vpack.c.b16 %v3427, %v3419
        %v5004 = vpack.c.b16 %v3428, %v3420
        %v5005 = vpack.c.b16 %v3429, %v3421
        %v5006 = vpack.c.b16 %v3430, %v3422
        %v5007 = vpack.c.b16 %v3439, %v3431
        %v5008 = vpack.c.b16 %v3440, %v3432
        %v5009 = vpack.c.b16 %v3441, %v3433
        %v5010 = vpack.c.b16 %v3442, %v3434
        %v5011 = vpack.c.b16 %v3443, %v3435
        %v5012 = vpack.c.b16 %v3444, %v3436
        %v5013 = vpack.c.b16 %v3445, %v3437
        %v5014 = vpack.c.b16 %v3446, %v3438
        %v5015 = vpack.c.b16 %v3455, %v3447
        %v5016 = vpack.c.b16 %v3456, %v3448
        %v5017 = vpack.c.b16 %v3457, %v3449
        %v5018 = vpack.c.b16 %v3458, %v3450
        %v5019 = vpack.c.b16 %v3459, %v3451
        %v5020 = vpack.c.b16 %v3460, %v3452
        %v5021 = vpack.c.b16 %v3461, %v3453
        %v5022 = vpack.c.b16 %v3462, %v3454
        %v5023 = vpack.c.b16 %v3471, %v3463
        %v5024 = vpack.c.b16 %v3472, %v3464
        %v5025 = vpack.c.b16 %v3473, %v3465
        %v5026 = vpack.c.b16 %v3474, %v3466
        %v5027 = vpack.c.b16 %v3475, %v3467
        %v5028 = vpack.c.b16 %v3476, %v3468
        %v5029 = vpack.c.b16 %v3477, %v3469
        %v5030 = vpack.c.b16 %v3478, %v3470
        %v5031 = vpack.c.b16 %v3487, %v3479
        %v5032 = vpack.c.b16 %v3488, %v3480
        %v5033 = vpack.c.b16 %v3489, %v3481
        %v5034 = vpack.c.b16 %v3490, %v3482
        %v5035 = vpack.c.b16 %v3491, %v3483
        %v5036 = vpack.c.b16 %v3492, %v3484
        %v5037 = vpack.c.b16 %v3493, %v3485
        %v5038 = vpack.c.b16 %v3494, %v3486
        %v5039 = vpack.c.b16 %v3503, %v3495
        %v5040 = vpack.c.b16 %v3504, %v3496
        %v5041 = vpack.c.b16 %v3505, %v3497
        %v5042 = vpack.c.b16 %v3506, %v3498
        %v5043 = vpack.c.b16 %v3507, %v3499
        %v5044 = vpack.c.b16 %v3508, %v3500
        %v5045 = vpack.c.b16 %v3509, %v3501
        %v5046 = vpack.c.b16 %v3510, %v3502
        %v5047 = vpack.c.b16 %v3519, %v3511
        %v5048 = vpack.c.b16 %v3520, %v3512
        %v5049 = vpack.c.b16 %v3521, %v3513
        %v5050 = vpack.c.b16 %v3522, %v3514
        %v5051 = vpack.c.b16 %v3523, %v3515
        %v5052 = vpack.c.b16 %v3524, %v3516
        %v5053 = vpack.c.b16 %v3525, %v3517
        %v5054 = vpack.c.b16 %v3526, %v3518
        %v5055 = vpack.c.b16 %v3535, %v3527
        %v5056 = vpack.c.b16 %v3536, %v3528
        %v5057 = vpack.c.b16 %v3537, %v3529
        %v5058 = vpack.c.b16 %v3538, %v3530
        %v5059 = vpack.c.b16 %v3539, %v3531
        %v5060 = vpack.c.b16 %v3540, %v3532
        %v5061 = vpack.c.b16 %v3541, %v3533
        %v5062 = vpack.c.b16 %v3542, %v3534
        %v5063 = vpack.c.b16 %v3551, %v3543
        %v5064 = vpack.c.b16 %v3552, %v3544
        %v5065 = vpack.c.b16 %v3553, %v3545
        %v5066 = vpack.c.b16 %v3554, %v3546
        %v5067 = vpack.c.b16 %v3555, %v3547
        %v5068 = vpack.c.b16 %v3556, %v3548
        %v5069 = vpack.c.b16 %v3557, %v3549
        %v5070 = vpack.c.b16 %v3558, %v3550
        %v5071 = vpack.c.b16 %v3567, %v3559
        %v5072 = vpack.c.b16 %v3568, %v3560
        %v5073 = vpack.c.b16 %v3569, %v3561
        %v5074 = vpack.c.b16 %v3570, %v3562
        %v5075 = vpack.c.b16 %v3571, %v3563
        %v5076 = vpack.c.b16 %v3572, %v3564
        %v5077 = vpack.c.b16 %v3573, %v3565
        %v5078 = vpack.c.b16 %v3574, %v3566
        %v5079 = vpack.c.b16 %v3583, %v3575
        %v5080 = vpack.c.b16 %v3584, %v3576
        %v5081 = vpack.c.b16 %v3585, %v3577
        %v5082 = vpack.c.b16 %v3586, %v3578
        %v5083 = vpack.c.b16 %v3587, %v3579
        %v5084 = vpack.c.b16 %v3588, %v3580
        %v5085 = vpack.c.b16 %v3589, %v3581
        %v5086 = vpack.c.b16 %v3590, %v3582
        %v5087 = vpack.c.b16 %v3599, %v3591
        %v5088 = vpack.c.b16 %v3600, %v3592
        %v5089 = vpack.c.b16 %v3601, %v3593
        %v5090 = vpack.c.b16 %v3602, %v3594
        %v5091 = vpack.c.b16 %v3603, %v3595
        %v5092 = vpack.c.b16 %v3604, %v3596
        %v5093 = vpack.c.b16 %v3605, %v3597
        %v5094 = vpack.c.b16 %v3606, %v3598
        %v5095 = vpack.c.b16 %v3615, %v3607
        %v5096 = vpack.c.b16 %v3616, %v3608
        %v5097 = vpack.c.b16 %v3617, %v3609
        %v5098 = vpack.c.b16 %v3618, %v3610
        %v5099 = vpack.c.b16 %v3619, %v3611
        %v5100 = vpack.c.b16 %v3620, %v3612
        %v5101 = vpack.c.b16 %v3621, %v3613
        %v5102 = vpack.c.b16 %v3622, %v3614
        %v5103 = vpack.c.b16 %v3631, %v3623
        %v5104 = vpack.c.b16 %v3632, %v3624
        %v5105 = vpack.c.b16 %v3633, %v3625
        %v5106 = vpack.c.b16 %v3634, %v3626
        %v5107 = vpack.c.b16 %v3635, %v3627
        %v5108 = vpack.c.b16 %v3636, %v3628
        %v5109 = vpack.c.b16 %v3637, %v3629
        %v5110 = vpack.c.b16 %v3638, %v3630
        %v5111 = vpack.c.b16 %v3647, %v3639
        %v5112 = vpack.c.b16 %v3648, %v3640
        %v5113 = vpack.c.b16 %v3649, %v3641
        %v5114 = vpack.c.b16 %v3650, %v3642
        %v5115 = vpack.c.b16 %v3651, %v3643
        %v5116 = vpack.c.b16 %v3652, %v3644
        %v5117 = vpack.c.b16 %v3653, %v3645
        %v5118 = vpack.c.b16 %v3654, %v3646
        %v5119 = vpack.c.b16 %v3663, %v3655
        %v5120 = vpack.c.b16 %v3664, %v3656
        %v5121 = vpack.c.b16 %v3665, %v3657
        %v5122 = vpack.c.b16 %v3666, %v3658
        %v5123 = vpack.c.b16 %v3667, %v3659
        %v5124 = vpack.c.b16 %v3668, %v3660
        %v5125 = vpack.c.b16 %v3669, %v3661
        %v5126 = vpack.c.b16 %v3670, %v3662
        %v5127 = vpack.c.b16 %v3679, %v3671
        %v5128 = vpack.c.b16 %v3680, %v3672
        %v5129 = vpack.c.b16 %v3681, %v3673
        %v5130 = vpack.c.b16 %v3682, %v3674
        %v5131 = vpack.c.b16 %v3683, %v3675
        %v5132 = vpack.c.b16 %v3684, %v3676
        %v5133 = vpack.c.b16 %v3685, %v3677
        %v5134 = vpack.c.b16 %v3686, %v3678
        %v5135 = vpack.c.b16 %v3695, %v3687
        %v5136 = vpack.c.b16 %v3696, %v3688
        %v5137 = vpack.c.b16 %v3697, %v3689
        %v5138 = vpack.c.b16 %v3698, %v3690
        %v5139 = vpack.c.b16 %v3699, %v3691
        %v5140 = vpack.c.b16 %v3700, %v3692
        %v5141 = vpack.c.b16 %v3701, %v3693
        %v5142 = vpack.c.b16 %v3702, %v3694
        %v5143 = vpack.c.b16 %v3711, %v3703
        %v5144 = vpack.c.b16 %v3712, %v3704
        %v5145 = vpack.c.b16 %v3713, %v3705
        %v5146 = vpack.c.b16 %v3714, %v3706
        %v5147 = vpack.c.b16 %v3715, %v3707
        %v5148 = vpack.c.b16 %v3716, %v3708
        %v5149 = vpack.c.b16 %v3717, %v3709
        %v5150 = vpack.c.b16 %v3718, %v3710
        %v5151 = vpack.c.b16 %v3727, %v3719
        %v5152 = vpack.c.b16 %v3728, %v3720
        %v5153 = vpack.c.b16 %v3729, %v3721
        %v5154 = vpack.c.b16 %v3730, %v3722
        %v5155 = vpack.c.b16 %v3731, %v3723
        %v5156 = vpack.c.b16 %v3732, %v3724
        %v5157 = vpack.c.b16 %v3733, %v3725
        %v5158 = vpack.c.b16 %v3734, %v3726
        %v5159 = vpack.c.b16 %v3743, %v3735
        %v5160 = vpack.c.b16 %v3744, %v3736
        %v5161 = vpack.c.b16 %v3745, %v3737
        %v5162 = vpack.c.b16 %v3746, %v3738
        %v5163 = vpack.c.b16 %v3747, %v3739
        %v5164 = vpack.c.b16 %v3748, %v3740
        %v5165 = vpack.c.b16 %v3749, %v3741
        %v5166 = vpack.c.b16 %v3750, %v3742
        %v5167 = vpack.c.b16 %v3759, %v3751
        %v5168 = vpack.c.b16 %v3760, %v3752
        %v5169 = vpack.c.b16 %v3761, %v3753
        %v5170 = vpack.c.b16 %v3762, %v3754
        %v5171 = vpack.c.b16 %v3763, %v3755
        %v5172 = vpack.c.b16 %v3764, %v3756
        %v5173 = vpack.c.b16 %v3765, %v3757
        %v5174 = vpack.c.b16 %v3766, %v3758
        %v5175 = vpack.c.b16 %v3775, %v3767
        %v5176 = vpack.c.b16 %v3776, %v3768
        %v5177 = vpack.c.b16 %v3777, %v3769
        %v5178 = vpack.c.b16 %v3778, %v3770
        %v5179 = vpack.c.b16 %v3779, %v3771
        %v5180 = vpack.c.b16 %v3780, %v3772
        %v5181 = vpack.c.b16 %v3781, %v3773
        %v5182 = vpack.c.b16 %v3782, %v3774
        %v5183 = vpack.c.b16 %v3791, %v3783
        %v5184 = vpack.c.b16 %v3792, %v3784
        %v5185 = vpack.c.b16 %v3793, %v3785
        %v5186 = vpack.c.b16 %v3794, %v3786
        %v5187 = vpack.c.b16 %v3795, %v3787
        %v5188 = vpack.c.b16 %v3796, %v3788
        %v5189 = vpack.c.b16 %v3797, %v3789
        %v5190 = vpack.c.b16 %v3798, %v3790
        %v5191 = vpack.c.b16 %v3807, %v3799
        %v5192 = vpack.c.b16 %v3808, %v3800
        %v5193 = vpack.c.b16 %v3809, %v3801
        %v5194 = vpack.c.b16 %v3810, %v3802
        %v5195 = vpack.c.b16 %v3811, %v3803
        %v5196 = vpack.c.b16 %v3812, %v3804
        %v5197 = vpack.c.b16 %v3813, %v3805
        %v5198 = vpack.c.b16 %v3814, %v3806
        %v5199 = vpack.c.b16 %v3823, %v3815
        %v5200 = vpack.c.b16 %v3824, %v3816
        %v5201 = vpack.c.b16 %v3825, %v3817
        %v5202 = vpack.c.b16 %v3826, %v3818
        %v5203 = vpack.c.b16 %v3827, %v3819
        %v5204 = vpack.c.b16 %v3828, %v3820
        %v5205 = vpack.c.b16 %v3829, %v3821
        %v5206 = vpack.c.b16 %v3830, %v3822
        %v5207 = vpack.c.b16 %v3839, %v3831
        %v5208 = vpack.c.b16 %v3840, %v3832
        %v5209 = vpack.c.b16 %v3841, %v3833
        %v5210 = vpack.c.b16 %v3842, %v3834
        %v5211 = vpack.c.b16 %v3843, %v3835
        %v5212 = vpack.c.b16 %v3844, %v3836
        %v5213 = vpack.c.b16 %v3845, %v3837
        %v5214 = vpack.c.b16 %v3846, %v3838
        %v5215 = vpack.c.b16 %v3855, %v3847
        %v5216 = vpack.c.b16 %v3856, %v3848
        %v5217 = vpack.c.b16 %v3857, %v3849
        %v5218 = vpack.c.b16 %v3858, %v3850
        %v5219 = vpack.c.b16 %v3859, %v3851
        %v5220 = vpack.c.b16 %v3860, %v3852
        %v5221 = vpack.c.b16 %v3861, %v3853
        %v5222 = vpack.c.b16 %v3862, %v3854
        %v5223 = vpack.c.b16 %v3871, %v3863
        %v5224 = vpack.c.b16 %v3872, %v3864
        %v5225 = vpack.c.b16 %v3873, %v3865
        %v5226 = vpack.c.b16 %v3874, %v3866
        %v5227 = vpack.c.b16 %v3875, %v3867
        %v5228 = vpack.c.b16 %v3876, %v3868
        %v5229 = vpack.c.b16 %v3877, %v3869
        %v5230 = vpack.c.b16 %v3878, %v3870
        %v5231 = vpack.c.b16 %v3887, %v3879
        %v5232 = vpack.c.b16 %v3888, %v3880
        %v5233 = vpack.c.b16 %v3889, %v3881
        %v5234 = vpack.c.b16 %v3890, %v3882
        %v5235 = vpack.c.b16 %v3891, %v3883
        %v5236 = vpack.c.b16 %v3892, %v3884
        %v5237 = vpack.c.b16 %v3893, %v3885
        %v5238 = vpack.c.b16 %v3894, %v3886
        %v5239 = vpack.c.b16 %v3903, %v3895
        %v5240 = vpack.c.b16 %v3904, %v3896
        %v5241 = vpack.c.b16 %v3905, %v3897
        %v5242 = vpack.c.b16 %v3906, %v3898
        %v5243 = vpack.c.b16 %v3907, %v3899
        %v5244 = vpack.c.b16 %v3908, %v3900
        %v5245 = vpack.c.b16 %v3909, %v3901
        %v5246 = vpack.c.b16 %v3910, %v3902
        %v5247 = vpack.c.b16 %v3919, %v3911
        %v5248 = vpack.c.b16 %v3920, %v3912
        %v5249 = vpack.c.b16 %v3921, %v3913
        %v5250 = vpack.c.b16 %v3922, %v3914
        %v5251 = vpack.c.b16 %v3923, %v3915
        %v5252 = vpack.c.b16 %v3924, %v3916
        %v5253 = vpack.c.b16 %v3925, %v3917
        %v5254 = vpack.c.b16 %v3926, %v3918
        %v5255 = vpack.c.b16 %v3935, %v3927
        %v5256 = vpack.c.b16 %v3936, %v3928
        %v5257 = vpack.c.b16 %v3937, %v3929
        %v5258 = vpack.c.b16 %v3938, %v3930
        %v5259 = vpack.c.b16 %v3939, %v3931
        %v5260 = vpack.c.b16 %v3940, %v3932
        %v5261 = vpack.c.b16 %v3941, %v3933
        %v5262 = vpack.c.b16 %v3942, %v3934
        %v5263 = vpack.c.b16 %v3951, %v3943
        %v5264 = vpack.c.b16 %v3952, %v3944
        %v5265 = vpack.c.b16 %v3953, %v3945
        %v5266 = vpack.c.b16 %v3954, %v3946
        %v5267 = vpack.c.b16 %v3955, %v3947
        %v5268 = vpack.c.b16 %v3956, %v3948
        %v5269 = vpack.c.b16 %v3957, %v3949
        %v5270 = vpack.c.b16 %v3958, %v3950
        %v5271 = vpack.c.b16 %v3967, %v3959
        %v5272 = vpack.c.b16 %v3968, %v3960
        %v5273 = vpack.c.b16 %v3969, %v3961
        %v5274 = vpack.c.b16 %v3970, %v3962
        %v5275 = vpack.c.b16 %v3971, %v3963
        %v5276 = vpack.c.b16 %v3972, %v3964
        %v5277 = vpack.c.b16 %v3973, %v3965
        %v5278 = vpack.c.b16 %v3974, %v3966
        %v5279 = vpack.c.b16 %v3983, %v3975
        %v5280 = vpack.c.b16 %v3984, %v3976
        %v5281 = vpack.c.b16 %v3985, %v3977
        %v5282 = vpack.c.b16 %v3986, %v3978
        %v5283 = vpack.c.b16 %v3987, %v3979
        %v5284 = vpack.c.b16 %v3988, %v3980
        %v5285 = vpack.c.b16 %v3989, %v3981
        %v5286 = vpack.c.b16 %v3990, %v3982
        %v5287 = vpack.c.b16 %v3999, %v3991
        %v5288 = vpack.c.b16 %v4000, %v3992
        %v5289 = vpack.c.b16 %v4001, %v3993
        %v5290 = vpack.c.b16 %v4002, %v3994
        %v5291 = vpack.c.b16 %v4003, %v3995
        %v5292 = vpack.c.b16 %v4004, %v3996
        %v5293 = vpack.c.b16 %v4005, %v3997
        %v5294 = vpack.c.b16 %v4006, %v3998
        %v5295 = vpack.c.b16 %v4015, %v4007
        %v5296 = vpack.c.b16 %v4016, %v4008
        %v5297 = vpack.c.b16 %v4017, %v4009
        %v5298 = vpack.c.b16 %v4018, %v4010
        %v5299 = vpack.c.b16 %v4019, %v4011
        %v5300 = vpack.c.b16 %v4020, %v4012
        %v5301 = vpack.c.b16 %v4021, %v4013
        %v5302 = vpack.c.b16 %v4022, %v4014
        %v5303 = vpack.c.b16 %v4031, %v4023
        %v5304 = vpack.c.b16 %v4032, %v4024
        %v5305 = vpack.c.b16 %v4033, %v4025
        %v5306 = vpack.c.b16 %v4034, %v4026
        %v5307 = vpack.c.b16 %v4035, %v4027
        %v5308 = vpack.c.b16 %v4036, %v4028
        %v5309 = vpack.c.b16 %v4037, %v4029
        %v5310 = vpack.c.b16 %v4038, %v4030
        %v5311 = vpack.c.b16 %v4047, %v4039
        %v5312 = vpack.c.b16 %v4048, %v4040
        %v5313 = vpack.c.b16 %v4049, %v4041
        %v5314 = vpack.c.b16 %v4050, %v4042
        %v5315 = vpack.c.b16 %v4051, %v4043
        %v5316 = vpack.c.b16 %v4052, %v4044
        %v5317 = vpack.c.b16 %v4053, %v4045
        %v5318 = vpack.c.b16 %v4054, %v4046
        %v5319 = vpack.c.b16 %v4063, %v4055
        %v5320 = vpack.c.b16 %v4064, %v4056
        %v5321 = vpack.c.b16 %v4065, %v4057
        %v5322 = vpack.c.b16 %v4066, %v4058
        %v5323 = vpack.c.b16 %v4067, %v4059
        %v5324 = vpack.c.b16 %v4068, %v4060
        %v5325 = vpack.c.b16 %v4069, %v4061
        %v5326 = vpack.c.b16 %v4070, %v4062
        %v5327 = vpack.c.b16 %v4079, %v4071
        %v5328 = vpack.c.b16 %v4080, %v4072
        %v5329 = vpack.c.b16 %v4081, %v4073
        %v5330 = vpack.c.b16 %v4082, %v4074
        %v5331 = vpack.c.b16 %v4083, %v4075
        %v5332 = vpack.c.b16 %v4084, %v4076
        %v5333 = vpack.c.b16 %v4085, %v4077
        %v5334 = vpack.c.b16 %v4086, %v4078
        %v5335 = vpack.c.b16 %v4095, %v4087
        %v5336 = vpack.c.b16 %v4096, %v4088
        %v5337 = vpack.c.b16 %v4097, %v4089
        %v5338 = vpack.c.b16 %v4098, %v4090
        %v5339 = vpack.c.b16 %v4099, %v4091
        %v5340 = vpack.c.b16 %v4100, %v4092
        %v5341 = vpack.c.b16 %v4101, %v4093
        %v5342 = vpack.c.b16 %v4102, %v4094
        %v5343 = vpack.c.b16 %v4111, %v4103
        %v5344 = vpack.c.b16 %v4112, %v4104
        %v5345 = vpack.c.b16 %v4113, %v4105
        %v5346 = vpack.c.b16 %v4114, %v4106
        %v5347 = vpack.c.b16 %v4115, %v4107
        %v5348 = vpack.c.b16 %v4116, %v4108
        %v5349 = vpack.c.b16 %v4117, %v4109
        %v5350 = vpack.c.b16 %v4118, %v4110
        %v5351 = vpack.c.b16 %v4127, %v4119
        %v5352 = vpack.c.b16 %v4128, %v4120
        %v5353 = vpack.c.b16 %v4129, %v4121
        %v5354 = vpack.c.b16 %v4130, %v4122
        %v5355 = vpack.c.b16 %v4131, %v4123
        %v5356 = vpack.c.b16 %v4132, %v4124
        %v5357 = vpack.c.b16 %v4133, %v4125
        %v5358 = vpack.c.b16 %v4134, %v4126
        %v5359 = vpack.c.b16 %v4143, %v4135
        %v5360 = vpack.c.b16 %v4144, %v4136
        %v5361 = vpack.c.b16 %v4145, %v4137
        %v5362 = vpack.c.b16 %v4146, %v4138
        %v5363 = vpack.c.b16 %v4147, %v4139
        %v5364 = vpack.c.b16 %v4148, %v4140
        %v5365 = vpack.c.b16 %v4149, %v4141
        %v5366 = vpack.c.b16 %v4150, %v4142
        %v5367 = vpack.c.b16 %v4159, %v4151
        %v5368 = vpack.c.b16 %v4160, %v4152
        %v5369 = vpack.c.b16 %v4161, %v4153
        %v5370 = vpack.c.b16 %v4162, %v4154
        %v5371 = vpack.c.b16 %v4163, %v4155
        %v5372 = vpack.c.b16 %v4164, %v4156
        %v5373 = vpack.c.b16 %v4165, %v4157
        %v5374 = vpack.c.b16 %v4166, %v4158
        %v5375 = vpack.c.b16 %v4175, %v4167
        %v5376 = vpack.c.b16 %v4176, %v4168
        %v5377 = vpack.c.b16 %v4177, %v4169
        %v5378 = vpack.c.b16 %v4178, %v4170
        %v5379 = vpack.c.b16 %v4179, %v4171
        %v5380 = vpack.c.b16 %v4180, %v4172
        %v5381 = vpack.c.b16 %v4181, %v4173
        %v5382 = vpack.c.b16 %v4182, %v4174
        %v5383 = vpack.c.b16 %v4191, %v4183
        %v5384 = vpack.c.b16 %v4192, %v4184
        %v5385 = vpack.c.b16 %v4193, %v4185
        %v5386 = vpack.c.b16 %v4194, %v4186
        %v5387 = vpack.c.b16 %v4195, %v4187
        %v5388 = vpack.c.b16 %v4196, %v4188
        %v5389 = vpack.c.b16 %v4197, %v4189
        %v5390 = vpack.c.b16 %v4198, %v4190
        %v5391 = vpack.c.b16 %v4207, %v4199
        %v5392 = vpack.c.b16 %v4208, %v4200
        %v5393 = vpack.c.b16 %v4209, %v4201
        %v5394 = vpack.c.b16 %v4210, %v4202
        %v5395 = vpack.c.b16 %v4211, %v4203
        %v5396 = vpack.c.b16 %v4212, %v4204
        %v5397 = vpack.c.b16 %v4213, %v4205
        %v5398 = vpack.c.b16 %v4214, %v4206
        %v5399 = vpack.c.b16 %v4223, %v4215
        %v5400 = vpack.c.b16 %v4224, %v4216
        %v5401 = vpack.c.b16 %v4225, %v4217
        %v5402 = vpack.c.b16 %v4226, %v4218
        %v5403 = vpack.c.b16 %v4227, %v4219
        %v5404 = vpack.c.b16 %v4228, %v4220
        %v5405 = vpack.c.b16 %v4229, %v4221
        %v5406 = vpack.c.b16 %v4230, %v4222
        %v5407 = vpack.c.b16 %v4239, %v4231
        %v5408 = vpack.c.b16 %v4240, %v4232
        %v5409 = vpack.c.b16 %v4241, %v4233
        %v5410 = vpack.c.b16 %v4242, %v4234
        %v5411 = vpack.c.b16 %v4243, %v4235
        %v5412 = vpack.c.b16 %v4244, %v4236
        %v5413 = vpack.c.b16 %v4245, %v4237
        %v5414 = vpack.c.b16 %v4246, %v4238
        %v5415 = vpack.c.b16 %v4255, %v4247
        %v5416 = vpack.c.b16 %v4256, %v4248
        %v5417 = vpack.c.b16 %v4257, %v4249
        %v5418 = vpack.c.b16 %v4258, %v4250
        %v5419 = vpack.c.b16 %v4259, %v4251
        %v5420 = vpack.c.b16 %v4260, %v4252
        %v5421 = vpack.c.b16 %v4261, %v4253
        %v5422 = vpack.c.b16 %v4262, %v4254
        %v5423 = vpack.c.b16 %v4271, %v4263
        %v5424 = vpack.c.b16 %v4272, %v4264
        %v5425 = vpack.c.b16 %v4273, %v4265
        %v5426 = vpack.c.b16 %v4274, %v4266
        %v5427 = vpack.c.b16 %v4275, %v4267
        %v5428 = vpack.c.b16 %v4276, %v4268
        %v5429 = vpack.c.b16 %v4277, %v4269
        %v5430 = vpack.c.b16 %v4278, %v4270
        %v5431 = vpack.c.b16 %v4287, %v4279
        %v5432 = vpack.c.b16 %v4288, %v4280
        %v5433 = vpack.c.b16 %v4289, %v4281
        %v5434 = vpack.c.b16 %v4290, %v4282
        %v5435 = vpack.c.b16 %v4291, %v4283
        %v5436 = vpack.c.b16 %v4292, %v4284
        %v5437 = vpack.c.b16 %v4293, %v4285
        %v5438 = vpack.c.b16 %v4294, %v4286
        %v5439 = vpack.c.b16 %v4303, %v4295
        %v5440 = vpack.c.b16 %v4304, %v4296
        %v5441 = vpack.c.b16 %v4305, %v4297
        %v5442 = vpack.c.b16 %v4306, %v4298
        %v5443 = vpack.c.b16 %v4307, %v4299
        %v5444 = vpack.c.b16 %v4308, %v4300
        %v5445 = vpack.c.b16 %v4309, %v4301
        %v5446 = vpack.c.b16 %v4310, %v4302
        %v5447 = vpack.c.b16 %v4319, %v4311
        %v5448 = vpack.c.b16 %v4320, %v4312
        %v5449 = vpack.c.b16 %v4321, %v4313
        %v5450 = vpack.c.b16 %v4322, %v4314
        %v5451 = vpack.c.b16 %v4323, %v4315
        %v5452 = vpack.c.b16 %v4324, %v4316
        %v5453 = vpack.c.b16 %v4325, %v4317
        %v5454 = vpack.c.b16 %v4326, %v4318
        %v5455 = vpack.c.b16 %v4335, %v4327
        %v5456 = vpack.c.b16 %v4336, %v4328
        %v5457 = vpack.c.b16 %v4337, %v4329
        %v5458 = vpack.c.b16 %v4338, %v4330
        %v5459 = vpack.c.b16 %v4339, %v4331
        %v5460 = vpack.c.b16 %v4340, %v4332
        %v5461 = vpack.c.b16 %v4341, %v4333
        %v5462 = vpack.c.b16 %v4342, %v4334
        %v5463 = vpack.c.b16 %v4351, %v4343
        %v5464 = vpack.c.b16 %v4352, %v4344
        %v5465 = vpack.c.b16 %v4353, %v4345
        %v5466 = vpack.c.b16 %v4354, %v4346
        %v5467 = vpack.c.b16 %v4355, %v4347
        %v5468 = vpack.c.b16 %v4356, %v4348
        %v5469 = vpack.c.b16 %v4357, %v4349
        %v5470 = vpack.c.b16 %v4358, %v4350
        %v5471 = vpack.c.b16 %v4367, %v4359
        %v5472 = vpack.c.b16 %v4368, %v4360
        %v5473 = vpack.c.b16 %v4369, %v4361
        %v5474 = vpack.c.b16 %v4370, %v4362
        %v5475 = vpack.c.b16 %v4371, %v4363
        %v5476 = vpack.c.b16 %v4372, %v4364
        %v5477 = vpack.c.b16 %v4373, %v4365
        %v5478 = vpack.c.b16 %v4374, %v4366
        %v5479 = vpack.c.b16 %v4383, %v4375
        %v5480 = vpack.c.b16 %v4384, %v4376
        %v5481 = vpack.c.b16 %v4385, %v4377
        %v5482 = vpack.c.b16 %v4386, %v4378
        %v5483 = vpack.c.b16 %v4387, %v4379
        %v5484 = vpack.c.b16 %v4388, %v4380
        %v5485 = vpack.c.b16 %v4389, %v4381
        %v5486 = vpack.c.b16 %v4390, %v4382
        %v5487 = vpack.c.b16 %v4399, %v4391
        %v5488 = vpack.c.b16 %v4400, %v4392
        %v5489 = vpack.c.b16 %v4401, %v4393
        %v5490 = vpack.c.b16 %v4402, %v4394
        %v5491 = vpack.c.b16 %v4403, %v4395
        %v5492 = vpack.c.b16 %v4404, %v4396
        %v5493 = vpack.c.b16 %v4405, %v4397
        %v5494 = vpack.c.b16 %v4406, %v4398
        %v5495 = vpack.c.b16 %v4415, %v4407
        %v5496 = vpack.c.b16 %v4416, %v4408
        %v5497 = vpack.c.b16 %v4417, %v4409
        %v5498 = vpack.c.b16 %v4418, %v4410
        %v5499 = vpack.c.b16 %v4419, %v4411
        %v5500 = vpack.c.b16 %v4420, %v4412
        %v5501 = vpack.c.b16 %v4421, %v4413
        %v5502 = vpack.c.b16 %v4422, %v4414
        %v5503 = vpack.c.b16 %v4431, %v4423
        %v5504 = vpack.c.b16 %v4432, %v4424
        %v5505 = vpack.c.b16 %v4433, %v4425
        %v5506 = vpack.c.b16 %v4434, %v4426
        %v5507 = vpack.c.b16 %v4435, %v4427
        %v5508 = vpack.c.b16 %v4436, %v4428
        %v5509 = vpack.c.b16 %v4437, %v4429
        %v5510 = vpack.c.b16 %v4438, %v4430
        %v5511 = vpack.c.b16 %v4447, %v4439
        %v5512 = vpack.c.b16 %v4448, %v4440
        %v5513 = vpack.c.b16 %v4449, %v4441
        %v5514 = vpack.c.b16 %v4450, %v4442
        %v5515 = vpack.c.b16 %v4451, %v4443
        %v5516 = vpack.c.b16 %v4452, %v4444
        %v5517 = vpack.c.b16 %v4453, %v4445
        %v5518 = vpack.c.b16 %v4454, %v4446
        %v5519 = vpack.c.b16 %v4463, %v4455
        %v5520 = vpack.c.b16 %v4464, %v4456
        %v5521 = vpack.c.b16 %v4465, %v4457
        %v5522 = vpack.c.b16 %v4466, %v4458
        %v5523 = vpack.c.b16 %v4467, %v4459
        %v5524 = vpack.c.b16 %v4468, %v4460
        %v5525 = vpack.c.b16 %v4469, %v4461
        %v5526 = vpack.c.b16 %v4470, %v4462
        %v5527 = vpack.c.b16 %v4479, %v4471
        %v5528 = vpack.c.b16 %v4480, %v4472
        %v5529 = vpack.c.b16 %v4481, %v4473
        %v5530 = vpack.c.b16 %v4482, %v4474
        %v5531 = vpack.c.b16 %v4483, %v4475
        %v5532 = vpack.c.b16 %v4484, %v4476
        %v5533 = vpack.c.b16 %v4485, %v4477
        %v5534 = vpack.c.b16 %v4486, %v4478
        %v5535 = vpack.c.b16 %v4495, %v4487
        %v5536 = vpack.c.b16 %v4496, %v4488
        %v5537 = vpack.c.b16 %v4497, %v4489
        %v5538 = vpack.c.b16 %v4498, %v4490
        %v5539 = vpack.c.b16 %v4499, %v4491
        %v5540 = vpack.c.b16 %v4500, %v4492
        %v5541 = vpack.c.b16 %v4501, %v4493
        %v5542 = vpack.c.b16 %v4502, %v4494
        %v5543 = vpack.c.b16 %v4511, %v4503
        %v5544 = vpack.c.b16 %v4512, %v4504
        %v5545 = vpack.c.b16 %v4513, %v4505
        %v5546 = vpack.c.b16 %v4514, %v4506
        %v5547 = vpack.c.b16 %v4515, %v4507
        %v5548 = vpack.c.b16 %v4516, %v4508
        %v5549 = vpack.c.b16 %v4517, %v4509
        %v5550 = vpack.c.b16 %v4518, %v4510
        %v5551 = vpack.c.b16 %v4527, %v4519
        %v5552 = vpack.c.b16 %v4528, %v4520
        %v5553 = vpack.c.b16 %v4529, %v4521
        %v5554 = vpack.c.b16 %v4530, %v4522
        %v5555 = vpack.c.b16 %v4531, %v4523
        %v5556 = vpack.c.b16 %v4532, %v4524
        %v5557 = vpack.c.b16 %v4533, %v4525
        %v5558 = vpack.c.b16 %v4534, %v4526
        %6583 = vmatprep.subr.bf16.mxu0 %v4536
        %6584 = vmatpush1.bf16.msra.mxu0 %v4535
        %6585 = vmatprep.subr.bf16.mxu0 %v4544
        %6586 = vmatpush1.bf16.msra.mxu0 %v4543
        %6587 = vmatprep.subr.bf16.mxu0 %v4552
        %6588 = vmatpush1.bf16.msra.mxu0 %v4551
        %6589 = vmatprep.subr.bf16.mxu0 %v4560
        %6590 = vmatpush1.bf16.msra.mxu0 %v4559
        %6591 = vmatprep.subr.bf16.mxu0 %v4568
        %6592 = vmatpush1.bf16.msra.mxu0 %v4567
        %6593 = vmatprep.subr.bf16.mxu0 %v4576
        %6594 = vmatpush1.bf16.msra.mxu0 %v4575
        %6595 = vmatprep.subr.bf16.mxu0 %v4584
        %6596 = vmatpush1.bf16.msra.mxu0 %v4583
        %6597 = vmatprep.subr.bf16.mxu0 %v4592
        %6598 = vmatpush1.bf16.msra.mxu0 %v4591
        %6599 = vmatprep.subr.bf16.mxu0 %v4600
        %6600 = vmatpush1.bf16.msra.mxu0 %v4599
        %6601 = vmatprep.subr.bf16.mxu0 %v4608
        %6602 = vmatpush1.bf16.msra.mxu0 %v4607
        %6603 = vmatprep.subr.bf16.mxu0 %v4616
        %6604 = vmatpush1.bf16.msra.mxu0 %v4615
        %6605 = vmatprep.subr.bf16.mxu0 %v4624
        %6606 = vmatpush1.bf16.msra.mxu0 %v4623
        %6607 = vmatprep.subr.bf16.mxu0 %v4632
        %6608 = vmatpush1.bf16.msra.mxu0 %v4631
        %6609 = vmatprep.subr.bf16.mxu0 %v4640
        %6610 = vmatpush1.bf16.msra.mxu0 %v4639
        %6611 = vmatprep.subr.bf16.mxu0 %v4648
        %6612 = vmatpush1.bf16.msra.mxu0 %v4647
        %6613 = vmatprep.subr.bf16.mxu0 %v4656
        %6614 = vmatpush1.bf16.msra.mxu0 %v4655
        %6615 = vmatprep.mubr.bf16.mxu0 %v1432
        %6616 = vmatmul.mubr.bf16.gmra.mrb[0].mxu0 %v1431
        %v6617 = vpop.f32.mrb[0].mxu0
        %v6618 = vadd.f32 %v1370, %v6617
        %v6619 = vpop.f32.mrb[0].mxu0
        %v6620 = vadd.f32 %v1374, %v6619
        %v6621 = vpop.f32.mrb[0].mxu0
        %v6622 = vpop.f32.mrb[0].mxu0
        %6623 = vdwg.mxu0
        %6624 = vmatprep.subr.bf16.mxu0 %v4664
        %6625 = vmatpush1.bf16.msra.mxu0 %v4663
        %6626 = vmatprep.subr.bf16.mxu0 %v4672
        %6627 = vmatpush1.bf16.msra.mxu0 %v4671
        %6628 = vmatprep.subr.bf16.mxu0 %v4680
        %6629 = vmatpush1.bf16.msra.mxu0 %v4679
        %6630 = vmatprep.subr.bf16.mxu0 %v4688
        %6631 = vmatpush1.bf16.msra.mxu0 %v4687
        %6632 = vmatprep.subr.bf16.mxu0 %v4696
        %6633 = vmatpush1.bf16.msra.mxu0 %v4695
        %6634 = vmatprep.subr.bf16.mxu0 %v4704
        %6635 = vmatpush1.bf16.msra.mxu0 %v4703
        %6636 = vmatprep.subr.bf16.mxu0 %v4712
        %6637 = vmatpush1.bf16.msra.mxu0 %v4711
        %6638 = vmatprep.subr.bf16.mxu0 %v4720
        %6639 = vmatpush1.bf16.msra.mxu0 %v4719
        %6640 = vmatprep.subr.bf16.mxu0 %v4728
        %6641 = vmatpush1.bf16.msra.mxu0 %v4727
        %6642 = vmatprep.subr.bf16.mxu0 %v4736
        %6643 = vmatpush1.bf16.msra.mxu0 %v4735
        %6644 = vmatprep.subr.bf16.mxu0 %v4744
        %6645 = vmatpush1.bf16.msra.mxu0 %v4743
        %6646 = vmatprep.subr.bf16.mxu0 %v4752
        %6647 = vmatpush1.bf16.msra.mxu0 %v4751
        %6648 = vmatprep.subr.bf16.mxu0 %v4760
        %6649 = vmatpush1.bf16.msra.mxu0 %v4759
        %6650 = vmatprep.subr.bf16.mxu0 %v4768
        %6651 = vmatpush1.bf16.msra.mxu0 %v4767
        %6652 = vmatprep.subr.bf16.mxu0 %v4776
        %6653 = vmatpush1.bf16.msra.mxu0 %v4775
        %6654 = vmatprep.subr.bf16.mxu0 %v4784
        %6655 = vmatpush1.bf16.msra.mxu0 %v4783
        %6656 = vmatprep.mubr.bf16.mxu0 %v1434
        %6657 = vmatmul.mubr.bf16.gmra.mrb[0].mxu0 %v1433
        %v6658 = vpop.f32.mrb[0].mxu0
        %v6659 = vadd.f32 %v6618, %v6658
        %v6660 = vpop.f32.mrb[0].mxu0
        %v6661 = vadd.f32 %v6620, %v6660
        %v6662 = vpop.f32.mrb[0].mxu0
        %v6663 = vpop.f32.mrb[0].mxu0
        %6664 = vdwg.mxu0
        %6665 = vmatprep.subr.bf16.mxu0 %v4792
        %6666 = vmatpush1.bf16.msra.mxu0 %v4791
        %6667 = vmatprep.subr.bf16.mxu0 %v4800
        %6668 = vmatpush1.bf16.msra.mxu0 %v4799
        %6669 = vmatprep.subr.bf16.mxu0 %v4808
        %6670 = vmatpush1.bf16.msra.mxu0 %v4807
        %6671 = vmatprep.subr.bf16.mxu0 %v4816
        %6672 = vmatpush1.bf16.msra.mxu0 %v4815
        %6673 = vmatprep.subr.bf16.mxu0 %v4824
        %6674 = vmatpush1.bf16.msra.mxu0 %v4823
        %6675 = vmatprep.subr.bf16.mxu0 %v4832
        %6676 = vmatpush1.bf16.msra.mxu0 %v4831
        %6677 = vmatprep.subr.bf16.mxu0 %v4840
        %6678 = vmatpush1.bf16.msra.mxu0 %v4839
        %6679 = vmatprep.subr.bf16.mxu0 %v4848
        %6680 = vmatpush1.bf16.msra.mxu0 %v4847
        %6681 = vmatprep.subr.bf16.mxu0 %v4856
        %6682 = vmatpush1.bf16.msra.mxu0 %v4855
        %6683 = vmatprep.subr.bf16.mxu0 %v4864
        %6684 = vmatpush1.bf16.msra.mxu0 %v4863
        %6685 = vmatprep.subr.bf16.mxu0 %v4872
        %6686 = vmatpush1.bf16.msra.mxu0 %v4871
        %6687 = vmatprep.subr.bf16.mxu0 %v4880
        %6688 = vmatpush1.bf16.msra.mxu0 %v4879
        %6689 = vmatprep.subr.bf16.mxu0 %v4888
        %6690 = vmatpush1.bf16.msra.mxu0 %v4887
        %6691 = vmatprep.subr.bf16.mxu0 %v4896
        %6692 = vmatpush1.bf16.msra.mxu0 %v4895
        %6693 = vmatprep.subr.bf16.mxu0 %v4904
        %6694 = vmatpush1.bf16.msra.mxu0 %v4903
        %6695 = vmatprep.subr.bf16.mxu0 %v4912
        %6696 = vmatpush1.bf16.msra.mxu0 %v4911
        %6697 = vmatprep.mubr.bf16.mxu0 %v1436
        %6698 = vmatmul.mubr.bf16.gmra.mrb[0].mxu0 %v1435
        %v6699 = vpop.f32.mrb[0].mxu0
        %v6700 = vadd.f32 %v6659, %v6699
        %v6701 = vpop.f32.mrb[0].mxu0
        %v6702 = vadd.f32 %v6661, %v6701
        %v6703 = vpop.f32.mrb[0].mxu0
        %v6704 = vpop.f32.mrb[0].mxu0
        %6705 = vdwg.mxu0
        %6706 = vmatprep.subr.bf16.mxu0 %v4920
        %6707 = vmatpush1.bf16.msra.mxu0 %v4919
        %6708 = vmatprep.subr.bf16.mxu0 %v4928
        %6709 = vmatpush1.bf16.msra.mxu0 %v4927
        %6710 = vmatprep.subr.bf16.mxu0 %v4936
        %6711 = vmatpush1.bf16.msra.mxu0 %v4935
        %6712 = vmatprep.subr.bf16.mxu0 %v4944
        %6713 = vmatpush1.bf16.msra.mxu0 %v4943
        %6714 = vmatprep.subr.bf16.mxu0 %v4952
        %6715 = vmatpush1.bf16.msra.mxu0 %v4951
        %6716 = vmatprep.subr.bf16.mxu0 %v4960
        %6717 = vmatpush1.bf16.msra.mxu0 %v4959
        %6718 = vmatprep.subr.bf16.mxu0 %v4968
        %6719 = vmatpush1.bf16.msra.mxu0 %v4967
        %6720 = vmatprep.subr.bf16.mxu0 %v4976
        %6721 = vmatpush1.bf16.msra.mxu0 %v4975
        %6722 = vmatprep.subr.bf16.mxu0 %v4984
        %6723 = vmatpush1.bf16.msra.mxu0 %v4983
        %6724 = vmatprep.subr.bf16.mxu0 %v4992
        %6725 = vmatpush1.bf16.msra.mxu0 %v4991
        %6726 = vmatprep.subr.bf16.mxu0 %v5000
        %6727 = vmatpush1.bf16.msra.mxu0 %v4999
        %6728 = vmatprep.subr.bf16.mxu0 %v5008
        %6729 = vmatpush1.bf16.msra.mxu0 %v5007
        %6730 = vmatprep.subr.bf16.mxu0 %v5016
        %6731 = vmatpush1.bf16.msra.mxu0 %v5015
        %6732 = vmatprep.subr.bf16.mxu0 %v5024
        %6733 = vmatpush1.bf16.msra.mxu0 %v5023
        %6734 = vmatprep.subr.bf16.mxu0 %v5032
        %6735 = vmatpush1.bf16.msra.mxu0 %v5031
        %6736 = vmatprep.subr.bf16.mxu0 %v5040
        %6737 = vmatpush1.bf16.msra.mxu0 %v5039
        %6738 = vmatprep.mubr.bf16.mxu0 %v1438
        %6739 = vmatmul.mubr.bf16.gmra.mrb[0].mxu0 %v1437
        %v6740 = vpop.f32.mrb[0].mxu0
        %v6741 = vadd.f32 %v6700, %v6740
        %v6742 = vpop.f32.mrb[0].mxu0
        %v6743 = vadd.f32 %v6702, %v6742
        %v6744 = vpop.f32.mrb[0].mxu0
        %v6745 = vpop.f32.mrb[0].mxu0
        %6746 = vdwg.mxu0
        %6747 = vmatprep.subr.bf16.mxu0 %v5048
        %6748 = vmatpush1.bf16.msra.mxu0 %v5047
        %6749 = vmatprep.subr.bf16.mxu0 %v5056
        %6750 = vmatpush1.bf16.msra.mxu0 %v5055
        %6751 = vmatprep.subr.bf16.mxu0 %v5064
        %6752 = vmatpush1.bf16.msra.mxu0 %v5063
        %6753 = vmatprep.subr.bf16.mxu0 %v5072
        %6754 = vmatpush1.bf16.msra.mxu0 %v5071
        %6755 = vmatprep.subr.bf16.mxu0 %v5080
        %6756 = vmatpush1.bf16.msra.mxu0 %v5079
        %6757 = vmatprep.subr.bf16.mxu0 %v5088
        %6758 = vmatpush1.bf16.msra.mxu0 %v5087
        %6759 = vmatprep.subr.bf16.mxu0 %v5096
        %6760 = vmatpush1.bf16.msra.mxu0 %v5095
        %6761 = vmatprep.subr.bf16.mxu0 %v5104
        %6762 = vmatpush1.bf16.msra.mxu0 %v5103
        %6763 = vmatprep.subr.bf16.mxu0 %v5112
        %6764 = vmatpush1.bf16.msra.mxu0 %v5111
        %6765 = vmatprep.subr.bf16.mxu0 %v5120
        %6766 = vmatpush1.bf16.msra.mxu0 %v5119
        %6767 = vmatprep.subr.bf16.mxu0 %v5128
        %6768 = vmatpush1.bf16.msra.mxu0 %v5127
        %6769 = vmatprep.subr.bf16.mxu0 %v5136
        %6770 = vmatpush1.bf16.msra.mxu0 %v5135
        %6771 = vmatprep.subr.bf16.mxu0 %v5144
        %6772 = vmatpush1.bf16.msra.mxu0 %v5143
        %6773 = vmatprep.subr.bf16.mxu0 %v5152
        %6774 = vmatpush1.bf16.msra.mxu0 %v5151
        %6775 = vmatprep.subr.bf16.mxu0 %v5160
        %6776 = vmatpush1.bf16.msra.mxu0 %v5159
        %6777 = vmatprep.subr.bf16.mxu0 %v5168
        %6778 = vmatpush1.bf16.msra.mxu0 %v5167
        %6779 = vmatprep.mubr.bf16.mxu0 %v1440
        %6780 = vmatmul.mubr.bf16.gmra.mrb[0].mxu0 %v1439
        %v6781 = vpop.f32.mrb[0].mxu0
        %v6782 = vadd.f32 %v6741, %v6781
        %v6783 = vpop.f32.mrb[0].mxu0
        %v6784 = vadd.f32 %v6743, %v6783
        %v6785 = vpop.f32.mrb[0].mxu0
        %v6786 = vpop.f32.mrb[0].mxu0
        %6787 = vdwg.mxu0
        %6788 = vmatprep.subr.bf16.mxu0 %v5176
        %6789 = vmatpush1.bf16.msra.mxu0 %v5175
        %6790 = vmatprep.subr.bf16.mxu0 %v5184
        %6791 = vmatpush1.bf16.msra.mxu0 %v5183
        %6792 = vmatprep.subr.bf16.mxu0 %v5192
        %6793 = vmatpush1.bf16.msra.mxu0 %v5191
        %6794 = vmatprep.subr.bf16.mxu0 %v5200
        %6795 = vmatpush1.bf16.msra.mxu0 %v5199
        %6796 = vmatprep.subr.bf16.mxu0 %v5208
        %6797 = vmatpush1.bf16.msra.mxu0 %v5207
        %6798 = vmatprep.subr.bf16.mxu0 %v5216
        %6799 = vmatpush1.bf16.msra.mxu0 %v5215
        %6800 = vmatprep.subr.bf16.mxu0 %v5224
        %6801 = vmatpush1.bf16.msra.mxu0 %v5223
        %6802 = vmatprep.subr.bf16.mxu0 %v5232
        %6803 = vmatpush1.bf16.msra.mxu0 %v5231
        %6804 = vmatprep.subr.bf16.mxu0 %v5240
        %6805 = vmatpush1.bf16.msra.mxu0 %v5239
        %6806 = vmatprep.subr.bf16.mxu0 %v5248
        %6807 = vmatpush1.bf16.msra.mxu0 %v5247
        %6808 = vmatprep.subr.bf16.mxu0 %v5256
        %6809 = vmatpush1.bf16.msra.mxu0 %v5255
        %6810 = vmatprep.subr.bf16.mxu0 %v5264
        %6811 = vmatpush1.bf16.msra.mxu0 %v5263
        %6812 = vmatprep.subr.bf16.mxu0 %v5272
        %6813 = vmatpush1.bf16.msra.mxu0 %v5271
        %6814 = vmatprep.subr.bf16.mxu0 %v5280
        %6815 = vmatpush1.bf16.msra.mxu0 %v5279
        %6816 = vmatprep.subr.bf16.mxu0 %v5288
        %6817 = vmatpush1.bf16.msra.mxu0 %v5287
        %6818 = vmatprep.subr.bf16.mxu0 %v5296
        %6819 = vmatpush1.bf16.msra.mxu0 %v5295
        %6820 = vmatprep.mubr.bf16.mxu0 %v1442
        %6821 = vmatmul.mubr.bf16.gmra.mrb[0].mxu0 %v1441
        %v6822 = vpop.f32.mrb[0].mxu0
        %v6823 = vadd.f32 %v6782, %v6822
        %v6824 = vpop.f32.mrb[0].mxu0
        %v6825 = vadd.f32 %v6784, %v6824
        %v6826 = vpop.f32.mrb[0].mxu0
        %v6827 = vpop.f32.mrb[0].mxu0
        %6828 = vdwg.mxu0
        %6829 = vmatprep.subr.bf16.mxu0 %v5304
        %6830 = vmatpush1.bf16.msra.mxu0 %v5303
        %6831 = vmatprep.subr.bf16.mxu0 %v5312
        %6832 = vmatpush1.bf16.msra.mxu0 %v5311
        %6833 = vmatprep.subr.bf16.mxu0 %v5320
        %6834 = vmatpush1.bf16.msra.mxu0 %v5319
        %6835 = vmatprep.subr.bf16.mxu0 %v5328
        %6836 = vmatpush1.bf16.msra.mxu0 %v5327
        %6837 = vmatprep.subr.bf16.mxu0 %v5336
        %6838 = vmatpush1.bf16.msra.mxu0 %v5335
        %6839 = vmatprep.subr.bf16.mxu0 %v5344
        %6840 = vmatpush1.bf16.msra.mxu0 %v5343
        %6841 = vmatprep.subr.bf16.mxu0 %v5352
        %6842 = vmatpush1.bf16.msra.mxu0 %v5351
        %6843 = vmatprep.subr.bf16.mxu0 %v5360
        %6844 = vmatpush1.bf16.msra.mxu0 %v5359
        %6845 = vmatprep.subr.bf16.mxu0 %v5368
        %6846 = vmatpush1.bf16.msra.mxu0 %v5367
        %6847 = vmatprep.subr.bf16.mxu0 %v5376
        %6848 = vmatpush1.bf16.msra.mxu0 %v5375
        %6849 = vmatprep.subr.bf16.mxu0 %v5384
        %6850 = vmatpush1.bf16.msra.mxu0 %v5383
        %6851 = vmatprep.subr.bf16.mxu0 %v5392
        %6852 = vmatpush1.bf16.msra.mxu0 %v5391
        %6853 = vmatprep.subr.bf16.mxu0 %v5400
        %6854 = vmatpush1.bf16.msra.mxu0 %v5399
        %6855 = vmatprep.subr.bf16.mxu0 %v5408
        %6856 = vmatpush1.bf16.msra.mxu0 %v5407
        %6857 = vmatprep.subr.bf16.mxu0 %v5416
        %6858 = vmatpush1.bf16.msra.mxu0 %v5415
        %6859 = vmatprep.subr.bf16.mxu0 %v5424
        %6860 = vmatpush1.bf16.msra.mxu0 %v5423
        %6861 = vmatprep.mubr.bf16.mxu0 %v1444
        %6862 = vmatmul.mubr.bf16.gmra.mrb[0].mxu0 %v1443
        %v6863 = vpop.f32.mrb[0].mxu0
        %v6864 = vadd.f32 %v6823, %v6863
        %v6865 = vpop.f32.mrb[0].mxu0
        %v6866 = vadd.f32 %v6825, %v6865
        %v6867 = vpop.f32.mrb[0].mxu0
        %v6868 = vpop.f32.mrb[0].mxu0
        %6869 = vdwg.mxu0
        %6870 = vmatprep.subr.bf16.mxu0 %v5432
        %6871 = vmatpush1.bf16.msra.mxu0 %v5431
        %6872 = vmatprep.subr.bf16.mxu0 %v5440
        %6873 = vmatpush1.bf16.msra.mxu0 %v5439
        %6874 = vmatprep.subr.bf16.mxu0 %v5448
        %6875 = vmatpush1.bf16.msra.mxu0 %v5447
        %6876 = vmatprep.subr.bf16.mxu0 %v5456
        %6877 = vmatpush1.bf16.msra.mxu0 %v5455
        %6878 = vmatprep.subr.bf16.mxu0 %v5464
        %6879 = vmatpush1.bf16.msra.mxu0 %v5463
        %6880 = vmatprep.subr.bf16.mxu0 %v5472
        %6881 = vmatpush1.bf16.msra.mxu0 %v5471
        %6882 = vmatprep.subr.bf16.mxu0 %v5480
        %6883 = vmatpush1.bf16.msra.mxu0 %v5479
        %6884 = vmatprep.subr.bf16.mxu0 %v5488
        %6885 = vmatpush1.bf16.msra.mxu0 %v5487
        %6886 = vmatprep.subr.bf16.mxu0 %v5496
        %6887 = vmatpush1.bf16.msra.mxu0 %v5495
        %6888 = vmatprep.subr.bf16.mxu0 %v5504
        %6889 = vmatpush1.bf16.msra.mxu0 %v5503
        %6890 = vmatprep.subr.bf16.mxu0 %v5512
        %6891 = vmatpush1.bf16.msra.mxu0 %v5511
        %6892 = vmatprep.subr.bf16.mxu0 %v5520
        %6893 = vmatpush1.bf16.msra.mxu0 %v5519
        %6894 = vmatprep.subr.bf16.mxu0 %v5528
        %6895 = vmatpush1.bf16.msra.mxu0 %v5527
        %6896 = vmatprep.subr.bf16.mxu0 %v5536
        %6897 = vmatpush1.bf16.msra.mxu0 %v5535
        %6898 = vmatprep.subr.bf16.mxu0 %v5544
        %6899 = vmatpush1.bf16.msra.mxu0 %v5543
        %6900 = vmatprep.subr.bf16.mxu0 %v5552
        %6901 = vmatpush1.bf16.msra.mxu0 %v5551
        %6902 = vmatprep.mubr.bf16.mxu0 %v1446
        %6903 = vmatmul.mubr.bf16.gmra.mrb[0].mxu0 %v1445
        %v6904 = vpop.f32.mrb[0].mxu0
        %v6905 = vadd.f32 %v6864, %v6904
        %v6906 = vpop.f32.mrb[0].mxu0
        %v6907 = vadd.f32 %v6866, %v6906
        %v6908 = vpop.f32.mrb[0].mxu0
        %v6909 = vpop.f32.mrb[0].mxu0
        %6910 = vdwg.mxu0
        %6911 = vmatprep.subr.bf16.mxu0 %v4538
        %6912 = vmatpush1.bf16.msra.mxu0 %v4537
        %6913 = vmatprep.subr.bf16.mxu0 %v4546
        %6914 = vmatpush1.bf16.msra.mxu0 %v4545
        %6915 = vmatprep.subr.bf16.mxu0 %v4554
        %6916 = vmatpush1.bf16.msra.mxu0 %v4553
        %6917 = vmatprep.subr.bf16.mxu0 %v4562
        %6918 = vmatpush1.bf16.msra.mxu0 %v4561
        %6919 = vmatprep.subr.bf16.mxu0 %v4570
        %6920 = vmatpush1.bf16.msra.mxu0 %v4569
        %6921 = vmatprep.subr.bf16.mxu0 %v4578
        %6922 = vmatpush1.bf16.msra.mxu0 %v4577
        %6923 = vmatprep.subr.bf16.mxu0 %v4586
        %6924 = vmatpush1.bf16.msra.mxu0 %v4585
        %6925 = vmatprep.subr.bf16.mxu0 %v4594
        %6926 = vmatpush1.bf16.msra.mxu0 %v4593
        %6927 = vmatprep.subr.bf16.mxu0 %v4602
        %6928 = vmatpush1.bf16.msra.mxu0 %v4601
        %6929 = vmatprep.subr.bf16.mxu0 %v4610
        %6930 = vmatpush1.bf16.msra.mxu0 %v4609
        %6931 = vmatprep.subr.bf16.mxu0 %v4618
        %6932 = vmatpush1.bf16.msra.mxu0 %v4617
        %6933 = vmatprep.subr.bf16.mxu0 %v4626
        %6934 = vmatpush1.bf16.msra.mxu0 %v4625
        %6935 = vmatprep.subr.bf16.mxu0 %v4634
        %6936 = vmatpush1.bf16.msra.mxu0 %v4633
        %6937 = vmatprep.subr.bf16.mxu0 %v4642
        %6938 = vmatpush1.bf16.msra.mxu0 %v4641
        %6939 = vmatprep.subr.bf16.mxu0 %v4650
        %6940 = vmatpush1.bf16.msra.mxu0 %v4649
        %6941 = vmatprep.subr.bf16.mxu0 %v4658
        %6942 = vmatpush1.bf16.msra.mxu0 %v4657
        %6943 = vmatprep.mubr.bf16.mxu0 %v1432
        %6944 = vmatmul.mubr.bf16.gmra.mrb[0].mxu0 %v1431
        %v6945 = vpop.f32.mrb[0].mxu0
        %v6946 = vadd.f32 %v1378, %v6945
        %v6947 = vpop.f32.mrb[0].mxu0
        %v6948 = vadd.f32 %v1382, %v6947
        %v6949 = vpop.f32.mrb[0].mxu0
        %v6950 = vpop.f32.mrb[0].mxu0
        %6951 = vdwg.mxu0
        %6952 = vmatprep.subr.bf16.mxu0 %v4666
        %6953 = vmatpush1.bf16.msra.mxu0 %v4665
        %6954 = vmatprep.subr.bf16.mxu0 %v4674
        %6955 = vmatpush1.bf16.msra.mxu0 %v4673
        %6956 = vmatprep.subr.bf16.mxu0 %v4682
        %6957 = vmatpush1.bf16.msra.mxu0 %v4681
        %6958 = vmatprep.subr.bf16.mxu0 %v4690
        %6959 = vmatpush1.bf16.msra.mxu0 %v4689
        %6960 = vmatprep.subr.bf16.mxu0 %v4698
        %6961 = vmatpush1.bf16.msra.mxu0 %v4697
        %6962 = vmatprep.subr.bf16.mxu0 %v4706
        %6963 = vmatpush1.bf16.msra.mxu0 %v4705
        %6964 = vmatprep.subr.bf16.mxu0 %v4714
        %6965 = vmatpush1.bf16.msra.mxu0 %v4713
        %6966 = vmatprep.subr.bf16.mxu0 %v4722
        %6967 = vmatpush1.bf16.msra.mxu0 %v4721
        %6968 = vmatprep.subr.bf16.mxu0 %v4730
        %6969 = vmatpush1.bf16.msra.mxu0 %v4729
        %6970 = vmatprep.subr.bf16.mxu0 %v4738
        %6971 = vmatpush1.bf16.msra.mxu0 %v4737
        %6972 = vmatprep.subr.bf16.mxu0 %v4746
        %6973 = vmatpush1.bf16.msra.mxu0 %v4745
        %6974 = vmatprep.subr.bf16.mxu0 %v4754
        %6975 = vmatpush1.bf16.msra.mxu0 %v4753
        %6976 = vmatprep.subr.bf16.mxu0 %v4762
        %6977 = vmatpush1.bf16.msra.mxu0 %v4761
        %6978 = vmatprep.subr.bf16.mxu0 %v4770
        %6979 = vmatpush1.bf16.msra.mxu0 %v4769
        %6980 = vmatprep.subr.bf16.mxu0 %v4778
        %6981 = vmatpush1.bf16.msra.mxu0 %v4777
        %6982 = vmatprep.subr.bf16.mxu0 %v4786
        %6983 = vmatpush1.bf16.msra.mxu0 %v4785
        %6984 = vmatprep.mubr.bf16.mxu0 %v1434
        %6985 = vmatmul.mubr.bf16.gmra.mrb[0].mxu0 %v1433
        %v6986 = vpop.f32.mrb[0].mxu0
        %v6987 = vadd.f32 %v6946, %v6986
        %v6988 = vpop.f32.mrb[0].mxu0
        %v6989 = vadd.f32 %v6948, %v6988
        %v6990 = vpop.f32.mrb[0].mxu0
        %v6991 = vpop.f32.mrb[0].mxu0
        %6992 = vdwg.mxu0
        %6993 = vmatprep.subr.bf16.mxu0 %v4794
        %6994 = vmatpush1.bf16.msra.mxu0 %v4793
        %6995 = vmatprep.subr.bf16.mxu0 %v4802
        %6996 = vmatpush1.bf16.msra.mxu0 %v4801
        %6997 = vmatprep.subr.bf16.mxu0 %v4810
        %6998 = vmatpush1.bf16.msra.mxu0 %v4809
        %6999 = vmatprep.subr.bf16.mxu0 %v4818
        %7000 = vmatpush1.bf16.msra.mxu0 %v4817
        %7001 = vmatprep.subr.bf16.mxu0 %v4826
        %7002 = vmatpush1.bf16.msra.mxu0 %v4825
        %7003 = vmatprep.subr.bf16.mxu0 %v4834
        %7004 = vmatpush1.bf16.msra.mxu0 %v4833
        %7005 = vmatprep.subr.bf16.mxu0 %v4842
        %7006 = vmatpush1.bf16.msra.mxu0 %v4841
        %7007 = vmatprep.subr.bf16.mxu0 %v4850
        %7008 = vmatpush1.bf16.msra.mxu0 %v4849
        %7009 = vmatprep.subr.bf16.mxu0 %v4858
        %7010 = vmatpush1.bf16.msra.mxu0 %v4857
        %7011 = vmatprep.subr.bf16.mxu0 %v4866
        %7012 = vmatpush1.bf16.msra.mxu0 %v4865
        %7013 = vmatprep.subr.bf16.mxu0 %v4874
        %7014 = vmatpush1.bf16.msra.mxu0 %v4873
        %7015 = vmatprep.subr.bf16.mxu0 %v4882
        %7016 = vmatpush1.bf16.msra.mxu0 %v4881
        %7017 = vmatprep.subr.bf16.mxu0 %v4890
        %7018 = vmatpush1.bf16.msra.mxu0 %v4889
        %7019 = vmatprep.subr.bf16.mxu0 %v4898
        %7020 = vmatpush1.bf16.msra.mxu0 %v4897
        %7021 = vmatprep.subr.bf16.mxu0 %v4906
        %7022 = vmatpush1.bf16.msra.mxu0 %v4905
        %7023 = vmatprep.subr.bf16.mxu0 %v4914
        %7024 = vmatpush1.bf16.msra.mxu0 %v4913
        %7025 = vmatprep.mubr.bf16.mxu0 %v1436
        %7026 = vmatmul.mubr.bf16.gmra.mrb[0].mxu0 %v1435
        %v7027 = vpop.f32.mrb[0].mxu0
        %v7028 = vadd.f32 %v6987, %v7027
        %v7029 = vpop.f32.mrb[0].mxu0
        %v7030 = vadd.f32 %v6989, %v7029
        %v7031 = vpop.f32.mrb[0].mxu0
        %v7032 = vpop.f32.mrb[0].mxu0
        %7033 = vdwg.mxu0
        %7034 = vmatprep.subr.bf16.mxu0 %v4922
        %7035 = vmatpush1.bf16.msra.mxu0 %v4921
        %7036 = vmatprep.subr.bf16.mxu0 %v4930
        %7037 = vmatpush1.bf16.msra.mxu0 %v4929
        %7038 = vmatprep.subr.bf16.mxu0 %v4938
        %7039 = vmatpush1.bf16.msra.mxu0 %v4937
        %7040 = vmatprep.subr.bf16.mxu0 %v4946
        %7041 = vmatpush1.bf16.msra.mxu0 %v4945
        %7042 = vmatprep.subr.bf16.mxu0 %v4954
        %7043 = vmatpush1.bf16.msra.mxu0 %v4953
        %7044 = vmatprep.subr.bf16.mxu0 %v4962
        %7045 = vmatpush1.bf16.msra.mxu0 %v4961
        %7046 = vmatprep.subr.bf16.mxu0 %v4970
        %7047 = vmatpush1.bf16.msra.mxu0 %v4969
        %7048 = vmatprep.subr.bf16.mxu0 %v4978
        %7049 = vmatpush1.bf16.msra.mxu0 %v4977
        %7050 = vmatprep.subr.bf16.mxu0 %v4986
        %7051 = vmatpush1.bf16.msra.mxu0 %v4985
        %7052 = vmatprep.subr.bf16.mxu0 %v4994
        %7053 = vmatpush1.bf16.msra.mxu0 %v4993
        %7054 = vmatprep.subr.bf16.mxu0 %v5002
        %7055 = vmatpush1.bf16.msra.mxu0 %v5001
        %7056 = vmatprep.subr.bf16.mxu0 %v5010
        %7057 = vmatpush1.bf16.msra.mxu0 %v5009
        %7058 = vmatprep.subr.bf16.mxu0 %v5018
        %7059 = vmatpush1.bf16.msra.mxu0 %v5017
        %7060 = vmatprep.subr.bf16.mxu0 %v5026
        %7061 = vmatpush1.bf16.msra.mxu0 %v5025
        %7062 = vmatprep.subr.bf16.mxu0 %v5034
        %7063 = vmatpush1.bf16.msra.mxu0 %v5033
        %7064 = vmatprep.subr.bf16.mxu0 %v5042
        %7065 = vmatpush1.bf16.msra.mxu0 %v5041
        %7066 = vmatprep.mubr.bf16.mxu0 %v1438
        %7067 = vmatmul.mubr.bf16.gmra.mrb[0].mxu0 %v1437
        %v7068 = vpop.f32.mrb[0].mxu0
        %v7069 = vadd.f32 %v7028, %v7068
        %v7070 = vpop.f32.mrb[0].mxu0
        %v7071 = vadd.f32 %v7030, %v7070
        %v7072 = vpop.f32.mrb[0].mxu0
        %v7073 = vpop.f32.mrb[0].mxu0
        %7074 = vdwg.mxu0
        %7075 = vmatprep.subr.bf16.mxu0 %v5050
        %7076 = vmatpush1.bf16.msra.mxu0 %v5049
        %7077 = vmatprep.subr.bf16.mxu0 %v5058
        %7078 = vmatpush1.bf16.msra.mxu0 %v5057
        %7079 = vmatprep.subr.bf16.mxu0 %v5066
        %7080 = vmatpush1.bf16.msra.mxu0 %v5065
        %7081 = vmatprep.subr.bf16.mxu0 %v5074
        %7082 = vmatpush1.bf16.msra.mxu0 %v5073
        %7083 = vmatprep.subr.bf16.mxu0 %v5082
        %7084 = vmatpush1.bf16.msra.mxu0 %v5081
        %7085 = vmatprep.subr.bf16.mxu0 %v5090
        %7086 = vmatpush1.bf16.msra.mxu0 %v5089
        %7087 = vmatprep.subr.bf16.mxu0 %v5098
        %7088 = vmatpush1.bf16.msra.mxu0 %v5097
        %7089 = vmatprep.subr.bf16.mxu0 %v5106
        %7090 = vmatpush1.bf16.msra.mxu0 %v5105
        %7091 = vmatprep.subr.bf16.mxu0 %v5114
        %7092 = vmatpush1.bf16.msra.mxu0 %v5113
        %7093 = vmatprep.subr.bf16.mxu0 %v5122
        %7094 = vmatpush1.bf16.msra.mxu0 %v5121
        %7095 = vmatprep.subr.bf16.mxu0 %v5130
        %7096 = vmatpush1.bf16.msra.mxu0 %v5129
        %7097 = vmatprep.subr.bf16.mxu0 %v5138
        %7098 = vmatpush1.bf16.msra.mxu0 %v5137
        %7099 = vmatprep.subr.bf16.mxu0 %v5146
        %7100 = vmatpush1.bf16.msra.mxu0 %v5145
        %7101 = vmatprep.subr.bf16.mxu0 %v5154
        %7102 = vmatpush1.bf16.msra.mxu0 %v5153
        %7103 = vmatprep.subr.bf16.mxu0 %v5162
        %7104 = vmatpush1.bf16.msra.mxu0 %v5161
        %7105 = vmatprep.subr.bf16.mxu0 %v5170
        %7106 = vmatpush1.bf16.msra.mxu0 %v5169
        %7107 = vmatprep.mubr.bf16.mxu0 %v1440
        %7108 = vmatmul.mubr.bf16.gmra.mrb[0].mxu0 %v1439
        %v7109 = vpop.f32.mrb[0].mxu0
        %v7110 = vadd.f32 %v7069, %v7109
        %v7111 = vpop.f32.mrb[0].mxu0
        %v7112 = vadd.f32 %v7071, %v7111
        %v7113 = vpop.f32.mrb[0].mxu0
        %v7114 = vpop.f32.mrb[0].mxu0
        %7115 = vdwg.mxu0
        %7116 = vmatprep.subr.bf16.mxu0 %v5178
        %7117 = vmatpush1.bf16.msra.mxu0 %v5177
        %7118 = vmatprep.subr.bf16.mxu0 %v5186
        %7119 = vmatpush1.bf16.msra.mxu0 %v5185
        %7120 = vmatprep.subr.bf16.mxu0 %v5194
        %7121 = vmatpush1.bf16.msra.mxu0 %v5193
        %7122 = vmatprep.subr.bf16.mxu0 %v5202
        %7123 = vmatpush1.bf16.msra.mxu0 %v5201
        %7124 = vmatprep.subr.bf16.mxu0 %v5210
        %7125 = vmatpush1.bf16.msra.mxu0 %v5209
        %7126 = vmatprep.subr.bf16.mxu0 %v5218
        %7127 = vmatpush1.bf16.msra.mxu0 %v5217
        %7128 = vmatprep.subr.bf16.mxu0 %v5226
        %7129 = vmatpush1.bf16.msra.mxu0 %v5225
        %7130 = vmatprep.subr.bf16.mxu0 %v5234
        %7131 = vmatpush1.bf16.msra.mxu0 %v5233
        %7132 = vmatprep.subr.bf16.mxu0 %v5242
        %7133 = vmatpush1.bf16.msra.mxu0 %v5241
        %7134 = vmatprep.subr.bf16.mxu0 %v5250
        %7135 = vmatpush1.bf16.msra.mxu0 %v5249
        %7136 = vmatprep.subr.bf16.mxu0 %v5258
        %7137 = vmatpush1.bf16.msra.mxu0 %v5257
        %7138 = vmatprep.subr.bf16.mxu0 %v5266
        %7139 = vmatpush1.bf16.msra.mxu0 %v5265
        %7140 = vmatprep.subr.bf16.mxu0 %v5274
        %7141 = vmatpush1.bf16.msra.mxu0 %v5273
        %7142 = vmatprep.subr.bf16.mxu0 %v5282
        %7143 = vmatpush1.bf16.msra.mxu0 %v5281
        %7144 = vmatprep.subr.bf16.mxu0 %v5290
        %7145 = vmatpush1.bf16.msra.mxu0 %v5289
        %7146 = vmatprep.subr.bf16.mxu0 %v5298
        %7147 = vmatpush1.bf16.msra.mxu0 %v5297
        %7148 = vmatprep.mubr.bf16.mxu0 %v1442
        %7149 = vmatmul.mubr.bf16.gmra.mrb[0].mxu0 %v1441
        %v7150 = vpop.f32.mrb[0].mxu0
        %v7151 = vadd.f32 %v7110, %v7150
        %v7152 = vpop.f32.mrb[0].mxu0
        %v7153 = vadd.f32 %v7112, %v7152
        %v7154 = vpop.f32.mrb[0].mxu0
        %v7155 = vpop.f32.mrb[0].mxu0
        %7156 = vdwg.mxu0
        %7157 = vmatprep.subr.bf16.mxu0 %v5306
        %7158 = vmatpush1.bf16.msra.mxu0 %v5305
        %7159 = vmatprep.subr.bf16.mxu0 %v5314
        %7160 = vmatpush1.bf16.msra.mxu0 %v5313
        %7161 = vmatprep.subr.bf16.mxu0 %v5322
        %7162 = vmatpush1.bf16.msra.mxu0 %v5321
        %7163 = vmatprep.subr.bf16.mxu0 %v5330
        %7164 = vmatpush1.bf16.msra.mxu0 %v5329
        %7165 = vmatprep.subr.bf16.mxu0 %v5338
        %7166 = vmatpush1.bf16.msra.mxu0 %v5337
        %7167 = vmatprep.subr.bf16.mxu0 %v5346
        %7168 = vmatpush1.bf16.msra.mxu0 %v5345
        %7169 = vmatprep.subr.bf16.mxu0 %v5354
        %7170 = vmatpush1.bf16.msra.mxu0 %v5353
        %7171 = vmatprep.subr.bf16.mxu0 %v5362
        %7172 = vmatpush1.bf16.msra.mxu0 %v5361
        %7173 = vmatprep.subr.bf16.mxu0 %v5370
        %7174 = vmatpush1.bf16.msra.mxu0 %v5369
        %7175 = vmatprep.subr.bf16.mxu0 %v5378
        %7176 = vmatpush1.bf16.msra.mxu0 %v5377
        %7177 = vmatprep.subr.bf16.mxu0 %v5386
        %7178 = vmatpush1.bf16.msra.mxu0 %v5385
        %7179 = vmatprep.subr.bf16.mxu0 %v5394
        %7180 = vmatpush1.bf16.msra.mxu0 %v5393
        %7181 = vmatprep.subr.bf16.mxu0 %v5402
        %7182 = vmatpush1.bf16.msra.mxu0 %v5401
        %7183 = vmatprep.subr.bf16.mxu0 %v5410
        %7184 = vmatpush1.bf16.msra.mxu0 %v5409
        %7185 = vmatprep.subr.bf16.mxu0 %v5418
        %7186 = vmatpush1.bf16.msra.mxu0 %v5417
        %7187 = vmatprep.subr.bf16.mxu0 %v5426
        %7188 = vmatpush1.bf16.msra.mxu0 %v5425
        %7189 = vmatprep.mubr.bf16.mxu0 %v1444
        %7190 = vmatmul.mubr.bf16.gmra.mrb[0].mxu0 %v1443
        %v7191 = vpop.f32.mrb[0].mxu0
        %v7192 = vadd.f32 %v7151, %v7191
        %v7193 = vpop.f32.mrb[0].mxu0
        %v7194 = vadd.f32 %v7153, %v7193
        %v7195 = vpop.f32.mrb[0].mxu0
        %v7196 = vpop.f32.mrb[0].mxu0
        %7197 = vdwg.mxu0
        %7198 = vmatprep.subr.bf16.mxu0 %v5434
        %7199 = vmatpush1.bf16.msra.mxu0 %v5433
        %7200 = vmatprep.subr.bf16.mxu0 %v5442
        %7201 = vmatpush1.bf16.msra.mxu0 %v5441
        %7202 = vmatprep.subr.bf16.mxu0 %v5450
        %7203 = vmatpush1.bf16.msra.mxu0 %v5449
        %7204 = vmatprep.subr.bf16.mxu0 %v5458
        %7205 = vmatpush1.bf16.msra.mxu0 %v5457
        %7206 = vmatprep.subr.bf16.mxu0 %v5466
        %7207 = vmatpush1.bf16.msra.mxu0 %v5465
        %7208 = vmatprep.subr.bf16.mxu0 %v5474
        %7209 = vmatpush1.bf16.msra.mxu0 %v5473
        %7210 = vmatprep.subr.bf16.mxu0 %v5482
        %7211 = vmatpush1.bf16.msra.mxu0 %v5481
        %7212 = vmatprep.subr.bf16.mxu0 %v5490
        %7213 = vmatpush1.bf16.msra.mxu0 %v5489
        %7214 = vmatprep.subr.bf16.mxu0 %v5498
        %7215 = vmatpush1.bf16.msra.mxu0 %v5497
        %7216 = vmatprep.subr.bf16.mxu0 %v5506
        %7217 = vmatpush1.bf16.msra.mxu0 %v5505
        %7218 = vmatprep.subr.bf16.mxu0 %v5514
        %7219 = vmatpush1.bf16.msra.mxu0 %v5513
        %7220 = vmatprep.subr.bf16.mxu0 %v5522
        %7221 = vmatpush1.bf16.msra.mxu0 %v5521
        %7222 = vmatprep.subr.bf16.mxu0 %v5530
        %7223 = vmatpush1.bf16.msra.mxu0 %v5529
        %7224 = vmatprep.subr.bf16.mxu0 %v5538
        %7225 = vmatpush1.bf16.msra.mxu0 %v5537
        %7226 = vmatprep.subr.bf16.mxu0 %v5546
        %7227 = vmatpush1.bf16.msra.mxu0 %v5545
        %7228 = vmatprep.subr.bf16.mxu0 %v5554
        %7229 = vmatpush1.bf16.msra.mxu0 %v5553
        %7230 = vmatprep.mubr.bf16.mxu0 %v1446
        %7231 = vmatmul.mubr.bf16.gmra.mrb[0].mxu0 %v1445
        %v7232 = vpop.f32.mrb[0].mxu0
        %v7233 = vadd.f32 %v7192, %v7232
        %v7234 = vpop.f32.mrb[0].mxu0
        %v7235 = vadd.f32 %v7194, %v7234
        %v7236 = vpop.f32.mrb[0].mxu0
        %v7237 = vpop.f32.mrb[0].mxu0
        %7238 = vdwg.mxu0
        %7239 = vmatprep.subr.bf16.mxu0 %v4540
        %7240 = vmatpush1.bf16.msra.mxu0 %v4539
        %7241 = vmatprep.subr.bf16.mxu0 %v4548
        %7242 = vmatpush1.bf16.msra.mxu0 %v4547
        %7243 = vmatprep.subr.bf16.mxu0 %v4556
        %7244 = vmatpush1.bf16.msra.mxu0 %v4555
        %7245 = vmatprep.subr.bf16.mxu0 %v4564
        %7246 = vmatpush1.bf16.msra.mxu0 %v4563
        %7247 = vmatprep.subr.bf16.mxu0 %v4572
        %7248 = vmatpush1.bf16.msra.mxu0 %v4571
        %7249 = vmatprep.subr.bf16.mxu0 %v4580
        %7250 = vmatpush1.bf16.msra.mxu0 %v4579
        %7251 = vmatprep.subr.bf16.mxu0 %v4588
        %7252 = vmatpush1.bf16.msra.mxu0 %v4587
        %7253 = vmatprep.subr.bf16.mxu0 %v4596
        %7254 = vmatpush1.bf16.msra.mxu0 %v4595
        %7255 = vmatprep.subr.bf16.mxu0 %v4604
        %7256 = vmatpush1.bf16.msra.mxu0 %v4603
        %7257 = vmatprep.subr.bf16.mxu0 %v4612
        %7258 = vmatpush1.bf16.msra.mxu0 %v4611
        %7259 = vmatprep.subr.bf16.mxu0 %v4620
        %7260 = vmatpush1.bf16.msra.mxu0 %v4619
        %7261 = vmatprep.subr.bf16.mxu0 %v4628
        %7262 = vmatpush1.bf16.msra.mxu0 %v4627
        %7263 = vmatprep.subr.bf16.mxu0 %v4636
        %7264 = vmatpush1.bf16.msra.mxu0 %v4635
        %7265 = vmatprep.subr.bf16.mxu0 %v4644
        %7266 = vmatpush1.bf16.msra.mxu0 %v4643
        %7267 = vmatprep.subr.bf16.mxu0 %v4652
        %7268 = vmatpush1.bf16.msra.mxu0 %v4651
        %7269 = vmatprep.subr.bf16.mxu0 %v4660
        %7270 = vmatpush1.bf16.msra.mxu0 %v4659
        %7271 = vmatprep.mubr.bf16.mxu0 %v1432
        %7272 = vmatmul.mubr.bf16.gmra.mrb[0].mxu0 %v1431
        %v7273 = vpop.f32.mrb[0].mxu0
        %v7274 = vadd.f32 %v1386, %v7273
        %v7275 = vpop.f32.mrb[0].mxu0
        %v7276 = vadd.f32 %v1390, %v7275
        %v7277 = vpop.f32.mrb[0].mxu0
        %v7278 = vpop.f32.mrb[0].mxu0
        %7279 = vdwg.mxu0
        %7280 = vmatprep.subr.bf16.mxu0 %v4668
        %7281 = vmatpush1.bf16.msra.mxu0 %v4667
        %7282 = vmatprep.subr.bf16.mxu0 %v4676
        %7283 = vmatpush1.bf16.msra.mxu0 %v4675
        %7284 = vmatprep.subr.bf16.mxu0 %v4684
        %7285 = vmatpush1.bf16.msra.mxu0 %v4683
        %7286 = vmatprep.subr.bf16.mxu0 %v4692
        %7287 = vmatpush1.bf16.msra.mxu0 %v4691
        %7288 = vmatprep.subr.bf16.mxu0 %v4700
        %7289 = vmatpush1.bf16.msra.mxu0 %v4699
        %7290 = vmatprep.subr.bf16.mxu0 %v4708
        %7291 = vmatpush1.bf16.msra.mxu0 %v4707
        %7292 = vmatprep.subr.bf16.mxu0 %v4716
        %7293 = vmatpush1.bf16.msra.mxu0 %v4715
        %7294 = vmatprep.subr.bf16.mxu0 %v4724
        %7295 = vmatpush1.bf16.msra.mxu0 %v4723
        %7296 = vmatprep.subr.bf16.mxu0 %v4732
        %7297 = vmatpush1.bf16.msra.mxu0 %v4731
        %7298 = vmatprep.subr.bf16.mxu0 %v4740
        %7299 = vmatpush1.bf16.msra.mxu0 %v4739
        %7300 = vmatprep.subr.bf16.mxu0 %v4748
        %7301 = vmatpush1.bf16.msra.mxu0 %v4747
        %7302 = vmatprep.subr.bf16.mxu0 %v4756
        %7303 = vmatpush1.bf16.msra.mxu0 %v4755
        %7304 = vmatprep.subr.bf16.mxu0 %v4764
        %7305 = vmatpush1.bf16.msra.mxu0 %v4763
        %7306 = vmatprep.subr.bf16.mxu0 %v4772
        %7307 = vmatpush1.bf16.msra.mxu0 %v4771
        %7308 = vmatprep.subr.bf16.mxu0 %v4780
        %7309 = vmatpush1.bf16.msra.mxu0 %v4779
        %7310 = vmatprep.subr.bf16.mxu0 %v4788
        %7311 = vmatpush1.bf16.msra.mxu0 %v4787
        %7312 = vmatprep.mubr.bf16.mxu0 %v1434
        %7313 = vmatmul.mubr.bf16.gmra.mrb[0].mxu0 %v1433
        %v7314 = vpop.f32.mrb[0].mxu0
        %v7315 = vadd.f32 %v7274, %v7314
        %v7316 = vpop.f32.mrb[0].mxu0
        %v7317 = vadd.f32 %v7276, %v7316
        %v7318 = vpop.f32.mrb[0].mxu0
        %v7319 = vpop.f32.mrb[0].mxu0
        %7320 = vdwg.mxu0
        %7321 = vmatprep.subr.bf16.mxu0 %v4796
        %7322 = vmatpush1.bf16.msra.mxu0 %v4795
        %7323 = vmatprep.subr.bf16.mxu0 %v4804
        %7324 = vmatpush1.bf16.msra.mxu0 %v4803
        %7325 = vmatprep.subr.bf16.mxu0 %v4812
        %7326 = vmatpush1.bf16.msra.mxu0 %v4811
        %7327 = vmatprep.subr.bf16.mxu0 %v4820
        %7328 = vmatpush1.bf16.msra.mxu0 %v4819
        %7329 = vmatprep.subr.bf16.mxu0 %v4828
        %7330 = vmatpush1.bf16.msra.mxu0 %v4827
        %7331 = vmatprep.subr.bf16.mxu0 %v4836
        %7332 = vmatpush1.bf16.msra.mxu0 %v4835
        %7333 = vmatprep.subr.bf16.mxu0 %v4844
        %7334 = vmatpush1.bf16.msra.mxu0 %v4843
        %7335 = vmatprep.subr.bf16.mxu0 %v4852
        %7336 = vmatpush1.bf16.msra.mxu0 %v4851
        %7337 = vmatprep.subr.bf16.mxu0 %v4860
        %7338 = vmatpush1.bf16.msra.mxu0 %v4859
        %7339 = vmatprep.subr.bf16.mxu0 %v4868
        %7340 = vmatpush1.bf16.msra.mxu0 %v4867
        %7341 = vmatprep.subr.bf16.mxu0 %v4876
        %7342 = vmatpush1.bf16.msra.mxu0 %v4875
        %7343 = vmatprep.subr.bf16.mxu0 %v4884
        %7344 = vmatpush1.bf16.msra.mxu0 %v4883
        %7345 = vmatprep.subr.bf16.mxu0 %v4892
        %7346 = vmatpush1.bf16.msra.mxu0 %v4891
        %7347 = vmatprep.subr.bf16.mxu0 %v4900
        %7348 = vmatpush1.bf16.msra.mxu0 %v4899
        %7349 = vmatprep.subr.bf16.mxu0 %v4908
        %7350 = vmatpush1.bf16.msra.mxu0 %v4907
        %7351 = vmatprep.subr.bf16.mxu0 %v4916
        %7352 = vmatpush1.bf16.msra.mxu0 %v4915
        %7353 = vmatprep.mubr.bf16.mxu0 %v1436
        %7354 = vmatmul.mubr.bf16.gmra.mrb[0].mxu0 %v1435
        %v7355 = vpop.f32.mrb[0].mxu0
        %v7356 = vadd.f32 %v7315, %v7355
        %v7357 = vpop.f32.mrb[0].mxu0
        %v7358 = vadd.f32 %v7317, %v7357
        %v7359 = vpop.f32.mrb[0].mxu0
        %v7360 = vpop.f32.mrb[0].mxu0
        %7361 = vdwg.mxu0
        %7362 = vmatprep.subr.bf16.mxu0 %v4924
        %7363 = vmatpush1.bf16.msra.mxu0 %v4923
        %7364 = vmatprep.subr.bf16.mxu0 %v4932
        %7365 = vmatpush1.bf16.msra.mxu0 %v4931
        %7366 = vmatprep.subr.bf16.mxu0 %v4940
        %7367 = vmatpush1.bf16.msra.mxu0 %v4939
        %7368 = vmatprep.subr.bf16.mxu0 %v4948
        %7369 = vmatpush1.bf16.msra.mxu0 %v4947
        %7370 = vmatprep.subr.bf16.mxu0 %v4956
        %7371 = vmatpush1.bf16.msra.mxu0 %v4955
        %7372 = vmatprep.subr.bf16.mxu0 %v4964
        %7373 = vmatpush1.bf16.msra.mxu0 %v4963
        %7374 = vmatprep.subr.bf16.mxu0 %v4972
        %7375 = vmatpush1.bf16.msra.mxu0 %v4971
        %7376 = vmatprep.subr.bf16.mxu0 %v4980
        %7377 = vmatpush1.bf16.msra.mxu0 %v4979
        %7378 = vmatprep.subr.bf16.mxu0 %v4988
        %7379 = vmatpush1.bf16.msra.mxu0 %v4987
        %7380 = vmatprep.subr.bf16.mxu0 %v4996
        %7381 = vmatpush1.bf16.msra.mxu0 %v4995
        %7382 = vmatprep.subr.bf16.mxu0 %v5004
        %7383 = vmatpush1.bf16.msra.mxu0 %v5003
        %7384 = vmatprep.subr.bf16.mxu0 %v5012
        %7385 = vmatpush1.bf16.msra.mxu0 %v5011
        %7386 = vmatprep.subr.bf16.mxu0 %v5020
        %7387 = vmatpush1.bf16.msra.mxu0 %v5019
        %7388 = vmatprep.subr.bf16.mxu0 %v5028
        %7389 = vmatpush1.bf16.msra.mxu0 %v5027
        %7390 = vmatprep.subr.bf16.mxu0 %v5036
        %7391 = vmatpush1.bf16.msra.mxu0 %v5035
        %7392 = vmatprep.subr.bf16.mxu0 %v5044
        %7393 = vmatpush1.bf16.msra.mxu0 %v5043
        %7394 = vmatprep.mubr.bf16.mxu0 %v1438
        %7395 = vmatmul.mubr.bf16.gmra.mrb[0].mxu0 %v1437
        %v7396 = vpop.f32.mrb[0].mxu0
        %v7397 = vadd.f32 %v7356, %v7396
        %v7398 = vpop.f32.mrb[0].mxu0
        %v7399 = vadd.f32 %v7358, %v7398
        %v7400 = vpop.f32.mrb[0].mxu0
        %v7401 = vpop.f32.mrb[0].mxu0
        %7402 = vdwg.mxu0
        %7403 = vmatprep.subr.bf16.mxu0 %v5052
        %7404 = vmatpush1.bf16.msra.mxu0 %v5051
        %7405 = vmatprep.subr.bf16.mxu0 %v5060
        %7406 = vmatpush1.bf16.msra.mxu0 %v5059
        %7407 = vmatprep.subr.bf16.mxu0 %v5068
        %7408 = vmatpush1.bf16.msra.mxu0 %v5067
        %7409 = vmatprep.subr.bf16.mxu0 %v5076
        %7410 = vmatpush1.bf16.msra.mxu0 %v5075
        %7411 = vmatprep.subr.bf16.mxu0 %v5084
        %7412 = vmatpush1.bf16.msra.mxu0 %v5083
        %7413 = vmatprep.subr.bf16.mxu0 %v5092
        %7414 = vmatpush1.bf16.msra.mxu0 %v5091
        %7415 = vmatprep.subr.bf16.mxu0 %v5100
        %7416 = vmatpush1.bf16.msra.mxu0 %v5099
        %7417 = vmatprep.subr.bf16.mxu0 %v5108
        %7418 = vmatpush1.bf16.msra.mxu0 %v5107
        %7419 = vmatprep.subr.bf16.mxu0 %v5116
        %7420 = vmatpush1.bf16.msra.mxu0 %v5115
        %7421 = vmatprep.subr.bf16.mxu0 %v5124
        %7422 = vmatpush1.bf16.msra.mxu0 %v5123
        %7423 = vmatprep.subr.bf16.mxu0 %v5132
        %7424 = vmatpush1.bf16.msra.mxu0 %v5131
        %7425 = vmatprep.subr.bf16.mxu0 %v5140
        %7426 = vmatpush1.bf16.msra.mxu0 %v5139
        %7427 = vmatprep.subr.bf16.mxu0 %v5148
        %7428 = vmatpush1.bf16.msra.mxu0 %v5147
        %7429 = vmatprep.subr.bf16.mxu0 %v5156
        %7430 = vmatpush1.bf16.msra.mxu0 %v5155
        %7431 = vmatprep.subr.bf16.mxu0 %v5164
        %7432 = vmatpush1.bf16.msra.mxu0 %v5163
        %7433 = vmatprep.subr.bf16.mxu0 %v5172
        %7434 = vmatpush1.bf16.msra.mxu0 %v5171
        %7435 = vmatprep.mubr.bf16.mxu0 %v1440
        %7436 = vmatmul.mubr.bf16.gmra.mrb[0].mxu0 %v1439
        %v7437 = vpop.f32.mrb[0].mxu0
        %v7438 = vadd.f32 %v7397, %v7437
        %v7439 = vpop.f32.mrb[0].mxu0
        %v7440 = vadd.f32 %v7399, %v7439
        %v7441 = vpop.f32.mrb[0].mxu0
        %v7442 = vpop.f32.mrb[0].mxu0
        %7443 = vdwg.mxu0
        %7444 = vmatprep.subr.bf16.mxu0 %v5180
        %7445 = vmatpush1.bf16.msra.mxu0 %v5179
        %7446 = vmatprep.subr.bf16.mxu0 %v5188
        %7447 = vmatpush1.bf16.msra.mxu0 %v5187
        %7448 = vmatprep.subr.bf16.mxu0 %v5196
        %7449 = vmatpush1.bf16.msra.mxu0 %v5195
        %7450 = vmatprep.subr.bf16.mxu0 %v5204
        %7451 = vmatpush1.bf16.msra.mxu0 %v5203
        %7452 = vmatprep.subr.bf16.mxu0 %v5212
        %7453 = vmatpush1.bf16.msra.mxu0 %v5211
        %7454 = vmatprep.subr.bf16.mxu0 %v5220
        %7455 = vmatpush1.bf16.msra.mxu0 %v5219
        %7456 = vmatprep.subr.bf16.mxu0 %v5228
        %7457 = vmatpush1.bf16.msra.mxu0 %v5227
        %7458 = vmatprep.subr.bf16.mxu0 %v5236
        %7459 = vmatpush1.bf16.msra.mxu0 %v5235
        %7460 = vmatprep.subr.bf16.mxu0 %v5244
        %7461 = vmatpush1.bf16.msra.mxu0 %v5243
        %7462 = vmatprep.subr.bf16.mxu0 %v5252
        %7463 = vmatpush1.bf16.msra.mxu0 %v5251
        %7464 = vmatprep.subr.bf16.mxu0 %v5260
        %7465 = vmatpush1.bf16.msra.mxu0 %v5259
        %7466 = vmatprep.subr.bf16.mxu0 %v5268
        %7467 = vmatpush1.bf16.msra.mxu0 %v5267
        %7468 = vmatprep.subr.bf16.mxu0 %v5276
        %7469 = vmatpush1.bf16.msra.mxu0 %v5275
        %7470 = vmatprep.subr.bf16.mxu0 %v5284
        %7471 = vmatpush1.bf16.msra.mxu0 %v5283
        %7472 = vmatprep.subr.bf16.mxu0 %v5292
        %7473 = vmatpush1.bf16.msra.mxu0 %v5291
        %7474 = vmatprep.subr.bf16.mxu0 %v5300
        %7475 = vmatpush1.bf16.msra.mxu0 %v5299
        %7476 = vmatprep.mubr.bf16.mxu0 %v1442
        %7477 = vmatmul.mubr.bf16.gmra.mrb[0].mxu0 %v1441
        %v7478 = vpop.f32.mrb[0].mxu0
        %v7479 = vadd.f32 %v7438, %v7478
        %v7480 = vpop.f32.mrb[0].mxu0
        %v7481 = vadd.f32 %v7440, %v7480
        %v7482 = vpop.f32.mrb[0].mxu0
        %v7483 = vpop.f32.mrb[0].mxu0
        %7484 = vdwg.mxu0
        %7485 = vmatprep.subr.bf16.mxu0 %v5308
        %7486 = vmatpush1.bf16.msra.mxu0 %v5307
        %7487 = vmatprep.subr.bf16.mxu0 %v5316
        %7488 = vmatpush1.bf16.msra.mxu0 %v5315
        %7489 = vmatprep.subr.bf16.mxu0 %v5324
        %7490 = vmatpush1.bf16.msra.mxu0 %v5323
        %7491 = vmatprep.subr.bf16.mxu0 %v5332
        %7492 = vmatpush1.bf16.msra.mxu0 %v5331
        %7493 = vmatprep.subr.bf16.mxu0 %v5340
        %7494 = vmatpush1.bf16.msra.mxu0 %v5339
        %7495 = vmatprep.subr.bf16.mxu0 %v5348
        %7496 = vmatpush1.bf16.msra.mxu0 %v5347
        %7497 = vmatprep.subr.bf16.mxu0 %v5356
        %7498 = vmatpush1.bf16.msra.mxu0 %v5355
        %7499 = vmatprep.subr.bf16.mxu0 %v5364
        %7500 = vmatpush1.bf16.msra.mxu0 %v5363
        %7501 = vmatprep.subr.bf16.mxu0 %v5372
        %7502 = vmatpush1.bf16.msra.mxu0 %v5371
        %7503 = vmatprep.subr.bf16.mxu0 %v5380
        %7504 = vmatpush1.bf16.msra.mxu0 %v5379
        %7505 = vmatprep.subr.bf16.mxu0 %v5388
        %7506 = vmatpush1.bf16.msra.mxu0 %v5387
        %7507 = vmatprep.subr.bf16.mxu0 %v5396
        %7508 = vmatpush1.bf16.msra.mxu0 %v5395
        %7509 = vmatprep.subr.bf16.mxu0 %v5404
        %7510 = vmatpush1.bf16.msra.mxu0 %v5403
        %7511 = vmatprep.subr.bf16.mxu0 %v5412
        %7512 = vmatpush1.bf16.msra.mxu0 %v5411
        %7513 = vmatprep.subr.bf16.mxu0 %v5420
        %7514 = vmatpush1.bf16.msra.mxu0 %v5419
        %7515 = vmatprep.subr.bf16.mxu0 %v5428
        %7516 = vmatpush1.bf16.msra.mxu0 %v5427
        %7517 = vmatprep.mubr.bf16.mxu0 %v1444
        %7518 = vmatmul.mubr.bf16.gmra.mrb[0].mxu0 %v1443
        %v7519 = vpop.f32.mrb[0].mxu0
        %v7520 = vadd.f32 %v7479, %v7519
        %v7521 = vpop.f32.mrb[0].mxu0
        %v7522 = vadd.f32 %v7481, %v7521
        %v7523 = vpop.f32.mrb[0].mxu0
        %v7524 = vpop.f32.mrb[0].mxu0
        %7525 = vdwg.mxu0
        %7526 = vmatprep.subr.bf16.mxu0 %v5436
        %7527 = vmatpush1.bf16.msra.mxu0 %v5435
        %7528 = vmatprep.subr.bf16.mxu0 %v5444
        %7529 = vmatpush1.bf16.msra.mxu0 %v5443
        %7530 = vmatprep.subr.bf16.mxu0 %v5452
        %7531 = vmatpush1.bf16.msra.mxu0 %v5451
        %7532 = vmatprep.subr.bf16.mxu0 %v5460
        %7533 = vmatpush1.bf16.msra.mxu0 %v5459
        %7534 = vmatprep.subr.bf16.mxu0 %v5468
        %7535 = vmatpush1.bf16.msra.mxu0 %v5467
        %7536 = vmatprep.subr.bf16.mxu0 %v5476
        %7537 = vmatpush1.bf16.msra.mxu0 %v5475
        %7538 = vmatprep.subr.bf16.mxu0 %v5484
        %7539 = vmatpush1.bf16.msra.mxu0 %v5483
        %7540 = vmatprep.subr.bf16.mxu0 %v5492
        %7541 = vmatpush1.bf16.msra.mxu0 %v5491
        %7542 = vmatprep.subr.bf16.mxu0 %v5500
        %7543 = vmatpush1.bf16.msra.mxu0 %v5499
        %7544 = vmatprep.subr.bf16.mxu0 %v5508
        %7545 = vmatpush1.bf16.msra.mxu0 %v5507
        %7546 = vmatprep.subr.bf16.mxu0 %v5516
        %7547 = vmatpush1.bf16.msra.mxu0 %v5515
        %7548 = vmatprep.subr.bf16.mxu0 %v5524
        %7549 = vmatpush1.bf16.msra.mxu0 %v5523
        %7550 = vmatprep.subr.bf16.mxu0 %v5532
        %7551 = vmatpush1.bf16.msra.mxu0 %v5531
        %7552 = vmatprep.subr.bf16.mxu0 %v5540
        %7553 = vmatpush1.bf16.msra.mxu0 %v5539
        %7554 = vmatprep.subr.bf16.mxu0 %v5548
        %7555 = vmatpush1.bf16.msra.mxu0 %v5547
        %7556 = vmatprep.subr.bf16.mxu0 %v5556
        %7557 = vmatpush1.bf16.msra.mxu0 %v5555
        %7558 = vmatprep.mubr.bf16.mxu0 %v1446
        %7559 = vmatmul.mubr.bf16.gmra.mrb[0].mxu0 %v1445
        %v7560 = vpop.f32.mrb[0].mxu0
        %v7561 = vadd.f32 %v7520, %v7560
        %v7562 = vpop.f32.mrb[0].mxu0
        %v7563 = vadd.f32 %v7522, %v7562
        %v7564 = vpop.f32.mrb[0].mxu0
        %v7565 = vpop.f32.mrb[0].mxu0
        %7566 = vdwg.mxu0
        %7567 = vmatprep.subr.bf16.mxu0 %v4542
        %7568 = vmatpush1.bf16.msra.mxu0 %v4541
        %7569 = vmatprep.subr.bf16.mxu0 %v4550
        %7570 = vmatpush1.bf16.msra.mxu0 %v4549
        %7571 = vmatprep.subr.bf16.mxu0 %v4558
        %7572 = vmatpush1.bf16.msra.mxu0 %v4557
        %7573 = vmatprep.subr.bf16.mxu0 %v4566
        %7574 = vmatpush1.bf16.msra.mxu0 %v4565
        %7575 = vmatprep.subr.bf16.mxu0 %v4574
        %7576 = vmatpush1.bf16.msra.mxu0 %v4573
        %7577 = vmatprep.subr.bf16.mxu0 %v4582
        %7578 = vmatpush1.bf16.msra.mxu0 %v4581
        %7579 = vmatprep.subr.bf16.mxu0 %v4590
        %7580 = vmatpush1.bf16.msra.mxu0 %v4589
        %7581 = vmatprep.subr.bf16.mxu0 %v4598
        %7582 = vmatpush1.bf16.msra.mxu0 %v4597
        %7583 = vmatprep.subr.bf16.mxu0 %v4606
        %7584 = vmatpush1.bf16.msra.mxu0 %v4605
        %7585 = vmatprep.subr.bf16.mxu0 %v4614
        %7586 = vmatpush1.bf16.msra.mxu0 %v4613
        %7587 = vmatprep.subr.bf16.mxu0 %v4622
        %7588 = vmatpush1.bf16.msra.mxu0 %v4621
        %7589 = vmatprep.subr.bf16.mxu0 %v4630
        %7590 = vmatpush1.bf16.msra.mxu0 %v4629
        %7591 = vmatprep.subr.bf16.mxu0 %v4638
        %7592 = vmatpush1.bf16.msra.mxu0 %v4637
        %7593 = vmatprep.subr.bf16.mxu0 %v4646
        %7594 = vmatpush1.bf16.msra.mxu0 %v4645
        %7595 = vmatprep.subr.bf16.mxu0 %v4654
        %7596 = vmatpush1.bf16.msra.mxu0 %v4653
        %7597 = vmatprep.subr.bf16.mxu0 %v4662
        %7598 = vmatpush1.bf16.msra.mxu0 %v4661
        %7599 = vmatprep.mubr.bf16.mxu0 %v1432
        %7600 = vmatmul.mubr.bf16.gmra.mrb[0].mxu0 %v1431
        %v7601 = vpop.f32.mrb[0].mxu0
        %v7602 = vadd.f32 %v1394, %v7601
        %v7603 = vpop.f32.mrb[0].mxu0
        %v7604 = vadd.f32 %v1398, %v7603
        %v7605 = vpop.f32.mrb[0].mxu0
        %v7606 = vpop.f32.mrb[0].mxu0
        %7607 = vdwg.mxu0
        %7608 = vmatprep.subr.bf16.mxu0 %v4670
        %7609 = vmatpush1.bf16.msra.mxu0 %v4669
        %7610 = vmatprep.subr.bf16.mxu0 %v4678
        %7611 = vmatpush1.bf16.msra.mxu0 %v4677
        %7612 = vmatprep.subr.bf16.mxu0 %v4686
        %7613 = vmatpush1.bf16.msra.mxu0 %v4685
        %7614 = vmatprep.subr.bf16.mxu0 %v4694
        %7615 = vmatpush1.bf16.msra.mxu0 %v4693
        %7616 = vmatprep.subr.bf16.mxu0 %v4702
        %7617 = vmatpush1.bf16.msra.mxu0 %v4701
        %7618 = vmatprep.subr.bf16.mxu0 %v4710
        %7619 = vmatpush1.bf16.msra.mxu0 %v4709
        %7620 = vmatprep.subr.bf16.mxu0 %v4718
        %7621 = vmatpush1.bf16.msra.mxu0 %v4717
        %7622 = vmatprep.subr.bf16.mxu0 %v4726
        %7623 = vmatpush1.bf16.msra.mxu0 %v4725
        %7624 = vmatprep.subr.bf16.mxu0 %v4734
        %7625 = vmatpush1.bf16.msra.mxu0 %v4733
        %7626 = vmatprep.subr.bf16.mxu0 %v4742
        %7627 = vmatpush1.bf16.msra.mxu0 %v4741
        %7628 = vmatprep.subr.bf16.mxu0 %v4750
        %7629 = vmatpush1.bf16.msra.mxu0 %v4749
        %7630 = vmatprep.subr.bf16.mxu0 %v4758
        %7631 = vmatpush1.bf16.msra.mxu0 %v4757
        %7632 = vmatprep.subr.bf16.mxu0 %v4766
        %7633 = vmatpush1.bf16.msra.mxu0 %v4765
        %7634 = vmatprep.subr.bf16.mxu0 %v4774
        %7635 = vmatpush1.bf16.msra.mxu0 %v4773
        %7636 = vmatprep.subr.bf16.mxu0 %v4782
        %7637 = vmatpush1.bf16.msra.mxu0 %v4781
        %7638 = vmatprep.subr.bf16.mxu0 %v4790
        %7639 = vmatpush1.bf16.msra.mxu0 %v4789
        %7640 = vmatprep.mubr.bf16.mxu0 %v1434
        %7641 = vmatmul.mubr.bf16.gmra.mrb[0].mxu0 %v1433
        %v7642 = vpop.f32.mrb[0].mxu0
        %v7643 = vadd.f32 %v7602, %v7642
        %v7644 = vpop.f32.mrb[0].mxu0
        %v7645 = vadd.f32 %v7604, %v7644
        %v7646 = vpop.f32.mrb[0].mxu0
        %v7647 = vpop.f32.mrb[0].mxu0
        %7648 = vdwg.mxu0
        %7649 = vmatprep.subr.bf16.mxu0 %v4798
        %7650 = vmatpush1.bf16.msra.mxu0 %v4797
        %7651 = vmatprep.subr.bf16.mxu0 %v4806
        %7652 = vmatpush1.bf16.msra.mxu0 %v4805
        %7653 = vmatprep.subr.bf16.mxu0 %v4814
        %7654 = vmatpush1.bf16.msra.mxu0 %v4813
        %7655 = vmatprep.subr.bf16.mxu0 %v4822
        %7656 = vmatpush1.bf16.msra.mxu0 %v4821
        %7657 = vmatprep.subr.bf16.mxu0 %v4830
        %7658 = vmatpush1.bf16.msra.mxu0 %v4829
        %7659 = vmatprep.subr.bf16.mxu0 %v4838
        %7660 = vmatpush1.bf16.msra.mxu0 %v4837
        %7661 = vmatprep.subr.bf16.mxu0 %v4846
        %7662 = vmatpush1.bf16.msra.mxu0 %v4845
        %7663 = vmatprep.subr.bf16.mxu0 %v4854
        %7664 = vmatpush1.bf16.msra.mxu0 %v4853
        %7665 = vmatprep.subr.bf16.mxu0 %v4862
        %7666 = vmatpush1.bf16.msra.mxu0 %v4861
        %7667 = vmatprep.subr.bf16.mxu0 %v4870
        %7668 = vmatpush1.bf16.msra.mxu0 %v4869
        %7669 = vmatprep.subr.bf16.mxu0 %v4878
        %7670 = vmatpush1.bf16.msra.mxu0 %v4877
        %7671 = vmatprep.subr.bf16.mxu0 %v4886
        %7672 = vmatpush1.bf16.msra.mxu0 %v4885
        %7673 = vmatprep.subr.bf16.mxu0 %v4894
        %7674 = vmatpush1.bf16.msra.mxu0 %v4893
        %7675 = vmatprep.subr.bf16.mxu0 %v4902
        %7676 = vmatpush1.bf16.msra.mxu0 %v4901
        %7677 = vmatprep.subr.bf16.mxu0 %v4910
        %7678 = vmatpush1.bf16.msra.mxu0 %v4909
        %7679 = vmatprep.subr.bf16.mxu0 %v4918
        %7680 = vmatpush1.bf16.msra.mxu0 %v4917
        %7681 = vmatprep.mubr.bf16.mxu0 %v1436
        %7682 = vmatmul.mubr.bf16.gmra.mrb[0].mxu0 %v1435
        %v7683 = vpop.f32.mrb[0].mxu0
        %v7684 = vadd.f32 %v7643, %v7683
        %v7685 = vpop.f32.mrb[0].mxu0
        %v7686 = vadd.f32 %v7645, %v7685
        %v7687 = vpop.f32.mrb[0].mxu0
        %v7688 = vpop.f32.mrb[0].mxu0
        %7689 = vdwg.mxu0
        %7690 = vmatprep.subr.bf16.mxu0 %v4926
        %7691 = vmatpush1.bf16.msra.mxu0 %v4925
        %7692 = vmatprep.subr.bf16.mxu0 %v4934
        %7693 = vmatpush1.bf16.msra.mxu0 %v4933
        %7694 = vmatprep.subr.bf16.mxu0 %v4942
        %7695 = vmatpush1.bf16.msra.mxu0 %v4941
        %7696 = vmatprep.subr.bf16.mxu0 %v4950
        %7697 = vmatpush1.bf16.msra.mxu0 %v4949
        %7698 = vmatprep.subr.bf16.mxu0 %v4958
        %7699 = vmatpush1.bf16.msra.mxu0 %v4957
        %7700 = vmatprep.subr.bf16.mxu0 %v4966
        %7701 = vmatpush1.bf16.msra.mxu0 %v4965
        %7702 = vmatprep.subr.bf16.mxu0 %v4974
        %7703 = vmatpush1.bf16.msra.mxu0 %v4973
        %7704 = vmatprep.subr.bf16.mxu0 %v4982
        %7705 = vmatpush1.bf16.msra.mxu0 %v4981
        %7706 = vmatprep.subr.bf16.mxu0 %v4990
        %7707 = vmatpush1.bf16.msra.mxu0 %v4989
        %7708 = vmatprep.subr.bf16.mxu0 %v4998
        %7709 = vmatpush1.bf16.msra.mxu0 %v4997
        %7710 = vmatprep.subr.bf16.mxu0 %v5006
        %7711 = vmatpush1.bf16.msra.mxu0 %v5005
        %7712 = vmatprep.subr.bf16.mxu0 %v5014
        %7713 = vmatpush1.bf16.msra.mxu0 %v5013
        %7714 = vmatprep.subr.bf16.mxu0 %v5022
        %7715 = vmatpush1.bf16.msra.mxu0 %v5021
        %7716 = vmatprep.subr.bf16.mxu0 %v5030
        %7717 = vmatpush1.bf16.msra.mxu0 %v5029
        %7718 = vmatprep.subr.bf16.mxu0 %v5038
        %7719 = vmatpush1.bf16.msra.mxu0 %v5037
        %7720 = vmatprep.subr.bf16.mxu0 %v5046
        %7721 = vmatpush1.bf16.msra.mxu0 %v5045
        %7722 = vmatprep.mubr.bf16.mxu0 %v1438
        %7723 = vmatmul.mubr.bf16.gmra.mrb[0].mxu0 %v1437
        %v7724 = vpop.f32.mrb[0].mxu0
        %v7725 = vadd.f32 %v7684, %v7724
        %v7726 = vpop.f32.mrb[0].mxu0
        %v7727 = vadd.f32 %v7686, %v7726
        %v7728 = vpop.f32.mrb[0].mxu0
        %v7729 = vpop.f32.mrb[0].mxu0
        %7730 = vdwg.mxu0
        %7731 = vmatprep.subr.bf16.mxu0 %v5054
        %7732 = vmatpush1.bf16.msra.mxu0 %v5053
        %7733 = vmatprep.subr.bf16.mxu0 %v5062
        %7734 = vmatpush1.bf16.msra.mxu0 %v5061
        %7735 = vmatprep.subr.bf16.mxu0 %v5070
        %7736 = vmatpush1.bf16.msra.mxu0 %v5069
        %7737 = vmatprep.subr.bf16.mxu0 %v5078
        %7738 = vmatpush1.bf16.msra.mxu0 %v5077
        %7739 = vmatprep.subr.bf16.mxu0 %v5086
        %7740 = vmatpush1.bf16.msra.mxu0 %v5085
        %7741 = vmatprep.subr.bf16.mxu0 %v5094
        %7742 = vmatpush1.bf16.msra.mxu0 %v5093
        %7743 = vmatprep.subr.bf16.mxu0 %v5102
        %7744 = vmatpush1.bf16.msra.mxu0 %v5101
        %7745 = vmatprep.subr.bf16.mxu0 %v5110
        %7746 = vmatpush1.bf16.msra.mxu0 %v5109
        %7747 = vmatprep.subr.bf16.mxu0 %v5118
        %7748 = vmatpush1.bf16.msra.mxu0 %v5117
        %7749 = vmatprep.subr.bf16.mxu0 %v5126
        %7750 = vmatpush1.bf16.msra.mxu0 %v5125
        %7751 = vmatprep.subr.bf16.mxu0 %v5134
        %7752 = vmatpush1.bf16.msra.mxu0 %v5133
        %7753 = vmatprep.subr.bf16.mxu0 %v5142
        %7754 = vmatpush1.bf16.msra.mxu0 %v5141
        %7755 = vmatprep.subr.bf16.mxu0 %v5150
        %7756 = vmatpush1.bf16.msra.mxu0 %v5149
        %7757 = vmatprep.subr.bf16.mxu0 %v5158
        %7758 = vmatpush1.bf16.msra.mxu0 %v5157
        %7759 = vmatprep.subr.bf16.mxu0 %v5166
        %7760 = vmatpush1.bf16.msra.mxu0 %v5165
        %7761 = vmatprep.subr.bf16.mxu0 %v5174
        %7762 = vmatpush1.bf16.msra.mxu0 %v5173
        %7763 = vmatprep.mubr.bf16.mxu0 %v1440
        %7764 = vmatmul.mubr.bf16.gmra.mrb[0].mxu0 %v1439
        %v7765 = vpop.f32.mrb[0].mxu0
        %v7766 = vadd.f32 %v7725, %v7765
        %v7767 = vpop.f32.mrb[0].mxu0
        %v7768 = vadd.f32 %v7727, %v7767
        %v7769 = vpop.f32.mrb[0].mxu0
        %v7770 = vpop.f32.mrb[0].mxu0
        %7771 = vdwg.mxu0
        %7772 = vmatprep.subr.bf16.mxu0 %v5182
        %7773 = vmatpush1.bf16.msra.mxu0 %v5181
        %7774 = vmatprep.subr.bf16.mxu0 %v5190
        %7775 = vmatpush1.bf16.msra.mxu0 %v5189
        %7776 = vmatprep.subr.bf16.mxu0 %v5198
        %7777 = vmatpush1.bf16.msra.mxu0 %v5197
        %7778 = vmatprep.subr.bf16.mxu0 %v5206
        %7779 = vmatpush1.bf16.msra.mxu0 %v5205
        %7780 = vmatprep.subr.bf16.mxu0 %v5214
        %7781 = vmatpush1.bf16.msra.mxu0 %v5213
        %7782 = vmatprep.subr.bf16.mxu0 %v5222
        %7783 = vmatpush1.bf16.msra.mxu0 %v5221
        %7784 = vmatprep.subr.bf16.mxu0 %v5230
        %7785 = vmatpush1.bf16.msra.mxu0 %v5229
        %7786 = vmatprep.subr.bf16.mxu0 %v5238
        %7787 = vmatpush1.bf16.msra.mxu0 %v5237
        %7788 = vmatprep.subr.bf16.mxu0 %v5246
        %7789 = vmatpush1.bf16.msra.mxu0 %v5245
        %7790 = vmatprep.subr.bf16.mxu0 %v5254
        %7791 = vmatpush1.bf16.msra.mxu0 %v5253
        %7792 = vmatprep.subr.bf16.mxu0 %v5262
        %7793 = vmatpush1.bf16.msra.mxu0 %v5261
        %7794 = vmatprep.subr.bf16.mxu0 %v5270
        %7795 = vmatpush1.bf16.msra.mxu0 %v5269
        %7796 = vmatprep.subr.bf16.mxu0 %v5278
        %7797 = vmatpush1.bf16.msra.mxu0 %v5277
        %7798 = vmatprep.subr.bf16.mxu0 %v5286
        %7799 = vmatpush1.bf16.msra.mxu0 %v5285
        %7800 = vmatprep.subr.bf16.mxu0 %v5294
        %7801 = vmatpush1.bf16.msra.mxu0 %v5293
        %7802 = vmatprep.subr.bf16.mxu0 %v5302
        %7803 = vmatpush1.bf16.msra.mxu0 %v5301
        %7804 = vmatprep.mubr.bf16.mxu0 %v1442
        %7805 = vmatmul.mubr.bf16.gmra.mrb[0].mxu0 %v1441
        %v7806 = vpop.f32.mrb[0].mxu0
        %v7807 = vadd.f32 %v7766, %v7806
        %v7808 = vpop.f32.mrb[0].mxu0
        %v7809 = vadd.f32 %v7768, %v7808
        %v7810 = vpop.f32.mrb[0].mxu0
        %v7811 = vpop.f32.mrb[0].mxu0
        %7812 = vdwg.mxu0
        %7813 = vmatprep.subr.bf16.mxu0 %v5310
        %7814 = vmatpush1.bf16.msra.mxu0 %v5309
        %7815 = vmatprep.subr.bf16.mxu0 %v5318
        %7816 = vmatpush1.bf16.msra.mxu0 %v5317
        %7817 = vmatprep.subr.bf16.mxu0 %v5326
        %7818 = vmatpush1.bf16.msra.mxu0 %v5325
        %7819 = vmatprep.subr.bf16.mxu0 %v5334
        %7820 = vmatpush1.bf16.msra.mxu0 %v5333
        %7821 = vmatprep.subr.bf16.mxu0 %v5342
        %7822 = vmatpush1.bf16.msra.mxu0 %v5341
        %7823 = vmatprep.subr.bf16.mxu0 %v5350
        %7824 = vmatpush1.bf16.msra.mxu0 %v5349
        %7825 = vmatprep.subr.bf16.mxu0 %v5358
        %7826 = vmatpush1.bf16.msra.mxu0 %v5357
        %7827 = vmatprep.subr.bf16.mxu0 %v5366
        %7828 = vmatpush1.bf16.msra.mxu0 %v5365
        %7829 = vmatprep.subr.bf16.mxu0 %v5374
        %7830 = vmatpush1.bf16.msra.mxu0 %v5373
        %7831 = vmatprep.subr.bf16.mxu0 %v5382
        %7832 = vmatpush1.bf16.msra.mxu0 %v5381
        %7833 = vmatprep.subr.bf16.mxu0 %v5390
        %7834 = vmatpush1.bf16.msra.mxu0 %v5389
        %7835 = vmatprep.subr.bf16.mxu0 %v5398
        %7836 = vmatpush1.bf16.msra.mxu0 %v5397
        %7837 = vmatprep.subr.bf16.mxu0 %v5406
        %7838 = vmatpush1.bf16.msra.mxu0 %v5405
        %7839 = vmatprep.subr.bf16.mxu0 %v5414
        %7840 = vmatpush1.bf16.msra.mxu0 %v5413
        %7841 = vmatprep.subr.bf16.mxu0 %v5422
        %7842 = vmatpush1.bf16.msra.mxu0 %v5421
        %7843 = vmatprep.subr.bf16.mxu0 %v5430
        %7844 = vmatpush1.bf16.msra.mxu0 %v5429
        %7845 = vmatprep.mubr.bf16.mxu0 %v1444
        %7846 = vmatmul.mubr.bf16.gmra.mrb[0].mxu0 %v1443
        %v7847 = vpop.f32.mrb[0].mxu0
        %v7848 = vadd.f32 %v7807, %v7847
        %v7849 = vpop.f32.mrb[0].mxu0
        %v7850 = vadd.f32 %v7809, %v7849
        %v7851 = vpop.f32.mrb[0].mxu0
        %v7852 = vpop.f32.mrb[0].mxu0
        %7853 = vdwg.mxu0
        %7854 = vmatprep.subr.bf16.mxu0 %v5438
        %7855 = vmatpush1.bf16.msra.mxu0 %v5437
        %7856 = vmatprep.subr.bf16.mxu0 %v5446
        %7857 = vmatpush1.bf16.msra.mxu0 %v5445
        %7858 = vmatprep.subr.bf16.mxu0 %v5454
        %7859 = vmatpush1.bf16.msra.mxu0 %v5453
        %7860 = vmatprep.subr.bf16.mxu0 %v5462
        %7861 = vmatpush1.bf16.msra.mxu0 %v5461
        %7862 = vmatprep.subr.bf16.mxu0 %v5470
        %7863 = vmatpush1.bf16.msra.mxu0 %v5469
        %7864 = vmatprep.subr.bf16.mxu0 %v5478
        %7865 = vmatpush1.bf16.msra.mxu0 %v5477
        %7866 = vmatprep.subr.bf16.mxu0 %v5486
        %7867 = vmatpush1.bf16.msra.mxu0 %v5485
        %7868 = vmatprep.subr.bf16.mxu0 %v5494
        %7869 = vmatpush1.bf16.msra.mxu0 %v5493
        %7870 = vmatprep.subr.bf16.mxu0 %v5502
        %7871 = vmatpush1.bf16.msra.mxu0 %v5501
        %7872 = vmatprep.subr.bf16.mxu0 %v5510
        %7873 = vmatpush1.bf16.msra.mxu0 %v5509
        %7874 = vmatprep.subr.bf16.mxu0 %v5518
        %7875 = vmatpush1.bf16.msra.mxu0 %v5517
        %7876 = vmatprep.subr.bf16.mxu0 %v5526
        %7877 = vmatpush1.bf16.msra.mxu0 %v5525
        %7878 = vmatprep.subr.bf16.mxu0 %v5534
        %7879 = vmatpush1.bf16.msra.mxu0 %v5533
        %7880 = vmatprep.subr.bf16.mxu0 %v5542
        %7881 = vmatpush1.bf16.msra.mxu0 %v5541
        %7882 = vmatprep.subr.bf16.mxu0 %v5550
        %7883 = vmatpush1.bf16.msra.mxu0 %v5549
        %7884 = vmatprep.subr.bf16.mxu0 %v5558
        %7885 = vmatpush1.bf16.msra.mxu0 %v5557
        %7886 = vmatprep.mubr.bf16.mxu0 %v1446
        %7887 = vmatmul.mubr.bf16.gmra.mrb[0].mxu0 %v1445
        %v7888 = vpop.f32.mrb[0].mxu0
        %v7889 = vadd.f32 %v7848, %v7888
        %v7890 = vpop.f32.mrb[0].mxu0
        %v7891 = vadd.f32 %v7850, %v7890
        %v7892 = vpop.f32.mrb[0].mxu0
        %v7893 = vpop.f32.mrb[0].mxu0
        %7894 = vdwg.mxu0
        %v7895 = vmax.f32 %v6905, 0.0
        %v7896 = vmax.f32 %v6907, 0.0
        %v7897 = vmax.f32 %v7233, 0.0
        %v7898 = vmax.f32 %v7235, 0.0
        %v7899 = vmax.f32 %v7561, 0.0
        %v7900 = vmax.f32 %v7563, 0.0
        %v7901 = vmax.f32 %v7889, 0.0
        %v7902 = vmax.f32 %v7891, 0.0
        %v7903 = vpack.c.bf16 %v7895, %v7895
        %v7904 = vpack.c.bf16 %v7896, %v7896
        %v7905 = vpack.c.bf16 %v7897, %v7897
        %v7906 = vpack.c.bf16 %v7898, %v7898
        %v7907 = vpack.c.bf16 %v7899, %v7899
        %v7908 = vpack.c.bf16 %v7900, %v7900
        %v7909 = vpack.c.bf16 %v7901, %v7901
        %v7910 = vpack.c.bf16 %v7902, %v7902
        %s7911 = smul.u32 %s27, 1024
        %p7912 = scmp.lt.s32.totalorder %s26, 4
        %p7913 = pnand %p7912, %p312
        %p7914 = pneg %p7913
        // Predicated region
        $region45: #{net_forward.4} parent=31 // pred_check
          _
        $region46: #{net_forward.4} parent=31 // pred_check_branch
          %7916 = sbr.rel (%p7913) target = $region48
        $region47: #{net_forward.4} parent=31 // pred_region
          %v7925 = vunpack.c.l.b16 %v7903
          %v7926 = vunpack.c.l.b16 %v7904
          %v7927 = vunpack.c.l.b16 %v7905
          %v7928 = vunpack.c.l.b16 %v7906
          %v7929 = vunpack.c.l.b16 %v7907
          %v7930 = vunpack.c.l.b16 %v7908
          %v7931 = vunpack.c.l.b16 %v7909
          %v7932 = vunpack.c.l.b16 %v7910
          %v7933 = vpack.c.b16 %v7926, %v7925
          %v7934 = vpack.c.b16 %v7928, %v7927
          %v7935 = vpack.c.b16 %v7930, %v7929
          %v7936 = vpack.c.b16 %v7932, %v7931
          %s7941 = sshra.s32 %s7911, 7
          %s7942 = sand.u32 %s7911, 127
          %s7943 = sadd.s32 %s7941, 16
          %s7944 = smul.addr %s7943, 4
          %s7945 = scalar_lea.vmem [#allocation2], %s7944
          %7946 = vst [vmem:[%s7945] sm:$0xff] %v7933
          %7947 = vst [vmem:[%s7945 + $0x8] sm:$0xff] %v7934
          %7948 = vst [vmem:[%s7945 + $0x10] sm:$0xff] %v7935
          %7949 = vst [vmem:[%s7945 + $0x18] sm:$0xff] %v7936
        $region48: #{net_forward.4} parent=31 // pred_fallthru
          _
        %p7950 = scmp.eq.s32.totalorder %s311, 1
        %p7951 = pnand %p7912, %p7950
        %p7952 = pneg %p7951
        // Predicated region
        $region49: #{net_forward.4} parent=31 // pred_check
          _
        $region50: #{net_forward.4} parent=31 // pred_check_branch
          %7954 = sbr.rel (%p7951) target = $region52
        $region51: #{net_forward.4} parent=31 // pred_region
          %v7963 = vunpack.c.l.b16 %v7903
          %v7964 = vunpack.c.l.b16 %v7904
          %v7965 = vunpack.c.l.b16 %v7905
          %v7966 = vunpack.c.l.b16 %v7906
          %v7967 = vunpack.c.l.b16 %v7907
          %v7968 = vunpack.c.l.b16 %v7908
          %v7969 = vunpack.c.l.b16 %v7909
          %v7970 = vunpack.c.l.b16 %v7910
          %v7971 = vpack.c.b16 %v7964, %v7963
          %v7972 = vpack.c.b16 %v7966, %v7965
          %v7973 = vpack.c.b16 %v7968, %v7967
          %v7974 = vpack.c.b16 %v7970, %v7969
          %s7979 = sshra.s32 %s7911, 7
          %s7980 = sand.u32 %s7911, 127
          %s7981 = smul.addr %s7979, 4
          %s7982 = scalar_lea.vmem [#allocation2], %s7981
          %7983 = vst [vmem:[%s7982] sm:$0xff] %v7971
          %7984 = vst [vmem:[%s7982 + $0x8] sm:$0xff] %v7972
          %7985 = vst [vmem:[%s7982 + $0x10] sm:$0xff] %v7973
          %7986 = vst [vmem:[%s7982 + $0x18] sm:$0xff] %v7974
        $region52: #{net_forward.4} parent=31 // pred_fallthru
          _
        %p7987 = scmp.eq.s32.totalorder %s26, 4
        // Predicated region
        $region53: #{net_forward.4} parent=31 // pred_check
          %p7988 = pneg %p7987
        $region54: #{net_forward.4} parent=31 // pred_check_branch
          %7990 = sbr.rel (%p7988) target = $region56
        $region55: #{net_forward.4} parent=31 // pred_region
          %v7999 = vunpack.c.l.b16 %v7903
          %v8000 = vunpack.c.l.b16 %v7904
          %v8001 = vunpack.c.l.b16 %v7905
          %v8002 = vunpack.c.l.b16 %v7906
          %v8003 = vunpack.c.l.b16 %v7907
          %v8004 = vunpack.c.l.b16 %v7908
          %v8005 = vunpack.c.l.b16 %v7909
          %v8006 = vunpack.c.l.b16 %v7910
          %v8007 = vpack.c.b16 %v8000, %v7999
          %v8008 = vpack.c.b16 %v8002, %v8001
          %v8009 = vpack.c.b16 %v8004, %v8003
          %v8010 = vpack.c.b16 %v8006, %v8005
          %s8015 = sshra.s32 %s7911, 7
          %s8016 = sand.u32 %s7911, 127
          %s8017 = smul.addr %s8015, 4
          %s8018 = scalar_lea.vmem %s277, %s8017
          %8019 = vst [vmem:[%s8018] sm:$0xff] %v8007
          %8020 = vst [vmem:[%s8018 + $0x8] sm:$0xff] %v8008
          %8021 = vst [vmem:[%s8018 + $0x10] sm:$0xff] %v8009
          %8022 = vst [vmem:[%s8018 + $0x18] sm:$0xff] %v8010
        $region56: #{net_forward.4} parent=31 // pred_fallthru
          _
        %p8023 = scmp.lt.s32.totalorder %s25, 0
        %s8024 = scalar_select %p8023, %s25, 0
        %s8025 = smul.addr %s8024, 16
        %s8026 = smul.addr %s8025, 4
        %s8027 = scalar_lea.vmem %s3, %s8026
        // Predicated region
        $region57: #{net_forward.4} parent=31 // pred_check
          %p8028 = pneg %p139
        $region58: #{net_forward.4} parent=31 // pred_check_branch
          %8030 = sbr.rel (%p8028) target = $region60
        $region59: #{net_forward.4} parent=31 // pred_region
          _
        $region60: #{net_forward.4} parent=31 // pred_fallthru
          _
        // Predicated region
        $region61: #{net_forward.4} parent=31 // pred_check
          %p8031 = pneg %p139
        $region62: #{net_forward.4} parent=31 // pred_check_branch
          %8033 = sbr.rel (%p8031) target = $region64
        $region63: #{net_forward.4} parent=31 // pred_region
          %p8034 = scmp.lt.s32.totalorder %s25, 0
          %s8035 = scalar_select %p8034, %s25, 0
          %s8036 = smul.addr %s8035, 16
          %s8037 = smul.addr %s8036, 4
          %s8038 = scalar_lea.vmem %s3, %s8037
        $region64: #{net_forward.4} parent=31 // pred_fallthru
          _
      $region32: #{net_forward.4} parent=5 // pred_fallthru
        _
      %p8039 = scmp.le.s32.totalorder 2, %s15
      // Predicated region
      $region65: #{net_forward.4} parent=5 // pred_check
        %p8040 = pneg %p8039
      $region66: #{net_forward.4} parent=5 // pred_check_branch
        %8042 = sbr.rel (%p8040) target = $region68
      $region67: #{net_forward.4} parent=5 // pred_region
        %s8043 = ssub.s32 %s15, 2
      $region68: #{net_forward.4} parent=5 // pred_fallthru
        _
    $region6: #{net_forward.4} parent=1 // loop_footer
      %s19 = sadd.s32 1, %s15
    $region7: #{net_forward.4} parent=1 // loop_footer_branch
      %14 = sbr.rel target = $region3
    $region8: #{net_forward.4} parent=1 // loop_exit
      _
    %8044 = vsyncpa [#allocation4], 1
    %s8045 = scalar_lea.sflag [#allocation4], 1
    %8046 = vsyncpa %s8045, 1
    %8047 = vsyncpa [#allocation6], 1
    %s8048 = scalar_lea.sflag [#allocation6], 1
    %8049 = vsyncpa %s8048, 1

</llo_original>
